<compile_context>
chip_gen: v6e
topology: v6e:2x2x1
jax: 0.10.0
libtpu: 0.0.40
codegen_flags: <defaults>
</compile_context>

<pallas_src>
import numpy as np
import jax
import jax.numpy as jnp
from jax.experimental import pallas as pl
from jax.experimental.pallas import tpu as pltpu


def _round_up(x, m):
    return ((x + m - 1) // m) * m


# ----------------------------------------------------------------------------
# Host-side repack: ConvTranspose2d(stride=2, pad=0) -> dense matmul operand.
#   out[b, co, s*ih+kh, s*iw+kw] += x[b, ci, ih, iw] * W[ci, co, kh, kw]
# becomes out_flat = x_flat @ M + b_flat with flat orders (ci,ih,iw) / (co,oh,ow),
# exactly matching PyTorch's reshape/flatten ordering.
# ----------------------------------------------------------------------------
def _expand_deconv(w, b, ih, iw, stride):
    w = np.asarray(w, dtype=np.float32)
    b = np.asarray(b, dtype=np.float32)
    cin, cout, kh, kw = w.shape
    oh = (ih - 1) * stride + kh
    ow = (iw - 1) * stride + kw
    m = np.zeros((cin, ih, iw, cout, oh, ow), np.float32)
    for i in range(ih):
        for j in range(iw):
            m[:, i, j, :, i * stride:i * stride + kh, j * stride:j * stride + kw] = w
    m = m.reshape(cin * ih * iw, cout * oh * ow)
    b_flat = np.broadcast_to(b[:, None, None], (cout, oh, ow)).reshape(-1).copy()
    return m, b_flat, oh, ow


def _pad2d(a, rows, cols):
    """Zero-pad a 2-D f32 matrix up to (rows, cols)."""
    out = np.zeros((rows, cols), np.float32)
    out[:a.shape[0], :a.shape[1]] = a
    return out


def _pad_bias(b, cols):
    out = np.zeros((1, cols), np.float32)
    out[0, :b.size] = b
    return out


# ----------------------------------------------------------------------------
# Fused kernel body: 4 lane-dense matmuls (bf16 in, f32 accumulate) + relu/sigmoid.
# ----------------------------------------------------------------------------
def _decoder_kernel(z4_ref, wlin_ref, blin_ref, m3_ref, b3_ref,
                    m2_ref, b2_ref, m1_ref, b1_ref, out_ref):
    f32, bf16 = jnp.float32, jnp.bfloat16

    # Linear + ReLU.
    h = jnp.dot(z4_ref[...].astype(bf16), wlin_ref[...],
                preferred_element_type=f32) + blin_ref[...].astype(f32)
    h = jnp.maximum(h, 0.0)

    # ConvTranspose2d #3 (dense scatter matmul) + ReLU.   2x2 -> 6x6
    h = jnp.dot(h.astype(bf16), m3_ref[...],
                preferred_element_type=f32) + b3_ref[...].astype(f32)
    h = jnp.maximum(h, 0.0)

    # ConvTranspose2d #2 + ReLU.                          6x6 -> 13x13
    h = jnp.dot(h.astype(bf16), m2_ref[...],
                preferred_element_type=f32) + b2_ref[...].astype(f32)
    h = jnp.maximum(h, 0.0)

    # ConvTranspose2d #1 + sigmoid.                       13x13 -> 28x28
    # exp and the approximate reciprocal both run on the EUP slot (keeps VALU free).
    h = jnp.dot(h.astype(bf16), m1_ref[...],
                preferred_element_type=f32) + b1_ref[...].astype(f32)
    out_ref[...] = pl.reciprocal(1.0 + jnp.exp(-h), approx=True).astype(out_ref.dtype)


def decoder_forward(z4, wlin_t, blin, m3, b3, m2, b2, m1, b1, *, tb=None):
    """Runs the whole decoder.  All weight operands must already be lane-padded bf16."""
    B, d0 = z4.shape
    dl = wlin_t.shape[1]
    d3 = m3.shape[1]
    d2 = m2.shape[1]
    d1 = m1.shape[1]

    if tb is None:
        # Multiple of 8 sublanes; >= 2 grid steps whenever B >= 16 so a 2-TC chip
        # (v7x) can split batch blocks across cores.  Cap 256 only for large batches
        # (v6e 256-wide MXU); on v5e pass tb=128 explicitly for very large batches.
        cap = 256 if B >= 512 else 128
        tb = max(8, min(cap, _round_up((B + 1) // 2, 8)))
    n_steps = pl.cdiv(B, tb)  # ragged last block is masked by Pallas -> no jnp.pad of z4

    flops = 2 * B * (d0 * dl + dl * d3 + d3 * d2 + d2 * d1)
    weight_bytes = 2 * int(wlin_t.size + m3.size + m2.size + m1.size
                           + blin.size + b3.size + b2.size + b1.size)
    cost = pl.CostEstimate(
        flops=int(flops),
        transcendentals=int(2 * B * d1),
        bytes_accessed=int(4 * B * (d0 + d1) + weight_bytes))

    def build(single_buffer_weights):
        const_kwargs = (
            {"pipeline_mode": pl.Buffered(1)} if single_buffer_weights else {})
        cmap = lambda i: (0, 0)

        def const(shape):
            # Grid-invariant block: no need to double-buffer it.
            return pl.BlockSpec(shape, cmap, **const_kwargs)

        return pl.pallas_call(
            _decoder_kernel,
            out_shape=jax.ShapeDtypeStruct((B, d1), z4.dtype),
            grid_spec=pltpu.PrefetchScalarGridSpec(
                num_scalar_prefetch=0,
                grid=(n_steps,),
                in_specs=[
                    pl.BlockSpec((tb, d0), lambda i: (i, 0)),  # z4 batch tile
                    const((d0, dl)),   # linear weight (transposed, lane-padded)
                    const((1, dl)),    # linear bias
                    const((dl, d3)),   # tc3 scatter matrix
                    const((1, d3)),
                    const((d3, d2)),   # tc2 scatter matrix
                    const((1, d2)),
                    const((d2, d1)),   # tc1 scatter matrix
                    const((1, d1)),
                ],
                out_specs=pl.BlockSpec((tb, d1), lambda i: (i, 0)),  # lane-dense store
            ),
            compiler_params=pltpu.CompilerParams(
                # Note: on v7x, pltpu.CORE_PARALLEL here (or an explicit leading
                # grid axis of size 2) is what actually shards batch blocks across
                # the two TensorCores.
                dimension_semantics=("parallel",),
                vmem_limit_bytes=32 * 1024 * 1024),
            cost_estimate=cost,
        )

    args = (z4, wlin_t, blin, m3, b3, m2, b2, m1, b1)
    try:
        return build(True)(*args)
    except Exception:
        # Fallback for jax builds that reject pipeline_mode / Buffered(1) on the
        # TPU pallas_call path; identical math, just double-buffered weights.
        return build(False)(*args)


# ----------------------------------------------------------------------------
# Module wrapper mirroring the PyTorch MNISTConvDecoder.
# ----------------------------------------------------------------------------
class MNISTConvDecoder:
    def __init__(self, feature_dim, code_dim, key):
        self.feature_dim = feature_dim
        self.code_dim = code_dim
        F = feature_dim
        ks = jax.random.split(key, 8)

        def u(k, shape, fan_in):
            bound = 1.0 / np.sqrt(float(fan_in))
            return jax.random.uniform(k, shape, jnp.float32, -bound, bound)

        # PyTorch-layout parameters (kept in f32 for the reference path).
        self.lin_w = u(ks[0], (16 * F, code_dim), code_dim)      # Linear(code_dim, 16F)
        self.lin_b = u(ks[1], (16 * F,), code_dim)
        self.tc3_w = u(ks[2], (4 * F, 2 * F, 4, 4), 4 * F * 16)  # ConvT(4F, 2F, 4, 2)
        self.tc3_b = u(ks[3], (2 * F,), 4 * F * 16)
        self.tc2_w = u(ks[4], (2 * F, F, 3, 3), 2 * F * 9)       # ConvT(2F, F, 3, 2)
        self.tc2_b = u(ks[5], (F,), 2 * F * 9)
        self.tc1_w = u(ks[6], (F, 1, 4, 4), F * 16)              # ConvT(F, 1, 4, 2)
        self.tc1_b = u(ks[7], (1,), F * 16)

        # One-time repack: deconvs -> dense scatter matmuls; all output/contraction
        # dims zero-padded to lane multiples of 128 (the padded K-rows of the next
        # matrix are zero too, so ReLU(0)=0 keeps results exact); stored in bf16.
        m3, b3, _, _ = _expand_deconv(self.tc3_w, self.tc3_b, 2, 2, 2)       # 2x2 -> 6x6
        m2, b2, _, _ = _expand_deconv(self.tc2_w, self.tc2_b, 6, 6, 2)       # 6x6 -> 13x13
        m1, b1, oh, ow = _expand_deconv(self.tc1_w, self.tc1_b, 13, 13, 2)   # 13x13 -> 28x28

        dl, d3 = m3.shape            # 16F, 72F
        d2 = m2.shape[1]             # 169F
        d1 = m1.shape[1]             # 784
        dl_p, d3_p, d2_p, d1_p = (_round_up(d, 128) for d in (dl, d3, d2, d1))

        wlin_t = np.asarray(self.lin_w, np.float32).T            # (code_dim, 16F)
        blin = np.asarray(self.lin_b, np.float32)

        as_bf16 = lambda a: jnp.asarray(a, dtype=jnp.bfloat16)
        self._ops = (
            as_bf16(_pad2d(wlin_t, code_dim, dl_p)),
            as_bf16(_pad_bias(blin, dl_p)),
            as_bf16(_pad2d(m3, dl_p, d3_p)),
            as_bf16(_pad_bias(b3, d3_p)),
            as_bf16(_pad2d(m2, d3_p, d2_p)),
            as_bf16(_pad_bias(b2, d2_p)),
            as_bf16(_pad2d(m1, d2_p, d1_p)),
            as_bf16(_pad_bias(b1, d1_p)),
        )
        self._out_cols = d1          # 784 logical output columns
        self._out_hw = (oh, ow)      # (28, 28)

    def __call__(self, z4):
        B = z4.shape[0]
        flat = decoder_forward(z4, *self._ops)          # (B, 896) lane-dense
        oh, ow = self._out_hw
        return flat[:, :self._out_cols].reshape(B, 1, oh, ow)


# ----------------------------------------------------------------------------
# Pure-JAX f32 reference (direct transliteration of the PyTorch forward).
# ----------------------------------------------------------------------------
def _conv_transpose_ref(x, w, b, stride):
    B, cin, ih, iw = x.shape
    _, cout, kh, kw = w.shape
    oh = (ih - 1) * stride + kh
    ow = (iw - 1) * stride + kw
    out = jnp.zeros((B, cout, oh, ow), jnp.float32)
    for i in range(ih):
        for j in range(iw):
            contrib = jnp.einsum("bi,iokl->bokl", x[:, :, i, j], w)
            out = out.at[:, :, i * stride:i * stride + kh,
                         j * stride:j * stride + kw].add(contrib)
    return out + b[None, :, None, None]


def _reference(z4, model):
    F = model.feature_dim
    h = jnp.maximum(z4 @ model.lin_w.T + model.lin_b, 0.0)
    h = h.reshape(z4.shape[0], 4 * F, 2, 2)
    h = jnp.maximum(_conv_transpose_ref(h, model.tc3_w, model.tc3_b, 2), 0.0)
    h = jnp.maximum(_conv_transpose_ref(h, model.tc2_w, model.tc2_b, 2), 0.0)
    h = jax.nn.sigmoid(_conv_transpose_ref(h, model.tc1_w, model.tc1_b, 2))
    return h


if __name__ == "__main__":
    feature_dim, code_dim, batch = 4, 32, 16
    key = jax.random.PRNGKey(0)
    kparams, kz = jax.random.split(key)

    model = MNISTConvDecoder(feature_dim, code_dim, kparams)
    z4 = jax.random.normal(kz, (batch, code_dim), dtype=jnp.float32)

    out = jax.block_until_ready(model(z4))
    assert out.shape == (batch, 1, 28, 28), out.shape

    ref = _reference(z4, model)
    err = float(jnp.max(jnp.abs(out - ref)))
    # bf16 MXU inputs + EUP-approximate sigmoid reciprocal -> small numeric drift.
    assert err < 1e-2, err
    print("KERNEL_OK")
</pallas_src>

<mosaic_0001>
module attributes {stable_mosaic.version = 11 : i64} {
  func.func @_decoder_kernel(%arg0: i32, %arg1: memref<8x32xf32, #tpu.memory_space<vmem>>, %arg2: memref<32x128xbf16, #tpu.memory_space<vmem>>, %arg3: memref<1x128xbf16, #tpu.memory_space<vmem>>, %arg4: memref<128x384xbf16, #tpu.memory_space<vmem>>, %arg5: memref<1x384xbf16, #tpu.memory_space<vmem>>, %arg6: memref<384x768xbf16, #tpu.memory_space<vmem>>, %arg7: memref<1x768xbf16, #tpu.memory_space<vmem>>, %arg8: memref<768x896xbf16, #tpu.memory_space<vmem>>, %arg9: memref<1x896xbf16, #tpu.memory_space<vmem>>, %arg10: memref<8x896xf32, #tpu.memory_space<vmem>>) attributes {dimension_semantics = [#tpu.dimension_semantics<parallel>], iteration_bounds = array<i64: 2>, scalar_prefetch = 0 : i64, scratch_operands = 0 : i64, tpu.core_type = #tpu.core_type<tc>, window_params = [{transform_indices = @transform_0, window_bounds = array<i64: 8, 32>}, {pipeline_mode = #tpu.pipeline_mode<synchronous>, transform_indices = @transform_1, window_bounds = array<i64: 32, 128>}, {pipeline_mode = #tpu.pipeline_mode<synchronous>, transform_indices = @transform_2, window_bounds = array<i64: 1, 128>}, {pipeline_mode = #tpu.pipeline_mode<synchronous>, transform_indices = @transform_3, window_bounds = array<i64: 128, 384>}, {pipeline_mode = #tpu.pipeline_mode<synchronous>, transform_indices = @transform_4, window_bounds = array<i64: 1, 384>}, {pipeline_mode = #tpu.pipeline_mode<synchronous>, transform_indices = @transform_5, window_bounds = array<i64: 384, 768>}, {pipeline_mode = #tpu.pipeline_mode<synchronous>, transform_indices = @transform_6, window_bounds = array<i64: 1, 768>}, {pipeline_mode = #tpu.pipeline_mode<synchronous>, transform_indices = @transform_7, window_bounds = array<i64: 768, 896>}, {pipeline_mode = #tpu.pipeline_mode<synchronous>, transform_indices = @transform_8, window_bounds = array<i64: 1, 896>}, {transform_indices = @transform_9, window_bounds = array<i64: 8, 896>}]} {
    %c0 = arith.constant 0 : index
    %c0_0 = arith.constant 0 : index
    %0 = vector.load %arg1[%c0, %c0_0] : memref<8x32xf32, #tpu.memory_space<vmem>>, vector<8x32xf32>
    %1 = arith.truncf %0 : vector<8x32xf32> to vector<8x32xbf16>
    %c0_1 = arith.constant 0 : index
    %c0_2 = arith.constant 0 : index
    %2 = vector.load %arg2[%c0_1, %c0_2] : memref<32x128xbf16, #tpu.memory_space<vmem>>, vector<32x128xbf16>
    %cst = arith.constant dense<0.000000e+00> : vector<8x128xf32>
    %3 = tpu.matmul %1, %2, %cst {dimension_numbers = #tpu.dot_dimension_numbers<[1], [0], [0], [1], [0, 0, 1, 1], [], []>} : vector<8x32xbf16>, vector<32x128xbf16>, vector<8x128xf32> -> vector<8x128xf32>
    %c0_3 = arith.constant 0 : index
    %c0_4 = arith.constant 0 : index
    %4 = vector.load %arg3[%c0_3, %c0_4] : memref<1x128xbf16, #tpu.memory_space<vmem>>, vector<1x128xbf16>
    %5 = arith.extf %4 : vector<1x128xbf16> to vector<1x128xf32>
    %6 = vector.broadcast %5 : vector<1x128xf32> to vector<8x128xf32>
    %7 = arith.addf %3, %6 : vector<8x128xf32>
    %cst_5 = arith.constant 0.000000e+00 : f32
    %8 = vector.broadcast %cst_5 : f32 to vector<8x128xf32>
    %9 = arith.maximumf %7, %8 : vector<8x128xf32>
    %10 = arith.truncf %9 : vector<8x128xf32> to vector<8x128xbf16>
    %c0_6 = arith.constant 0 : index
    %c0_7 = arith.constant 0 : index
    %11 = vector.load %arg4[%c0_6, %c0_7] : memref<128x384xbf16, #tpu.memory_space<vmem>>, vector<128x384xbf16>
    %cst_8 = arith.constant dense<0.000000e+00> : vector<8x384xf32>
    %12 = tpu.matmul %10, %11, %cst_8 {dimension_numbers = #tpu.dot_dimension_numbers<[1], [0], [0], [1], [0, 0, 1, 1], [], []>} : vector<8x128xbf16>, vector<128x384xbf16>, vector<8x384xf32> -> vector<8x384xf32>
    %c0_9 = arith.constant 0 : index
    %c0_10 = arith.constant 0 : index
    %13 = vector.load %arg5[%c0_9, %c0_10] : memref<1x384xbf16, #tpu.memory_space<vmem>>, vector<1x384xbf16>
    %14 = arith.extf %13 : vector<1x384xbf16> to vector<1x384xf32>
    %15 = vector.broadcast %14 : vector<1x384xf32> to vector<8x384xf32>
    %16 = arith.addf %12, %15 : vector<8x384xf32>
    %cst_11 = arith.constant 0.000000e+00 : f32
    %17 = vector.broadcast %cst_11 : f32 to vector<8x384xf32>
    %18 = arith.maximumf %16, %17 : vector<8x384xf32>
    %19 = arith.truncf %18 : vector<8x384xf32> to vector<8x384xbf16>
    %c0_12 = arith.constant 0 : index
    %c0_13 = arith.constant 0 : index
    %20 = vector.load %arg6[%c0_12, %c0_13] : memref<384x768xbf16, #tpu.memory_space<vmem>>, vector<384x768xbf16>
    %cst_14 = arith.constant dense<0.000000e+00> : vector<8x768xf32>
    %21 = tpu.matmul %19, %20, %cst_14 {dimension_numbers = #tpu.dot_dimension_numbers<[1], [0], [0], [1], [0, 0, 1, 1], [], []>} : vector<8x384xbf16>, vector<384x768xbf16>, vector<8x768xf32> -> vector<8x768xf32>
    %c0_15 = arith.constant 0 : index
    %c0_16 = arith.constant 0 : index
    %22 = vector.load %arg7[%c0_15, %c0_16] : memref<1x768xbf16, #tpu.memory_space<vmem>>, vector<1x768xbf16>
    %23 = arith.extf %22 : vector<1x768xbf16> to vector<1x768xf32>
    %24 = vector.broadcast %23 : vector<1x768xf32> to vector<8x768xf32>
    %25 = arith.addf %21, %24 : vector<8x768xf32>
    %cst_17 = arith.constant 0.000000e+00 : f32
    %26 = vector.broadcast %cst_17 : f32 to vector<8x768xf32>
    %27 = arith.maximumf %25, %26 : vector<8x768xf32>
    %28 = arith.truncf %27 : vector<8x768xf32> to vector<8x768xbf16>
    %c0_18 = arith.constant 0 : index
    %c0_19 = arith.constant 0 : index
    %29 = vector.load %arg8[%c0_18, %c0_19] : memref<768x896xbf16, #tpu.memory_space<vmem>>, vector<768x896xbf16>
    %cst_20 = arith.constant dense<0.000000e+00> : vector<8x896xf32>
    %30 = tpu.matmul %28, %29, %cst_20 {dimension_numbers = #tpu.dot_dimension_numbers<[1], [0], [0], [1], [0, 0, 1, 1], [], []>} : vector<8x768xbf16>, vector<768x896xbf16>, vector<8x896xf32> -> vector<8x896xf32>
    %c0_21 = arith.constant 0 : index
    %c0_22 = arith.constant 0 : index
    %31 = vector.load %arg9[%c0_21, %c0_22] : memref<1x896xbf16, #tpu.memory_space<vmem>>, vector<1x896xbf16>
    %32 = arith.extf %31 : vector<1x896xbf16> to vector<1x896xf32>
    %33 = vector.broadcast %32 : vector<1x896xf32> to vector<8x896xf32>
    %34 = arith.addf %30, %33 : vector<8x896xf32>
    %cst_23 = arith.constant 0.000000e+00 : f32
    %35 = vector.broadcast %cst_23 : f32 to vector<8x896xf32>
    %36 = arith.subf %35, %34 : vector<8x896xf32>
    %37 = math.exp %36 : vector<8x896xf32>
    %cst_24 = arith.constant 1.000000e+00 : f32
    %38 = vector.broadcast %cst_24 : f32 to vector<8x896xf32>
    %39 = arith.addf %38, %37 : vector<8x896xf32>
    %40 = tpu.reciprocal %39 {approx = true} : vector<8x896xf32> -> vector<8x896xf32>
    %c0_25 = arith.constant 0 : index
    %c0_26 = arith.constant 0 : index
    %41 = vector.load %arg10[%c0_25, %c0_26] : memref<8x896xf32, #tpu.memory_space<vmem>>, vector<8x896xf32>
    tpu.vector_store %arg10[%c0_25, %c0_26], %40 {strides = array<i32>} : memref<8x896xf32, #tpu.memory_space<vmem>>, vector<8x896xf32>,
    return
  }
  func.func @transform_0(%arg0: i32) -> (i32, i32) {
    %c0_i32 = arith.constant 0 : i32
    %c0_i32_0 = arith.constant 0 : i32
    return %arg0, %c0_i32 : i32, i32
  }
  func.func @transform_1(%arg0: i32) -> (i32, i32) {
    %c0_i32 = arith.constant 0 : i32
    %c0_i32_0 = arith.constant 0 : i32
    %c0_i32_1 = arith.constant 0 : i32
    return %c0_i32, %c0_i32_0 : i32, i32
  }
  func.func @transform_2(%arg0: i32) -> (i32, i32) {
    %c0_i32 = arith.constant 0 : i32
    %c0_i32_0 = arith.constant 0 : i32
    %c0_i32_1 = arith.constant 0 : i32
    return %c0_i32, %c0_i32_0 : i32, i32
  }
  func.func @transform_3(%arg0: i32) -> (i32, i32) {
    %c0_i32 = arith.constant 0 : i32
    %c0_i32_0 = arith.constant 0 : i32
    %c0_i32_1 = arith.constant 0 : i32
    return %c0_i32, %c0_i32_0 : i32, i32
  }
  func.func @transform_4(%arg0: i32) -> (i32, i32) {
    %c0_i32 = arith.constant 0 : i32
    %c0_i32_0 = arith.constant 0 : i32
    %c0_i32_1 = arith.constant 0 : i32
    return %c0_i32, %c0_i32_0 : i32, i32
  }
  func.func @transform_5(%arg0: i32) -> (i32, i32) {
    %c0_i32 = arith.constant 0 : i32
    %c0_i32_0 = arith.constant 0 : i32
    %c0_i32_1 = arith.constant 0 : i32
    return %c0_i32, %c0_i32_0 : i32, i32
  }
  func.func @transform_6(%arg0: i32) -> (i32, i32) {
    %c0_i32 = arith.constant 0 : i32
    %c0_i32_0 = arith.constant 0 : i32
    %c0_i32_1 = arith.constant 0 : i32
    return %c0_i32, %c0_i32_0 : i32, i32
  }
  func.func @transform_7(%arg0: i32) -> (i32, i32) {
    %c0_i32 = arith.constant 0 : i32
    %c0_i32_0 = arith.constant 0 : i32
    %c0_i32_1 = arith.constant 0 : i32
    return %c0_i32, %c0_i32_0 : i32, i32
  }
  func.func @transform_8(%arg0: i32) -> (i32, i32) {
    %c0_i32 = arith.constant 0 : i32
    %c0_i32_0 = arith.constant 0 : i32
    %c0_i32_1 = arith.constant 0 : i32
    return %c0_i32, %c0_i32_0 : i32, i32
  }
  func.func @transform_9(%arg0: i32) -> (i32, i32) {
    %c0_i32 = arith.constant 0 : i32
    %c0_i32_0 = arith.constant 0 : i32
    return %arg0, %c0_i32 : i32, i32
  }
}

module attributes {stable_mosaic.version = 11 : i64} {
  func.func @_decoder_kernel(%arg0: i32, %arg1: memref<8x32xf32, #tpu.memory_space<vmem>>, %arg2: memref<32x128xbf16, #tpu.memory_space<vmem>>, %arg3: memref<1x128xbf16, #tpu.memory_space<vmem>>, %arg4: memref<128x384xbf16, #tpu.memory_space<vmem>>, %arg5: memref<1x384xbf16, #tpu.memory_space<vmem>>, %arg6: memref<384x768xbf16, #tpu.memory_space<vmem>>, %arg7: memref<1x768xbf16, #tpu.memory_space<vmem>>, %arg8: memref<768x896xbf16, #tpu.memory_space<vmem>>, %arg9: memref<1x896xbf16, #tpu.memory_space<vmem>>, %arg10: memref<8x896xf32, #tpu.memory_space<vmem>>) attributes {dimension_semantics = [#tpu.dimension_semantics<parallel>], iteration_bounds = array<i64: 2>, scalar_prefetch = 0 : i64, scratch_operands = 0 : i64, tpu.core_type = #tpu.core_type<tc>, window_params = [{transform_indices = @transform_0, window_bounds = array<i64: 8, 32>}, {pipeline_mode = #tpu.pipeline_mode<synchronous>, transform_indices = @transform_1, window_bounds = array<i64: 32, 128>}, {pipeline_mode = #tpu.pipeline_mode<synchronous>, transform_indices = @transform_2, window_bounds = array<i64: 1, 128>}, {pipeline_mode = #tpu.pipeline_mode<synchronous>, transform_indices = @transform_3, window_bounds = array<i64: 128, 384>}, {pipeline_mode = #tpu.pipeline_mode<synchronous>, transform_indices = @transform_4, window_bounds = array<i64: 1, 384>}, {pipeline_mode = #tpu.pipeline_mode<synchronous>, transform_indices = @transform_5, window_bounds = array<i64: 384, 768>}, {pipeline_mode = #tpu.pipeline_mode<synchronous>, transform_indices = @transform_6, window_bounds = array<i64: 1, 768>}, {pipeline_mode = #tpu.pipeline_mode<synchronous>, transform_indices = @transform_7, window_bounds = array<i64: 768, 896>}, {pipeline_mode = #tpu.pipeline_mode<synchronous>, transform_indices = @transform_8, window_bounds = array<i64: 1, 896>}, {transform_indices = @transform_9, window_bounds = array<i64: 8, 896>}]} {
    %c0 = arith.constant 0 : index
    %c0_0 = arith.constant 0 : index
    %0 = vector.load %arg1[%c0, %c0_0] : memref<8x32xf32, #tpu.memory_space<vmem>>, vector<8x32xf32>
    %1 = arith.truncf %0 : vector<8x32xf32> to vector<8x32xbf16>
    %c0_1 = arith.constant 0 : index
    %c0_2 = arith.constant 0 : index
    %2 = vector.load %arg2[%c0_1, %c0_2] : memref<32x128xbf16, #tpu.memory_space<vmem>>, vector<32x128xbf16>
    %cst = arith.constant dense<0.000000e+00> : vector<8x128xf32>
    %3 = tpu.matmul %1, %2, %cst {dimension_numbers = #tpu.dot_dimension_numbers<[1], [0], [0], [1], [0, 0, 1, 1], [], []>} : vector<8x32xbf16>, vector<32x128xbf16>, vector<8x128xf32> -> vector<8x128xf32>
    %c0_3 = arith.constant 0 : index
    %c0_4 = arith.constant 0 : index
    %4 = vector.load %arg3[%c0_3, %c0_4] : memref<1x128xbf16, #tpu.memory_space<vmem>>, vector<1x128xbf16>
    %5 = arith.extf %4 : vector<1x128xbf16> to vector<1x128xf32>
    %6 = vector.broadcast %5 : vector<1x128xf32> to vector<8x128xf32>
    %7 = arith.addf %3, %6 : vector<8x128xf32>
    %cst_5 = arith.constant 0.000000e+00 : f32
    %8 = vector.broadcast %cst_5 : f32 to vector<8x128xf32>
    %9 = arith.maximumf %7, %8 : vector<8x128xf32>
    %10 = arith.truncf %9 : vector<8x128xf32> to vector<8x128xbf16>
    %c0_6 = arith.constant 0 : index
    %c0_7 = arith.constant 0 : index
    %11 = vector.load %arg4[%c0_6, %c0_7] : memref<128x384xbf16, #tpu.memory_space<vmem>>, vector<128x384xbf16>
    %cst_8 = arith.constant dense<0.000000e+00> : vector<8x384xf32>
    %12 = tpu.matmul %10, %11, %cst_8 {dimension_numbers = #tpu.dot_dimension_numbers<[1], [0], [0], [1], [0, 0, 1, 1], [], []>} : vector<8x128xbf16>, vector<128x384xbf16>, vector<8x384xf32> -> vector<8x384xf32>
    %c0_9 = arith.constant 0 : index
    %c0_10 = arith.constant 0 : index
    %13 = vector.load %arg5[%c0_9, %c0_10] : memref<1x384xbf16, #tpu.memory_space<vmem>>, vector<1x384xbf16>
    %14 = arith.extf %13 : vector<1x384xbf16> to vector<1x384xf32>
    %15 = vector.broadcast %14 : vector<1x384xf32> to vector<8x384xf32>
    %16 = arith.addf %12, %15 : vector<8x384xf32>
    %cst_11 = arith.constant 0.000000e+00 : f32
    %17 = vector.broadcast %cst_11 : f32 to vector<8x384xf32>
    %18 = arith.maximumf %16, %17 : vector<8x384xf32>
    %19 = arith.truncf %18 : vector<8x384xf32> to vector<8x384xbf16>
    %c0_12 = arith.constant 0 : index
    %c0_13 = arith.constant 0 : index
    %20 = vector.load %arg6[%c0_12, %c0_13] : memref<384x768xbf16, #tpu.memory_space<vmem>>, vector<384x768xbf16>
    %cst_14 = arith.constant dense<0.000000e+00> : vector<8x768xf32>
    %21 = tpu.matmul %19, %20, %cst_14 {dimension_numbers = #tpu.dot_dimension_numbers<[1], [0], [0], [1], [0, 0, 1, 1], [], []>} : vector<8x384xbf16>, vector<384x768xbf16>, vector<8x768xf32> -> vector<8x768xf32>
    %c0_15 = arith.constant 0 : index
    %c0_16 = arith.constant 0 : index
    %22 = vector.load %arg7[%c0_15, %c0_16] : memref<1x768xbf16, #tpu.memory_space<vmem>>, vector<1x768xbf16>
    %23 = arith.extf %22 : vector<1x768xbf16> to vector<1x768xf32>
    %24 = vector.broadcast %23 : vector<1x768xf32> to vector<8x768xf32>
    %25 = arith.addf %21, %24 : vector<8x768xf32>
    %cst_17 = arith.constant 0.000000e+00 : f32
    %26 = vector.broadcast %cst_17 : f32 to vector<8x768xf32>
    %27 = arith.maximumf %25, %26 : vector<8x768xf32>
    %28 = arith.truncf %27 : vector<8x768xf32> to vector<8x768xbf16>
    %c0_18 = arith.constant 0 : index
    %c0_19 = arith.constant 0 : index
    %29 = vector.load %arg8[%c0_18, %c0_19] : memref<768x896xbf16, #tpu.memory_space<vmem>>, vector<768x896xbf16>
    %cst_20 = arith.constant dense<0.000000e+00> : vector<8x896xf32>
    %30 = tpu.matmul %28, %29, %cst_20 {dimension_numbers = #tpu.dot_dimension_numbers<[1], [0], [0], [1], [0, 0, 1, 1], [], []>} : vector<8x768xbf16>, vector<768x896xbf16>, vector<8x896xf32> -> vector<8x896xf32>
    %c0_21 = arith.constant 0 : index
    %c0_22 = arith.constant 0 : index
    %31 = vector.load %arg9[%c0_21, %c0_22] : memref<1x896xbf16, #tpu.memory_space<vmem>>, vector<1x896xbf16>
    %32 = arith.extf %31 : vector<1x896xbf16> to vector<1x896xf32>
    %33 = vector.broadcast %32 : vector<1x896xf32> to vector<8x896xf32>
    %34 = arith.addf %30, %33 : vector<8x896xf32>
    %cst_23 = arith.constant 0.000000e+00 : f32
    %35 = vector.broadcast %cst_23 : f32 to vector<8x896xf32>
    %36 = arith.subf %35, %34 : vector<8x896xf32>
    %37 = math.exp %36 : vector<8x896xf32>
    %cst_24 = arith.constant 1.000000e+00 : f32
    %38 = vector.broadcast %cst_24 : f32 to vector<8x896xf32>
    %39 = arith.addf %38, %37 : vector<8x896xf32>
    %40 = tpu.reciprocal %39 {approx = true} : vector<8x896xf32> -> vector<8x896xf32>
    %c0_25 = arith.constant 0 : index
    %c0_26 = arith.constant 0 : index
    %41 = vector.load %arg10[%c0_25, %c0_26] : memref<8x896xf32, #tpu.memory_space<vmem>>, vector<8x896xf32>
    tpu.vector_store %arg10[%c0_25, %c0_26], %40 {strides = array<i32>} : memref<8x896xf32, #tpu.memory_space<vmem>>, vector<8x896xf32>,
    return
  }
  func.func @transform_0(%arg0: i32) -> (i32, i32) {
    %c0_i32 = arith.constant 0 : i32
    %c0_i32_0 = arith.constant 0 : i32
    return %arg0, %c0_i32 : i32, i32
  }
  func.func @transform_1(%arg0: i32) -> (i32, i32) {
    %c0_i32 = arith.constant 0 : i32
    %c0_i32_0 = arith.constant 0 : i32
    %c0_i32_1 = arith.constant 0 : i32
    return %c0_i32, %c0_i32_0 : i32, i32
  }
  func.func @transform_2(%arg0: i32) -> (i32, i32) {
    %c0_i32 = arith.constant 0 : i32
    %c0_i32_0 = arith.constant 0 : i32
    %c0_i32_1 = arith.constant 0 : i32
    return %c0_i32, %c0_i32_0 : i32, i32
  }
  func.func @transform_3(%arg0: i32) -> (i32, i32) {
    %c0_i32 = arith.constant 0 : i32
    %c0_i32_0 = arith.constant 0 : i32
    %c0_i32_1 = arith.constant 0 : i32
    return %c0_i32, %c0_i32_0 : i32, i32
  }
  func.func @transform_4(%arg0: i32) -> (i32, i32) {
    %c0_i32 = arith.constant 0 : i32
    %c0_i32_0 = arith.constant 0 : i32
    %c0_i32_1 = arith.constant 0 : i32
    return %c0_i32, %c0_i32_0 : i32, i32
  }
  func.func @transform_5(%arg0: i32) -> (i32, i32) {
    %c0_i32 = arith.constant 0 : i32
    %c0_i32_0 = arith.constant 0 : i32
    %c0_i32_1 = arith.constant 0 : i32
    return %c0_i32, %c0_i32_0 : i32, i32
  }
  func.func @transform_6(%arg0: i32) -> (i32, i32) {
    %c0_i32 = arith.constant 0 : i32
    %c0_i32_0 = arith.constant 0 : i32
    %c0_i32_1 = arith.constant 0 : i32
    return %c0_i32, %c0_i32_0 : i32, i32
  }
  func.func @transform_7(%arg0: i32) -> (i32, i32) {
    %c0_i32 = arith.constant 0 : i32
    %c0_i32_0 = arith.constant 0 : i32
    %c0_i32_1 = arith.constant 0 : i32
    return %c0_i32, %c0_i32_0 : i32, i32
  }
  func.func @transform_8(%arg0: i32) -> (i32, i32) {
    %c0_i32 = arith.constant 0 : i32
    %c0_i32_0 = arith.constant 0 : i32
    %c0_i32_1 = arith.constant 0 : i32
    return %c0_i32, %c0_i32_0 : i32, i32
  }
  func.func @transform_9(%arg0: i32) -> (i32, i32) {
    %c0_i32 = arith.constant 0 : i32
    %c0_i32_0 = arith.constant 0 : i32
    return %arg0, %c0_i32 : i32, i32
  }
}

</mosaic_0001>

<llo_original>
// kernel: tpu_custom_call.1
$region0: #{tpu_custom_call.1}
  #allocation0 [shape = 'u32[]', space=smem, size = 0x4, offset = 0x4, fixed_abs, tag = 'smem constant byte address 0x4 - core index']
  #allocation1 [shape = 'u32[144,128]{1,0:T(1,128)}', space=vmem, size = 0x12000, scoped, tag = 'internal scratch']
  %s0 = inlined_call_operand.hbm [shape: f32[16,32], index: 0, kind: input, shape index: {}]
  %s1 = inlined_call_operand.hbm [shape: bf16[32,128], index: 1, kind: input, shape index: {}]
  %s2 = inlined_call_operand.hbm [shape: bf16[1,128], index: 2, kind: input, shape index: {}]
  %s3 = inlined_call_operand.hbm [shape: bf16[128,384], index: 3, kind: input, shape index: {}]
  %s4 = inlined_call_operand.hbm [shape: bf16[1,384], index: 4, kind: input, shape index: {}]
  %s5 = inlined_call_operand.hbm [shape: bf16[384,768], index: 5, kind: input, shape index: {}]
  %s6 = inlined_call_operand.hbm [shape: bf16[1,768], index: 6, kind: input, shape index: {}]
  %s7 = inlined_call_operand.hbm [shape: bf16[768,896], index: 7, kind: input, shape index: {}]
  %s8 = inlined_call_operand.hbm [shape: bf16[1,896], index: 8, kind: input, shape index: {}]
  %s9 = inlined_call_operand.hbm [shape: f32[16,896], index: 9, kind: output, shape index: {}]
  %s10 = sld [smem:[#allocation0]]
  $region105: #{tpu_custom_call.1} parent=0
    _
  %s12 = ssub.s32 1, %s10
  %s13 = scalar_select 0, %s12, %s10
  $region1: #{tpu_custom_call.1} parent=0
    #allocation2 [shape = 'u8[8192]{0}', space=vmem, size = 0x2000, scoped, tag = 'input window, operand 0']
    #allocation3 [shape = 's32[2]{0}', space=sflag, size = 0x8, scoped, tag = 'scoped memory for tpu_custom_call.1']
    #allocation4 [shape = 's32[2]{0}', space=sflag, size = 0x8, scoped, tag = 'scoped memory for tpu_custom_call.1']
    #allocation5 [shape = 'u8[8192]{0}', space=vmem, size = 0x2000, scoped, tag = 'input window, operand 1, single buffered']
    #allocation6 [shape = 's32[1]{0}', space=sflag, size = 0x4, scoped, tag = 'scoped memory for tpu_custom_call.1']
    #allocation7 [shape = 'u8[512]{0}', space=vmem, size = 0x400, scoped, tag = 'input window, operand 2, single buffered']
    #allocation8 [shape = 'u8[98304]{0}', space=vmem, size = 0x18000, scoped, tag = 'input window, operand 3, single buffered']
    #allocation9 [shape = 's32[1]{0}', space=sflag, size = 0x4, scoped, tag = 'scoped memory for tpu_custom_call.1']
    #allocation10 [shape = 'u8[1536]{0}', space=vmem, size = 0x800, scoped, tag = 'input window, operand 4, single buffered']
    #allocation11 [shape = 'u8[589824]{0}', space=vmem, size = 0x90000, scoped, tag = 'input window, operand 5, single buffered']
    #allocation12 [shape = 's32[1]{0}', space=sflag, size = 0x4, scoped, tag = 'scoped memory for tpu_custom_call.1']
    #allocation13 [shape = 'u8[3072]{0}', space=vmem, size = 0xc00, scoped, tag = 'input window, operand 6, single buffered']
    #allocation14 [shape = 'u8[1376256]{0}', space=vmem, size = 0x150000, scoped, tag = 'input window, operand 7, single buffered']
    #allocation15 [shape = 's32[1]{0}', space=sflag, size = 0x4, scoped, tag = 'scoped memory for tpu_custom_call.1']
    #allocation16 [shape = 'u8[3584]{0}', space=vmem, size = 0x1000, scoped, tag = 'input window, operand 8, single buffered']
    #allocation17 [shape = 'u8[57344]{0}', space=vmem, size = 0xe000, scoped, tag = 'output window, operand 0']
    %14 = vsyncpa [#allocation3], 0
    %s15 = scalar_lea.sflag [#allocation3], 1
    %16 = vsyncpa %s15, 0
    %17 = vsyncpa [#allocation6], 0
    %18 = vsyncpa [#allocation9], 0
    %19 = vsyncpa [#allocation12], 0
    %20 = vsyncpa [#allocation15], 0
    %21 = vsyncpa [#allocation4], 0
    %s22 = scalar_lea.sflag [#allocation4], 1
    %23 = vsyncpa %s22, 0
    loop: start=0, step=1, limit=4
    $region2: #{tpu_custom_call.1} parent=1 // loop_pre_header
      _
    $region3: #{tpu_custom_call.1} parent=1 // loop_header
      %s25 = sphi 0, %s29
      %p26 = scmp.ge.s32.totalorder %s25, 4
      %s35 = sphi 0, %s37
      %s38 = sphi 0, %s35
      %s39 = sphi 0, %s38
      %s55 = sphi 0, %s39
      %s59 = sphi 0, %s59
      %s61 = sphi 0, %s59
      %s62 = sphi 0, %s61
      %s76 = sphi 0, %s62
      %s80 = sphi 0, %s80
      %s82 = sphi 0, %s80
      %s83 = sphi 0, %s82
      %s97 = sphi 0, %s83
      %s101 = sphi 0, %s101
      %s103 = sphi 0, %s101
      %s104 = sphi 0, %s103
      %s118 = sphi 0, %s104
      %s122 = sphi 0, %s122
      %s124 = sphi 0, %s122
      %s125 = sphi 0, %s124
      %s139 = sphi 0, %s125
      %s143 = sphi 0, %s143
      %s145 = sphi 0, %s143
      %s146 = sphi 0, %s145
      %s160 = sphi 0, %s146
      %s164 = sphi 0, %s164
      %s166 = sphi 0, %s164
      %s167 = sphi 0, %s166
      %s181 = sphi 0, %s167
      %s185 = sphi 0, %s185
      %s187 = sphi 0, %s185
      %s188 = sphi 0, %s187
      %s202 = sphi 0, %s188
      %s206 = sphi 0, %s206
      %s208 = sphi 0, %s206
      %s209 = sphi 0, %s208
      %s223 = sphi 0, %s209
      %s229 = sphi 0, %s231
      %s232 = sphi 0, %s229
      %s233 = sphi 0, %s232
      %s249 = sphi 0, %s233
    $region4: #{tpu_custom_call.1} parent=1 // loop_header_branch
      %28 = sbr.rel (%p26) target = $region8
    $region5: #{tpu_custom_call.1} parent=1 // loop_body
      %s30 = ssub.s32 %s25, 1
      %s31 = ssub.s32 %s25, 2
      %s32 = sadd.s32 %s25, 1
      %s33 = ssub.s32 %s25, %s32
      %p34 = scmp.eq.s32.totalorder %s33, 0
      %s36 = sadd.s32 %s35, 1
      %s37 = scalar_select %p34, %s35, %s36
      %p40 = pneg %p34
      %p41 = scmp.eq.s32.totalorder %s25, 1
      %p42 = por %p40, %p41
      %p43 = scmp.ne.s32.totalorder %s35, %s38
      %p44 = scmp.eq.s32.totalorder %s25, 0
      %p45 = por %p43, %p44
      %p46 = scmp.ne.s32.totalorder %s35, %s38
      %p47 = scmp.eq.s32.totalorder %s30, 1
      %p48 = por %p46, %p47
      %p49 = scmp.ne.s32.totalorder %s38, %s39
      %p50 = scmp.eq.s32.totalorder %s30, 0
      %p51 = por %p49, %p50
      %p52 = scmp.ne.s32.totalorder %s38, %s39
      %p53 = scmp.eq.s32.totalorder %s31, 1
      %p54 = por %p52, %p53
      %p56 = scmp.ne.s32.totalorder %s39, %s55
      %p57 = scmp.eq.s32.totalorder %s31, 0
      %p58 = por %p56, %p57
      %s60 = sadd.s32 %s59, 1
      %p63 = scmp.eq.s32.totalorder %s25, 1
      %p64 = scmp.ne.s32.totalorder %s59, %s61
      %p65 = scmp.eq.s32.totalorder %s25, 0
      %p66 = por %p64, %p65
      %p67 = scmp.ne.s32.totalorder %s59, %s61
      %p68 = scmp.eq.s32.totalorder %s30, 1
      %p69 = por %p67, %p68
      %p70 = scmp.ne.s32.totalorder %s61, %s62
      %p71 = scmp.eq.s32.totalorder %s30, 0
      %p72 = por %p70, %p71
      %p73 = scmp.ne.s32.totalorder %s61, %s62
      %p74 = scmp.eq.s32.totalorder %s31, 1
      %p75 = por %p73, %p74
      %p77 = scmp.ne.s32.totalorder %s62, %s76
      %p78 = scmp.eq.s32.totalorder %s31, 0
      %p79 = por %p77, %p78
      %s81 = sadd.s32 %s80, 1
      %p84 = scmp.eq.s32.totalorder %s25, 1
      %p85 = scmp.ne.s32.totalorder %s80, %s82
      %p86 = scmp.eq.s32.totalorder %s25, 0
      %p87 = por %p85, %p86
      %p88 = scmp.ne.s32.totalorder %s80, %s82
      %p89 = scmp.eq.s32.totalorder %s30, 1
      %p90 = por %p88, %p89
      %p91 = scmp.ne.s32.totalorder %s82, %s83
      %p92 = scmp.eq.s32.totalorder %s30, 0
      %p93 = por %p91, %p92
      %p94 = scmp.ne.s32.totalorder %s82, %s83
      %p95 = scmp.eq.s32.totalorder %s31, 1
      %p96 = por %p94, %p95
      %p98 = scmp.ne.s32.totalorder %s83, %s97
      %p99 = scmp.eq.s32.totalorder %s31, 0
      %p100 = por %p98, %p99
      %s102 = sadd.s32 %s101, 1
      %p105 = scmp.eq.s32.totalorder %s25, 1
      %p106 = scmp.ne.s32.totalorder %s101, %s103
      %p107 = scmp.eq.s32.totalorder %s25, 0
      %p108 = por %p106, %p107
      %p109 = scmp.ne.s32.totalorder %s101, %s103
      %p110 = scmp.eq.s32.totalorder %s30, 1
      %p111 = por %p109, %p110
      %p112 = scmp.ne.s32.totalorder %s103, %s104
      %p113 = scmp.eq.s32.totalorder %s30, 0
      %p114 = por %p112, %p113
      %p115 = scmp.ne.s32.totalorder %s103, %s104
      %p116 = scmp.eq.s32.totalorder %s31, 1
      %p117 = por %p115, %p116
      %p119 = scmp.ne.s32.totalorder %s104, %s118
      %p120 = scmp.eq.s32.totalorder %s31, 0
      %p121 = por %p119, %p120
      %s123 = sadd.s32 %s122, 1
      %p126 = scmp.eq.s32.totalorder %s25, 1
      %p127 = scmp.ne.s32.totalorder %s122, %s124
      %p128 = scmp.eq.s32.totalorder %s25, 0
      %p129 = por %p127, %p128
      %p130 = scmp.ne.s32.totalorder %s122, %s124
      %p131 = scmp.eq.s32.totalorder %s30, 1
      %p132 = por %p130, %p131
      %p133 = scmp.ne.s32.totalorder %s124, %s125
      %p134 = scmp.eq.s32.totalorder %s30, 0
      %p135 = por %p133, %p134
      %p136 = scmp.ne.s32.totalorder %s124, %s125
      %p137 = scmp.eq.s32.totalorder %s31, 1
      %p138 = por %p136, %p137
      %p140 = scmp.ne.s32.totalorder %s125, %s139
      %p141 = scmp.eq.s32.totalorder %s31, 0
      %p142 = por %p140, %p141
      %s144 = sadd.s32 %s143, 1
      %p147 = scmp.eq.s32.totalorder %s25, 1
      %p148 = scmp.ne.s32.totalorder %s143, %s145
      %p149 = scmp.eq.s32.totalorder %s25, 0
      %p150 = por %p148, %p149
      %p151 = scmp.ne.s32.totalorder %s143, %s145
      %p152 = scmp.eq.s32.totalorder %s30, 1
      %p153 = por %p151, %p152
      %p154 = scmp.ne.s32.totalorder %s145, %s146
      %p155 = scmp.eq.s32.totalorder %s30, 0
      %p156 = por %p154, %p155
      %p157 = scmp.ne.s32.totalorder %s145, %s146
      %p158 = scmp.eq.s32.totalorder %s31, 1
      %p159 = por %p157, %p158
      %p161 = scmp.ne.s32.totalorder %s146, %s160
      %p162 = scmp.eq.s32.totalorder %s31, 0
      %p163 = por %p161, %p162
      %s165 = sadd.s32 %s164, 1
      %p168 = scmp.eq.s32.totalorder %s25, 1
      %p169 = scmp.ne.s32.totalorder %s164, %s166
      %p170 = scmp.eq.s32.totalorder %s25, 0
      %p171 = por %p169, %p170
      %p172 = scmp.ne.s32.totalorder %s164, %s166
      %p173 = scmp.eq.s32.totalorder %s30, 1
      %p174 = por %p172, %p173
      %p175 = scmp.ne.s32.totalorder %s166, %s167
      %p176 = scmp.eq.s32.totalorder %s30, 0
      %p177 = por %p175, %p176
      %p178 = scmp.ne.s32.totalorder %s166, %s167
      %p179 = scmp.eq.s32.totalorder %s31, 1
      %p180 = por %p178, %p179
      %p182 = scmp.ne.s32.totalorder %s167, %s181
      %p183 = scmp.eq.s32.totalorder %s31, 0
      %p184 = por %p182, %p183
      %s186 = sadd.s32 %s185, 1
      %p189 = scmp.eq.s32.totalorder %s25, 1
      %p190 = scmp.ne.s32.totalorder %s185, %s187
      %p191 = scmp.eq.s32.totalorder %s25, 0
      %p192 = por %p190, %p191
      %p193 = scmp.ne.s32.totalorder %s185, %s187
      %p194 = scmp.eq.s32.totalorder %s30, 1
      %p195 = por %p193, %p194
      %p196 = scmp.ne.s32.totalorder %s187, %s188
      %p197 = scmp.eq.s32.totalorder %s30, 0
      %p198 = por %p196, %p197
      %p199 = scmp.ne.s32.totalorder %s187, %s188
      %p200 = scmp.eq.s32.totalorder %s31, 1
      %p201 = por %p199, %p200
      %p203 = scmp.ne.s32.totalorder %s188, %s202
      %p204 = scmp.eq.s32.totalorder %s31, 0
      %p205 = por %p203, %p204
      %s207 = sadd.s32 %s206, 1
      %p210 = scmp.eq.s32.totalorder %s25, 1
      %p211 = scmp.ne.s32.totalorder %s206, %s208
      %p212 = scmp.eq.s32.totalorder %s25, 0
      %p213 = por %p211, %p212
      %p214 = scmp.ne.s32.totalorder %s206, %s208
      %p215 = scmp.eq.s32.totalorder %s30, 1
      %p216 = por %p214, %p215
      %p217 = scmp.ne.s32.totalorder %s208, %s209
      %p218 = scmp.eq.s32.totalorder %s30, 0
      %p219 = por %p217, %p218
      %p220 = scmp.ne.s32.totalorder %s208, %s209
      %p221 = scmp.eq.s32.totalorder %s31, 1
      %p222 = por %p220, %p221
      %p224 = scmp.ne.s32.totalorder %s209, %s223
      %p225 = scmp.eq.s32.totalorder %s31, 0
      %p226 = por %p224, %p225
      %s227 = ssub.s32 %s25, %s32
      %p228 = scmp.eq.s32.totalorder %s227, 0
      %s230 = sadd.s32 %s229, 1
      %s231 = scalar_select %p228, %s229, %s230
      %p234 = pneg %p228
      %p235 = scmp.eq.s32.totalorder %s25, 1
      %p236 = por %p234, %p235
      %p237 = scmp.ne.s32.totalorder %s229, %s232
      %p238 = scmp.eq.s32.totalorder %s25, 0
      %p239 = por %p237, %p238
      %p240 = scmp.ne.s32.totalorder %s229, %s232
      %p241 = scmp.eq.s32.totalorder %s30, 1
      %p242 = por %p240, %p241
      %p243 = scmp.ne.s32.totalorder %s232, %s233
      %p244 = scmp.eq.s32.totalorder %s30, 0
      %p245 = por %p243, %p244
      %p246 = scmp.ne.s32.totalorder %s232, %s233
      %p247 = scmp.eq.s32.totalorder %s31, 1
      %p248 = por %p246, %p247
      %p250 = scmp.ne.s32.totalorder %s233, %s249
      %p251 = scmp.eq.s32.totalorder %s31, 0
      %p252 = por %p250, %p251
      %p253 = scmp.le.s32.totalorder 1, %s25
      %p254 = scmp.lt.s32.totalorder %s25, 3
      %p255 = pnand %p253, %p254
      %p256 = pneg %p255
      // Predicated region
      $region9: #{tpu_custom_call.1} parent=5 // pred_check
        _
      $region10: #{tpu_custom_call.1} parent=5 // pred_check_branch
        %258 = sbr.rel (%p255) target = $region12
      $region11: #{tpu_custom_call.1} parent=5 // pred_region
        %s259 = ssub.s32 %s25, 1
        // Predicated region
        $region13: #{tpu_custom_call.1} parent=11 // pred_check
          %p260 = pneg %p72
        $region14: #{tpu_custom_call.1} parent=11 // pred_check_branch
          %262 = sbr.rel (%p260) target = $region16
        $region15: #{tpu_custom_call.1} parent=11 // pred_region
          %s264 = ssub.s32 256, 256
          %265 = vsyncadd [#allocation6], %s264
          %s266 = sshll.u32 [#allocation5], 4
          %s267 = int_to_ptr.vmem [resolvable:$true] %s266
          %272 = dma.hbm_to_vmem [thread:$0]  %s1, 256, %s267, [#allocation6], 64, 64, 4
        $region16: #{tpu_custom_call.1} parent=11 // pred_fallthru
          _
        // Predicated region
        $region17: #{tpu_custom_call.1} parent=11 // pred_check
          %p273 = pneg %p93
        $region18: #{tpu_custom_call.1} parent=11 // pred_check_branch
          %275 = sbr.rel (%p273) target = $region20
        $region19: #{tpu_custom_call.1} parent=11 // pred_region
          %s277 = ssub.s32 16, 16
          %278 = vsyncadd [#allocation6], %s277
          %s280 = sshll.u32 [#allocation7], 4
          %s281 = int_to_ptr.vmem [resolvable:$true] %s280
          %283 = dma.hbm_to_vmem [thread:$0]  %s2, 16, %s281, [#allocation6]
        $region20: #{tpu_custom_call.1} parent=11 // pred_fallthru
          _
        // Predicated region
        $region21: #{tpu_custom_call.1} parent=11 // pred_check
          %p284 = pneg %p114
        $region22: #{tpu_custom_call.1} parent=11 // pred_check_branch
          %286 = sbr.rel (%p284) target = $region24
        $region23: #{tpu_custom_call.1} parent=11 // pred_region
          %s288 = ssub.s32 3072, 3072
          %289 = vsyncadd [#allocation9], %s288
          %s290 = sshll.u32 [#allocation8], 4
          %s291 = int_to_ptr.vmem [resolvable:$true] %s290
          %296 = dma.hbm_to_vmem [thread:$0]  %s3, 3072, %s291, [#allocation9], 192, 192, 12
        $region24: #{tpu_custom_call.1} parent=11 // pred_fallthru
          _
        // Predicated region
        $region25: #{tpu_custom_call.1} parent=11 // pred_check
          %p297 = pneg %p135
        $region26: #{tpu_custom_call.1} parent=11 // pred_check_branch
          %299 = sbr.rel (%p297) target = $region28
        $region27: #{tpu_custom_call.1} parent=11 // pred_region
          %s301 = ssub.s32 48, 48
          %302 = vsyncadd [#allocation9], %s301
          %s304 = sshll.u32 [#allocation10], 4
          %s305 = int_to_ptr.vmem [resolvable:$true] %s304
          %307 = dma.hbm_to_vmem [thread:$0]  %s4, 48, %s305, [#allocation9]
        $region28: #{tpu_custom_call.1} parent=11 // pred_fallthru
          _
        // Predicated region
        $region29: #{tpu_custom_call.1} parent=11 // pred_check
          %p308 = pneg %p156
        $region30: #{tpu_custom_call.1} parent=11 // pred_check_branch
          %310 = sbr.rel (%p308) target = $region32
        $region31: #{tpu_custom_call.1} parent=11 // pred_region
          %s312 = ssub.s32 18432, 18432
          %313 = vsyncadd [#allocation12], %s312
          %s314 = sshll.u32 [#allocation11], 4
          %s315 = int_to_ptr.vmem [resolvable:$true] %s314
          %320 = dma.hbm_to_vmem [thread:$0]  %s5, 18432, %s315, [#allocation12], 384, 384, 24
        $region32: #{tpu_custom_call.1} parent=11 // pred_fallthru
          _
        // Predicated region
        $region33: #{tpu_custom_call.1} parent=11 // pred_check
          %p321 = pneg %p177
        $region34: #{tpu_custom_call.1} parent=11 // pred_check_branch
          %323 = sbr.rel (%p321) target = $region36
        $region35: #{tpu_custom_call.1} parent=11 // pred_region
          %s325 = ssub.s32 96, 96
          %326 = vsyncadd [#allocation12], %s325
          %s328 = sshll.u32 [#allocation13], 4
          %s329 = int_to_ptr.vmem [resolvable:$true] %s328
          %331 = dma.hbm_to_vmem [thread:$0]  %s6, 96, %s329, [#allocation12]
        $region36: #{tpu_custom_call.1} parent=11 // pred_fallthru
          _
        // Predicated region
        $region37: #{tpu_custom_call.1} parent=11 // pred_check
          %p332 = pneg %p198
        $region38: #{tpu_custom_call.1} parent=11 // pred_check_branch
          %334 = sbr.rel (%p332) target = $region40
        $region39: #{tpu_custom_call.1} parent=11 // pred_region
          %s336 = ssub.s32 43008, 43008
          %337 = vsyncadd [#allocation15], %s336
          %s338 = sshll.u32 [#allocation14], 4
          %s339 = int_to_ptr.vmem [resolvable:$true] %s338
          %344 = dma.hbm_to_vmem [thread:$0]  %s7, 43008, %s339, [#allocation15], 448, 448, 28
        $region40: #{tpu_custom_call.1} parent=11 // pred_fallthru
          _
        // Predicated region
        $region41: #{tpu_custom_call.1} parent=11 // pred_check
          %p345 = pneg %p219
        $region42: #{tpu_custom_call.1} parent=11 // pred_check_branch
          %347 = sbr.rel (%p345) target = $region44
        $region43: #{tpu_custom_call.1} parent=11 // pred_region
          %s349 = ssub.s32 112, 112
          %350 = vsyncadd [#allocation15], %s349
          %s352 = sshll.u32 [#allocation16], 4
          %s353 = int_to_ptr.vmem [resolvable:$true] %s352
          %355 = dma.hbm_to_vmem [thread:$0]  %s8, 112, %s353, [#allocation15]
        $region44: #{tpu_custom_call.1} parent=11 // pred_fallthru
          _
      $region12: #{tpu_custom_call.1} parent=5 // pred_fallthru
        _
      %p356 = scmp.lt.s32.totalorder %s25, 2
      // Predicated region
      $region45: #{tpu_custom_call.1} parent=5 // pred_check
        %p357 = pneg %p356
      $region46: #{tpu_custom_call.1} parent=5 // pred_check_branch
        %359 = sbr.rel (%p357) target = $region48
      $region47: #{tpu_custom_call.1} parent=5 // pred_region
        // Predicated region
        $region49: #{tpu_custom_call.1} parent=47 // pred_check
          %p360 = pneg %p45
        $region50: #{tpu_custom_call.1} parent=47 // pred_check_branch
          %362 = sbr.rel (%p360) target = $region52
        $region51: #{tpu_custom_call.1} parent=47 // pred_region
          %s363 = sand.u32 %s35, 1
          %s364 = scalar_lea.sflag [#allocation3], %s363
          %s365 = sand.u32 %s35, 1
          %s366 = smul.addr %s365, 8
          %s367 = scalar_lea.vmem [#allocation2], %s366
          %s369 = ssub.s32 128, 128
          %370 = vsyncadd %s364, %s369
          %s371 = smul.addr %s25, 128
          %s372 = scalar_lea.hbm %s0, %s371
          %s374 = sshll.u32 %s367, 4
          %s375 = int_to_ptr.vmem [resolvable:$true] %s374
          %377 = dma.hbm_to_vmem [thread:$0]  %s372, 128, %s375, %s364
        $region52: #{tpu_custom_call.1} parent=47 // pred_fallthru
          _
      $region48: #{tpu_custom_call.1} parent=5 // pred_fallthru
        _
      %p378 = scmp.le.s32.totalorder 1, %s25
      %p379 = scmp.lt.s32.totalorder %s25, 3
      %p380 = pnand %p378, %p379
      %p381 = pneg %p380
      // Predicated region
      $region53: #{tpu_custom_call.1} parent=5 // pred_check
        _
      $region54: #{tpu_custom_call.1} parent=5 // pred_check_branch
        %383 = sbr.rel (%p380) target = $region56
      $region55: #{tpu_custom_call.1} parent=5 // pred_region
        %s384 = ssub.s32 %s25, 1
        %s385 = sand.u32 %s38, 1
        %s386 = scalar_lea.sflag [#allocation3], %s385
        %s387 = sand.u32 %s38, 1
        %s388 = smul.addr %s387, 8
        %s389 = scalar_lea.vmem [#allocation2], %s388
        // Predicated region
        $region57: #{tpu_custom_call.1} parent=55 // pred_check
          %p390 = pneg %p51
        $region58: #{tpu_custom_call.1} parent=55 // pred_check_branch
          %392 = sbr.rel (%p390) target = $region60
        $region59: #{tpu_custom_call.1} parent=55 // pred_region
          %393 = dma.done %s386, 128
        $region60: #{tpu_custom_call.1} parent=55 // pred_fallthru
          _
        // Predicated region
        $region61: #{tpu_custom_call.1} parent=55 // pred_check
          %p394 = pneg %p72
        $region62: #{tpu_custom_call.1} parent=55 // pred_check_branch
          %396 = sbr.rel (%p394) target = $region64
        $region63: #{tpu_custom_call.1} parent=55 // pred_region
          %397 = dma.done [#allocation6], 256
        $region64: #{tpu_custom_call.1} parent=55 // pred_fallthru
          _
        // Predicated region
        $region65: #{tpu_custom_call.1} parent=55 // pred_check
          %p398 = pneg %p93
        $region66: #{tpu_custom_call.1} parent=55 // pred_check_branch
          %400 = sbr.rel (%p398) target = $region68
        $region67: #{tpu_custom_call.1} parent=55 // pred_region
          %401 = dma.done [#allocation6], 16
        $region68: #{tpu_custom_call.1} parent=55 // pred_fallthru
          _
        // Predicated region
        $region69: #{tpu_custom_call.1} parent=55 // pred_check
          %p402 = pneg %p114
        $region70: #{tpu_custom_call.1} parent=55 // pred_check_branch
          %404 = sbr.rel (%p402) target = $region72
        $region71: #{tpu_custom_call.1} parent=55 // pred_region
          %405 = dma.done [#allocation9], 3072
        $region72: #{tpu_custom_call.1} parent=55 // pred_fallthru
          _
        // Predicated region
        $region73: #{tpu_custom_call.1} parent=55 // pred_check
          %p406 = pneg %p135
        $region74: #{tpu_custom_call.1} parent=55 // pred_check_branch
          %408 = sbr.rel (%p406) target = $region76
        $region75: #{tpu_custom_call.1} parent=55 // pred_region
          %409 = dma.done [#allocation9], 48
        $region76: #{tpu_custom_call.1} parent=55 // pred_fallthru
          _
        // Predicated region
        $region77: #{tpu_custom_call.1} parent=55 // pred_check
          %p410 = pneg %p156
        $region78: #{tpu_custom_call.1} parent=55 // pred_check_branch
          %412 = sbr.rel (%p410) target = $region80
        $region79: #{tpu_custom_call.1} parent=55 // pred_region
          %413 = dma.done [#allocation12], 18432
        $region80: #{tpu_custom_call.1} parent=55 // pred_fallthru
          _
        // Predicated region
        $region81: #{tpu_custom_call.1} parent=55 // pred_check
          %p414 = pneg %p177
        $region82: #{tpu_custom_call.1} parent=55 // pred_check_branch
          %416 = sbr.rel (%p414) target = $region84
        $region83: #{tpu_custom_call.1} parent=55 // pred_region
          %417 = dma.done [#allocation12], 96
        $region84: #{tpu_custom_call.1} parent=55 // pred_fallthru
          _
        // Predicated region
        $region85: #{tpu_custom_call.1} parent=55 // pred_check
          %p418 = pneg %p198
        $region86: #{tpu_custom_call.1} parent=55 // pred_check_branch
          %420 = sbr.rel (%p418) target = $region88
        $region87: #{tpu_custom_call.1} parent=55 // pred_region
          %421 = dma.done [#allocation15], 43008
        $region88: #{tpu_custom_call.1} parent=55 // pred_fallthru
          _
        // Predicated region
        $region89: #{tpu_custom_call.1} parent=55 // pred_check
          %p422 = pneg %p219
        $region90: #{tpu_custom_call.1} parent=55 // pred_check_branch
          %424 = sbr.rel (%p422) target = $region92
        $region91: #{tpu_custom_call.1} parent=55 // pred_region
          %425 = dma.done [#allocation15], 112
        $region92: #{tpu_custom_call.1} parent=55 // pred_fallthru
          _
        %s426 = sand.u32 %s38, 1
        %s427 = scalar_lea.sflag [#allocation3], %s426
        %s428 = sand.u32 %s38, 1
        %s429 = smul.addr %s428, 8
        %s430 = scalar_lea.vmem [#allocation2], %s429
        %p431 = pneg %p51
        %p432 = pneg %p48
        %p433 = pneg %p72
        %p434 = pneg %p69
        %p435 = pneg %p93
        %p436 = pneg %p90
        %p437 = pneg %p114
        %p438 = pneg %p111
        %p439 = pneg %p135
        %p440 = pneg %p132
        %p441 = pneg %p156
        %p442 = pneg %p153
        %p443 = pneg %p177
        %p444 = pneg %p174
        %p445 = pneg %p198
        %p446 = pneg %p195
        %p447 = pneg %p219
        %p448 = pneg %p216
        %p449 = pneg %p245
        %p450 = pneg %p242
        %s451 = sand.u32 %s232, 1
        %s452 = scalar_lea.sflag [#allocation4], %s451
        %s453 = sand.u32 %s232, 1
        %s454 = smul.addr %s453, 56
        %s455 = scalar_lea.vmem [#allocation17], %s454
        %v457 = vld [vmem:[%s389] sm:$0xff]
        %v458 = vpack.c.bf16 %v457, %v457
        %v459 = vld [vmem:[#allocation5] sm:$0xf]
        %v460 = vld [vmem:[#allocation5 + $0x4] sm:$0xf]
        %v461 = vld [vmem:[#allocation5 + $0x8] sm:$0xf]
        %v462 = vld [vmem:[#allocation5 + $0xc] sm:$0xf]
        %v463 = vld [vmem:[#allocation7] sm:$0x1]
        %v464 = vunpack.c.l.bf16 %v463
        %v465 = vlaneseq
        %v466 = vshrl.u32 %v465, 7
        %v467 = vsub.s32 0, %v466
        %v468 = vrot.slane %v464, %v467
        %v473 = vunpack.c.l.b16 %v459
        %v474 = vunpack.c.l.b16 %v460
        %v475 = vunpack.c.l.b16 %v461
        %v476 = vunpack.c.l.b16 %v462
        %v477 = vpack.c.b16 %v474, %v473
        %v478 = vpack.c.b16 %v476, %v475
        %vm481 = vcmask 261120
        %v483 = vsel %vm481, %v458, 0
        %485 = vmatprep.subr.bf16.mxu0 0
        %486 = vmatpush1.bf16.msra.mxu0 0
        %487 = vmatprep.subr.bf16.mxu0 0
        %488 = vmatpush1.bf16.msra.mxu0 0
        %489 = vmatprep.subr.bf16.mxu0 0
        %490 = vmatpush1.bf16.msra.mxu0 0
        %491 = vmatprep.subr.bf16.mxu0 0
        %492 = vmatpush1.bf16.msra.mxu0 0
        %493 = vmatprep.subr.bf16.mxu0 0
        %494 = vmatpush1.bf16.msra.mxu0 0
        %495 = vmatprep.subr.bf16.mxu0 0
        %496 = vmatpush1.bf16.msra.mxu0 0
        %497 = vmatprep.subr.bf16.mxu0 0
        %498 = vmatpush1.bf16.msra.mxu0 %v478
        %499 = vmatprep.subr.bf16.mxu0 0
        %500 = vmatpush1.bf16.msra.mxu0 %v477
        %501 = vmatprep.subr.bf16.mxu0 0
        %502 = vmatpush2.bf16.msra.mxu0 0
        %503 = vmatprep.subr.bf16.mxu0 0
        %504 = vmatpush2.bf16.msra.mxu0 0
        %505 = vmatprep.subr.bf16.mxu0 0
        %506 = vmatpush2.bf16.msra.mxu0 0
        %507 = vmatprep.subr.bf16.mxu0 0
        %508 = vmatpush2.bf16.msra.mxu0 0
        %509 = vmatprep.subr.bf16.mxu0 0
        %510 = vmatpush2.bf16.msra.mxu0 0
        %511 = vmatprep.subr.bf16.mxu0 0
        %512 = vmatpush2.bf16.msra.mxu0 0
        %513 = vmatprep.subr.bf16.mxu0 0
        %514 = vmatpush2.bf16.msra.mxu0 0
        %515 = vmatprep.subr.bf16.mxu0 0
        %516 = vmatpush2.bf16.msra.mxu0 0
        %517 = vmatprep.mubr.bf16.mxu0 0
        %518 = vmatmul.mubr.bf16.gmra.mxu0 %v483
        %v519 = vpop.f32.mrf.mxu0
        %v520 = vadd.f32 %v468, %v519
        %v521 = vpop.f32.mrf.mxu0
        %v522 = vpop.f32.mrf.mxu0
        %v523 = vpop.f32.mrf.mxu0
        %524 = vdwg.mxu0
        %v525 = vmax.f32 %v520, 0.0
        %v526 = vpack.c.bf16 %v525, %v525
        %v527 = vld [vmem:[#allocation8] sm:$0xff]
        %v528 = vld [vmem:[#allocation8 + $0x8] sm:$0xf]
        %v529 = vld [vmem:[#allocation8 + $0xc] sm:$0xff]
        %v530 = vld [vmem:[#allocation8 + $0x14] sm:$0xf]
        %v531 = vld [vmem:[#allocation8 + $0x18] sm:$0xff]
        %v532 = vld [vmem:[#allocation8 + $0x20] sm:$0xf]
        %v533 = vld [vmem:[#allocation8 + $0x24] sm:$0xff]
        %v534 = vld [vmem:[#allocation8 + $0x2c] sm:$0xf]
        %v535 = vld [vmem:[#allocation8 + $0x30] sm:$0xff]
        %v536 = vld [vmem:[#allocation8 + $0x38] sm:$0xf]
        %v537 = vld [vmem:[#allocation8 + $0x3c] sm:$0xff]
        %v538 = vld [vmem:[#allocation8 + $0x44] sm:$0xf]
        %v539 = vld [vmem:[#allocation8 + $0x48] sm:$0xff]
        %v540 = vld [vmem:[#allocation8 + $0x50] sm:$0xf]
        %v541 = vld [vmem:[#allocation8 + $0x54] sm:$0xff]
        %v542 = vld [vmem:[#allocation8 + $0x5c] sm:$0xf]
        %v543 = vld [vmem:[#allocation8 + $0x60] sm:$0xff]
        %v544 = vld [vmem:[#allocation8 + $0x68] sm:$0xf]
        %v545 = vld [vmem:[#allocation8 + $0x6c] sm:$0xff]
        %v546 = vld [vmem:[#allocation8 + $0x74] sm:$0xf]
        %v547 = vld [vmem:[#allocation8 + $0x78] sm:$0xff]
        %v548 = vld [vmem:[#allocation8 + $0x80] sm:$0xf]
        %v549 = vld [vmem:[#allocation8 + $0x84] sm:$0xff]
        %v550 = vld [vmem:[#allocation8 + $0x8c] sm:$0xf]
        %v551 = vld [vmem:[#allocation8 + $0x90] sm:$0xff]
        %v552 = vld [vmem:[#allocation8 + $0x98] sm:$0xf]
        %v553 = vld [vmem:[#allocation8 + $0x9c] sm:$0xff]
        %v554 = vld [vmem:[#allocation8 + $0xa4] sm:$0xf]
        %v555 = vld [vmem:[#allocation8 + $0xa8] sm:$0xff]
        %v556 = vld [vmem:[#allocation8 + $0xb0] sm:$0xf]
        %v557 = vld [vmem:[#allocation8 + $0xb4] sm:$0xff]
        %v558 = vld [vmem:[#allocation8 + $0xbc] sm:$0xf]
        %v559 = vld [vmem:[#allocation10] sm:$0x7]
        %v560 = vunpack.c.l.bf16 %v559
        %v562 = vlaneseq
        %v563 = vshrl.u32 %v562, 7
        %v564 = vsub.s32 0, %v563
        %v565 = vrot.slane %v560, %v564
        %v566 = vlaneseq
        %v567 = vshrl.u32 %v566, 7
        %v568 = vsub.s32 2, %v567
        %v569 = vrot.slane %v560, %v568
        %v570 = vlaneseq
        %v571 = vshrl.u32 %v570, 7
        %v572 = vsub.s32 4, %v571
        %v573 = vrot.slane %v560, %v572
        %v577 = vlaneseq
        %v578 = vshrl.u32 %v577, 7
        %v579 = vsub.s32 0, %v578
        %v580 = vrot.slane %v565, %v579
        %v581 = vlaneseq
        %v582 = vshrl.u32 %v581, 7
        %v583 = vsub.s32 0, %v582
        %v584 = vrot.slane %v569, %v583
        %v585 = vlaneseq
        %v586 = vshrl.u32 %v585, 7
        %v587 = vsub.s32 0, %v586
        %v588 = vrot.slane %v573, %v587
        %v621 = vunpack.c.l.b16 %v527
        %v622 = vunpack.c.h.b16 %v527
        %v623 = vunpack.c.l.b16 %v528
        %v624 = vunpack.c.l.b16 %v529
        %v625 = vunpack.c.h.b16 %v529
        %v626 = vunpack.c.l.b16 %v530
        %v627 = vunpack.c.l.b16 %v531
        %v628 = vunpack.c.h.b16 %v531
        %v629 = vunpack.c.l.b16 %v532
        %v630 = vunpack.c.l.b16 %v533
        %v631 = vunpack.c.h.b16 %v533
        %v632 = vunpack.c.l.b16 %v534
        %v633 = vunpack.c.l.b16 %v535
        %v634 = vunpack.c.h.b16 %v535
        %v635 = vunpack.c.l.b16 %v536
        %v636 = vunpack.c.l.b16 %v537
        %v637 = vunpack.c.h.b16 %v537
        %v638 = vunpack.c.l.b16 %v538
        %v639 = vunpack.c.l.b16 %v539
        %v640 = vunpack.c.h.b16 %v539
        %v641 = vunpack.c.l.b16 %v540
        %v642 = vunpack.c.l.b16 %v541
        %v643 = vunpack.c.h.b16 %v541
        %v644 = vunpack.c.l.b16 %v542
        %v645 = vunpack.c.l.b16 %v543
        %v646 = vunpack.c.h.b16 %v543
        %v647 = vunpack.c.l.b16 %v544
        %v648 = vunpack.c.l.b16 %v545
        %v649 = vunpack.c.h.b16 %v545
        %v650 = vunpack.c.l.b16 %v546
        %v651 = vunpack.c.l.b16 %v547
        %v652 = vunpack.c.h.b16 %v547
        %v653 = vunpack.c.l.b16 %v548
        %v654 = vunpack.c.l.b16 %v549
        %v655 = vunpack.c.h.b16 %v549
        %v656 = vunpack.c.l.b16 %v550
        %v657 = vunpack.c.l.b16 %v551
        %v658 = vunpack.c.h.b16 %v551
        %v659 = vunpack.c.l.b16 %v552
        %v660 = vunpack.c.l.b16 %v553
        %v661 = vunpack.c.h.b16 %v553
        %v662 = vunpack.c.l.b16 %v554
        %v663 = vunpack.c.l.b16 %v555
        %v664 = vunpack.c.h.b16 %v555
        %v665 = vunpack.c.l.b16 %v556
        %v666 = vunpack.c.l.b16 %v557
        %v667 = vunpack.c.h.b16 %v557
        %v668 = vunpack.c.l.b16 %v558
        %v669 = vpack.c.b16 %v624, %v621
        %v670 = vpack.c.b16 %v625, %v622
        %v671 = vpack.c.b16 %v626, %v623
        %v672 = vpack.c.b16 %v630, %v627
        %v673 = vpack.c.b16 %v631, %v628
        %v674 = vpack.c.b16 %v632, %v629
        %v675 = vpack.c.b16 %v636, %v633
        %v676 = vpack.c.b16 %v637, %v634
        %v677 = vpack.c.b16 %v638, %v635
        %v678 = vpack.c.b16 %v642, %v639
        %v679 = vpack.c.b16 %v643, %v640
        %v680 = vpack.c.b16 %v644, %v641
        %v681 = vpack.c.b16 %v648, %v645
        %v682 = vpack.c.b16 %v649, %v646
        %v683 = vpack.c.b16 %v650, %v647
        %v684 = vpack.c.b16 %v654, %v651
        %v685 = vpack.c.b16 %v655, %v652
        %v686 = vpack.c.b16 %v656, %v653
        %v687 = vpack.c.b16 %v660, %v657
        %v688 = vpack.c.b16 %v661, %v658
        %v689 = vpack.c.b16 %v662, %v659
        %v690 = vpack.c.b16 %v666, %v663
        %v691 = vpack.c.b16 %v667, %v664
        %v692 = vpack.c.b16 %v668, %v665
        %717 = vmatprep.subr.bf16.mxu0 %v691
        %718 = vmatpush1.bf16.msra.mxu0 %v690
        %719 = vmatprep.subr.bf16.mxu0 %v688
        %720 = vmatpush1.bf16.msra.mxu0 %v687
        %721 = vmatprep.subr.bf16.mxu0 %v685
        %722 = vmatpush1.bf16.msra.mxu0 %v684
        %723 = vmatprep.subr.bf16.mxu0 %v682
        %724 = vmatpush1.bf16.msra.mxu0 %v681
        %725 = vmatprep.subr.bf16.mxu0 %v679
        %726 = vmatpush1.bf16.msra.mxu0 %v678
        %727 = vmatprep.subr.bf16.mxu0 %v676
        %728 = vmatpush1.bf16.msra.mxu0 %v675
        %729 = vmatprep.subr.bf16.mxu0 %v673
        %730 = vmatpush1.bf16.msra.mxu0 %v672
        %731 = vmatprep.subr.bf16.mxu0 %v670
        %732 = vmatpush1.bf16.msra.mxu0 %v669
        %733 = vmatprep.subr.bf16.mxu0 0
        %734 = vmatpush2.bf16.msra.mxu0 0
        %735 = vmatprep.subr.bf16.mxu0 0
        %736 = vmatpush2.bf16.msra.mxu0 0
        %737 = vmatprep.subr.bf16.mxu0 0
        %738 = vmatpush2.bf16.msra.mxu0 0
        %739 = vmatprep.subr.bf16.mxu0 0
        %740 = vmatpush2.bf16.msra.mxu0 0
        %741 = vmatprep.subr.bf16.mxu0 0
        %742 = vmatpush2.bf16.msra.mxu0 0
        %743 = vmatprep.subr.bf16.mxu0 0
        %744 = vmatpush2.bf16.msra.mxu0 0
        %745 = vmatprep.subr.bf16.mxu0 0
        %746 = vmatpush2.bf16.msra.mxu0 0
        %747 = vmatprep.subr.bf16.mxu0 0
        %748 = vmatpush2.bf16.msra.mxu0 0
        %749 = vmatprep.mubr.bf16.mxu0 0
        %750 = vmatmul.mubr.bf16.gmra.mxu0 %v526
        %v751 = vpop.f32.mrf.mxu0
        %v752 = vadd.f32 %v580, %v751
        %v753 = vpop.f32.mrf.mxu0
        %v754 = vadd.f32 %v584, %v753
        %v755 = vpop.f32.mrf.mxu0
        %v756 = vpop.f32.mrf.mxu0
        %757 = vdwg.mxu0
        %758 = vmatprep.subr.bf16.mxu0 0
        %759 = vmatpush1.bf16.msra.mxu0 %v692
        %760 = vmatprep.subr.bf16.mxu0 0
        %761 = vmatpush1.bf16.msra.mxu0 %v689
        %762 = vmatprep.subr.bf16.mxu0 0
        %763 = vmatpush1.bf16.msra.mxu0 %v686
        %764 = vmatprep.subr.bf16.mxu0 0
        %765 = vmatpush1.bf16.msra.mxu0 %v683
        %766 = vmatprep.subr.bf16.mxu0 0
        %767 = vmatpush1.bf16.msra.mxu0 %v680
        %768 = vmatprep.subr.bf16.mxu0 0
        %769 = vmatpush1.bf16.msra.mxu0 %v677
        %770 = vmatprep.subr.bf16.mxu0 0
        %771 = vmatpush1.bf16.msra.mxu0 %v674
        %772 = vmatprep.subr.bf16.mxu0 0
        %773 = vmatpush1.bf16.msra.mxu0 %v671
        %774 = vmatprep.subr.bf16.mxu0 0
        %775 = vmatpush2.bf16.msra.mxu0 0
        %776 = vmatprep.subr.bf16.mxu0 0
        %777 = vmatpush2.bf16.msra.mxu0 0
        %778 = vmatprep.subr.bf16.mxu0 0
        %779 = vmatpush2.bf16.msra.mxu0 0
        %780 = vmatprep.subr.bf16.mxu0 0
        %781 = vmatpush2.bf16.msra.mxu0 0
        %782 = vmatprep.subr.bf16.mxu0 0
        %783 = vmatpush2.bf16.msra.mxu0 0
        %784 = vmatprep.subr.bf16.mxu0 0
        %785 = vmatpush2.bf16.msra.mxu0 0
        %786 = vmatprep.subr.bf16.mxu0 0
        %787 = vmatpush2.bf16.msra.mxu0 0
        %788 = vmatprep.subr.bf16.mxu0 0
        %789 = vmatpush2.bf16.msra.mxu0 0
        %790 = vmatprep.mubr.bf16.mxu0 0
        %791 = vmatmul.mubr.bf16.gmra.mxu0 %v526
        %v792 = vpop.f32.mrf.mxu0
        %v793 = vadd.f32 %v588, %v792
        %v794 = vpop.f32.mrf.mxu0
        %v795 = vpop.f32.mrf.mxu0
        %v796 = vpop.f32.mrf.mxu0
        %797 = vdwg.mxu0
        %v798 = vmax.f32 %v752, 0.0
        %v799 = vmax.f32 %v754, 0.0
        %v800 = vmax.f32 %v793, 0.0
        %v801 = vpack.c.bf16 %v798, %v798
        %v802 = vpack.c.bf16 %v799, %v799
        %v803 = vpack.c.bf16 %v800, %v800
        %v804 = vld [vmem:[#allocation11] sm:$0xff]
        %v805 = vld [vmem:[#allocation11 + $0x8] sm:$0xff]
        %v806 = vld [vmem:[#allocation11 + $0x10] sm:$0xff]
        %v807 = vld [vmem:[#allocation11 + $0x18] sm:$0xff]
        %v808 = vld [vmem:[#allocation11 + $0x20] sm:$0xff]
        %v809 = vld [vmem:[#allocation11 + $0x28] sm:$0xff]
        %v810 = vld [vmem:[#allocation11 + $0x30] sm:$0xff]
        %v811 = vld [vmem:[#allocation11 + $0x38] sm:$0xff]
        %v812 = vld [vmem:[#allocation11 + $0x40] sm:$0xff]
        %v813 = vld [vmem:[#allocation11 + $0x48] sm:$0xff]
        %v814 = vld [vmem:[#allocation11 + $0x50] sm:$0xff]
        %v815 = vld [vmem:[#allocation11 + $0x58] sm:$0xff]
        %v816 = vld [vmem:[#allocation11 + $0x60] sm:$0xff]
        %v817 = vld [vmem:[#allocation11 + $0x68] sm:$0xff]
        %v818 = vld [vmem:[#allocation11 + $0x70] sm:$0xff]
        %v819 = vld [vmem:[#allocation11 + $0x78] sm:$0xff]
        %v820 = vld [vmem:[#allocation11 + $0x80] sm:$0xff]
        %v821 = vld [vmem:[#allocation11 + $0x88] sm:$0xff]
        %v822 = vld [vmem:[#allocation11 + $0x90] sm:$0xff]
        %v823 = vld [vmem:[#allocation11 + $0x98] sm:$0xff]
        %v824 = vld [vmem:[#allocation11 + $0xa0] sm:$0xff]
        %v825 = vld [vmem:[#allocation11 + $0xa8] sm:$0xff]
        %v826 = vld [vmem:[#allocation11 + $0xb0] sm:$0xff]
        %v827 = vld [vmem:[#allocation11 + $0xb8] sm:$0xff]
        %v828 = vld [vmem:[#allocation11 + $0xc0] sm:$0xff]
        %v829 = vld [vmem:[#allocation11 + $0xc8] sm:$0xff]
        %v830 = vld [vmem:[#allocation11 + $0xd0] sm:$0xff]
        %v831 = vld [vmem:[#allocation11 + $0xd8] sm:$0xff]
        %v832 = vld [vmem:[#allocation11 + $0xe0] sm:$0xff]
        %v833 = vld [vmem:[#allocation11 + $0xe8] sm:$0xff]
        %v834 = vld [vmem:[#allocation11 + $0xf0] sm:$0xff]
        %v835 = vld [vmem:[#allocation11 + $0xf8] sm:$0xff]
        %v836 = vld [vmem:[#allocation11 + $0x100] sm:$0xff]
        %v837 = vld [vmem:[#allocation11 + $0x108] sm:$0xff]
        %v838 = vld [vmem:[#allocation11 + $0x110] sm:$0xff]
        %v839 = vld [vmem:[#allocation11 + $0x118] sm:$0xff]
        %v840 = vld [vmem:[#allocation11 + $0x120] sm:$0xff]
        %v841 = vld [vmem:[#allocation11 + $0x128] sm:$0xff]
        %v842 = vld [vmem:[#allocation11 + $0x130] sm:$0xff]
        %v843 = vld [vmem:[#allocation11 + $0x138] sm:$0xff]
        %v844 = vld [vmem:[#allocation11 + $0x140] sm:$0xff]
        %v845 = vld [vmem:[#allocation11 + $0x148] sm:$0xff]
        %v846 = vld [vmem:[#allocation11 + $0x150] sm:$0xff]
        %v847 = vld [vmem:[#allocation11 + $0x158] sm:$0xff]
        %v848 = vld [vmem:[#allocation11 + $0x160] sm:$0xff]
        %v849 = vld [vmem:[#allocation11 + $0x168] sm:$0xff]
        %v850 = vld [vmem:[#allocation11 + $0x170] sm:$0xff]
        %v851 = vld [vmem:[#allocation11 + $0x178] sm:$0xff]
        %v852 = vld [vmem:[#allocation11 + $0x180] sm:$0xff]
        %v853 = vld [vmem:[#allocation11 + $0x188] sm:$0xff]
        %v854 = vld [vmem:[#allocation11 + $0x190] sm:$0xff]
        %v855 = vld [vmem:[#allocation11 + $0x198] sm:$0xff]
        %v856 = vld [vmem:[#allocation11 + $0x1a0] sm:$0xff]
        %v857 = vld [vmem:[#allocation11 + $0x1a8] sm:$0xff]
        %v858 = vld [vmem:[#allocation11 + $0x1b0] sm:$0xff]
        %v859 = vld [vmem:[#allocation11 + $0x1b8] sm:$0xff]
        %v860 = vld [vmem:[#allocation11 + $0x1c0] sm:$0xff]
        %v861 = vld [vmem:[#allocation11 + $0x1c8] sm:$0xff]
        %v862 = vld [vmem:[#allocation11 + $0x1d0] sm:$0xff]
        %v863 = vld [vmem:[#allocation11 + $0x1d8] sm:$0xff]
        %v864 = vld [vmem:[#allocation11 + $0x1e0] sm:$0xff]
        %v865 = vld [vmem:[#allocation11 + $0x1e8] sm:$0xff]
        %v866 = vld [vmem:[#allocation11 + $0x1f0] sm:$0xff]
        %v867 = vld [vmem:[#allocation11 + $0x1f8] sm:$0xff]
        %v868 = vld [vmem:[#allocation11 + $0x200] sm:$0xff]
        %v869 = vld [vmem:[#allocation11 + $0x208] sm:$0xff]
        %v870 = vld [vmem:[#allocation11 + $0x210] sm:$0xff]
        %v871 = vld [vmem:[#allocation11 + $0x218] sm:$0xff]
        %v872 = vld [vmem:[#allocation11 + $0x220] sm:$0xff]
        %v873 = vld [vmem:[#allocation11 + $0x228] sm:$0xff]
        %v874 = vld [vmem:[#allocation11 + $0x230] sm:$0xff]
        %v875 = vld [vmem:[#allocation11 + $0x238] sm:$0xff]
        %v876 = vld [vmem:[#allocation11 + $0x240] sm:$0xff]
        %v877 = vld [vmem:[#allocation11 + $0x248] sm:$0xff]
        %v878 = vld [vmem:[#allocation11 + $0x250] sm:$0xff]
        %v879 = vld [vmem:[#allocation11 + $0x258] sm:$0xff]
        %v880 = vld [vmem:[#allocation11 + $0x260] sm:$0xff]
        %v881 = vld [vmem:[#allocation11 + $0x268] sm:$0xff]
        %v882 = vld [vmem:[#allocation11 + $0x270] sm:$0xff]
        %v883 = vld [vmem:[#allocation11 + $0x278] sm:$0xff]
        %v884 = vld [vmem:[#allocation11 + $0x280] sm:$0xff]
        %v885 = vld [vmem:[#allocation11 + $0x288] sm:$0xff]
        %v886 = vld [vmem:[#allocation11 + $0x290] sm:$0xff]
        %v887 = vld [vmem:[#allocation11 + $0x298] sm:$0xff]
        %v888 = vld [vmem:[#allocation11 + $0x2a0] sm:$0xff]
        %v889 = vld [vmem:[#allocation11 + $0x2a8] sm:$0xff]
        %v890 = vld [vmem:[#allocation11 + $0x2b0] sm:$0xff]
        %v891 = vld [vmem:[#allocation11 + $0x2b8] sm:$0xff]
        %v892 = vld [vmem:[#allocation11 + $0x2c0] sm:$0xff]
        %v893 = vld [vmem:[#allocation11 + $0x2c8] sm:$0xff]
        %v894 = vld [vmem:[#allocation11 + $0x2d0] sm:$0xff]
        %v895 = vld [vmem:[#allocation11 + $0x2d8] sm:$0xff]
        %v896 = vld [vmem:[#allocation11 + $0x2e0] sm:$0xff]
        %v897 = vld [vmem:[#allocation11 + $0x2e8] sm:$0xff]
        %v898 = vld [vmem:[#allocation11 + $0x2f0] sm:$0xff]
        %v899 = vld [vmem:[#allocation11 + $0x2f8] sm:$0xff]
        %v900 = vld [vmem:[#allocation11 + $0x300] sm:$0xff]
        %v901 = vld [vmem:[#allocation11 + $0x308] sm:$0xff]
        %v902 = vld [vmem:[#allocation11 + $0x310] sm:$0xff]
        %v903 = vld [vmem:[#allocation11 + $0x318] sm:$0xff]
        %v904 = vld [vmem:[#allocation11 + $0x320] sm:$0xff]
        %v905 = vld [vmem:[#allocation11 + $0x328] sm:$0xff]
        %v906 = vld [vmem:[#allocation11 + $0x330] sm:$0xff]
        %v907 = vld [vmem:[#allocation11 + $0x338] sm:$0xff]
        %v908 = vld [vmem:[#allocation11 + $0x340] sm:$0xff]
        %v909 = vld [vmem:[#allocation11 + $0x348] sm:$0xff]
        %v910 = vld [vmem:[#allocation11 + $0x350] sm:$0xff]
        %v911 = vld [vmem:[#allocation11 + $0x358] sm:$0xff]
        %v912 = vld [vmem:[#allocation11 + $0x360] sm:$0xff]
        %v913 = vld [vmem:[#allocation11 + $0x368] sm:$0xff]
        %v914 = vld [vmem:[#allocation11 + $0x370] sm:$0xff]
        %v915 = vld [vmem:[#allocation11 + $0x378] sm:$0xff]
        %v916 = vld [vmem:[#allocation11 + $0x380] sm:$0xff]
        %v917 = vld [vmem:[#allocation11 + $0x388] sm:$0xff]
        %v918 = vld [vmem:[#allocation11 + $0x390] sm:$0xff]
        %v919 = vld [vmem:[#allocation11 + $0x398] sm:$0xff]
        %v920 = vld [vmem:[#allocation11 + $0x3a0] sm:$0xff]
        %v921 = vld [vmem:[#allocation11 + $0x3a8] sm:$0xff]
        %v922 = vld [vmem:[#allocation11 + $0x3b0] sm:$0xff]
        %v923 = vld [vmem:[#allocation11 + $0x3b8] sm:$0xff]
        %v924 = vld [vmem:[#allocation11 + $0x3c0] sm:$0xff]
        %v925 = vld [vmem:[#allocation11 + $0x3c8] sm:$0xff]
        %v926 = vld [vmem:[#allocation11 + $0x3d0] sm:$0xff]
        %v927 = vld [vmem:[#allocation11 + $0x3d8] sm:$0xff]
        %v928 = vld [vmem:[#allocation11 + $0x3e0] sm:$0xff]
        %v929 = vld [vmem:[#allocation11 + $0x3e8] sm:$0xff]
        %v930 = vld [vmem:[#allocation11 + $0x3f0] sm:$0xff]
        %v931 = vld [vmem:[#allocation11 + $0x3f8] sm:$0xff]
        %v932 = vld [vmem:[#allocation11 + $0x400] sm:$0xff]
        %v933 = vld [vmem:[#allocation11 + $0x408] sm:$0xff]
        %v934 = vld [vmem:[#allocation11 + $0x410] sm:$0xff]
        %v935 = vld [vmem:[#allocation11 + $0x418] sm:$0xff]
        %v936 = vld [vmem:[#allocation11 + $0x420] sm:$0xff]
        %v937 = vld [vmem:[#allocation11 + $0x428] sm:$0xff]
        %v938 = vld [vmem:[#allocation11 + $0x430] sm:$0xff]
        %v939 = vld [vmem:[#allocation11 + $0x438] sm:$0xff]
        %v940 = vld [vmem:[#allocation11 + $0x440] sm:$0xff]
        %v941 = vld [vmem:[#allocation11 + $0x448] sm:$0xff]
        %v942 = vld [vmem:[#allocation11 + $0x450] sm:$0xff]
        %v943 = vld [vmem:[#allocation11 + $0x458] sm:$0xff]
        %v944 = vld [vmem:[#allocation11 + $0x460] sm:$0xff]
        %v945 = vld [vmem:[#allocation11 + $0x468] sm:$0xff]
        %v946 = vld [vmem:[#allocation11 + $0x470] sm:$0xff]
        %v947 = vld [vmem:[#allocation11 + $0x478] sm:$0xff]
        %v948 = vld [vmem:[#allocation13] sm:$0x3f]
        %v949 = vunpack.c.l.bf16 %v948
        %v950 = vunpack.c.h.bf16 %v948
        %v953 = vlaneseq
        %v954 = vshrl.u32 %v953, 7
        %v955 = vsub.s32 0, %v954
        %v956 = vrot.slane %v949, %v955
        %v957 = vlaneseq
        %v958 = vshrl.u32 %v957, 7
        %v959 = vsub.s32 2, %v958
        %v960 = vrot.slane %v949, %v959
        %v961 = vlaneseq
        %v962 = vshrl.u32 %v961, 7
        %v963 = vsub.s32 4, %v962
        %v964 = vrot.slane %v949, %v963
        %v965 = vlaneseq
        %v966 = vshrl.u32 %v965, 7
        %v967 = vsub.s32 6, %v966
        %v968 = vrot.slane %v949, %v967
        %v969 = vlaneseq
        %v970 = vshrl.u32 %v969, 7
        %v971 = vsub.s32 0, %v970
        %v972 = vrot.slane %v950, %v971
        %v973 = vlaneseq
        %v974 = vshrl.u32 %v973, 7
        %v975 = vsub.s32 2, %v974
        %v976 = vrot.slane %v950, %v975
        %v983 = vlaneseq
        %v984 = vshrl.u32 %v983, 7
        %v985 = vsub.s32 0, %v984
        %v986 = vrot.slane %v956, %v985
        %v987 = vlaneseq
        %v988 = vshrl.u32 %v987, 7
        %v989 = vsub.s32 0, %v988
        %v990 = vrot.slane %v960, %v989
        %v991 = vlaneseq
        %v992 = vshrl.u32 %v991, 7
        %v993 = vsub.s32 0, %v992
        %v994 = vrot.slane %v964, %v993
        %v995 = vlaneseq
        %v996 = vshrl.u32 %v995, 7
        %v997 = vsub.s32 0, %v996
        %v998 = vrot.slane %v968, %v997
        %v999 = vlaneseq
        %v1000 = vshrl.u32 %v999, 7
        %v1001 = vsub.s32 0, %v1000
        %v1002 = vrot.slane %v972, %v1001
        %v1003 = vlaneseq
        %v1004 = vshrl.u32 %v1003, 7
        %v1005 = vsub.s32 0, %v1004
        %v1006 = vrot.slane %v976, %v1005
        %v1151 = vunpack.c.l.b16 %v804
        %v1152 = vunpack.c.h.b16 %v804
        %v1153 = vunpack.c.l.b16 %v805
        %v1154 = vunpack.c.h.b16 %v805
        %v1155 = vunpack.c.l.b16 %v806
        %v1156 = vunpack.c.h.b16 %v806
        %v1157 = vunpack.c.l.b16 %v807
        %v1158 = vunpack.c.h.b16 %v807
        %v1159 = vunpack.c.l.b16 %v808
        %v1160 = vunpack.c.h.b16 %v808
        %v1161 = vunpack.c.l.b16 %v809
        %v1162 = vunpack.c.h.b16 %v809
        %v1163 = vunpack.c.l.b16 %v810
        %v1164 = vunpack.c.h.b16 %v810
        %v1165 = vunpack.c.l.b16 %v811
        %v1166 = vunpack.c.h.b16 %v811
        %v1167 = vunpack.c.l.b16 %v812
        %v1168 = vunpack.c.h.b16 %v812
        %v1169 = vunpack.c.l.b16 %v813
        %v1170 = vunpack.c.h.b16 %v813
        %v1171 = vunpack.c.l.b16 %v814
        %v1172 = vunpack.c.h.b16 %v814
        %v1173 = vunpack.c.l.b16 %v815
        %v1174 = vunpack.c.h.b16 %v815
        %v1175 = vunpack.c.l.b16 %v816
        %v1176 = vunpack.c.h.b16 %v816
        %v1177 = vunpack.c.l.b16 %v817
        %v1178 = vunpack.c.h.b16 %v817
        %v1179 = vunpack.c.l.b16 %v818
        %v1180 = vunpack.c.h.b16 %v818
        %v1181 = vunpack.c.l.b16 %v819
        %v1182 = vunpack.c.h.b16 %v819
        %v1183 = vunpack.c.l.b16 %v820
        %v1184 = vunpack.c.h.b16 %v820
        %v1185 = vunpack.c.l.b16 %v821
        %v1186 = vunpack.c.h.b16 %v821
        %v1187 = vunpack.c.l.b16 %v822
        %v1188 = vunpack.c.h.b16 %v822
        %v1189 = vunpack.c.l.b16 %v823
        %v1190 = vunpack.c.h.b16 %v823
        %v1191 = vunpack.c.l.b16 %v824
        %v1192 = vunpack.c.h.b16 %v824
        %v1193 = vunpack.c.l.b16 %v825
        %v1194 = vunpack.c.h.b16 %v825
        %v1195 = vunpack.c.l.b16 %v826
        %v1196 = vunpack.c.h.b16 %v826
        %v1197 = vunpack.c.l.b16 %v827
        %v1198 = vunpack.c.h.b16 %v827
        %v1199 = vunpack.c.l.b16 %v828
        %v1200 = vunpack.c.h.b16 %v828
        %v1201 = vunpack.c.l.b16 %v829
        %v1202 = vunpack.c.h.b16 %v829
        %v1203 = vunpack.c.l.b16 %v830
        %v1204 = vunpack.c.h.b16 %v830
        %v1205 = vunpack.c.l.b16 %v831
        %v1206 = vunpack.c.h.b16 %v831
        %v1207 = vunpack.c.l.b16 %v832
        %v1208 = vunpack.c.h.b16 %v832
        %v1209 = vunpack.c.l.b16 %v833
        %v1210 = vunpack.c.h.b16 %v833
        %v1211 = vunpack.c.l.b16 %v834
        %v1212 = vunpack.c.h.b16 %v834
        %v1213 = vunpack.c.l.b16 %v835
        %v1214 = vunpack.c.h.b16 %v835
        %v1215 = vunpack.c.l.b16 %v836
        %v1216 = vunpack.c.h.b16 %v836
        %v1217 = vunpack.c.l.b16 %v837
        %v1218 = vunpack.c.h.b16 %v837
        %v1219 = vunpack.c.l.b16 %v838
        %v1220 = vunpack.c.h.b16 %v838
        %v1221 = vunpack.c.l.b16 %v839
        %v1222 = vunpack.c.h.b16 %v839
        %v1223 = vunpack.c.l.b16 %v840
        %v1224 = vunpack.c.h.b16 %v840
        %v1225 = vunpack.c.l.b16 %v841
        %v1226 = vunpack.c.h.b16 %v841
        %v1227 = vunpack.c.l.b16 %v842
        %v1228 = vunpack.c.h.b16 %v842
        %v1229 = vunpack.c.l.b16 %v843
        %v1230 = vunpack.c.h.b16 %v843
        %v1231 = vunpack.c.l.b16 %v844
        %v1232 = vunpack.c.h.b16 %v844
        %v1233 = vunpack.c.l.b16 %v845
        %v1234 = vunpack.c.h.b16 %v845
        %v1235 = vunpack.c.l.b16 %v846
        %v1236 = vunpack.c.h.b16 %v846
        %v1237 = vunpack.c.l.b16 %v847
        %v1238 = vunpack.c.h.b16 %v847
        %v1239 = vunpack.c.l.b16 %v848
        %v1240 = vunpack.c.h.b16 %v848
        %v1241 = vunpack.c.l.b16 %v849
        %v1242 = vunpack.c.h.b16 %v849
        %v1243 = vunpack.c.l.b16 %v850
        %v1244 = vunpack.c.h.b16 %v850
        %v1245 = vunpack.c.l.b16 %v851
        %v1246 = vunpack.c.h.b16 %v851
        %v1247 = vunpack.c.l.b16 %v852
        %v1248 = vunpack.c.h.b16 %v852
        %v1249 = vunpack.c.l.b16 %v853
        %v1250 = vunpack.c.h.b16 %v853
        %v1251 = vunpack.c.l.b16 %v854
        %v1252 = vunpack.c.h.b16 %v854
        %v1253 = vunpack.c.l.b16 %v855
        %v1254 = vunpack.c.h.b16 %v855
        %v1255 = vunpack.c.l.b16 %v856
        %v1256 = vunpack.c.h.b16 %v856
        %v1257 = vunpack.c.l.b16 %v857
        %v1258 = vunpack.c.h.b16 %v857
        %v1259 = vunpack.c.l.b16 %v858
        %v1260 = vunpack.c.h.b16 %v858
        %v1261 = vunpack.c.l.b16 %v859
        %v1262 = vunpack.c.h.b16 %v859
        %v1263 = vunpack.c.l.b16 %v860
        %v1264 = vunpack.c.h.b16 %v860
        %v1265 = vunpack.c.l.b16 %v861
        %v1266 = vunpack.c.h.b16 %v861
        %v1267 = vunpack.c.l.b16 %v862
        %v1268 = vunpack.c.h.b16 %v862
        %v1269 = vunpack.c.l.b16 %v863
        %v1270 = vunpack.c.h.b16 %v863
        %v1271 = vunpack.c.l.b16 %v864
        %v1272 = vunpack.c.h.b16 %v864
        %v1273 = vunpack.c.l.b16 %v865
        %v1274 = vunpack.c.h.b16 %v865
        %v1275 = vunpack.c.l.b16 %v866
        %v1276 = vunpack.c.h.b16 %v866
        %v1277 = vunpack.c.l.b16 %v867
        %v1278 = vunpack.c.h.b16 %v867
        %v1279 = vunpack.c.l.b16 %v868
        %v1280 = vunpack.c.h.b16 %v868
        %v1281 = vunpack.c.l.b16 %v869
        %v1282 = vunpack.c.h.b16 %v869
        %v1283 = vunpack.c.l.b16 %v870
        %v1284 = vunpack.c.h.b16 %v870
        %v1285 = vunpack.c.l.b16 %v871
        %v1286 = vunpack.c.h.b16 %v871
        %v1287 = vunpack.c.l.b16 %v872
        %v1288 = vunpack.c.h.b16 %v872
        %v1289 = vunpack.c.l.b16 %v873
        %v1290 = vunpack.c.h.b16 %v873
        %v1291 = vunpack.c.l.b16 %v874
        %v1292 = vunpack.c.h.b16 %v874
        %v1293 = vunpack.c.l.b16 %v875
        %v1294 = vunpack.c.h.b16 %v875
        %v1295 = vunpack.c.l.b16 %v876
        %v1296 = vunpack.c.h.b16 %v876
        %v1297 = vunpack.c.l.b16 %v877
        %v1298 = vunpack.c.h.b16 %v877
        %v1299 = vunpack.c.l.b16 %v878
        %v1300 = vunpack.c.h.b16 %v878
        %v1301 = vunpack.c.l.b16 %v879
        %v1302 = vunpack.c.h.b16 %v879
        %v1303 = vunpack.c.l.b16 %v880
        %v1304 = vunpack.c.h.b16 %v880
        %v1305 = vunpack.c.l.b16 %v881
        %v1306 = vunpack.c.h.b16 %v881
        %v1307 = vunpack.c.l.b16 %v882
        %v1308 = vunpack.c.h.b16 %v882
        %v1309 = vunpack.c.l.b16 %v883
        %v1310 = vunpack.c.h.b16 %v883
        %v1311 = vunpack.c.l.b16 %v884
        %v1312 = vunpack.c.h.b16 %v884
        %v1313 = vunpack.c.l.b16 %v885
        %v1314 = vunpack.c.h.b16 %v885
        %v1315 = vunpack.c.l.b16 %v886
        %v1316 = vunpack.c.h.b16 %v886
        %v1317 = vunpack.c.l.b16 %v887
        %v1318 = vunpack.c.h.b16 %v887
        %v1319 = vunpack.c.l.b16 %v888
        %v1320 = vunpack.c.h.b16 %v888
        %v1321 = vunpack.c.l.b16 %v889
        %v1322 = vunpack.c.h.b16 %v889
        %v1323 = vunpack.c.l.b16 %v890
        %v1324 = vunpack.c.h.b16 %v890
        %v1325 = vunpack.c.l.b16 %v891
        %v1326 = vunpack.c.h.b16 %v891
        %v1327 = vunpack.c.l.b16 %v892
        %v1328 = vunpack.c.h.b16 %v892
        %v1329 = vunpack.c.l.b16 %v893
        %v1330 = vunpack.c.h.b16 %v893
        %v1331 = vunpack.c.l.b16 %v894
        %v1332 = vunpack.c.h.b16 %v894
        %v1333 = vunpack.c.l.b16 %v895
        %v1334 = vunpack.c.h.b16 %v895
        %v1335 = vunpack.c.l.b16 %v896
        %v1336 = vunpack.c.h.b16 %v896
        %v1337 = vunpack.c.l.b16 %v897
        %v1338 = vunpack.c.h.b16 %v897
        %v1339 = vunpack.c.l.b16 %v898
        %v1340 = vunpack.c.h.b16 %v898
        %v1341 = vunpack.c.l.b16 %v899
        %v1342 = vunpack.c.h.b16 %v899
        %v1343 = vunpack.c.l.b16 %v900
        %v1344 = vunpack.c.h.b16 %v900
        %v1345 = vunpack.c.l.b16 %v901
        %v1346 = vunpack.c.h.b16 %v901
        %v1347 = vunpack.c.l.b16 %v902
        %v1348 = vunpack.c.h.b16 %v902
        %v1349 = vunpack.c.l.b16 %v903
        %v1350 = vunpack.c.h.b16 %v903
        %v1351 = vunpack.c.l.b16 %v904
        %v1352 = vunpack.c.h.b16 %v904
        %v1353 = vunpack.c.l.b16 %v905
        %v1354 = vunpack.c.h.b16 %v905
        %v1355 = vunpack.c.l.b16 %v906
        %v1356 = vunpack.c.h.b16 %v906
        %v1357 = vunpack.c.l.b16 %v907
        %v1358 = vunpack.c.h.b16 %v907
        %v1359 = vunpack.c.l.b16 %v908
        %v1360 = vunpack.c.h.b16 %v908
        %v1361 = vunpack.c.l.b16 %v909
        %v1362 = vunpack.c.h.b16 %v909
        %v1363 = vunpack.c.l.b16 %v910
        %v1364 = vunpack.c.h.b16 %v910
        %v1365 = vunpack.c.l.b16 %v911
        %v1366 = vunpack.c.h.b16 %v911
        %v1367 = vunpack.c.l.b16 %v912
        %v1368 = vunpack.c.h.b16 %v912
        %v1369 = vunpack.c.l.b16 %v913
        %v1370 = vunpack.c.h.b16 %v913
        %v1371 = vunpack.c.l.b16 %v914
        %v1372 = vunpack.c.h.b16 %v914
        %v1373 = vunpack.c.l.b16 %v915
        %v1374 = vunpack.c.h.b16 %v915
        %v1375 = vunpack.c.l.b16 %v916
        %v1376 = vunpack.c.h.b16 %v916
        %v1377 = vunpack.c.l.b16 %v917
        %v1378 = vunpack.c.h.b16 %v917
        %v1379 = vunpack.c.l.b16 %v918
        %v1380 = vunpack.c.h.b16 %v918
        %v1381 = vunpack.c.l.b16 %v919
        %v1382 = vunpack.c.h.b16 %v919
        %v1383 = vunpack.c.l.b16 %v920
        %v1384 = vunpack.c.h.b16 %v920
        %v1385 = vunpack.c.l.b16 %v921
        %v1386 = vunpack.c.h.b16 %v921
        %v1387 = vunpack.c.l.b16 %v922
        %v1388 = vunpack.c.h.b16 %v922
        %v1389 = vunpack.c.l.b16 %v923
        %v1390 = vunpack.c.h.b16 %v923
        %v1391 = vunpack.c.l.b16 %v924
        %v1392 = vunpack.c.h.b16 %v924
        %v1393 = vunpack.c.l.b16 %v925
        %v1394 = vunpack.c.h.b16 %v925
        %v1395 = vunpack.c.l.b16 %v926
        %v1396 = vunpack.c.h.b16 %v926
        %v1397 = vunpack.c.l.b16 %v927
        %v1398 = vunpack.c.h.b16 %v927
        %v1399 = vunpack.c.l.b16 %v928
        %v1400 = vunpack.c.h.b16 %v928
        %v1401 = vunpack.c.l.b16 %v929
        %v1402 = vunpack.c.h.b16 %v929
        %v1403 = vunpack.c.l.b16 %v930
        %v1404 = vunpack.c.h.b16 %v930
        %v1405 = vunpack.c.l.b16 %v931
        %v1406 = vunpack.c.h.b16 %v931
        %v1407 = vunpack.c.l.b16 %v932
        %v1408 = vunpack.c.h.b16 %v932
        %v1409 = vunpack.c.l.b16 %v933
        %v1410 = vunpack.c.h.b16 %v933
        %v1411 = vunpack.c.l.b16 %v934
        %v1412 = vunpack.c.h.b16 %v934
        %v1413 = vunpack.c.l.b16 %v935
        %v1414 = vunpack.c.h.b16 %v935
        %v1415 = vunpack.c.l.b16 %v936
        %v1416 = vunpack.c.h.b16 %v936
        %v1417 = vunpack.c.l.b16 %v937
        %v1418 = vunpack.c.h.b16 %v937
        %v1419 = vunpack.c.l.b16 %v938
        %v1420 = vunpack.c.h.b16 %v938
        %v1421 = vunpack.c.l.b16 %v939
        %v1422 = vunpack.c.h.b16 %v939
        %v1423 = vunpack.c.l.b16 %v940
        %v1424 = vunpack.c.h.b16 %v940
        %v1425 = vunpack.c.l.b16 %v941
        %v1426 = vunpack.c.h.b16 %v941
        %v1427 = vunpack.c.l.b16 %v942
        %v1428 = vunpack.c.h.b16 %v942
        %v1429 = vunpack.c.l.b16 %v943
        %v1430 = vunpack.c.h.b16 %v943
        %v1431 = vunpack.c.l.b16 %v944
        %v1432 = vunpack.c.h.b16 %v944
        %v1433 = vunpack.c.l.b16 %v945
        %v1434 = vunpack.c.h.b16 %v945
        %v1435 = vunpack.c.l.b16 %v946
        %v1436 = vunpack.c.h.b16 %v946
        %v1437 = vunpack.c.l.b16 %v947
        %v1438 = vunpack.c.h.b16 %v947
        %v1439 = vpack.c.b16 %v1157, %v1151
        %v1440 = vpack.c.b16 %v1158, %v1152
        %v1441 = vpack.c.b16 %v1159, %v1153
        %v1442 = vpack.c.b16 %v1160, %v1154
        %v1443 = vpack.c.b16 %v1161, %v1155
        %v1444 = vpack.c.b16 %v1162, %v1156
        %v1445 = vpack.c.b16 %v1169, %v1163
        %v1446 = vpack.c.b16 %v1170, %v1164
        %v1447 = vpack.c.b16 %v1171, %v1165
        %v1448 = vpack.c.b16 %v1172, %v1166
        %v1449 = vpack.c.b16 %v1173, %v1167
        %v1450 = vpack.c.b16 %v1174, %v1168
        %v1451 = vpack.c.b16 %v1181, %v1175
        %v1452 = vpack.c.b16 %v1182, %v1176
        %v1453 = vpack.c.b16 %v1183, %v1177
        %v1454 = vpack.c.b16 %v1184, %v1178
        %v1455 = vpack.c.b16 %v1185, %v1179
        %v1456 = vpack.c.b16 %v1186, %v1180
        %v1457 = vpack.c.b16 %v1193, %v1187
        %v1458 = vpack.c.b16 %v1194, %v1188
        %v1459 = vpack.c.b16 %v1195, %v1189
        %v1460 = vpack.c.b16 %v1196, %v1190
        %v1461 = vpack.c.b16 %v1197, %v1191
        %v1462 = vpack.c.b16 %v1198, %v1192
        %v1463 = vpack.c.b16 %v1205, %v1199
        %v1464 = vpack.c.b16 %v1206, %v1200
        %v1465 = vpack.c.b16 %v1207, %v1201
        %v1466 = vpack.c.b16 %v1208, %v1202
        %v1467 = vpack.c.b16 %v1209, %v1203
        %v1468 = vpack.c.b16 %v1210, %v1204
        %v1469 = vpack.c.b16 %v1217, %v1211
        %v1470 = vpack.c.b16 %v1218, %v1212
        %v1471 = vpack.c.b16 %v1219, %v1213
        %v1472 = vpack.c.b16 %v1220, %v1214
        %v1473 = vpack.c.b16 %v1221, %v1215
        %v1474 = vpack.c.b16 %v1222, %v1216
        %v1475 = vpack.c.b16 %v1229, %v1223
        %v1476 = vpack.c.b16 %v1230, %v1224
        %v1477 = vpack.c.b16 %v1231, %v1225
        %v1478 = vpack.c.b16 %v1232, %v1226
        %v1479 = vpack.c.b16 %v1233, %v1227
        %v1480 = vpack.c.b16 %v1234, %v1228
        %v1481 = vpack.c.b16 %v1241, %v1235
        %v1482 = vpack.c.b16 %v1242, %v1236
        %v1483 = vpack.c.b16 %v1243, %v1237
        %v1484 = vpack.c.b16 %v1244, %v1238
        %v1485 = vpack.c.b16 %v1245, %v1239
        %v1486 = vpack.c.b16 %v1246, %v1240
        %v1487 = vpack.c.b16 %v1253, %v1247
        %v1488 = vpack.c.b16 %v1254, %v1248
        %v1489 = vpack.c.b16 %v1255, %v1249
        %v1490 = vpack.c.b16 %v1256, %v1250
        %v1491 = vpack.c.b16 %v1257, %v1251
        %v1492 = vpack.c.b16 %v1258, %v1252
        %v1493 = vpack.c.b16 %v1265, %v1259
        %v1494 = vpack.c.b16 %v1266, %v1260
        %v1495 = vpack.c.b16 %v1267, %v1261
        %v1496 = vpack.c.b16 %v1268, %v1262
        %v1497 = vpack.c.b16 %v1269, %v1263
        %v1498 = vpack.c.b16 %v1270, %v1264
        %v1499 = vpack.c.b16 %v1277, %v1271
        %v1500 = vpack.c.b16 %v1278, %v1272
        %v1501 = vpack.c.b16 %v1279, %v1273
        %v1502 = vpack.c.b16 %v1280, %v1274
        %v1503 = vpack.c.b16 %v1281, %v1275
        %v1504 = vpack.c.b16 %v1282, %v1276
        %v1505 = vpack.c.b16 %v1289, %v1283
        %v1506 = vpack.c.b16 %v1290, %v1284
        %v1507 = vpack.c.b16 %v1291, %v1285
        %v1508 = vpack.c.b16 %v1292, %v1286
        %v1509 = vpack.c.b16 %v1293, %v1287
        %v1510 = vpack.c.b16 %v1294, %v1288
        %v1511 = vpack.c.b16 %v1301, %v1295
        %v1512 = vpack.c.b16 %v1302, %v1296
        %v1513 = vpack.c.b16 %v1303, %v1297
        %v1514 = vpack.c.b16 %v1304, %v1298
        %v1515 = vpack.c.b16 %v1305, %v1299
        %v1516 = vpack.c.b16 %v1306, %v1300
        %v1517 = vpack.c.b16 %v1313, %v1307
        %v1518 = vpack.c.b16 %v1314, %v1308
        %v1519 = vpack.c.b16 %v1315, %v1309
        %v1520 = vpack.c.b16 %v1316, %v1310
        %v1521 = vpack.c.b16 %v1317, %v1311
        %v1522 = vpack.c.b16 %v1318, %v1312
        %v1523 = vpack.c.b16 %v1325, %v1319
        %v1524 = vpack.c.b16 %v1326, %v1320
        %v1525 = vpack.c.b16 %v1327, %v1321
        %v1526 = vpack.c.b16 %v1328, %v1322
        %v1527 = vpack.c.b16 %v1329, %v1323
        %v1528 = vpack.c.b16 %v1330, %v1324
        %v1529 = vpack.c.b16 %v1337, %v1331
        %v1530 = vpack.c.b16 %v1338, %v1332
        %v1531 = vpack.c.b16 %v1339, %v1333
        %v1532 = vpack.c.b16 %v1340, %v1334
        %v1533 = vpack.c.b16 %v1341, %v1335
        %v1534 = vpack.c.b16 %v1342, %v1336
        %v1535 = vpack.c.b16 %v1349, %v1343
        %v1536 = vpack.c.b16 %v1350, %v1344
        %v1537 = vpack.c.b16 %v1351, %v1345
        %v1538 = vpack.c.b16 %v1352, %v1346
        %v1539 = vpack.c.b16 %v1353, %v1347
        %v1540 = vpack.c.b16 %v1354, %v1348
        %v1541 = vpack.c.b16 %v1361, %v1355
        %v1542 = vpack.c.b16 %v1362, %v1356
        %v1543 = vpack.c.b16 %v1363, %v1357
        %v1544 = vpack.c.b16 %v1364, %v1358
        %v1545 = vpack.c.b16 %v1365, %v1359
        %v1546 = vpack.c.b16 %v1366, %v1360
        %v1547 = vpack.c.b16 %v1373, %v1367
        %v1548 = vpack.c.b16 %v1374, %v1368
        %v1549 = vpack.c.b16 %v1375, %v1369
        %v1550 = vpack.c.b16 %v1376, %v1370
        %v1551 = vpack.c.b16 %v1377, %v1371
        %v1552 = vpack.c.b16 %v1378, %v1372
        %v1553 = vpack.c.b16 %v1385, %v1379
        %v1554 = vpack.c.b16 %v1386, %v1380
        %v1555 = vpack.c.b16 %v1387, %v1381
        %v1556 = vpack.c.b16 %v1388, %v1382
        %v1557 = vpack.c.b16 %v1389, %v1383
        %v1558 = vpack.c.b16 %v1390, %v1384
        %v1559 = vpack.c.b16 %v1397, %v1391
        %v1560 = vpack.c.b16 %v1398, %v1392
        %v1561 = vpack.c.b16 %v1399, %v1393
        %v1562 = vpack.c.b16 %v1400, %v1394
        %v1563 = vpack.c.b16 %v1401, %v1395
        %v1564 = vpack.c.b16 %v1402, %v1396
        %v1565 = vpack.c.b16 %v1409, %v1403
        %v1566 = vpack.c.b16 %v1410, %v1404
        %v1567 = vpack.c.b16 %v1411, %v1405
        %v1568 = vpack.c.b16 %v1412, %v1406
        %v1569 = vpack.c.b16 %v1413, %v1407
        %v1570 = vpack.c.b16 %v1414, %v1408
        %v1571 = vpack.c.b16 %v1421, %v1415
        %v1572 = vpack.c.b16 %v1422, %v1416
        %v1573 = vpack.c.b16 %v1423, %v1417
        %v1574 = vpack.c.b16 %v1424, %v1418
        %v1575 = vpack.c.b16 %v1425, %v1419
        %v1576 = vpack.c.b16 %v1426, %v1420
        %v1577 = vpack.c.b16 %v1433, %v1427
        %v1578 = vpack.c.b16 %v1434, %v1428
        %v1579 = vpack.c.b16 %v1435, %v1429
        %v1580 = vpack.c.b16 %v1436, %v1430
        %v1581 = vpack.c.b16 %v1437, %v1431
        %v1582 = vpack.c.b16 %v1438, %v1432
        %1727 = vmatprep.subr.bf16.mxu0 %v1482
        %1728 = vmatpush1.bf16.msra.mxu0 %v1481
        %1729 = vmatprep.subr.bf16.mxu0 %v1476
        %1730 = vmatpush1.bf16.msra.mxu0 %v1475
        %1731 = vmatprep.subr.bf16.mxu0 %v1470
        %1732 = vmatpush1.bf16.msra.mxu0 %v1469
        %1733 = vmatprep.subr.bf16.mxu0 %v1464
        %1734 = vmatpush1.bf16.msra.mxu0 %v1463
        %1735 = vmatprep.subr.bf16.mxu0 %v1458
        %1736 = vmatpush1.bf16.msra.mxu0 %v1457
        %1737 = vmatprep.subr.bf16.mxu0 %v1452
        %1738 = vmatpush1.bf16.msra.mxu0 %v1451
        %1739 = vmatprep.subr.bf16.mxu0 %v1446
        %1740 = vmatpush1.bf16.msra.mxu0 %v1445
        %1741 = vmatprep.subr.bf16.mxu0 %v1440
        %1742 = vmatpush1.bf16.msra.mxu0 %v1439
        %1743 = vmatprep.subr.bf16.mxu0 %v1530
        %1744 = vmatpush2.bf16.msra.mxu0 %v1529
        %1745 = vmatprep.subr.bf16.mxu0 %v1524
        %1746 = vmatpush2.bf16.msra.mxu0 %v1523
        %1747 = vmatprep.subr.bf16.mxu0 %v1518
        %1748 = vmatpush2.bf16.msra.mxu0 %v1517
        %1749 = vmatprep.subr.bf16.mxu0 %v1512
        %1750 = vmatpush2.bf16.msra.mxu0 %v1511
        %1751 = vmatprep.subr.bf16.mxu0 %v1506
        %1752 = vmatpush2.bf16.msra.mxu0 %v1505
        %1753 = vmatprep.subr.bf16.mxu0 %v1500
        %1754 = vmatpush2.bf16.msra.mxu0 %v1499
        %1755 = vmatprep.subr.bf16.mxu0 %v1494
        %1756 = vmatpush2.bf16.msra.mxu0 %v1493
        %1757 = vmatprep.subr.bf16.mxu0 %v1488
        %1758 = vmatpush2.bf16.msra.mxu0 %v1487
        %1759 = vmatprep.mubr.bf16.mxu0 %v802
        %1760 = vmatmul.mubr.bf16.gmra.mxu0 %v801
        %v1761 = vpop.f32.mrf.mxu0
        %v1762 = vadd.f32 %v986, %v1761
        %v1763 = vpop.f32.mrf.mxu0
        %v1764 = vadd.f32 %v990, %v1763
        %v1765 = vpop.f32.mrf.mxu0
        %v1766 = vpop.f32.mrf.mxu0
        %1767 = vdwg.mxu0
        %1768 = vmatprep.subr.bf16.mxu0 %v1578
        %1769 = vmatpush1.bf16.msra.mxu0 %v1577
        %1770 = vmatprep.subr.bf16.mxu0 %v1572
        %1771 = vmatpush1.bf16.msra.mxu0 %v1571
        %1772 = vmatprep.subr.bf16.mxu0 %v1566
        %1773 = vmatpush1.bf16.msra.mxu0 %v1565
        %1774 = vmatprep.subr.bf16.mxu0 %v1560
        %1775 = vmatpush1.bf16.msra.mxu0 %v1559
        %1776 = vmatprep.subr.bf16.mxu0 %v1554
        %1777 = vmatpush1.bf16.msra.mxu0 %v1553
        %1778 = vmatprep.subr.bf16.mxu0 %v1548
        %1779 = vmatpush1.bf16.msra.mxu0 %v1547
        %1780 = vmatprep.subr.bf16.mxu0 %v1542
        %1781 = vmatpush1.bf16.msra.mxu0 %v1541
        %1782 = vmatprep.subr.bf16.mxu0 %v1536
        %1783 = vmatpush1.bf16.msra.mxu0 %v1535
        %1784 = vmatprep.subr.bf16.mxu0 0
        %1785 = vmatpush2.bf16.msra.mxu0 0
        %1786 = vmatprep.subr.bf16.mxu0 0
        %1787 = vmatpush2.bf16.msra.mxu0 0
        %1788 = vmatprep.subr.bf16.mxu0 0
        %1789 = vmatpush2.bf16.msra.mxu0 0
        %1790 = vmatprep.subr.bf16.mxu0 0
        %1791 = vmatpush2.bf16.msra.mxu0 0
        %1792 = vmatprep.subr.bf16.mxu0 0
        %1793 = vmatpush2.bf16.msra.mxu0 0
        %1794 = vmatprep.subr.bf16.mxu0 0
        %1795 = vmatpush2.bf16.msra.mxu0 0
        %1796 = vmatprep.subr.bf16.mxu0 0
        %1797 = vmatpush2.bf16.msra.mxu0 0
        %1798 = vmatprep.subr.bf16.mxu0 0
        %1799 = vmatpush2.bf16.msra.mxu0 0
        %1800 = vmatprep.mubr.bf16.mxu0 0
        %1801 = vmatmul.mubr.bf16.gmra.mxu0 %v803
        %v1802 = vpop.f32.mrf.mxu0
        %v1803 = vadd.f32 %v1762, %v1802
        %v1804 = vpop.f32.mrf.mxu0
        %v1805 = vadd.f32 %v1764, %v1804
        %v1806 = vpop.f32.mrf.mxu0
        %v1807 = vpop.f32.mrf.mxu0
        %1808 = vdwg.mxu0
        %1809 = vmatprep.subr.bf16.mxu0 %v1484
        %1810 = vmatpush1.bf16.msra.mxu0 %v1483
        %1811 = vmatprep.subr.bf16.mxu0 %v1478
        %1812 = vmatpush1.bf16.msra.mxu0 %v1477
        %1813 = vmatprep.subr.bf16.mxu0 %v1472
        %1814 = vmatpush1.bf16.msra.mxu0 %v1471
        %1815 = vmatprep.subr.bf16.mxu0 %v1466
        %1816 = vmatpush1.bf16.msra.mxu0 %v1465
        %1817 = vmatprep.subr.bf16.mxu0 %v1460
        %1818 = vmatpush1.bf16.msra.mxu0 %v1459
        %1819 = vmatprep.subr.bf16.mxu0 %v1454
        %1820 = vmatpush1.bf16.msra.mxu0 %v1453
        %1821 = vmatprep.subr.bf16.mxu0 %v1448
        %1822 = vmatpush1.bf16.msra.mxu0 %v1447
        %1823 = vmatprep.subr.bf16.mxu0 %v1442
        %1824 = vmatpush1.bf16.msra.mxu0 %v1441
        %1825 = vmatprep.subr.bf16.mxu0 %v1532
        %1826 = vmatpush2.bf16.msra.mxu0 %v1531
        %1827 = vmatprep.subr.bf16.mxu0 %v1526
        %1828 = vmatpush2.bf16.msra.mxu0 %v1525
        %1829 = vmatprep.subr.bf16.mxu0 %v1520
        %1830 = vmatpush2.bf16.msra.mxu0 %v1519
        %1831 = vmatprep.subr.bf16.mxu0 %v1514
        %1832 = vmatpush2.bf16.msra.mxu0 %v1513
        %1833 = vmatprep.subr.bf16.mxu0 %v1508
        %1834 = vmatpush2.bf16.msra.mxu0 %v1507
        %1835 = vmatprep.subr.bf16.mxu0 %v1502
        %1836 = vmatpush2.bf16.msra.mxu0 %v1501
        %1837 = vmatprep.subr.bf16.mxu0 %v1496
        %1838 = vmatpush2.bf16.msra.mxu0 %v1495
        %1839 = vmatprep.subr.bf16.mxu0 %v1490
        %1840 = vmatpush2.bf16.msra.mxu0 %v1489
        %1841 = vmatprep.mubr.bf16.mxu0 %v802
        %1842 = vmatmul.mubr.bf16.gmra.mxu0 %v801
        %v1843 = vpop.f32.mrf.mxu0
        %v1844 = vadd.f32 %v994, %v1843
        %v1845 = vpop.f32.mrf.mxu0
        %v1846 = vadd.f32 %v998, %v1845
        %v1847 = vpop.f32.mrf.mxu0
        %v1848 = vpop.f32.mrf.mxu0
        %1849 = vdwg.mxu0
        %1850 = vmatprep.subr.bf16.mxu0 %v1580
        %1851 = vmatpush1.bf16.msra.mxu0 %v1579
        %1852 = vmatprep.subr.bf16.mxu0 %v1574
        %1853 = vmatpush1.bf16.msra.mxu0 %v1573
        %1854 = vmatprep.subr.bf16.mxu0 %v1568
        %1855 = vmatpush1.bf16.msra.mxu0 %v1567
        %1856 = vmatprep.subr.bf16.mxu0 %v1562
        %1857 = vmatpush1.bf16.msra.mxu0 %v1561
        %1858 = vmatprep.subr.bf16.mxu0 %v1556
        %1859 = vmatpush1.bf16.msra.mxu0 %v1555
        %1860 = vmatprep.subr.bf16.mxu0 %v1550
        %1861 = vmatpush1.bf16.msra.mxu0 %v1549
        %1862 = vmatprep.subr.bf16.mxu0 %v1544
        %1863 = vmatpush1.bf16.msra.mxu0 %v1543
        %1864 = vmatprep.subr.bf16.mxu0 %v1538
        %1865 = vmatpush1.bf16.msra.mxu0 %v1537
        %1866 = vmatprep.subr.bf16.mxu0 0
        %1867 = vmatpush2.bf16.msra.mxu0 0
        %1868 = vmatprep.subr.bf16.mxu0 0
        %1869 = vmatpush2.bf16.msra.mxu0 0
        %1870 = vmatprep.subr.bf16.mxu0 0
        %1871 = vmatpush2.bf16.msra.mxu0 0
        %1872 = vmatprep.subr.bf16.mxu0 0
        %1873 = vmatpush2.bf16.msra.mxu0 0
        %1874 = vmatprep.subr.bf16.mxu0 0
        %1875 = vmatpush2.bf16.msra.mxu0 0
        %1876 = vmatprep.subr.bf16.mxu0 0
        %1877 = vmatpush2.bf16.msra.mxu0 0
        %1878 = vmatprep.subr.bf16.mxu0 0
        %1879 = vmatpush2.bf16.msra.mxu0 0
        %1880 = vmatprep.subr.bf16.mxu0 0
        %1881 = vmatpush2.bf16.msra.mxu0 0
        %1882 = vmatprep.mubr.bf16.mxu0 0
        %1883 = vmatmul.mubr.bf16.gmra.mxu0 %v803
        %v1884 = vpop.f32.mrf.mxu0
        %v1885 = vadd.f32 %v1844, %v1884
        %v1886 = vpop.f32.mrf.mxu0
        %v1887 = vadd.f32 %v1846, %v1886
        %v1888 = vpop.f32.mrf.mxu0
        %v1889 = vpop.f32.mrf.mxu0
        %1890 = vdwg.mxu0
        %1891 = vmatprep.subr.bf16.mxu0 %v1486
        %1892 = vmatpush1.bf16.msra.mxu0 %v1485
        %1893 = vmatprep.subr.bf16.mxu0 %v1480
        %1894 = vmatpush1.bf16.msra.mxu0 %v1479
        %1895 = vmatprep.subr.bf16.mxu0 %v1474
        %1896 = vmatpush1.bf16.msra.mxu0 %v1473
        %1897 = vmatprep.subr.bf16.mxu0 %v1468
        %1898 = vmatpush1.bf16.msra.mxu0 %v1467
        %1899 = vmatprep.subr.bf16.mxu0 %v1462
        %1900 = vmatpush1.bf16.msra.mxu0 %v1461
        %1901 = vmatprep.subr.bf16.mxu0 %v1456
        %1902 = vmatpush1.bf16.msra.mxu0 %v1455
        %1903 = vmatprep.subr.bf16.mxu0 %v1450
        %1904 = vmatpush1.bf16.msra.mxu0 %v1449
        %1905 = vmatprep.subr.bf16.mxu0 %v1444
        %1906 = vmatpush1.bf16.msra.mxu0 %v1443
        %1907 = vmatprep.subr.bf16.mxu0 %v1534
        %1908 = vmatpush2.bf16.msra.mxu0 %v1533
        %1909 = vmatprep.subr.bf16.mxu0 %v1528
        %1910 = vmatpush2.bf16.msra.mxu0 %v1527
        %1911 = vmatprep.subr.bf16.mxu0 %v1522
        %1912 = vmatpush2.bf16.msra.mxu0 %v1521
        %1913 = vmatprep.subr.bf16.mxu0 %v1516
        %1914 = vmatpush2.bf16.msra.mxu0 %v1515
        %1915 = vmatprep.subr.bf16.mxu0 %v1510
        %1916 = vmatpush2.bf16.msra.mxu0 %v1509
        %1917 = vmatprep.subr.bf16.mxu0 %v1504
        %1918 = vmatpush2.bf16.msra.mxu0 %v1503
        %1919 = vmatprep.subr.bf16.mxu0 %v1498
        %1920 = vmatpush2.bf16.msra.mxu0 %v1497
        %1921 = vmatprep.subr.bf16.mxu0 %v1492
        %1922 = vmatpush2.bf16.msra.mxu0 %v1491
        %1923 = vmatprep.mubr.bf16.mxu0 %v802
        %1924 = vmatmul.mubr.bf16.gmra.mxu0 %v801
        %v1925 = vpop.f32.mrf.mxu0
        %v1926 = vadd.f32 %v1002, %v1925
        %v1927 = vpop.f32.mrf.mxu0
        %v1928 = vadd.f32 %v1006, %v1927
        %v1929 = vpop.f32.mrf.mxu0
        %v1930 = vpop.f32.mrf.mxu0
        %1931 = vdwg.mxu0
        %1932 = vmatprep.subr.bf16.mxu0 %v1582
        %1933 = vmatpush1.bf16.msra.mxu0 %v1581
        %1934 = vmatprep.subr.bf16.mxu0 %v1576
        %1935 = vmatpush1.bf16.msra.mxu0 %v1575
        %1936 = vmatprep.subr.bf16.mxu0 %v1570
        %1937 = vmatpush1.bf16.msra.mxu0 %v1569
        %1938 = vmatprep.subr.bf16.mxu0 %v1564
        %1939 = vmatpush1.bf16.msra.mxu0 %v1563
        %1940 = vmatprep.subr.bf16.mxu0 %v1558
        %1941 = vmatpush1.bf16.msra.mxu0 %v1557
        %1942 = vmatprep.subr.bf16.mxu0 %v1552
        %1943 = vmatpush1.bf16.msra.mxu0 %v1551
        %1944 = vmatprep.subr.bf16.mxu0 %v1546
        %1945 = vmatpush1.bf16.msra.mxu0 %v1545
        %1946 = vmatprep.subr.bf16.mxu0 %v1540
        %1947 = vmatpush1.bf16.msra.mxu0 %v1539
        %1948 = vmatprep.subr.bf16.mxu0 0
        %1949 = vmatpush2.bf16.msra.mxu0 0
        %1950 = vmatprep.subr.bf16.mxu0 0
        %1951 = vmatpush2.bf16.msra.mxu0 0
        %1952 = vmatprep.subr.bf16.mxu0 0
        %1953 = vmatpush2.bf16.msra.mxu0 0
        %1954 = vmatprep.subr.bf16.mxu0 0
        %1955 = vmatpush2.bf16.msra.mxu0 0
        %1956 = vmatprep.subr.bf16.mxu0 0
        %1957 = vmatpush2.bf16.msra.mxu0 0
        %1958 = vmatprep.subr.bf16.mxu0 0
        %1959 = vmatpush2.bf16.msra.mxu0 0
        %1960 = vmatprep.subr.bf16.mxu0 0
        %1961 = vmatpush2.bf16.msra.mxu0 0
        %1962 = vmatprep.subr.bf16.mxu0 0
        %1963 = vmatpush2.bf16.msra.mxu0 0
        %1964 = vmatprep.mubr.bf16.mxu0 0
        %1965 = vmatmul.mubr.bf16.gmra.mxu0 %v803
        %v1966 = vpop.f32.mrf.mxu0
        %v1967 = vadd.f32 %v1926, %v1966
        %v1968 = vpop.f32.mrf.mxu0
        %v1969 = vadd.f32 %v1928, %v1968
        %v1970 = vpop.f32.mrf.mxu0
        %v1971 = vpop.f32.mrf.mxu0
        %1972 = vdwg.mxu0
        %v1973 = vmax.f32 %v1803, 0.0
        %v1974 = vmax.f32 %v1805, 0.0
        %v1975 = vmax.f32 %v1885, 0.0
        %v1976 = vmax.f32 %v1887, 0.0
        %v1977 = vmax.f32 %v1967, 0.0
        %v1978 = vmax.f32 %v1969, 0.0
        %v1979 = vpack.c.bf16 %v1973, %v1973
        %v1980 = vpack.c.bf16 %v1974, %v1974
        %v1981 = vpack.c.bf16 %v1975, %v1975
        %v1982 = vpack.c.bf16 %v1976, %v1976
        %v1983 = vpack.c.bf16 %v1977, %v1977
        %v1984 = vpack.c.bf16 %v1978, %v1978
        %v1985 = vld [vmem:[#allocation14] sm:$0xff]
        %v1986 = vld [vmem:[#allocation14 + $0x8] sm:$0xff]
        %v1987 = vld [vmem:[#allocation14 + $0x10] sm:$0xff]
        %v1988 = vld [vmem:[#allocation14 + $0x18] sm:$0xf]
        %v1989 = vld [vmem:[#allocation14 + $0x1c] sm:$0xff]
        %v1990 = vld [vmem:[#allocation14 + $0x24] sm:$0xff]
        %v1991 = vld [vmem:[#allocation14 + $0x2c] sm:$0xff]
        %v1992 = vld [vmem:[#allocation14 + $0x34] sm:$0xf]
        %v1993 = vld [vmem:[#allocation14 + $0x38] sm:$0xff]
        %v1994 = vld [vmem:[#allocation14 + $0x40] sm:$0xff]
        %v1995 = vld [vmem:[#allocation14 + $0x48] sm:$0xff]
        %v1996 = vld [vmem:[#allocation14 + $0x50] sm:$0xf]
        %v1997 = vld [vmem:[#allocation14 + $0x54] sm:$0xff]
        %v1998 = vld [vmem:[#allocation14 + $0x5c] sm:$0xff]
        %v1999 = vld [vmem:[#allocation14 + $0x64] sm:$0xff]
        %v2000 = vld [vmem:[#allocation14 + $0x6c] sm:$0xf]
        %v2001 = vld [vmem:[#allocation14 + $0x70] sm:$0xff]
        %v2002 = vld [vmem:[#allocation14 + $0x78] sm:$0xff]
        %v2003 = vld [vmem:[#allocation14 + $0x80] sm:$0xff]
        %v2004 = vld [vmem:[#allocation14 + $0x88] sm:$0xf]
        %v2005 = vld [vmem:[#allocation14 + $0x8c] sm:$0xff]
        %v2006 = vld [vmem:[#allocation14 + $0x94] sm:$0xff]
        %v2007 = vld [vmem:[#allocation14 + $0x9c] sm:$0xff]
        %v2008 = vld [vmem:[#allocation14 + $0xa4] sm:$0xf]
        %v2009 = vld [vmem:[#allocation14 + $0xa8] sm:$0xff]
        %v2010 = vld [vmem:[#allocation14 + $0xb0] sm:$0xff]
        %v2011 = vld [vmem:[#allocation14 + $0xb8] sm:$0xff]
        %v2012 = vld [vmem:[#allocation14 + $0xc0] sm:$0xf]
        %v2013 = vld [vmem:[#allocation14 + $0xc4] sm:$0xff]
        %v2014 = vld [vmem:[#allocation14 + $0xcc] sm:$0xff]
        %v2015 = vld [vmem:[#allocation14 + $0xd4] sm:$0xff]
        %v2016 = vld [vmem:[#allocation14 + $0xdc] sm:$0xf]
        %v2017 = vld [vmem:[#allocation14 + $0xe0] sm:$0xff]
        %v2018 = vld [vmem:[#allocation14 + $0xe8] sm:$0xff]
        %v2019 = vld [vmem:[#allocation14 + $0xf0] sm:$0xff]
        %v2020 = vld [vmem:[#allocation14 + $0xf8] sm:$0xf]
        %v2021 = vld [vmem:[#allocation14 + $0xfc] sm:$0xff]
        %v2022 = vld [vmem:[#allocation14 + $0x104] sm:$0xff]
        %v2023 = vld [vmem:[#allocation14 + $0x10c] sm:$0xff]
        %v2024 = vld [vmem:[#allocation14 + $0x114] sm:$0xf]
        %v2025 = vld [vmem:[#allocation14 + $0x118] sm:$0xff]
        %v2026 = vld [vmem:[#allocation14 + $0x120] sm:$0xff]
        %v2027 = vld [vmem:[#allocation14 + $0x128] sm:$0xff]
        %v2028 = vld [vmem:[#allocation14 + $0x130] sm:$0xf]
        %v2029 = vld [vmem:[#allocation14 + $0x134] sm:$0xff]
        %v2030 = vld [vmem:[#allocation14 + $0x13c] sm:$0xff]
        %v2031 = vld [vmem:[#allocation14 + $0x144] sm:$0xff]
        %v2032 = vld [vmem:[#allocation14 + $0x14c] sm:$0xf]
        %v2033 = vld [vmem:[#allocation14 + $0x150] sm:$0xff]
        %v2034 = vld [vmem:[#allocation14 + $0x158] sm:$0xff]
        %v2035 = vld [vmem:[#allocation14 + $0x160] sm:$0xff]
        %v2036 = vld [vmem:[#allocation14 + $0x168] sm:$0xf]
        %v2037 = vld [vmem:[#allocation14 + $0x16c] sm:$0xff]
        %v2038 = vld [vmem:[#allocation14 + $0x174] sm:$0xff]
        %v2039 = vld [vmem:[#allocation14 + $0x17c] sm:$0xff]
        %v2040 = vld [vmem:[#allocation14 + $0x184] sm:$0xf]
        %v2041 = vld [vmem:[#allocation14 + $0x188] sm:$0xff]
        %v2042 = vld [vmem:[#allocation14 + $0x190] sm:$0xff]
        %v2043 = vld [vmem:[#allocation14 + $0x198] sm:$0xff]
        %v2044 = vld [vmem:[#allocation14 + $0x1a0] sm:$0xf]
        %v2045 = vld [vmem:[#allocation14 + $0x1a4] sm:$0xff]
        %v2046 = vld [vmem:[#allocation14 + $0x1ac] sm:$0xff]
        %v2047 = vld [vmem:[#allocation14 + $0x1b4] sm:$0xff]
        %v2048 = vld [vmem:[#allocation14 + $0x1bc] sm:$0xf]
        %v2049 = vld [vmem:[#allocation14 + $0x1c0] sm:$0xff]
        %v2050 = vld [vmem:[#allocation14 + $0x1c8] sm:$0xff]
        %v2051 = vld [vmem:[#allocation14 + $0x1d0] sm:$0xff]
        %v2052 = vld [vmem:[#allocation14 + $0x1d8] sm:$0xf]
        %v2053 = vld [vmem:[#allocation14 + $0x1dc] sm:$0xff]
        %v2054 = vld [vmem:[#allocation14 + $0x1e4] sm:$0xff]
        %v2055 = vld [vmem:[#allocation14 + $0x1ec] sm:$0xff]
        %v2056 = vld [vmem:[#allocation14 + $0x1f4] sm:$0xf]
        %v2057 = vld [vmem:[#allocation14 + $0x1f8] sm:$0xff]
        %v2058 = vld [vmem:[#allocation14 + $0x200] sm:$0xff]
        %v2059 = vld [vmem:[#allocation14 + $0x208] sm:$0xff]
        %v2060 = vld [vmem:[#allocation14 + $0x210] sm:$0xf]
        %v2061 = vld [vmem:[#allocation14 + $0x214] sm:$0xff]
        %v2062 = vld [vmem:[#allocation14 + $0x21c] sm:$0xff]
        %v2063 = vld [vmem:[#allocation14 + $0x224] sm:$0xff]
        %v2064 = vld [vmem:[#allocation14 + $0x22c] sm:$0xf]
        %v2065 = vld [vmem:[#allocation14 + $0x230] sm:$0xff]
        %v2066 = vld [vmem:[#allocation14 + $0x238] sm:$0xff]
        %v2067 = vld [vmem:[#allocation14 + $0x240] sm:$0xff]
        %v2068 = vld [vmem:[#allocation14 + $0x248] sm:$0xf]
        %v2069 = vld [vmem:[#allocation14 + $0x24c] sm:$0xff]
        %v2070 = vld [vmem:[#allocation14 + $0x254] sm:$0xff]
        %v2071 = vld [vmem:[#allocation14 + $0x25c] sm:$0xff]
        %v2072 = vld [vmem:[#allocation14 + $0x264] sm:$0xf]
        %v2073 = vld [vmem:[#allocation14 + $0x268] sm:$0xff]
        %v2074 = vld [vmem:[#allocation14 + $0x270] sm:$0xff]
        %v2075 = vld [vmem:[#allocation14 + $0x278] sm:$0xff]
        %v2076 = vld [vmem:[#allocation14 + $0x280] sm:$0xf]
        %v2077 = vld [vmem:[#allocation14 + $0x284] sm:$0xff]
        %v2078 = vld [vmem:[#allocation14 + $0x28c] sm:$0xff]
        %v2079 = vld [vmem:[#allocation14 + $0x294] sm:$0xff]
        %v2080 = vld [vmem:[#allocation14 + $0x29c] sm:$0xf]
        %v2081 = vld [vmem:[#allocation14 + $0x2a0] sm:$0xff]
        %v2082 = vld [vmem:[#allocation14 + $0x2a8] sm:$0xff]
        %v2083 = vld [vmem:[#allocation14 + $0x2b0] sm:$0xff]
        %v2084 = vld [vmem:[#allocation14 + $0x2b8] sm:$0xf]
        %v2085 = vld [vmem:[#allocation14 + $0x2bc] sm:$0xff]
        %v2086 = vld [vmem:[#allocation14 + $0x2c4] sm:$0xff]
        %v2087 = vld [vmem:[#allocation14 + $0x2cc] sm:$0xff]
        %v2088 = vld [vmem:[#allocation14 + $0x2d4] sm:$0xf]
        %v2089 = vld [vmem:[#allocation14 + $0x2d8] sm:$0xff]
        %v2090 = vld [vmem:[#allocation14 + $0x2e0] sm:$0xff]
        %v2091 = vld [vmem:[#allocation14 + $0x2e8] sm:$0xff]
        %v2092 = vld [vmem:[#allocation14 + $0x2f0] sm:$0xf]
        %v2093 = vld [vmem:[#allocation14 + $0x2f4] sm:$0xff]
        %v2094 = vld [vmem:[#allocation14 + $0x2fc] sm:$0xff]
        %v2095 = vld [vmem:[#allocation14 + $0x304] sm:$0xff]
        %v2096 = vld [vmem:[#allocation14 + $0x30c] sm:$0xf]
        %v2097 = vld [vmem:[#allocation14 + $0x310] sm:$0xff]
        %v2098 = vld [vmem:[#allocation14 + $0x318] sm:$0xff]
        %v2099 = vld [vmem:[#allocation14 + $0x320] sm:$0xff]
        %v2100 = vld [vmem:[#allocation14 + $0x328] sm:$0xf]
        %v2101 = vld [vmem:[#allocation14 + $0x32c] sm:$0xff]
        %v2102 = vld [vmem:[#allocation14 + $0x334] sm:$0xff]
        %v2103 = vld [vmem:[#allocation14 + $0x33c] sm:$0xff]
        %v2104 = vld [vmem:[#allocation14 + $0x344] sm:$0xf]
        %v2105 = vld [vmem:[#allocation14 + $0x348] sm:$0xff]
        %v2106 = vld [vmem:[#allocation14 + $0x350] sm:$0xff]
        %v2107 = vld [vmem:[#allocation14 + $0x358] sm:$0xff]
        %v2108 = vld [vmem:[#allocation14 + $0x360] sm:$0xf]
        %v2109 = vld [vmem:[#allocation14 + $0x364] sm:$0xff]
        %v2110 = vld [vmem:[#allocation14 + $0x36c] sm:$0xff]
        %v2111 = vld [vmem:[#allocation14 + $0x374] sm:$0xff]
        %v2112 = vld [vmem:[#allocation14 + $0x37c] sm:$0xf]
        %v2113 = vld [vmem:[#allocation14 + $0x380] sm:$0xff]
        %v2114 = vld [vmem:[#allocation14 + $0x388] sm:$0xff]
        %v2115 = vld [vmem:[#allocation14 + $0x390] sm:$0xff]
        %v2116 = vld [vmem:[#allocation14 + $0x398] sm:$0xf]
        %v2117 = vld [vmem:[#allocation14 + $0x39c] sm:$0xff]
        %v2118 = vld [vmem:[#allocation14 + $0x3a4] sm:$0xff]
        %v2119 = vld [vmem:[#allocation14 + $0x3ac] sm:$0xff]
        %v2120 = vld [vmem:[#allocation14 + $0x3b4] sm:$0xf]
        %v2121 = vld [vmem:[#allocation14 + $0x3b8] sm:$0xff]
        %v2122 = vld [vmem:[#allocation14 + $0x3c0] sm:$0xff]
        %v2123 = vld [vmem:[#allocation14 + $0x3c8] sm:$0xff]
        %v2124 = vld [vmem:[#allocation14 + $0x3d0] sm:$0xf]
        %v2125 = vld [vmem:[#allocation14 + $0x3d4] sm:$0xff]
        %v2126 = vld [vmem:[#allocation14 + $0x3dc] sm:$0xff]
        %v2127 = vld [vmem:[#allocation14 + $0x3e4] sm:$0xff]
        %v2128 = vld [vmem:[#allocation14 + $0x3ec] sm:$0xf]
        %v2129 = vld [vmem:[#allocation14 + $0x3f0] sm:$0xff]
        %v2130 = vld [vmem:[#allocation14 + $0x3f8] sm:$0xff]
        %v2131 = vld [vmem:[#allocation14 + $0x400] sm:$0xff]
        %v2132 = vld [vmem:[#allocation14 + $0x408] sm:$0xf]
        %v2133 = vld [vmem:[#allocation14 + $0x40c] sm:$0xff]
        %v2134 = vld [vmem:[#allocation14 + $0x414] sm:$0xff]
        %v2135 = vld [vmem:[#allocation14 + $0x41c] sm:$0xff]
        %v2136 = vld [vmem:[#allocation14 + $0x424] sm:$0xf]
        %v2137 = vld [vmem:[#allocation14 + $0x428] sm:$0xff]
        %v2138 = vld [vmem:[#allocation14 + $0x430] sm:$0xff]
        %v2139 = vld [vmem:[#allocation14 + $0x438] sm:$0xff]
        %v2140 = vld [vmem:[#allocation14 + $0x440] sm:$0xf]
        %v2141 = vld [vmem:[#allocation14 + $0x444] sm:$0xff]
        %v2142 = vld [vmem:[#allocation14 + $0x44c] sm:$0xff]
        %v2143 = vld [vmem:[#allocation14 + $0x454] sm:$0xff]
        %v2144 = vld [vmem:[#allocation14 + $0x45c] sm:$0xf]
        %v2145 = vld [vmem:[#allocation14 + $0x460] sm:$0xff]
        %v2146 = vld [vmem:[#allocation14 + $0x468] sm:$0xff]
        %v2147 = vld [vmem:[#allocation14 + $0x470] sm:$0xff]
        %v2148 = vld [vmem:[#allocation14 + $0x478] sm:$0xf]
        %v2149 = vld [vmem:[#allocation14 + $0x47c] sm:$0xff]
        %v2150 = vld [vmem:[#allocation14 + $0x484] sm:$0xff]
        %v2151 = vld [vmem:[#allocation14 + $0x48c] sm:$0xff]
        %v2152 = vld [vmem:[#allocation14 + $0x494] sm:$0xf]
        %v2153 = vld [vmem:[#allocation14 + $0x498] sm:$0xff]
        %v2154 = vld [vmem:[#allocation14 + $0x4a0] sm:$0xff]
        %v2155 = vld [vmem:[#allocation14 + $0x4a8] sm:$0xff]
        %v2156 = vld [vmem:[#allocation14 + $0x4b0] sm:$0xf]
        %v2157 = vld [vmem:[#allocation14 + $0x4b4] sm:$0xff]
        %v2158 = vld [vmem:[#allocation14 + $0x4bc] sm:$0xff]
        %v2159 = vld [vmem:[#allocation14 + $0x4c4] sm:$0xff]
        %v2160 = vld [vmem:[#allocation14 + $0x4cc] sm:$0xf]
        %v2161 = vld [vmem:[#allocation14 + $0x4d0] sm:$0xff]
        %v2162 = vld [vmem:[#allocation14 + $0x4d8] sm:$0xff]
        %v2163 = vld [vmem:[#allocation14 + $0x4e0] sm:$0xff]
        %v2164 = vld [vmem:[#allocation14 + $0x4e8] sm:$0xf]
        %v2165 = vld [vmem:[#allocation14 + $0x4ec] sm:$0xff]
        %v2166 = vld [vmem:[#allocation14 + $0x4f4] sm:$0xff]
        %v2167 = vld [vmem:[#allocation14 + $0x4fc] sm:$0xff]
        %v2168 = vld [vmem:[#allocation14 + $0x504] sm:$0xf]
        %v2169 = vld [vmem:[#allocation14 + $0x508] sm:$0xff]
        %v2170 = vld [vmem:[#allocation14 + $0x510] sm:$0xff]
        %v2171 = vld [vmem:[#allocation14 + $0x518] sm:$0xff]
        %v2172 = vld [vmem:[#allocation14 + $0x520] sm:$0xf]
        %v2173 = vld [vmem:[#allocation14 + $0x524] sm:$0xff]
        %v2174 = vld [vmem:[#allocation14 + $0x52c] sm:$0xff]
        %v2175 = vld [vmem:[#allocation14 + $0x534] sm:$0xff]
        %v2176 = vld [vmem:[#allocation14 + $0x53c] sm:$0xf]
        %v2177 = vld [vmem:[#allocation14 + $0x540] sm:$0xff]
        %v2178 = vld [vmem:[#allocation14 + $0x548] sm:$0xff]
        %v2179 = vld [vmem:[#allocation14 + $0x550] sm:$0xff]
        %v2180 = vld [vmem:[#allocation14 + $0x558] sm:$0xf]
        %v2181 = vld [vmem:[#allocation14 + $0x55c] sm:$0xff]
        %v2182 = vld [vmem:[#allocation14 + $0x564] sm:$0xff]
        %v2183 = vld [vmem:[#allocation14 + $0x56c] sm:$0xff]
        %v2184 = vld [vmem:[#allocation14 + $0x574] sm:$0xf]
        %v2185 = vld [vmem:[#allocation14 + $0x578] sm:$0xff]
        %v2186 = vld [vmem:[#allocation14 + $0x580] sm:$0xff]
        %v2187 = vld [vmem:[#allocation14 + $0x588] sm:$0xff]
        %v2188 = vld [vmem:[#allocation14 + $0x590] sm:$0xf]
        %v2189 = vld [vmem:[#allocation14 + $0x594] sm:$0xff]
        %v2190 = vld [vmem:[#allocation14 + $0x59c] sm:$0xff]
        %v2191 = vld [vmem:[#allocation14 + $0x5a4] sm:$0xff]
        %v2192 = vld [vmem:[#allocation14 + $0x5ac] sm:$0xf]
        %v2193 = vld [vmem:[#allocation14 + $0x5b0] sm:$0xff]
        %v2194 = vld [vmem:[#allocation14 + $0x5b8] sm:$0xff]
        %v2195 = vld [vmem:[#allocation14 + $0x5c0] sm:$0xff]
        %v2196 = vld [vmem:[#allocation14 + $0x5c8] sm:$0xf]
        %v2197 = vld [vmem:[#allocation14 + $0x5cc] sm:$0xff]
        %v2198 = vld [vmem:[#allocation14 + $0x5d4] sm:$0xff]
        %v2199 = vld [vmem:[#allocation14 + $0x5dc] sm:$0xff]
        %v2200 = vld [vmem:[#allocation14 + $0x5e4] sm:$0xf]
        %v2201 = vld [vmem:[#allocation14 + $0x5e8] sm:$0xff]
        %v2202 = vld [vmem:[#allocation14 + $0x5f0] sm:$0xff]
        %v2203 = vld [vmem:[#allocation14 + $0x5f8] sm:$0xff]
        %v2204 = vld [vmem:[#allocation14 + $0x600] sm:$0xf]
        %v2205 = vld [vmem:[#allocation14 + $0x604] sm:$0xff]
        %v2206 = vld [vmem:[#allocation14 + $0x60c] sm:$0xff]
        %v2207 = vld [vmem:[#allocation14 + $0x614] sm:$0xff]
        %v2208 = vld [vmem:[#allocation14 + $0x61c] sm:$0xf]
        %v2209 = vld [vmem:[#allocation14 + $0x620] sm:$0xff]
        %v2210 = vld [vmem:[#allocation14 + $0x628] sm:$0xff]
        %v2211 = vld [vmem:[#allocation14 + $0x630] sm:$0xff]
        %v2212 = vld [vmem:[#allocation14 + $0x638] sm:$0xf]
        %v2213 = vld [vmem:[#allocation14 + $0x63c] sm:$0xff]
        %v2214 = vld [vmem:[#allocation14 + $0x644] sm:$0xff]
        %v2215 = vld [vmem:[#allocation14 + $0x64c] sm:$0xff]
        %v2216 = vld [vmem:[#allocation14 + $0x654] sm:$0xf]
        %v2217 = vld [vmem:[#allocation14 + $0x658] sm:$0xff]
        %v2218 = vld [vmem:[#allocation14 + $0x660] sm:$0xff]
        %v2219 = vld [vmem:[#allocation14 + $0x668] sm:$0xff]
        %v2220 = vld [vmem:[#allocation14 + $0x670] sm:$0xf]
        %v2221 = vld [vmem:[#allocation14 + $0x674] sm:$0xff]
        %v2222 = vld [vmem:[#allocation14 + $0x67c] sm:$0xff]
        %v2223 = vld [vmem:[#allocation14 + $0x684] sm:$0xff]
        %v2224 = vld [vmem:[#allocation14 + $0x68c] sm:$0xf]
        %v2225 = vld [vmem:[#allocation14 + $0x690] sm:$0xff]
        %v2226 = vld [vmem:[#allocation14 + $0x698] sm:$0xff]
        %v2227 = vld [vmem:[#allocation14 + $0x6a0] sm:$0xff]
        %v2228 = vld [vmem:[#allocation14 + $0x6a8] sm:$0xf]
        %v2229 = vld [vmem:[#allocation14 + $0x6ac] sm:$0xff]
        %v2230 = vld [vmem:[#allocation14 + $0x6b4] sm:$0xff]
        %v2231 = vld [vmem:[#allocation14 + $0x6bc] sm:$0xff]
        %v2232 = vld [vmem:[#allocation14 + $0x6c4] sm:$0xf]
        %v2233 = vld [vmem:[#allocation14 + $0x6c8] sm:$0xff]
        %v2234 = vld [vmem:[#allocation14 + $0x6d0] sm:$0xff]
        %v2235 = vld [vmem:[#allocation14 + $0x6d8] sm:$0xff]
        %v2236 = vld [vmem:[#allocation14 + $0x6e0] sm:$0xf]
        %v2237 = vld [vmem:[#allocation14 + $0x6e4] sm:$0xff]
        %v2238 = vld [vmem:[#allocation14 + $0x6ec] sm:$0xff]
        %v2239 = vld [vmem:[#allocation14 + $0x6f4] sm:$0xff]
        %v2240 = vld [vmem:[#allocation14 + $0x6fc] sm:$0xf]
        %v2241 = vld [vmem:[#allocation14 + $0x700] sm:$0xff]
        %v2242 = vld [vmem:[#allocation14 + $0x708] sm:$0xff]
        %v2243 = vld [vmem:[#allocation14 + $0x710] sm:$0xff]
        %v2244 = vld [vmem:[#allocation14 + $0x718] sm:$0xf]
        %v2245 = vld [vmem:[#allocation14 + $0x71c] sm:$0xff]
        %v2246 = vld [vmem:[#allocation14 + $0x724] sm:$0xff]
        %v2247 = vld [vmem:[#allocation14 + $0x72c] sm:$0xff]
        %v2248 = vld [vmem:[#allocation14 + $0x734] sm:$0xf]
        %v2249 = vld [vmem:[#allocation14 + $0x738] sm:$0xff]
        %v2250 = vld [vmem:[#allocation14 + $0x740] sm:$0xff]
        %v2251 = vld [vmem:[#allocation14 + $0x748] sm:$0xff]
        %v2252 = vld [vmem:[#allocation14 + $0x750] sm:$0xf]
        %v2253 = vld [vmem:[#allocation14 + $0x754] sm:$0xff]
        %v2254 = vld [vmem:[#allocation14 + $0x75c] sm:$0xff]
        %v2255 = vld [vmem:[#allocation14 + $0x764] sm:$0xff]
        %v2256 = vld [vmem:[#allocation14 + $0x76c] sm:$0xf]
        %v2257 = vld [vmem:[#allocation14 + $0x770] sm:$0xff]
        %v2258 = vld [vmem:[#allocation14 + $0x778] sm:$0xff]
        %v2259 = vld [vmem:[#allocation14 + $0x780] sm:$0xff]
        %v2260 = vld [vmem:[#allocation14 + $0x788] sm:$0xf]
        %v2261 = vld [vmem:[#allocation14 + $0x78c] sm:$0xff]
        %v2262 = vld [vmem:[#allocation14 + $0x794] sm:$0xff]
        %v2263 = vld [vmem:[#allocation14 + $0x79c] sm:$0xff]
        %v2264 = vld [vmem:[#allocation14 + $0x7a4] sm:$0xf]
        %v2265 = vld [vmem:[#allocation14 + $0x7a8] sm:$0xff]
        %v2266 = vld [vmem:[#allocation14 + $0x7b0] sm:$0xff]
        %v2267 = vld [vmem:[#allocation14 + $0x7b8] sm:$0xff]
        %v2268 = vld [vmem:[#allocation14 + $0x7c0] sm:$0xf]
        %v2269 = vld [vmem:[#allocation14 + $0x7c4] sm:$0xff]
        %v2270 = vld [vmem:[#allocation14 + $0x7cc] sm:$0xff]
        %v2271 = vld [vmem:[#allocation14 + $0x7d4] sm:$0xff]
        %v2272 = vld [vmem:[#allocation14 + $0x7dc] sm:$0xf]
        %v2273 = vld [vmem:[#allocation14 + $0x7e0] sm:$0xff]
        %v2274 = vld [vmem:[#allocation14 + $0x7e8] sm:$0xff]
        %v2275 = vld [vmem:[#allocation14 + $0x7f0] sm:$0xff]
        %v2276 = vld [vmem:[#allocation14 + $0x7f8] sm:$0xf]
        %v2277 = vld [vmem:[#allocation14 + $0x7fc] sm:$0xff]
        %v2278 = vld [vmem:[#allocation14 + $0x804] sm:$0xff]
        %v2279 = vld [vmem:[#allocation14 + $0x80c] sm:$0xff]
        %v2280 = vld [vmem:[#allocation14 + $0x814] sm:$0xf]
        %v2281 = vld [vmem:[#allocation14 + $0x818] sm:$0xff]
        %v2282 = vld [vmem:[#allocation14 + $0x820] sm:$0xff]
        %v2283 = vld [vmem:[#allocation14 + $0x828] sm:$0xff]
        %v2284 = vld [vmem:[#allocation14 + $0x830] sm:$0xf]
        %v2285 = vld [vmem:[#allocation14 + $0x834] sm:$0xff]
        %v2286 = vld [vmem:[#allocation14 + $0x83c] sm:$0xff]
        %v2287 = vld [vmem:[#allocation14 + $0x844] sm:$0xff]
        %v2288 = vld [vmem:[#allocation14 + $0x84c] sm:$0xf]
        %v2289 = vld [vmem:[#allocation14 + $0x850] sm:$0xff]
        %v2290 = vld [vmem:[#allocation14 + $0x858] sm:$0xff]
        %v2291 = vld [vmem:[#allocation14 + $0x860] sm:$0xff]
        %v2292 = vld [vmem:[#allocation14 + $0x868] sm:$0xf]
        %v2293 = vld [vmem:[#allocation14 + $0x86c] sm:$0xff]
        %v2294 = vld [vmem:[#allocation14 + $0x874] sm:$0xff]
        %v2295 = vld [vmem:[#allocation14 + $0x87c] sm:$0xff]
        %v2296 = vld [vmem:[#allocation14 + $0x884] sm:$0xf]
        %v2297 = vld [vmem:[#allocation14 + $0x888] sm:$0xff]
        %v2298 = vld [vmem:[#allocation14 + $0x890] sm:$0xff]
        %v2299 = vld [vmem:[#allocation14 + $0x898] sm:$0xff]
        %v2300 = vld [vmem:[#allocation14 + $0x8a0] sm:$0xf]
        %v2301 = vld [vmem:[#allocation14 + $0x8a4] sm:$0xff]
        %v2302 = vld [vmem:[#allocation14 + $0x8ac] sm:$0xff]
        %v2303 = vld [vmem:[#allocation14 + $0x8b4] sm:$0xff]
        %v2304 = vld [vmem:[#allocation14 + $0x8bc] sm:$0xf]
        %v2305 = vld [vmem:[#allocation14 + $0x8c0] sm:$0xff]
        %v2306 = vld [vmem:[#allocation14 + $0x8c8] sm:$0xff]
        %v2307 = vld [vmem:[#allocation14 + $0x8d0] sm:$0xff]
        %v2308 = vld [vmem:[#allocation14 + $0x8d8] sm:$0xf]
        %v2309 = vld [vmem:[#allocation14 + $0x8dc] sm:$0xff]
        %v2310 = vld [vmem:[#allocation14 + $0x8e4] sm:$0xff]
        %v2311 = vld [vmem:[#allocation14 + $0x8ec] sm:$0xff]
        %v2312 = vld [vmem:[#allocation14 + $0x8f4] sm:$0xf]
        %v2313 = vld [vmem:[#allocation14 + $0x8f8] sm:$0xff]
        %v2314 = vld [vmem:[#allocation14 + $0x900] sm:$0xff]
        %v2315 = vld [vmem:[#allocation14 + $0x908] sm:$0xff]
        %v2316 = vld [vmem:[#allocation14 + $0x910] sm:$0xf]
        %v2317 = vld [vmem:[#allocation14 + $0x914] sm:$0xff]
        %v2318 = vld [vmem:[#allocation14 + $0x91c] sm:$0xff]
        %v2319 = vld [vmem:[#allocation14 + $0x924] sm:$0xff]
        %v2320 = vld [vmem:[#allocation14 + $0x92c] sm:$0xf]
        %v2321 = vld [vmem:[#allocation14 + $0x930] sm:$0xff]
        %v2322 = vld [vmem:[#allocation14 + $0x938] sm:$0xff]
        %v2323 = vld [vmem:[#allocation14 + $0x940] sm:$0xff]
        %v2324 = vld [vmem:[#allocation14 + $0x948] sm:$0xf]
        %v2325 = vld [vmem:[#allocation14 + $0x94c] sm:$0xff]
        %v2326 = vld [vmem:[#allocation14 + $0x954] sm:$0xff]
        %v2327 = vld [vmem:[#allocation14 + $0x95c] sm:$0xff]
        %v2328 = vld [vmem:[#allocation14 + $0x964] sm:$0xf]
        %v2329 = vld [vmem:[#allocation14 + $0x968] sm:$0xff]
        %v2330 = vld [vmem:[#allocation14 + $0x970] sm:$0xff]
        %v2331 = vld [vmem:[#allocation14 + $0x978] sm:$0xff]
        %v2332 = vld [vmem:[#allocation14 + $0x980] sm:$0xf]
        %v2333 = vld [vmem:[#allocation14 + $0x984] sm:$0xff]
        %v2334 = vld [vmem:[#allocation14 + $0x98c] sm:$0xff]
        %v2335 = vld [vmem:[#allocation14 + $0x994] sm:$0xff]
        %v2336 = vld [vmem:[#allocation14 + $0x99c] sm:$0xf]
        %v2337 = vld [vmem:[#allocation14 + $0x9a0] sm:$0xff]
        %v2338 = vld [vmem:[#allocation14 + $0x9a8] sm:$0xff]
        %v2339 = vld [vmem:[#allocation14 + $0x9b0] sm:$0xff]
        %v2340 = vld [vmem:[#allocation14 + $0x9b8] sm:$0xf]
        %v2341 = vld [vmem:[#allocation14 + $0x9bc] sm:$0xff]
        %v2342 = vld [vmem:[#allocation14 + $0x9c4] sm:$0xff]
        %v2343 = vld [vmem:[#allocation14 + $0x9cc] sm:$0xff]
        %v2344 = vld [vmem:[#allocation14 + $0x9d4] sm:$0xf]
        %v2345 = vld [vmem:[#allocation14 + $0x9d8] sm:$0xff]
        %v2346 = vld [vmem:[#allocation14 + $0x9e0] sm:$0xff]
        %v2347 = vld [vmem:[#allocation14 + $0x9e8] sm:$0xff]
        %v2348 = vld [vmem:[#allocation14 + $0x9f0] sm:$0xf]
        %v2349 = vld [vmem:[#allocation14 + $0x9f4] sm:$0xff]
        %v2350 = vld [vmem:[#allocation14 + $0x9fc] sm:$0xff]
        %v2351 = vld [vmem:[#allocation14 + $0xa04] sm:$0xff]
        %v2352 = vld [vmem:[#allocation14 + $0xa0c] sm:$0xf]
        %v2353 = vld [vmem:[#allocation14 + $0xa10] sm:$0xff]
        %v2354 = vld [vmem:[#allocation14 + $0xa18] sm:$0xff]
        %v2355 = vld [vmem:[#allocation14 + $0xa20] sm:$0xff]
        %v2356 = vld [vmem:[#allocation14 + $0xa28] sm:$0xf]
        %v2357 = vld [vmem:[#allocation14 + $0xa2c] sm:$0xff]
        %v2358 = vld [vmem:[#allocation14 + $0xa34] sm:$0xff]
        %v2359 = vld [vmem:[#allocation14 + $0xa3c] sm:$0xff]
        %v2360 = vld [vmem:[#allocation14 + $0xa44] sm:$0xf]
        %v2361 = vld [vmem:[#allocation14 + $0xa48] sm:$0xff]
        %v2362 = vld [vmem:[#allocation14 + $0xa50] sm:$0xff]
        %v2363 = vld [vmem:[#allocation14 + $0xa58] sm:$0xff]
        %v2364 = vld [vmem:[#allocation14 + $0xa60] sm:$0xf]
        %v2365 = vld [vmem:[#allocation14 + $0xa64] sm:$0xff]
        %v2366 = vld [vmem:[#allocation14 + $0xa6c] sm:$0xff]
        %v2367 = vld [vmem:[#allocation14 + $0xa74] sm:$0xff]
        %v2368 = vld [vmem:[#allocation14 + $0xa7c] sm:$0xf]
        %v2369 = vld [vmem:[#allocation16] sm:$0x7f]
        %v2370 = vunpack.c.l.bf16 %v2369
        %v2371 = vunpack.c.h.bf16 %v2369
        %v2374 = vlaneseq
        %v2375 = vshrl.u32 %v2374, 7
        %v2376 = vsub.s32 0, %v2375
        %v2377 = vrot.slane %v2370, %v2376
        %v2378 = vlaneseq
        %v2379 = vshrl.u32 %v2378, 7
        %v2380 = vsub.s32 2, %v2379
        %v2381 = vrot.slane %v2370, %v2380
        %v2382 = vlaneseq
        %v2383 = vshrl.u32 %v2382, 7
        %v2384 = vsub.s32 4, %v2383
        %v2385 = vrot.slane %v2370, %v2384
        %v2386 = vlaneseq
        %v2387 = vshrl.u32 %v2386, 7
        %v2388 = vsub.s32 6, %v2387
        %v2389 = vrot.slane %v2370, %v2388
        %v2390 = vlaneseq
        %v2391 = vshrl.u32 %v2390, 7
        %v2392 = vsub.s32 0, %v2391
        %v2393 = vrot.slane %v2371, %v2392
        %v2394 = vlaneseq
        %v2395 = vshrl.u32 %v2394, 7
        %v2396 = vsub.s32 2, %v2395
        %v2397 = vrot.slane %v2371, %v2396
        %v2398 = vlaneseq
        %v2399 = vshrl.u32 %v2398, 7
        %v2400 = vsub.s32 4, %v2399
        %v2401 = vrot.slane %v2371, %v2400
        %v2409 = vlaneseq
        %v2410 = vshrl.u32 %v2409, 7
        %v2411 = vsub.s32 0, %v2410
        %v2412 = vrot.slane %v2377, %v2411
        %v2413 = vlaneseq
        %v2414 = vshrl.u32 %v2413, 7
        %v2415 = vsub.s32 0, %v2414
        %v2416 = vrot.slane %v2381, %v2415
        %v2417 = vlaneseq
        %v2418 = vshrl.u32 %v2417, 7
        %v2419 = vsub.s32 0, %v2418
        %v2420 = vrot.slane %v2385, %v2419
        %v2421 = vlaneseq
        %v2422 = vshrl.u32 %v2421, 7
        %v2423 = vsub.s32 0, %v2422
        %v2424 = vrot.slane %v2389, %v2423
        %v2425 = vlaneseq
        %v2426 = vshrl.u32 %v2425, 7
        %v2427 = vsub.s32 0, %v2426
        %v2428 = vrot.slane %v2393, %v2427
        %v2429 = vlaneseq
        %v2430 = vshrl.u32 %v2429, 7
        %v2431 = vsub.s32 0, %v2430
        %v2432 = vrot.slane %v2397, %v2431
        %v2433 = vlaneseq
        %v2434 = vshrl.u32 %v2433, 7
        %v2435 = vsub.s32 0, %v2434
        %v2436 = vrot.slane %v2401, %v2435
        %v2821 = vunpack.c.l.b16 %v1985
        %v2822 = vunpack.c.h.b16 %v1985
        %v2823 = vunpack.c.l.b16 %v1986
        %v2824 = vunpack.c.h.b16 %v1986
        %v2825 = vunpack.c.l.b16 %v1987
        %v2826 = vunpack.c.h.b16 %v1987
        %v2827 = vunpack.c.l.b16 %v1988
        %v2828 = vunpack.c.l.b16 %v1989
        %v2829 = vunpack.c.h.b16 %v1989
        %v2830 = vunpack.c.l.b16 %v1990
        %v2831 = vunpack.c.h.b16 %v1990
        %v2832 = vunpack.c.l.b16 %v1991
        %v2833 = vunpack.c.h.b16 %v1991
        %v2834 = vunpack.c.l.b16 %v1992
        %v2835 = vunpack.c.l.b16 %v1993
        %v2836 = vunpack.c.h.b16 %v1993
        %v2837 = vunpack.c.l.b16 %v1994
        %v2838 = vunpack.c.h.b16 %v1994
        %v2839 = vunpack.c.l.b16 %v1995
        %v2840 = vunpack.c.h.b16 %v1995
        %v2841 = vunpack.c.l.b16 %v1996
        %v2842 = vunpack.c.l.b16 %v1997
        %v2843 = vunpack.c.h.b16 %v1997
        %v2844 = vunpack.c.l.b16 %v1998
        %v2845 = vunpack.c.h.b16 %v1998
        %v2846 = vunpack.c.l.b16 %v1999
        %v2847 = vunpack.c.h.b16 %v1999
        %v2848 = vunpack.c.l.b16 %v2000
        %v2849 = vunpack.c.l.b16 %v2001
        %v2850 = vunpack.c.h.b16 %v2001
        %v2851 = vunpack.c.l.b16 %v2002
        %v2852 = vunpack.c.h.b16 %v2002
        %v2853 = vunpack.c.l.b16 %v2003
        %v2854 = vunpack.c.h.b16 %v2003
        %v2855 = vunpack.c.l.b16 %v2004
        %v2856 = vunpack.c.l.b16 %v2005
        %v2857 = vunpack.c.h.b16 %v2005
        %v2858 = vunpack.c.l.b16 %v2006
        %v2859 = vunpack.c.h.b16 %v2006
        %v2860 = vunpack.c.l.b16 %v2007
        %v2861 = vunpack.c.h.b16 %v2007
        %v2862 = vunpack.c.l.b16 %v2008
        %v2863 = vunpack.c.l.b16 %v2009
        %v2864 = vunpack.c.h.b16 %v2009
        %v2865 = vunpack.c.l.b16 %v2010
        %v2866 = vunpack.c.h.b16 %v2010
        %v2867 = vunpack.c.l.b16 %v2011
        %v2868 = vunpack.c.h.b16 %v2011
        %v2869 = vunpack.c.l.b16 %v2012
        %v2870 = vunpack.c.l.b16 %v2013
        %v2871 = vunpack.c.h.b16 %v2013
        %v2872 = vunpack.c.l.b16 %v2014
        %v2873 = vunpack.c.h.b16 %v2014
        %v2874 = vunpack.c.l.b16 %v2015
        %v2875 = vunpack.c.h.b16 %v2015
        %v2876 = vunpack.c.l.b16 %v2016
        %v2877 = vunpack.c.l.b16 %v2017
        %v2878 = vunpack.c.h.b16 %v2017
        %v2879 = vunpack.c.l.b16 %v2018
        %v2880 = vunpack.c.h.b16 %v2018
        %v2881 = vunpack.c.l.b16 %v2019
        %v2882 = vunpack.c.h.b16 %v2019
        %v2883 = vunpack.c.l.b16 %v2020
        %v2884 = vunpack.c.l.b16 %v2021
        %v2885 = vunpack.c.h.b16 %v2021
        %v2886 = vunpack.c.l.b16 %v2022
        %v2887 = vunpack.c.h.b16 %v2022
        %v2888 = vunpack.c.l.b16 %v2023
        %v2889 = vunpack.c.h.b16 %v2023
        %v2890 = vunpack.c.l.b16 %v2024
        %v2891 = vunpack.c.l.b16 %v2025
        %v2892 = vunpack.c.h.b16 %v2025
        %v2893 = vunpack.c.l.b16 %v2026
        %v2894 = vunpack.c.h.b16 %v2026
        %v2895 = vunpack.c.l.b16 %v2027
        %v2896 = vunpack.c.h.b16 %v2027
        %v2897 = vunpack.c.l.b16 %v2028
        %v2898 = vunpack.c.l.b16 %v2029
        %v2899 = vunpack.c.h.b16 %v2029
        %v2900 = vunpack.c.l.b16 %v2030
        %v2901 = vunpack.c.h.b16 %v2030
        %v2902 = vunpack.c.l.b16 %v2031
        %v2903 = vunpack.c.h.b16 %v2031
        %v2904 = vunpack.c.l.b16 %v2032
        %v2905 = vunpack.c.l.b16 %v2033
        %v2906 = vunpack.c.h.b16 %v2033
        %v2907 = vunpack.c.l.b16 %v2034
        %v2908 = vunpack.c.h.b16 %v2034
        %v2909 = vunpack.c.l.b16 %v2035
        %v2910 = vunpack.c.h.b16 %v2035
        %v2911 = vunpack.c.l.b16 %v2036
        %v2912 = vunpack.c.l.b16 %v2037
        %v2913 = vunpack.c.h.b16 %v2037
        %v2914 = vunpack.c.l.b16 %v2038
        %v2915 = vunpack.c.h.b16 %v2038
        %v2916 = vunpack.c.l.b16 %v2039
        %v2917 = vunpack.c.h.b16 %v2039
        %v2918 = vunpack.c.l.b16 %v2040
        %v2919 = vunpack.c.l.b16 %v2041
        %v2920 = vunpack.c.h.b16 %v2041
        %v2921 = vunpack.c.l.b16 %v2042
        %v2922 = vunpack.c.h.b16 %v2042
        %v2923 = vunpack.c.l.b16 %v2043
        %v2924 = vunpack.c.h.b16 %v2043
        %v2925 = vunpack.c.l.b16 %v2044
        %v2926 = vunpack.c.l.b16 %v2045
        %v2927 = vunpack.c.h.b16 %v2045
        %v2928 = vunpack.c.l.b16 %v2046
        %v2929 = vunpack.c.h.b16 %v2046
        %v2930 = vunpack.c.l.b16 %v2047
        %v2931 = vunpack.c.h.b16 %v2047
        %v2932 = vunpack.c.l.b16 %v2048
        %v2933 = vunpack.c.l.b16 %v2049
        %v2934 = vunpack.c.h.b16 %v2049
        %v2935 = vunpack.c.l.b16 %v2050
        %v2936 = vunpack.c.h.b16 %v2050
        %v2937 = vunpack.c.l.b16 %v2051
        %v2938 = vunpack.c.h.b16 %v2051
        %v2939 = vunpack.c.l.b16 %v2052
        %v2940 = vunpack.c.l.b16 %v2053
        %v2941 = vunpack.c.h.b16 %v2053
        %v2942 = vunpack.c.l.b16 %v2054
        %v2943 = vunpack.c.h.b16 %v2054
        %v2944 = vunpack.c.l.b16 %v2055
        %v2945 = vunpack.c.h.b16 %v2055
        %v2946 = vunpack.c.l.b16 %v2056
        %v2947 = vunpack.c.l.b16 %v2057
        %v2948 = vunpack.c.h.b16 %v2057
        %v2949 = vunpack.c.l.b16 %v2058
        %v2950 = vunpack.c.h.b16 %v2058
        %v2951 = vunpack.c.l.b16 %v2059
        %v2952 = vunpack.c.h.b16 %v2059
        %v2953 = vunpack.c.l.b16 %v2060
        %v2954 = vunpack.c.l.b16 %v2061
        %v2955 = vunpack.c.h.b16 %v2061
        %v2956 = vunpack.c.l.b16 %v2062
        %v2957 = vunpack.c.h.b16 %v2062
        %v2958 = vunpack.c.l.b16 %v2063
        %v2959 = vunpack.c.h.b16 %v2063
        %v2960 = vunpack.c.l.b16 %v2064
        %v2961 = vunpack.c.l.b16 %v2065
        %v2962 = vunpack.c.h.b16 %v2065
        %v2963 = vunpack.c.l.b16 %v2066
        %v2964 = vunpack.c.h.b16 %v2066
        %v2965 = vunpack.c.l.b16 %v2067
        %v2966 = vunpack.c.h.b16 %v2067
        %v2967 = vunpack.c.l.b16 %v2068
        %v2968 = vunpack.c.l.b16 %v2069
        %v2969 = vunpack.c.h.b16 %v2069
        %v2970 = vunpack.c.l.b16 %v2070
        %v2971 = vunpack.c.h.b16 %v2070
        %v2972 = vunpack.c.l.b16 %v2071
        %v2973 = vunpack.c.h.b16 %v2071
        %v2974 = vunpack.c.l.b16 %v2072
        %v2975 = vunpack.c.l.b16 %v2073
        %v2976 = vunpack.c.h.b16 %v2073
        %v2977 = vunpack.c.l.b16 %v2074
        %v2978 = vunpack.c.h.b16 %v2074
        %v2979 = vunpack.c.l.b16 %v2075
        %v2980 = vunpack.c.h.b16 %v2075
        %v2981 = vunpack.c.l.b16 %v2076
        %v2982 = vunpack.c.l.b16 %v2077
        %v2983 = vunpack.c.h.b16 %v2077
        %v2984 = vunpack.c.l.b16 %v2078
        %v2985 = vunpack.c.h.b16 %v2078
        %v2986 = vunpack.c.l.b16 %v2079
        %v2987 = vunpack.c.h.b16 %v2079
        %v2988 = vunpack.c.l.b16 %v2080
        %v2989 = vunpack.c.l.b16 %v2081
        %v2990 = vunpack.c.h.b16 %v2081
        %v2991 = vunpack.c.l.b16 %v2082
        %v2992 = vunpack.c.h.b16 %v2082
        %v2993 = vunpack.c.l.b16 %v2083
        %v2994 = vunpack.c.h.b16 %v2083
        %v2995 = vunpack.c.l.b16 %v2084
        %v2996 = vunpack.c.l.b16 %v2085
        %v2997 = vunpack.c.h.b16 %v2085
        %v2998 = vunpack.c.l.b16 %v2086
        %v2999 = vunpack.c.h.b16 %v2086
        %v3000 = vunpack.c.l.b16 %v2087
        %v3001 = vunpack.c.h.b16 %v2087
        %v3002 = vunpack.c.l.b16 %v2088
        %v3003 = vunpack.c.l.b16 %v2089
        %v3004 = vunpack.c.h.b16 %v2089
        %v3005 = vunpack.c.l.b16 %v2090
        %v3006 = vunpack.c.h.b16 %v2090
        %v3007 = vunpack.c.l.b16 %v2091
        %v3008 = vunpack.c.h.b16 %v2091
        %v3009 = vunpack.c.l.b16 %v2092
        %v3010 = vunpack.c.l.b16 %v2093
        %v3011 = vunpack.c.h.b16 %v2093
        %v3012 = vunpack.c.l.b16 %v2094
        %v3013 = vunpack.c.h.b16 %v2094
        %v3014 = vunpack.c.l.b16 %v2095
        %v3015 = vunpack.c.h.b16 %v2095
        %v3016 = vunpack.c.l.b16 %v2096
        %v3017 = vunpack.c.l.b16 %v2097
        %v3018 = vunpack.c.h.b16 %v2097
        %v3019 = vunpack.c.l.b16 %v2098
        %v3020 = vunpack.c.h.b16 %v2098
        %v3021 = vunpack.c.l.b16 %v2099
        %v3022 = vunpack.c.h.b16 %v2099
        %v3023 = vunpack.c.l.b16 %v2100
        %v3024 = vunpack.c.l.b16 %v2101
        %v3025 = vunpack.c.h.b16 %v2101
        %v3026 = vunpack.c.l.b16 %v2102
        %v3027 = vunpack.c.h.b16 %v2102
        %v3028 = vunpack.c.l.b16 %v2103
        %v3029 = vunpack.c.h.b16 %v2103
        %v3030 = vunpack.c.l.b16 %v2104
        %v3031 = vunpack.c.l.b16 %v2105
        %v3032 = vunpack.c.h.b16 %v2105
        %v3033 = vunpack.c.l.b16 %v2106
        %v3034 = vunpack.c.h.b16 %v2106
        %v3035 = vunpack.c.l.b16 %v2107
        %v3036 = vunpack.c.h.b16 %v2107
        %v3037 = vunpack.c.l.b16 %v2108
        %v3038 = vunpack.c.l.b16 %v2109
        %v3039 = vunpack.c.h.b16 %v2109
        %v3040 = vunpack.c.l.b16 %v2110
        %v3041 = vunpack.c.h.b16 %v2110
        %v3042 = vunpack.c.l.b16 %v2111
        %v3043 = vunpack.c.h.b16 %v2111
        %v3044 = vunpack.c.l.b16 %v2112
        %v3045 = vunpack.c.l.b16 %v2113
        %v3046 = vunpack.c.h.b16 %v2113
        %v3047 = vunpack.c.l.b16 %v2114
        %v3048 = vunpack.c.h.b16 %v2114
        %v3049 = vunpack.c.l.b16 %v2115
        %v3050 = vunpack.c.h.b16 %v2115
        %v3051 = vunpack.c.l.b16 %v2116
        %v3052 = vunpack.c.l.b16 %v2117
        %v3053 = vunpack.c.h.b16 %v2117
        %v3054 = vunpack.c.l.b16 %v2118
        %v3055 = vunpack.c.h.b16 %v2118
        %v3056 = vunpack.c.l.b16 %v2119
        %v3057 = vunpack.c.h.b16 %v2119
        %v3058 = vunpack.c.l.b16 %v2120
        %v3059 = vunpack.c.l.b16 %v2121
        %v3060 = vunpack.c.h.b16 %v2121
        %v3061 = vunpack.c.l.b16 %v2122
        %v3062 = vunpack.c.h.b16 %v2122
        %v3063 = vunpack.c.l.b16 %v2123
        %v3064 = vunpack.c.h.b16 %v2123
        %v3065 = vunpack.c.l.b16 %v2124
        %v3066 = vunpack.c.l.b16 %v2125
        %v3067 = vunpack.c.h.b16 %v2125
        %v3068 = vunpack.c.l.b16 %v2126
        %v3069 = vunpack.c.h.b16 %v2126
        %v3070 = vunpack.c.l.b16 %v2127
        %v3071 = vunpack.c.h.b16 %v2127
        %v3072 = vunpack.c.l.b16 %v2128
        %v3073 = vunpack.c.l.b16 %v2129
        %v3074 = vunpack.c.h.b16 %v2129
        %v3075 = vunpack.c.l.b16 %v2130
        %v3076 = vunpack.c.h.b16 %v2130
        %v3077 = vunpack.c.l.b16 %v2131
        %v3078 = vunpack.c.h.b16 %v2131
        %v3079 = vunpack.c.l.b16 %v2132
        %v3080 = vunpack.c.l.b16 %v2133
        %v3081 = vunpack.c.h.b16 %v2133
        %v3082 = vunpack.c.l.b16 %v2134
        %v3083 = vunpack.c.h.b16 %v2134
        %v3084 = vunpack.c.l.b16 %v2135
        %v3085 = vunpack.c.h.b16 %v2135
        %v3086 = vunpack.c.l.b16 %v2136
        %v3087 = vunpack.c.l.b16 %v2137
        %v3088 = vunpack.c.h.b16 %v2137
        %v3089 = vunpack.c.l.b16 %v2138
        %v3090 = vunpack.c.h.b16 %v2138
        %v3091 = vunpack.c.l.b16 %v2139
        %v3092 = vunpack.c.h.b16 %v2139
        %v3093 = vunpack.c.l.b16 %v2140
        %v3094 = vunpack.c.l.b16 %v2141
        %v3095 = vunpack.c.h.b16 %v2141
        %v3096 = vunpack.c.l.b16 %v2142
        %v3097 = vunpack.c.h.b16 %v2142
        %v3098 = vunpack.c.l.b16 %v2143
        %v3099 = vunpack.c.h.b16 %v2143
        %v3100 = vunpack.c.l.b16 %v2144
        %v3101 = vunpack.c.l.b16 %v2145
        %v3102 = vunpack.c.h.b16 %v2145
        %v3103 = vunpack.c.l.b16 %v2146
        %v3104 = vunpack.c.h.b16 %v2146
        %v3105 = vunpack.c.l.b16 %v2147
        %v3106 = vunpack.c.h.b16 %v2147
        %v3107 = vunpack.c.l.b16 %v2148
        %v3108 = vunpack.c.l.b16 %v2149
        %v3109 = vunpack.c.h.b16 %v2149
        %v3110 = vunpack.c.l.b16 %v2150
        %v3111 = vunpack.c.h.b16 %v2150
        %v3112 = vunpack.c.l.b16 %v2151
        %v3113 = vunpack.c.h.b16 %v2151
        %v3114 = vunpack.c.l.b16 %v2152
        %v3115 = vunpack.c.l.b16 %v2153
        %v3116 = vunpack.c.h.b16 %v2153
        %v3117 = vunpack.c.l.b16 %v2154
        %v3118 = vunpack.c.h.b16 %v2154
        %v3119 = vunpack.c.l.b16 %v2155
        %v3120 = vunpack.c.h.b16 %v2155
        %v3121 = vunpack.c.l.b16 %v2156
        %v3122 = vunpack.c.l.b16 %v2157
        %v3123 = vunpack.c.h.b16 %v2157
        %v3124 = vunpack.c.l.b16 %v2158
        %v3125 = vunpack.c.h.b16 %v2158
        %v3126 = vunpack.c.l.b16 %v2159
        %v3127 = vunpack.c.h.b16 %v2159
        %v3128 = vunpack.c.l.b16 %v2160
        %v3129 = vunpack.c.l.b16 %v2161
        %v3130 = vunpack.c.h.b16 %v2161
        %v3131 = vunpack.c.l.b16 %v2162
        %v3132 = vunpack.c.h.b16 %v2162
        %v3133 = vunpack.c.l.b16 %v2163
        %v3134 = vunpack.c.h.b16 %v2163
        %v3135 = vunpack.c.l.b16 %v2164
        %v3136 = vunpack.c.l.b16 %v2165
        %v3137 = vunpack.c.h.b16 %v2165
        %v3138 = vunpack.c.l.b16 %v2166
        %v3139 = vunpack.c.h.b16 %v2166
        %v3140 = vunpack.c.l.b16 %v2167
        %v3141 = vunpack.c.h.b16 %v2167
        %v3142 = vunpack.c.l.b16 %v2168
        %v3143 = vunpack.c.l.b16 %v2169
        %v3144 = vunpack.c.h.b16 %v2169
        %v3145 = vunpack.c.l.b16 %v2170
        %v3146 = vunpack.c.h.b16 %v2170
        %v3147 = vunpack.c.l.b16 %v2171
        %v3148 = vunpack.c.h.b16 %v2171
        %v3149 = vunpack.c.l.b16 %v2172
        %v3150 = vunpack.c.l.b16 %v2173
        %v3151 = vunpack.c.h.b16 %v2173
        %v3152 = vunpack.c.l.b16 %v2174
        %v3153 = vunpack.c.h.b16 %v2174
        %v3154 = vunpack.c.l.b16 %v2175
        %v3155 = vunpack.c.h.b16 %v2175
        %v3156 = vunpack.c.l.b16 %v2176
        %v3157 = vunpack.c.l.b16 %v2177
        %v3158 = vunpack.c.h.b16 %v2177
        %v3159 = vunpack.c.l.b16 %v2178
        %v3160 = vunpack.c.h.b16 %v2178
        %v3161 = vunpack.c.l.b16 %v2179
        %v3162 = vunpack.c.h.b16 %v2179
        %v3163 = vunpack.c.l.b16 %v2180
        %v3164 = vunpack.c.l.b16 %v2181
        %v3165 = vunpack.c.h.b16 %v2181
        %v3166 = vunpack.c.l.b16 %v2182
        %v3167 = vunpack.c.h.b16 %v2182
        %v3168 = vunpack.c.l.b16 %v2183
        %v3169 = vunpack.c.h.b16 %v2183
        %v3170 = vunpack.c.l.b16 %v2184
        %v3171 = vunpack.c.l.b16 %v2185
        %v3172 = vunpack.c.h.b16 %v2185
        %v3173 = vunpack.c.l.b16 %v2186
        %v3174 = vunpack.c.h.b16 %v2186
        %v3175 = vunpack.c.l.b16 %v2187
        %v3176 = vunpack.c.h.b16 %v2187
        %v3177 = vunpack.c.l.b16 %v2188
        %v3178 = vunpack.c.l.b16 %v2189
        %v3179 = vunpack.c.h.b16 %v2189
        %v3180 = vunpack.c.l.b16 %v2190
        %v3181 = vunpack.c.h.b16 %v2190
        %v3182 = vunpack.c.l.b16 %v2191
        %v3183 = vunpack.c.h.b16 %v2191
        %v3184 = vunpack.c.l.b16 %v2192
        %v3185 = vunpack.c.l.b16 %v2193
        %v3186 = vunpack.c.h.b16 %v2193
        %v3187 = vunpack.c.l.b16 %v2194
        %v3188 = vunpack.c.h.b16 %v2194
        %v3189 = vunpack.c.l.b16 %v2195
        %v3190 = vunpack.c.h.b16 %v2195
        %v3191 = vunpack.c.l.b16 %v2196
        %v3192 = vunpack.c.l.b16 %v2197
        %v3193 = vunpack.c.h.b16 %v2197
        %v3194 = vunpack.c.l.b16 %v2198
        %v3195 = vunpack.c.h.b16 %v2198
        %v3196 = vunpack.c.l.b16 %v2199
        %v3197 = vunpack.c.h.b16 %v2199
        %v3198 = vunpack.c.l.b16 %v2200
        %v3199 = vunpack.c.l.b16 %v2201
        %v3200 = vunpack.c.h.b16 %v2201
        %v3201 = vunpack.c.l.b16 %v2202
        %v3202 = vunpack.c.h.b16 %v2202
        %v3203 = vunpack.c.l.b16 %v2203
        %v3204 = vunpack.c.h.b16 %v2203
        %v3205 = vunpack.c.l.b16 %v2204
        %v3206 = vunpack.c.l.b16 %v2205
        %v3207 = vunpack.c.h.b16 %v2205
        %v3208 = vunpack.c.l.b16 %v2206
        %v3209 = vunpack.c.h.b16 %v2206
        %v3210 = vunpack.c.l.b16 %v2207
        %v3211 = vunpack.c.h.b16 %v2207
        %v3212 = vunpack.c.l.b16 %v2208
        %v3213 = vunpack.c.l.b16 %v2209
        %v3214 = vunpack.c.h.b16 %v2209
        %v3215 = vunpack.c.l.b16 %v2210
        %v3216 = vunpack.c.h.b16 %v2210
        %v3217 = vunpack.c.l.b16 %v2211
        %v3218 = vunpack.c.h.b16 %v2211
        %v3219 = vunpack.c.l.b16 %v2212
        %v3220 = vunpack.c.l.b16 %v2213
        %v3221 = vunpack.c.h.b16 %v2213
        %v3222 = vunpack.c.l.b16 %v2214
        %v3223 = vunpack.c.h.b16 %v2214
        %v3224 = vunpack.c.l.b16 %v2215
        %v3225 = vunpack.c.h.b16 %v2215
        %v3226 = vunpack.c.l.b16 %v2216
        %v3227 = vunpack.c.l.b16 %v2217
        %v3228 = vunpack.c.h.b16 %v2217
        %v3229 = vunpack.c.l.b16 %v2218
        %v3230 = vunpack.c.h.b16 %v2218
        %v3231 = vunpack.c.l.b16 %v2219
        %v3232 = vunpack.c.h.b16 %v2219
        %v3233 = vunpack.c.l.b16 %v2220
        %v3234 = vunpack.c.l.b16 %v2221
        %v3235 = vunpack.c.h.b16 %v2221
        %v3236 = vunpack.c.l.b16 %v2222
        %v3237 = vunpack.c.h.b16 %v2222
        %v3238 = vunpack.c.l.b16 %v2223
        %v3239 = vunpack.c.h.b16 %v2223
        %v3240 = vunpack.c.l.b16 %v2224
        %v3241 = vunpack.c.l.b16 %v2225
        %v3242 = vunpack.c.h.b16 %v2225
        %v3243 = vunpack.c.l.b16 %v2226
        %v3244 = vunpack.c.h.b16 %v2226
        %v3245 = vunpack.c.l.b16 %v2227
        %v3246 = vunpack.c.h.b16 %v2227
        %v3247 = vunpack.c.l.b16 %v2228
        %v3248 = vunpack.c.l.b16 %v2229
        %v3249 = vunpack.c.h.b16 %v2229
        %v3250 = vunpack.c.l.b16 %v2230
        %v3251 = vunpack.c.h.b16 %v2230
        %v3252 = vunpack.c.l.b16 %v2231
        %v3253 = vunpack.c.h.b16 %v2231
        %v3254 = vunpack.c.l.b16 %v2232
        %v3255 = vunpack.c.l.b16 %v2233
        %v3256 = vunpack.c.h.b16 %v2233
        %v3257 = vunpack.c.l.b16 %v2234
        %v3258 = vunpack.c.h.b16 %v2234
        %v3259 = vunpack.c.l.b16 %v2235
        %v3260 = vunpack.c.h.b16 %v2235
        %v3261 = vunpack.c.l.b16 %v2236
        %v3262 = vunpack.c.l.b16 %v2237
        %v3263 = vunpack.c.h.b16 %v2237
        %v3264 = vunpack.c.l.b16 %v2238
        %v3265 = vunpack.c.h.b16 %v2238
        %v3266 = vunpack.c.l.b16 %v2239
        %v3267 = vunpack.c.h.b16 %v2239
        %v3268 = vunpack.c.l.b16 %v2240
        %v3269 = vunpack.c.l.b16 %v2241
        %v3270 = vunpack.c.h.b16 %v2241
        %v3271 = vunpack.c.l.b16 %v2242
        %v3272 = vunpack.c.h.b16 %v2242
        %v3273 = vunpack.c.l.b16 %v2243
        %v3274 = vunpack.c.h.b16 %v2243
        %v3275 = vunpack.c.l.b16 %v2244
        %v3276 = vunpack.c.l.b16 %v2245
        %v3277 = vunpack.c.h.b16 %v2245
        %v3278 = vunpack.c.l.b16 %v2246
        %v3279 = vunpack.c.h.b16 %v2246
        %v3280 = vunpack.c.l.b16 %v2247
        %v3281 = vunpack.c.h.b16 %v2247
        %v3282 = vunpack.c.l.b16 %v2248
        %v3283 = vunpack.c.l.b16 %v2249
        %v3284 = vunpack.c.h.b16 %v2249
        %v3285 = vunpack.c.l.b16 %v2250
        %v3286 = vunpack.c.h.b16 %v2250
        %v3287 = vunpack.c.l.b16 %v2251
        %v3288 = vunpack.c.h.b16 %v2251
        %v3289 = vunpack.c.l.b16 %v2252
        %v3290 = vunpack.c.l.b16 %v2253
        %v3291 = vunpack.c.h.b16 %v2253
        %v3292 = vunpack.c.l.b16 %v2254
        %v3293 = vunpack.c.h.b16 %v2254
        %v3294 = vunpack.c.l.b16 %v2255
        %v3295 = vunpack.c.h.b16 %v2255
        %v3296 = vunpack.c.l.b16 %v2256
        %v3297 = vunpack.c.l.b16 %v2257
        %v3298 = vunpack.c.h.b16 %v2257
        %v3299 = vunpack.c.l.b16 %v2258
        %v3300 = vunpack.c.h.b16 %v2258
        %v3301 = vunpack.c.l.b16 %v2259
        %v3302 = vunpack.c.h.b16 %v2259
        %v3303 = vunpack.c.l.b16 %v2260
        %v3304 = vunpack.c.l.b16 %v2261
        %v3305 = vunpack.c.h.b16 %v2261
        %v3306 = vunpack.c.l.b16 %v2262
        %v3307 = vunpack.c.h.b16 %v2262
        %v3308 = vunpack.c.l.b16 %v2263
        %v3309 = vunpack.c.h.b16 %v2263
        %v3310 = vunpack.c.l.b16 %v2264
        %v3311 = vunpack.c.l.b16 %v2265
        %v3312 = vunpack.c.h.b16 %v2265
        %v3313 = vunpack.c.l.b16 %v2266
        %v3314 = vunpack.c.h.b16 %v2266
        %v3315 = vunpack.c.l.b16 %v2267
        %v3316 = vunpack.c.h.b16 %v2267
        %v3317 = vunpack.c.l.b16 %v2268
        %v3318 = vunpack.c.l.b16 %v2269
        %v3319 = vunpack.c.h.b16 %v2269
        %v3320 = vunpack.c.l.b16 %v2270
        %v3321 = vunpack.c.h.b16 %v2270
        %v3322 = vunpack.c.l.b16 %v2271
        %v3323 = vunpack.c.h.b16 %v2271
        %v3324 = vunpack.c.l.b16 %v2272
        %v3325 = vunpack.c.l.b16 %v2273
        %v3326 = vunpack.c.h.b16 %v2273
        %v3327 = vunpack.c.l.b16 %v2274
        %v3328 = vunpack.c.h.b16 %v2274
        %v3329 = vunpack.c.l.b16 %v2275
        %v3330 = vunpack.c.h.b16 %v2275
        %v3331 = vunpack.c.l.b16 %v2276
        %v3332 = vunpack.c.l.b16 %v2277
        %v3333 = vunpack.c.h.b16 %v2277
        %v3334 = vunpack.c.l.b16 %v2278
        %v3335 = vunpack.c.h.b16 %v2278
        %v3336 = vunpack.c.l.b16 %v2279
        %v3337 = vunpack.c.h.b16 %v2279
        %v3338 = vunpack.c.l.b16 %v2280
        %v3339 = vunpack.c.l.b16 %v2281
        %v3340 = vunpack.c.h.b16 %v2281
        %v3341 = vunpack.c.l.b16 %v2282
        %v3342 = vunpack.c.h.b16 %v2282
        %v3343 = vunpack.c.l.b16 %v2283
        %v3344 = vunpack.c.h.b16 %v2283
        %v3345 = vunpack.c.l.b16 %v2284
        %v3346 = vunpack.c.l.b16 %v2285
        %v3347 = vunpack.c.h.b16 %v2285
        %v3348 = vunpack.c.l.b16 %v2286
        %v3349 = vunpack.c.h.b16 %v2286
        %v3350 = vunpack.c.l.b16 %v2287
        %v3351 = vunpack.c.h.b16 %v2287
        %v3352 = vunpack.c.l.b16 %v2288
        %v3353 = vunpack.c.l.b16 %v2289
        %v3354 = vunpack.c.h.b16 %v2289
        %v3355 = vunpack.c.l.b16 %v2290
        %v3356 = vunpack.c.h.b16 %v2290
        %v3357 = vunpack.c.l.b16 %v2291
        %v3358 = vunpack.c.h.b16 %v2291
        %v3359 = vunpack.c.l.b16 %v2292
        %v3360 = vunpack.c.l.b16 %v2293
        %v3361 = vunpack.c.h.b16 %v2293
        %v3362 = vunpack.c.l.b16 %v2294
        %v3363 = vunpack.c.h.b16 %v2294
        %v3364 = vunpack.c.l.b16 %v2295
        %v3365 = vunpack.c.h.b16 %v2295
        %v3366 = vunpack.c.l.b16 %v2296
        %v3367 = vunpack.c.l.b16 %v2297
        %v3368 = vunpack.c.h.b16 %v2297
        %v3369 = vunpack.c.l.b16 %v2298
        %v3370 = vunpack.c.h.b16 %v2298
        %v3371 = vunpack.c.l.b16 %v2299
        %v3372 = vunpack.c.h.b16 %v2299
        %v3373 = vunpack.c.l.b16 %v2300
        %v3374 = vunpack.c.l.b16 %v2301
        %v3375 = vunpack.c.h.b16 %v2301
        %v3376 = vunpack.c.l.b16 %v2302
        %v3377 = vunpack.c.h.b16 %v2302
        %v3378 = vunpack.c.l.b16 %v2303
        %v3379 = vunpack.c.h.b16 %v2303
        %v3380 = vunpack.c.l.b16 %v2304
        %v3381 = vunpack.c.l.b16 %v2305
        %v3382 = vunpack.c.h.b16 %v2305
        %v3383 = vunpack.c.l.b16 %v2306
        %v3384 = vunpack.c.h.b16 %v2306
        %v3385 = vunpack.c.l.b16 %v2307
        %v3386 = vunpack.c.h.b16 %v2307
        %v3387 = vunpack.c.l.b16 %v2308
        %v3388 = vunpack.c.l.b16 %v2309
        %v3389 = vunpack.c.h.b16 %v2309
        %v3390 = vunpack.c.l.b16 %v2310
        %v3391 = vunpack.c.h.b16 %v2310
        %v3392 = vunpack.c.l.b16 %v2311
        %v3393 = vunpack.c.h.b16 %v2311
        %v3394 = vunpack.c.l.b16 %v2312
        %v3395 = vunpack.c.l.b16 %v2313
        %v3396 = vunpack.c.h.b16 %v2313
        %v3397 = vunpack.c.l.b16 %v2314
        %v3398 = vunpack.c.h.b16 %v2314
        %v3399 = vunpack.c.l.b16 %v2315
        %v3400 = vunpack.c.h.b16 %v2315
        %v3401 = vunpack.c.l.b16 %v2316
        %v3402 = vunpack.c.l.b16 %v2317
        %v3403 = vunpack.c.h.b16 %v2317
        %v3404 = vunpack.c.l.b16 %v2318
        %v3405 = vunpack.c.h.b16 %v2318
        %v3406 = vunpack.c.l.b16 %v2319
        %v3407 = vunpack.c.h.b16 %v2319
        %v3408 = vunpack.c.l.b16 %v2320
        %v3409 = vunpack.c.l.b16 %v2321
        %v3410 = vunpack.c.h.b16 %v2321
        %v3411 = vunpack.c.l.b16 %v2322
        %v3412 = vunpack.c.h.b16 %v2322
        %v3413 = vunpack.c.l.b16 %v2323
        %v3414 = vunpack.c.h.b16 %v2323
        %v3415 = vunpack.c.l.b16 %v2324
        %v3416 = vunpack.c.l.b16 %v2325
        %v3417 = vunpack.c.h.b16 %v2325
        %v3418 = vunpack.c.l.b16 %v2326
        %v3419 = vunpack.c.h.b16 %v2326
        %v3420 = vunpack.c.l.b16 %v2327
        %v3421 = vunpack.c.h.b16 %v2327
        %v3422 = vunpack.c.l.b16 %v2328
        %v3423 = vunpack.c.l.b16 %v2329
        %v3424 = vunpack.c.h.b16 %v2329
        %v3425 = vunpack.c.l.b16 %v2330
        %v3426 = vunpack.c.h.b16 %v2330
        %v3427 = vunpack.c.l.b16 %v2331
        %v3428 = vunpack.c.h.b16 %v2331
        %v3429 = vunpack.c.l.b16 %v2332
        %v3430 = vunpack.c.l.b16 %v2333
        %v3431 = vunpack.c.h.b16 %v2333
        %v3432 = vunpack.c.l.b16 %v2334
        %v3433 = vunpack.c.h.b16 %v2334
        %v3434 = vunpack.c.l.b16 %v2335
        %v3435 = vunpack.c.h.b16 %v2335
        %v3436 = vunpack.c.l.b16 %v2336
        %v3437 = vunpack.c.l.b16 %v2337
        %v3438 = vunpack.c.h.b16 %v2337
        %v3439 = vunpack.c.l.b16 %v2338
        %v3440 = vunpack.c.h.b16 %v2338
        %v3441 = vunpack.c.l.b16 %v2339
        %v3442 = vunpack.c.h.b16 %v2339
        %v3443 = vunpack.c.l.b16 %v2340
        %v3444 = vunpack.c.l.b16 %v2341
        %v3445 = vunpack.c.h.b16 %v2341
        %v3446 = vunpack.c.l.b16 %v2342
        %v3447 = vunpack.c.h.b16 %v2342
        %v3448 = vunpack.c.l.b16 %v2343
        %v3449 = vunpack.c.h.b16 %v2343
        %v3450 = vunpack.c.l.b16 %v2344
        %v3451 = vunpack.c.l.b16 %v2345
        %v3452 = vunpack.c.h.b16 %v2345
        %v3453 = vunpack.c.l.b16 %v2346
        %v3454 = vunpack.c.h.b16 %v2346
        %v3455 = vunpack.c.l.b16 %v2347
        %v3456 = vunpack.c.h.b16 %v2347
        %v3457 = vunpack.c.l.b16 %v2348
        %v3458 = vunpack.c.l.b16 %v2349
        %v3459 = vunpack.c.h.b16 %v2349
        %v3460 = vunpack.c.l.b16 %v2350
        %v3461 = vunpack.c.h.b16 %v2350
        %v3462 = vunpack.c.l.b16 %v2351
        %v3463 = vunpack.c.h.b16 %v2351
        %v3464 = vunpack.c.l.b16 %v2352
        %v3465 = vunpack.c.l.b16 %v2353
        %v3466 = vunpack.c.h.b16 %v2353
        %v3467 = vunpack.c.l.b16 %v2354
        %v3468 = vunpack.c.h.b16 %v2354
        %v3469 = vunpack.c.l.b16 %v2355
        %v3470 = vunpack.c.h.b16 %v2355
        %v3471 = vunpack.c.l.b16 %v2356
        %v3472 = vunpack.c.l.b16 %v2357
        %v3473 = vunpack.c.h.b16 %v2357
        %v3474 = vunpack.c.l.b16 %v2358
        %v3475 = vunpack.c.h.b16 %v2358
        %v3476 = vunpack.c.l.b16 %v2359
        %v3477 = vunpack.c.h.b16 %v2359
        %v3478 = vunpack.c.l.b16 %v2360
        %v3479 = vunpack.c.l.b16 %v2361
        %v3480 = vunpack.c.h.b16 %v2361
        %v3481 = vunpack.c.l.b16 %v2362
        %v3482 = vunpack.c.h.b16 %v2362
        %v3483 = vunpack.c.l.b16 %v2363
        %v3484 = vunpack.c.h.b16 %v2363
        %v3485 = vunpack.c.l.b16 %v2364
        %v3486 = vunpack.c.l.b16 %v2365
        %v3487 = vunpack.c.h.b16 %v2365
        %v3488 = vunpack.c.l.b16 %v2366
        %v3489 = vunpack.c.h.b16 %v2366
        %v3490 = vunpack.c.l.b16 %v2367
        %v3491 = vunpack.c.h.b16 %v2367
        %v3492 = vunpack.c.l.b16 %v2368
        %v3493 = vpack.c.b16 %v2828, %v2821
        %v3494 = vpack.c.b16 %v2829, %v2822
        %v3495 = vpack.c.b16 %v2830, %v2823
        %v3496 = vpack.c.b16 %v2831, %v2824
        %v3497 = vpack.c.b16 %v2832, %v2825
        %v3498 = vpack.c.b16 %v2833, %v2826
        %v3499 = vpack.c.b16 %v2834, %v2827
        %v3500 = vpack.c.b16 %v2842, %v2835
        %v3501 = vpack.c.b16 %v2843, %v2836
        %v3502 = vpack.c.b16 %v2844, %v2837
        %v3503 = vpack.c.b16 %v2845, %v2838
        %v3504 = vpack.c.b16 %v2846, %v2839
        %v3505 = vpack.c.b16 %v2847, %v2840
        %v3506 = vpack.c.b16 %v2848, %v2841
        %v3507 = vpack.c.b16 %v2856, %v2849
        %v3508 = vpack.c.b16 %v2857, %v2850
        %v3509 = vpack.c.b16 %v2858, %v2851
        %v3510 = vpack.c.b16 %v2859, %v2852
        %v3511 = vpack.c.b16 %v2860, %v2853
        %v3512 = vpack.c.b16 %v2861, %v2854
        %v3513 = vpack.c.b16 %v2862, %v2855
        %v3514 = vpack.c.b16 %v2870, %v2863
        %v3515 = vpack.c.b16 %v2871, %v2864
        %v3516 = vpack.c.b16 %v2872, %v2865
        %v3517 = vpack.c.b16 %v2873, %v2866
        %v3518 = vpack.c.b16 %v2874, %v2867
        %v3519 = vpack.c.b16 %v2875, %v2868
        %v3520 = vpack.c.b16 %v2876, %v2869
        %v3521 = vpack.c.b16 %v2884, %v2877
        %v3522 = vpack.c.b16 %v2885, %v2878
        %v3523 = vpack.c.b16 %v2886, %v2879
        %v3524 = vpack.c.b16 %v2887, %v2880
        %v3525 = vpack.c.b16 %v2888, %v2881
        %v3526 = vpack.c.b16 %v2889, %v2882
        %v3527 = vpack.c.b16 %v2890, %v2883
        %v3528 = vpack.c.b16 %v2898, %v2891
        %v3529 = vpack.c.b16 %v2899, %v2892
        %v3530 = vpack.c.b16 %v2900, %v2893
        %v3531 = vpack.c.b16 %v2901, %v2894
        %v3532 = vpack.c.b16 %v2902, %v2895
        %v3533 = vpack.c.b16 %v2903, %v2896
        %v3534 = vpack.c.b16 %v2904, %v2897
        %v3535 = vpack.c.b16 %v2912, %v2905
        %v3536 = vpack.c.b16 %v2913, %v2906
        %v3537 = vpack.c.b16 %v2914, %v2907
        %v3538 = vpack.c.b16 %v2915, %v2908
        %v3539 = vpack.c.b16 %v2916, %v2909
        %v3540 = vpack.c.b16 %v2917, %v2910
        %v3541 = vpack.c.b16 %v2918, %v2911
        %v3542 = vpack.c.b16 %v2926, %v2919
        %v3543 = vpack.c.b16 %v2927, %v2920
        %v3544 = vpack.c.b16 %v2928, %v2921
        %v3545 = vpack.c.b16 %v2929, %v2922
        %v3546 = vpack.c.b16 %v2930, %v2923
        %v3547 = vpack.c.b16 %v2931, %v2924
        %v3548 = vpack.c.b16 %v2932, %v2925
        %v3549 = vpack.c.b16 %v2940, %v2933
        %v3550 = vpack.c.b16 %v2941, %v2934
        %v3551 = vpack.c.b16 %v2942, %v2935
        %v3552 = vpack.c.b16 %v2943, %v2936
        %v3553 = vpack.c.b16 %v2944, %v2937
        %v3554 = vpack.c.b16 %v2945, %v2938
        %v3555 = vpack.c.b16 %v2946, %v2939
        %v3556 = vpack.c.b16 %v2954, %v2947
        %v3557 = vpack.c.b16 %v2955, %v2948
        %v3558 = vpack.c.b16 %v2956, %v2949
        %v3559 = vpack.c.b16 %v2957, %v2950
        %v3560 = vpack.c.b16 %v2958, %v2951
        %v3561 = vpack.c.b16 %v2959, %v2952
        %v3562 = vpack.c.b16 %v2960, %v2953
        %v3563 = vpack.c.b16 %v2968, %v2961
        %v3564 = vpack.c.b16 %v2969, %v2962
        %v3565 = vpack.c.b16 %v2970, %v2963
        %v3566 = vpack.c.b16 %v2971, %v2964
        %v3567 = vpack.c.b16 %v2972, %v2965
        %v3568 = vpack.c.b16 %v2973, %v2966
        %v3569 = vpack.c.b16 %v2974, %v2967
        %v3570 = vpack.c.b16 %v2982, %v2975
        %v3571 = vpack.c.b16 %v2983, %v2976
        %v3572 = vpack.c.b16 %v2984, %v2977
        %v3573 = vpack.c.b16 %v2985, %v2978
        %v3574 = vpack.c.b16 %v2986, %v2979
        %v3575 = vpack.c.b16 %v2987, %v2980
        %v3576 = vpack.c.b16 %v2988, %v2981
        %v3577 = vpack.c.b16 %v2996, %v2989
        %v3578 = vpack.c.b16 %v2997, %v2990
        %v3579 = vpack.c.b16 %v2998, %v2991
        %v3580 = vpack.c.b16 %v2999, %v2992
        %v3581 = vpack.c.b16 %v3000, %v2993
        %v3582 = vpack.c.b16 %v3001, %v2994
        %v3583 = vpack.c.b16 %v3002, %v2995
        %v3584 = vpack.c.b16 %v3010, %v3003
        %v3585 = vpack.c.b16 %v3011, %v3004
        %v3586 = vpack.c.b16 %v3012, %v3005
        %v3587 = vpack.c.b16 %v3013, %v3006
        %v3588 = vpack.c.b16 %v3014, %v3007
        %v3589 = vpack.c.b16 %v3015, %v3008
        %v3590 = vpack.c.b16 %v3016, %v3009
        %v3591 = vpack.c.b16 %v3024, %v3017
        %v3592 = vpack.c.b16 %v3025, %v3018
        %v3593 = vpack.c.b16 %v3026, %v3019
        %v3594 = vpack.c.b16 %v3027, %v3020
        %v3595 = vpack.c.b16 %v3028, %v3021
        %v3596 = vpack.c.b16 %v3029, %v3022
        %v3597 = vpack.c.b16 %v3030, %v3023
        %v3598 = vpack.c.b16 %v3038, %v3031
        %v3599 = vpack.c.b16 %v3039, %v3032
        %v3600 = vpack.c.b16 %v3040, %v3033
        %v3601 = vpack.c.b16 %v3041, %v3034
        %v3602 = vpack.c.b16 %v3042, %v3035
        %v3603 = vpack.c.b16 %v3043, %v3036
        %v3604 = vpack.c.b16 %v3044, %v3037
        %v3605 = vpack.c.b16 %v3052, %v3045
        %v3606 = vpack.c.b16 %v3053, %v3046
        %v3607 = vpack.c.b16 %v3054, %v3047
        %v3608 = vpack.c.b16 %v3055, %v3048
        %v3609 = vpack.c.b16 %v3056, %v3049
        %v3610 = vpack.c.b16 %v3057, %v3050
        %v3611 = vpack.c.b16 %v3058, %v3051
        %v3612 = vpack.c.b16 %v3066, %v3059
        %v3613 = vpack.c.b16 %v3067, %v3060
        %v3614 = vpack.c.b16 %v3068, %v3061
        %v3615 = vpack.c.b16 %v3069, %v3062
        %v3616 = vpack.c.b16 %v3070, %v3063
        %v3617 = vpack.c.b16 %v3071, %v3064
        %v3618 = vpack.c.b16 %v3072, %v3065
        %v3619 = vpack.c.b16 %v3080, %v3073
        %v3620 = vpack.c.b16 %v3081, %v3074
        %v3621 = vpack.c.b16 %v3082, %v3075
        %v3622 = vpack.c.b16 %v3083, %v3076
        %v3623 = vpack.c.b16 %v3084, %v3077
        %v3624 = vpack.c.b16 %v3085, %v3078
        %v3625 = vpack.c.b16 %v3086, %v3079
        %v3626 = vpack.c.b16 %v3094, %v3087
        %v3627 = vpack.c.b16 %v3095, %v3088
        %v3628 = vpack.c.b16 %v3096, %v3089
        %v3629 = vpack.c.b16 %v3097, %v3090
        %v3630 = vpack.c.b16 %v3098, %v3091
        %v3631 = vpack.c.b16 %v3099, %v3092
        %v3632 = vpack.c.b16 %v3100, %v3093
        %v3633 = vpack.c.b16 %v3108, %v3101
        %v3634 = vpack.c.b16 %v3109, %v3102
        %v3635 = vpack.c.b16 %v3110, %v3103
        %v3636 = vpack.c.b16 %v3111, %v3104
        %v3637 = vpack.c.b16 %v3112, %v3105
        %v3638 = vpack.c.b16 %v3113, %v3106
        %v3639 = vpack.c.b16 %v3114, %v3107
        %v3640 = vpack.c.b16 %v3122, %v3115
        %v3641 = vpack.c.b16 %v3123, %v3116
        %v3642 = vpack.c.b16 %v3124, %v3117
        %v3643 = vpack.c.b16 %v3125, %v3118
        %v3644 = vpack.c.b16 %v3126, %v3119
        %v3645 = vpack.c.b16 %v3127, %v3120
        %v3646 = vpack.c.b16 %v3128, %v3121
        %v3647 = vpack.c.b16 %v3136, %v3129
        %v3648 = vpack.c.b16 %v3137, %v3130
        %v3649 = vpack.c.b16 %v3138, %v3131
        %v3650 = vpack.c.b16 %v3139, %v3132
        %v3651 = vpack.c.b16 %v3140, %v3133
        %v3652 = vpack.c.b16 %v3141, %v3134
        %v3653 = vpack.c.b16 %v3142, %v3135
        %v3654 = vpack.c.b16 %v3150, %v3143
        %v3655 = vpack.c.b16 %v3151, %v3144
        %v3656 = vpack.c.b16 %v3152, %v3145
        %v3657 = vpack.c.b16 %v3153, %v3146
        %v3658 = vpack.c.b16 %v3154, %v3147
        %v3659 = vpack.c.b16 %v3155, %v3148
        %v3660 = vpack.c.b16 %v3156, %v3149
        %v3661 = vpack.c.b16 %v3164, %v3157
        %v3662 = vpack.c.b16 %v3165, %v3158
        %v3663 = vpack.c.b16 %v3166, %v3159
        %v3664 = vpack.c.b16 %v3167, %v3160
        %v3665 = vpack.c.b16 %v3168, %v3161
        %v3666 = vpack.c.b16 %v3169, %v3162
        %v3667 = vpack.c.b16 %v3170, %v3163
        %v3668 = vpack.c.b16 %v3178, %v3171
        %v3669 = vpack.c.b16 %v3179, %v3172
        %v3670 = vpack.c.b16 %v3180, %v3173
        %v3671 = vpack.c.b16 %v3181, %v3174
        %v3672 = vpack.c.b16 %v3182, %v3175
        %v3673 = vpack.c.b16 %v3183, %v3176
        %v3674 = vpack.c.b16 %v3184, %v3177
        %v3675 = vpack.c.b16 %v3192, %v3185
        %v3676 = vpack.c.b16 %v3193, %v3186
        %v3677 = vpack.c.b16 %v3194, %v3187
        %v3678 = vpack.c.b16 %v3195, %v3188
        %v3679 = vpack.c.b16 %v3196, %v3189
        %v3680 = vpack.c.b16 %v3197, %v3190
        %v3681 = vpack.c.b16 %v3198, %v3191
        %v3682 = vpack.c.b16 %v3206, %v3199
        %v3683 = vpack.c.b16 %v3207, %v3200
        %v3684 = vpack.c.b16 %v3208, %v3201
        %v3685 = vpack.c.b16 %v3209, %v3202
        %v3686 = vpack.c.b16 %v3210, %v3203
        %v3687 = vpack.c.b16 %v3211, %v3204
        %v3688 = vpack.c.b16 %v3212, %v3205
        %v3689 = vpack.c.b16 %v3220, %v3213
        %v3690 = vpack.c.b16 %v3221, %v3214
        %v3691 = vpack.c.b16 %v3222, %v3215
        %v3692 = vpack.c.b16 %v3223, %v3216
        %v3693 = vpack.c.b16 %v3224, %v3217
        %v3694 = vpack.c.b16 %v3225, %v3218
        %v3695 = vpack.c.b16 %v3226, %v3219
        %v3696 = vpack.c.b16 %v3234, %v3227
        %v3697 = vpack.c.b16 %v3235, %v3228
        %v3698 = vpack.c.b16 %v3236, %v3229
        %v3699 = vpack.c.b16 %v3237, %v3230
        %v3700 = vpack.c.b16 %v3238, %v3231
        %v3701 = vpack.c.b16 %v3239, %v3232
        %v3702 = vpack.c.b16 %v3240, %v3233
        %v3703 = vpack.c.b16 %v3248, %v3241
        %v3704 = vpack.c.b16 %v3249, %v3242
        %v3705 = vpack.c.b16 %v3250, %v3243
        %v3706 = vpack.c.b16 %v3251, %v3244
        %v3707 = vpack.c.b16 %v3252, %v3245
        %v3708 = vpack.c.b16 %v3253, %v3246
        %v3709 = vpack.c.b16 %v3254, %v3247
        %v3710 = vpack.c.b16 %v3262, %v3255
        %v3711 = vpack.c.b16 %v3263, %v3256
        %v3712 = vpack.c.b16 %v3264, %v3257
        %v3713 = vpack.c.b16 %v3265, %v3258
        %v3714 = vpack.c.b16 %v3266, %v3259
        %v3715 = vpack.c.b16 %v3267, %v3260
        %v3716 = vpack.c.b16 %v3268, %v3261
        %v3717 = vpack.c.b16 %v3276, %v3269
        %v3718 = vpack.c.b16 %v3277, %v3270
        %v3719 = vpack.c.b16 %v3278, %v3271
        %v3720 = vpack.c.b16 %v3279, %v3272
        %v3721 = vpack.c.b16 %v3280, %v3273
        %v3722 = vpack.c.b16 %v3281, %v3274
        %v3723 = vpack.c.b16 %v3282, %v3275
        %v3724 = vpack.c.b16 %v3290, %v3283
        %v3725 = vpack.c.b16 %v3291, %v3284
        %v3726 = vpack.c.b16 %v3292, %v3285
        %v3727 = vpack.c.b16 %v3293, %v3286
        %v3728 = vpack.c.b16 %v3294, %v3287
        %v3729 = vpack.c.b16 %v3295, %v3288
        %v3730 = vpack.c.b16 %v3296, %v3289
        %v3731 = vpack.c.b16 %v3304, %v3297
        %v3732 = vpack.c.b16 %v3305, %v3298
        %v3733 = vpack.c.b16 %v3306, %v3299
        %v3734 = vpack.c.b16 %v3307, %v3300
        %v3735 = vpack.c.b16 %v3308, %v3301
        %v3736 = vpack.c.b16 %v3309, %v3302
        %v3737 = vpack.c.b16 %v3310, %v3303
        %v3738 = vpack.c.b16 %v3318, %v3311
        %v3739 = vpack.c.b16 %v3319, %v3312
        %v3740 = vpack.c.b16 %v3320, %v3313
        %v3741 = vpack.c.b16 %v3321, %v3314
        %v3742 = vpack.c.b16 %v3322, %v3315
        %v3743 = vpack.c.b16 %v3323, %v3316
        %v3744 = vpack.c.b16 %v3324, %v3317
        %v3745 = vpack.c.b16 %v3332, %v3325
        %v3746 = vpack.c.b16 %v3333, %v3326
        %v3747 = vpack.c.b16 %v3334, %v3327
        %v3748 = vpack.c.b16 %v3335, %v3328
        %v3749 = vpack.c.b16 %v3336, %v3329
        %v3750 = vpack.c.b16 %v3337, %v3330
        %v3751 = vpack.c.b16 %v3338, %v3331
        %v3752 = vpack.c.b16 %v3346, %v3339
        %v3753 = vpack.c.b16 %v3347, %v3340
        %v3754 = vpack.c.b16 %v3348, %v3341
        %v3755 = vpack.c.b16 %v3349, %v3342
        %v3756 = vpack.c.b16 %v3350, %v3343
        %v3757 = vpack.c.b16 %v3351, %v3344
        %v3758 = vpack.c.b16 %v3352, %v3345
        %v3759 = vpack.c.b16 %v3360, %v3353
        %v3760 = vpack.c.b16 %v3361, %v3354
        %v3761 = vpack.c.b16 %v3362, %v3355
        %v3762 = vpack.c.b16 %v3363, %v3356
        %v3763 = vpack.c.b16 %v3364, %v3357
        %v3764 = vpack.c.b16 %v3365, %v3358
        %v3765 = vpack.c.b16 %v3366, %v3359
        %v3766 = vpack.c.b16 %v3374, %v3367
        %v3767 = vpack.c.b16 %v3375, %v3368
        %v3768 = vpack.c.b16 %v3376, %v3369
        %v3769 = vpack.c.b16 %v3377, %v3370
        %v3770 = vpack.c.b16 %v3378, %v3371
        %v3771 = vpack.c.b16 %v3379, %v3372
        %v3772 = vpack.c.b16 %v3380, %v3373
        %v3773 = vpack.c.b16 %v3388, %v3381
        %v3774 = vpack.c.b16 %v3389, %v3382
        %v3775 = vpack.c.b16 %v3390, %v3383
        %v3776 = vpack.c.b16 %v3391, %v3384
        %v3777 = vpack.c.b16 %v3392, %v3385
        %v3778 = vpack.c.b16 %v3393, %v3386
        %v3779 = vpack.c.b16 %v3394, %v3387
        %v3780 = vpack.c.b16 %v3402, %v3395
        %v3781 = vpack.c.b16 %v3403, %v3396
        %v3782 = vpack.c.b16 %v3404, %v3397
        %v3783 = vpack.c.b16 %v3405, %v3398
        %v3784 = vpack.c.b16 %v3406, %v3399
        %v3785 = vpack.c.b16 %v3407, %v3400
        %v3786 = vpack.c.b16 %v3408, %v3401
        %v3787 = vpack.c.b16 %v3416, %v3409
        %v3788 = vpack.c.b16 %v3417, %v3410
        %v3789 = vpack.c.b16 %v3418, %v3411
        %v3790 = vpack.c.b16 %v3419, %v3412
        %v3791 = vpack.c.b16 %v3420, %v3413
        %v3792 = vpack.c.b16 %v3421, %v3414
        %v3793 = vpack.c.b16 %v3422, %v3415
        %v3794 = vpack.c.b16 %v3430, %v3423
        %v3795 = vpack.c.b16 %v3431, %v3424
        %v3796 = vpack.c.b16 %v3432, %v3425
        %v3797 = vpack.c.b16 %v3433, %v3426
        %v3798 = vpack.c.b16 %v3434, %v3427
        %v3799 = vpack.c.b16 %v3435, %v3428
        %v3800 = vpack.c.b16 %v3436, %v3429
        %v3801 = vpack.c.b16 %v3444, %v3437
        %v3802 = vpack.c.b16 %v3445, %v3438
        %v3803 = vpack.c.b16 %v3446, %v3439
        %v3804 = vpack.c.b16 %v3447, %v3440
        %v3805 = vpack.c.b16 %v3448, %v3441
        %v3806 = vpack.c.b16 %v3449, %v3442
        %v3807 = vpack.c.b16 %v3450, %v3443
        %v3808 = vpack.c.b16 %v3458, %v3451
        %v3809 = vpack.c.b16 %v3459, %v3452
        %v3810 = vpack.c.b16 %v3460, %v3453
        %v3811 = vpack.c.b16 %v3461, %v3454
        %v3812 = vpack.c.b16 %v3462, %v3455
        %v3813 = vpack.c.b16 %v3463, %v3456
        %v3814 = vpack.c.b16 %v3464, %v3457
        %v3815 = vpack.c.b16 %v3472, %v3465
        %v3816 = vpack.c.b16 %v3473, %v3466
        %v3817 = vpack.c.b16 %v3474, %v3467
        %v3818 = vpack.c.b16 %v3475, %v3468
        %v3819 = vpack.c.b16 %v3476, %v3469
        %v3820 = vpack.c.b16 %v3477, %v3470
        %v3821 = vpack.c.b16 %v3478, %v3471
        %v3822 = vpack.c.b16 %v3486, %v3479
        %v3823 = vpack.c.b16 %v3487, %v3480
        %v3824 = vpack.c.b16 %v3488, %v3481
        %v3825 = vpack.c.b16 %v3489, %v3482
        %v3826 = vpack.c.b16 %v3490, %v3483
        %v3827 = vpack.c.b16 %v3491, %v3484
        %v3828 = vpack.c.b16 %v3492, %v3485
        %4165 = vmatprep.subr.bf16.mxu0 %v3543
        %4166 = vmatpush1.bf16.msra.mxu0 %v3542
        %4167 = vmatprep.subr.bf16.mxu0 %v3536
        %4168 = vmatpush1.bf16.msra.mxu0 %v3535
        %4169 = vmatprep.subr.bf16.mxu0 %v3529
        %4170 = vmatpush1.bf16.msra.mxu0 %v3528
        %4171 = vmatprep.subr.bf16.mxu0 %v3522
        %4172 = vmatpush1.bf16.msra.mxu0 %v3521
        %4173 = vmatprep.subr.bf16.mxu0 %v3515
        %4174 = vmatpush1.bf16.msra.mxu0 %v3514
        %4175 = vmatprep.subr.bf16.mxu0 %v3508
        %4176 = vmatpush1.bf16.msra.mxu0 %v3507
        %4177 = vmatprep.subr.bf16.mxu0 %v3501
        %4178 = vmatpush1.bf16.msra.mxu0 %v3500
        %4179 = vmatprep.subr.bf16.mxu0 %v3494
        %4180 = vmatpush1.bf16.msra.mxu0 %v3493
        %4181 = vmatprep.subr.bf16.mxu0 %v3599
        %4182 = vmatpush2.bf16.msra.mxu0 %v3598
        %4183 = vmatprep.subr.bf16.mxu0 %v3592
        %4184 = vmatpush2.bf16.msra.mxu0 %v3591
        %4185 = vmatprep.subr.bf16.mxu0 %v3585
        %4186 = vmatpush2.bf16.msra.mxu0 %v3584
        %4187 = vmatprep.subr.bf16.mxu0 %v3578
        %4188 = vmatpush2.bf16.msra.mxu0 %v3577
        %4189 = vmatprep.subr.bf16.mxu0 %v3571
        %4190 = vmatpush2.bf16.msra.mxu0 %v3570
        %4191 = vmatprep.subr.bf16.mxu0 %v3564
        %4192 = vmatpush2.bf16.msra.mxu0 %v3563
        %4193 = vmatprep.subr.bf16.mxu0 %v3557
        %4194 = vmatpush2.bf16.msra.mxu0 %v3556
        %4195 = vmatprep.subr.bf16.mxu0 %v3550
        %4196 = vmatpush2.bf16.msra.mxu0 %v3549
        %4197 = vmatprep.mubr.bf16.mxu0 %v1980
        %4198 = vmatmul.mubr.bf16.gmra.mxu0 %v1979
        %v4199 = vpop.f32.mrf.mxu0
        %v4200 = vadd.f32 %v2412, %v4199
        %v4201 = vpop.f32.mrf.mxu0
        %v4202 = vadd.f32 %v2416, %v4201
        %v4203 = vpop.f32.mrf.mxu0
        %v4204 = vpop.f32.mrf.mxu0
        %4205 = vdwg.mxu0
        %4206 = vmatprep.subr.bf16.mxu0 %v3655
        %4207 = vmatpush1.bf16.msra.mxu0 %v3654
        %4208 = vmatprep.subr.bf16.mxu0 %v3648
        %4209 = vmatpush1.bf16.msra.mxu0 %v3647
        %4210 = vmatprep.subr.bf16.mxu0 %v3641
        %4211 = vmatpush1.bf16.msra.mxu0 %v3640
        %4212 = vmatprep.subr.bf16.mxu0 %v3634
        %4213 = vmatpush1.bf16.msra.mxu0 %v3633
        %4214 = vmatprep.subr.bf16.mxu0 %v3627
        %4215 = vmatpush1.bf16.msra.mxu0 %v3626
        %4216 = vmatprep.subr.bf16.mxu0 %v3620
        %4217 = vmatpush1.bf16.msra.mxu0 %v3619
        %4218 = vmatprep.subr.bf16.mxu0 %v3613
        %4219 = vmatpush1.bf16.msra.mxu0 %v3612
        %4220 = vmatprep.subr.bf16.mxu0 %v3606
        %4221 = vmatpush1.bf16.msra.mxu0 %v3605
        %4222 = vmatprep.subr.bf16.mxu0 %v3711
        %4223 = vmatpush2.bf16.msra.mxu0 %v3710
        %4224 = vmatprep.subr.bf16.mxu0 %v3704
        %4225 = vmatpush2.bf16.msra.mxu0 %v3703
        %4226 = vmatprep.subr.bf16.mxu0 %v3697
        %4227 = vmatpush2.bf16.msra.mxu0 %v3696
        %4228 = vmatprep.subr.bf16.mxu0 %v3690
        %4229 = vmatpush2.bf16.msra.mxu0 %v3689
        %4230 = vmatprep.subr.bf16.mxu0 %v3683
        %4231 = vmatpush2.bf16.msra.mxu0 %v3682
        %4232 = vmatprep.subr.bf16.mxu0 %v3676
        %4233 = vmatpush2.bf16.msra.mxu0 %v3675
        %4234 = vmatprep.subr.bf16.mxu0 %v3669
        %4235 = vmatpush2.bf16.msra.mxu0 %v3668
        %4236 = vmatprep.subr.bf16.mxu0 %v3662
        %4237 = vmatpush2.bf16.msra.mxu0 %v3661
        %4238 = vmatprep.mubr.bf16.mxu0 %v1982
        %4239 = vmatmul.mubr.bf16.gmra.mxu0 %v1981
        %v4240 = vpop.f32.mrf.mxu0
        %v4241 = vadd.f32 %v4200, %v4240
        %v4242 = vpop.f32.mrf.mxu0
        %v4243 = vadd.f32 %v4202, %v4242
        %v4244 = vpop.f32.mrf.mxu0
        %v4245 = vpop.f32.mrf.mxu0
        %4246 = vdwg.mxu0
        %4247 = vmatprep.subr.bf16.mxu0 %v3767
        %4248 = vmatpush1.bf16.msra.mxu0 %v3766
        %4249 = vmatprep.subr.bf16.mxu0 %v3760
        %4250 = vmatpush1.bf16.msra.mxu0 %v3759
        %4251 = vmatprep.subr.bf16.mxu0 %v3753
        %4252 = vmatpush1.bf16.msra.mxu0 %v3752
        %4253 = vmatprep.subr.bf16.mxu0 %v3746
        %4254 = vmatpush1.bf16.msra.mxu0 %v3745
        %4255 = vmatprep.subr.bf16.mxu0 %v3739
        %4256 = vmatpush1.bf16.msra.mxu0 %v3738
        %4257 = vmatprep.subr.bf16.mxu0 %v3732
        %4258 = vmatpush1.bf16.msra.mxu0 %v3731
        %4259 = vmatprep.subr.bf16.mxu0 %v3725
        %4260 = vmatpush1.bf16.msra.mxu0 %v3724
        %4261 = vmatprep.subr.bf16.mxu0 %v3718
        %4262 = vmatpush1.bf16.msra.mxu0 %v3717
        %4263 = vmatprep.subr.bf16.mxu0 %v3823
        %4264 = vmatpush2.bf16.msra.mxu0 %v3822
        %4265 = vmatprep.subr.bf16.mxu0 %v3816
        %4266 = vmatpush2.bf16.msra.mxu0 %v3815
        %4267 = vmatprep.subr.bf16.mxu0 %v3809
        %4268 = vmatpush2.bf16.msra.mxu0 %v3808
        %4269 = vmatprep.subr.bf16.mxu0 %v3802
        %4270 = vmatpush2.bf16.msra.mxu0 %v3801
        %4271 = vmatprep.subr.bf16.mxu0 %v3795
        %4272 = vmatpush2.bf16.msra.mxu0 %v3794
        %4273 = vmatprep.subr.bf16.mxu0 %v3788
        %4274 = vmatpush2.bf16.msra.mxu0 %v3787
        %4275 = vmatprep.subr.bf16.mxu0 %v3781
        %4276 = vmatpush2.bf16.msra.mxu0 %v3780
        %4277 = vmatprep.subr.bf16.mxu0 %v3774
        %4278 = vmatpush2.bf16.msra.mxu0 %v3773
        %4279 = vmatprep.mubr.bf16.mxu0 %v1984
        %4280 = vmatmul.mubr.bf16.gmra.mxu0 %v1983
        %v4281 = vpop.f32.mrf.mxu0
        %v4282 = vadd.f32 %v4241, %v4281
        %v4283 = vpop.f32.mrf.mxu0
        %v4284 = vadd.f32 %v4243, %v4283
        %v4285 = vpop.f32.mrf.mxu0
        %v4286 = vpop.f32.mrf.mxu0
        %4287 = vdwg.mxu0
        %4288 = vmatprep.subr.bf16.mxu0 %v3545
        %4289 = vmatpush1.bf16.msra.mxu0 %v3544
        %4290 = vmatprep.subr.bf16.mxu0 %v3538
        %4291 = vmatpush1.bf16.msra.mxu0 %v3537
        %4292 = vmatprep.subr.bf16.mxu0 %v3531
        %4293 = vmatpush1.bf16.msra.mxu0 %v3530
        %4294 = vmatprep.subr.bf16.mxu0 %v3524
        %4295 = vmatpush1.bf16.msra.mxu0 %v3523
        %4296 = vmatprep.subr.bf16.mxu0 %v3517
        %4297 = vmatpush1.bf16.msra.mxu0 %v3516
        %4298 = vmatprep.subr.bf16.mxu0 %v3510
        %4299 = vmatpush1.bf16.msra.mxu0 %v3509
        %4300 = vmatprep.subr.bf16.mxu0 %v3503
        %4301 = vmatpush1.bf16.msra.mxu0 %v3502
        %4302 = vmatprep.subr.bf16.mxu0 %v3496
        %4303 = vmatpush1.bf16.msra.mxu0 %v3495
        %4304 = vmatprep.subr.bf16.mxu0 %v3601
        %4305 = vmatpush2.bf16.msra.mxu0 %v3600
        %4306 = vmatprep.subr.bf16.mxu0 %v3594
        %4307 = vmatpush2.bf16.msra.mxu0 %v3593
        %4308 = vmatprep.subr.bf16.mxu0 %v3587
        %4309 = vmatpush2.bf16.msra.mxu0 %v3586
        %4310 = vmatprep.subr.bf16.mxu0 %v3580
        %4311 = vmatpush2.bf16.msra.mxu0 %v3579
        %4312 = vmatprep.subr.bf16.mxu0 %v3573
        %4313 = vmatpush2.bf16.msra.mxu0 %v3572
        %4314 = vmatprep.subr.bf16.mxu0 %v3566
        %4315 = vmatpush2.bf16.msra.mxu0 %v3565
        %4316 = vmatprep.subr.bf16.mxu0 %v3559
        %4317 = vmatpush2.bf16.msra.mxu0 %v3558
        %4318 = vmatprep.subr.bf16.mxu0 %v3552
        %4319 = vmatpush2.bf16.msra.mxu0 %v3551
        %4320 = vmatprep.mubr.bf16.mxu0 %v1980
        %4321 = vmatmul.mubr.bf16.gmra.mxu0 %v1979
        %v4322 = vpop.f32.mrf.mxu0
        %v4323 = vadd.f32 %v2420, %v4322
        %v4324 = vpop.f32.mrf.mxu0
        %v4325 = vadd.f32 %v2424, %v4324
        %v4326 = vpop.f32.mrf.mxu0
        %v4327 = vpop.f32.mrf.mxu0
        %4328 = vdwg.mxu0
        %4329 = vmatprep.subr.bf16.mxu0 %v3657
        %4330 = vmatpush1.bf16.msra.mxu0 %v3656
        %4331 = vmatprep.subr.bf16.mxu0 %v3650
        %4332 = vmatpush1.bf16.msra.mxu0 %v3649
        %4333 = vmatprep.subr.bf16.mxu0 %v3643
        %4334 = vmatpush1.bf16.msra.mxu0 %v3642
        %4335 = vmatprep.subr.bf16.mxu0 %v3636
        %4336 = vmatpush1.bf16.msra.mxu0 %v3635
        %4337 = vmatprep.subr.bf16.mxu0 %v3629
        %4338 = vmatpush1.bf16.msra.mxu0 %v3628
        %4339 = vmatprep.subr.bf16.mxu0 %v3622
        %4340 = vmatpush1.bf16.msra.mxu0 %v3621
        %4341 = vmatprep.subr.bf16.mxu0 %v3615
        %4342 = vmatpush1.bf16.msra.mxu0 %v3614
        %4343 = vmatprep.subr.bf16.mxu0 %v3608
        %4344 = vmatpush1.bf16.msra.mxu0 %v3607
        %4345 = vmatprep.subr.bf16.mxu0 %v3713
        %4346 = vmatpush2.bf16.msra.mxu0 %v3712
        %4347 = vmatprep.subr.bf16.mxu0 %v3706
        %4348 = vmatpush2.bf16.msra.mxu0 %v3705
        %4349 = vmatprep.subr.bf16.mxu0 %v3699
        %4350 = vmatpush2.bf16.msra.mxu0 %v3698
        %4351 = vmatprep.subr.bf16.mxu0 %v3692
        %4352 = vmatpush2.bf16.msra.mxu0 %v3691
        %4353 = vmatprep.subr.bf16.mxu0 %v3685
        %4354 = vmatpush2.bf16.msra.mxu0 %v3684
        %4355 = vmatprep.subr.bf16.mxu0 %v3678
        %4356 = vmatpush2.bf16.msra.mxu0 %v3677
        %4357 = vmatprep.subr.bf16.mxu0 %v3671
        %4358 = vmatpush2.bf16.msra.mxu0 %v3670
        %4359 = vmatprep.subr.bf16.mxu0 %v3664
        %4360 = vmatpush2.bf16.msra.mxu0 %v3663
        %4361 = vmatprep.mubr.bf16.mxu0 %v1982
        %4362 = vmatmul.mubr.bf16.gmra.mxu0 %v1981
        %v4363 = vpop.f32.mrf.mxu0
        %v4364 = vadd.f32 %v4323, %v4363
        %v4365 = vpop.f32.mrf.mxu0
        %v4366 = vadd.f32 %v4325, %v4365
        %v4367 = vpop.f32.mrf.mxu0
        %v4368 = vpop.f32.mrf.mxu0
        %4369 = vdwg.mxu0
        %4370 = vmatprep.subr.bf16.mxu0 %v3769
        %4371 = vmatpush1.bf16.msra.mxu0 %v3768
        %4372 = vmatprep.subr.bf16.mxu0 %v3762
        %4373 = vmatpush1.bf16.msra.mxu0 %v3761
        %4374 = vmatprep.subr.bf16.mxu0 %v3755
        %4375 = vmatpush1.bf16.msra.mxu0 %v3754
        %4376 = vmatprep.subr.bf16.mxu0 %v3748
        %4377 = vmatpush1.bf16.msra.mxu0 %v3747
        %4378 = vmatprep.subr.bf16.mxu0 %v3741
        %4379 = vmatpush1.bf16.msra.mxu0 %v3740
        %4380 = vmatprep.subr.bf16.mxu0 %v3734
        %4381 = vmatpush1.bf16.msra.mxu0 %v3733
        %4382 = vmatprep.subr.bf16.mxu0 %v3727
        %4383 = vmatpush1.bf16.msra.mxu0 %v3726
        %4384 = vmatprep.subr.bf16.mxu0 %v3720
        %4385 = vmatpush1.bf16.msra.mxu0 %v3719
        %4386 = vmatprep.subr.bf16.mxu0 %v3825
        %4387 = vmatpush2.bf16.msra.mxu0 %v3824
        %4388 = vmatprep.subr.bf16.mxu0 %v3818
        %4389 = vmatpush2.bf16.msra.mxu0 %v3817
        %4390 = vmatprep.subr.bf16.mxu0 %v3811
        %4391 = vmatpush2.bf16.msra.mxu0 %v3810
        %4392 = vmatprep.subr.bf16.mxu0 %v3804
        %4393 = vmatpush2.bf16.msra.mxu0 %v3803
        %4394 = vmatprep.subr.bf16.mxu0 %v3797
        %4395 = vmatpush2.bf16.msra.mxu0 %v3796
        %4396 = vmatprep.subr.bf16.mxu0 %v3790
        %4397 = vmatpush2.bf16.msra.mxu0 %v3789
        %4398 = vmatprep.subr.bf16.mxu0 %v3783
        %4399 = vmatpush2.bf16.msra.mxu0 %v3782
        %4400 = vmatprep.subr.bf16.mxu0 %v3776
        %4401 = vmatpush2.bf16.msra.mxu0 %v3775
        %4402 = vmatprep.mubr.bf16.mxu0 %v1984
        %4403 = vmatmul.mubr.bf16.gmra.mxu0 %v1983
        %v4404 = vpop.f32.mrf.mxu0
        %v4405 = vadd.f32 %v4364, %v4404
        %v4406 = vpop.f32.mrf.mxu0
        %v4407 = vadd.f32 %v4366, %v4406
        %v4408 = vpop.f32.mrf.mxu0
        %v4409 = vpop.f32.mrf.mxu0
        %4410 = vdwg.mxu0
        %4411 = vmatprep.subr.bf16.mxu0 %v3547
        %4412 = vmatpush1.bf16.msra.mxu0 %v3546
        %4413 = vmatprep.subr.bf16.mxu0 %v3540
        %4414 = vmatpush1.bf16.msra.mxu0 %v3539
        %4415 = vmatprep.subr.bf16.mxu0 %v3533
        %4416 = vmatpush1.bf16.msra.mxu0 %v3532
        %4417 = vmatprep.subr.bf16.mxu0 %v3526
        %4418 = vmatpush1.bf16.msra.mxu0 %v3525
        %4419 = vmatprep.subr.bf16.mxu0 %v3519
        %4420 = vmatpush1.bf16.msra.mxu0 %v3518
        %4421 = vmatprep.subr.bf16.mxu0 %v3512
        %4422 = vmatpush1.bf16.msra.mxu0 %v3511
        %4423 = vmatprep.subr.bf16.mxu0 %v3505
        %4424 = vmatpush1.bf16.msra.mxu0 %v3504
        %4425 = vmatprep.subr.bf16.mxu0 %v3498
        %4426 = vmatpush1.bf16.msra.mxu0 %v3497
        %4427 = vmatprep.subr.bf16.mxu0 %v3603
        %4428 = vmatpush2.bf16.msra.mxu0 %v3602
        %4429 = vmatprep.subr.bf16.mxu0 %v3596
        %4430 = vmatpush2.bf16.msra.mxu0 %v3595
        %4431 = vmatprep.subr.bf16.mxu0 %v3589
        %4432 = vmatpush2.bf16.msra.mxu0 %v3588
        %4433 = vmatprep.subr.bf16.mxu0 %v3582
        %4434 = vmatpush2.bf16.msra.mxu0 %v3581
        %4435 = vmatprep.subr.bf16.mxu0 %v3575
        %4436 = vmatpush2.bf16.msra.mxu0 %v3574
        %4437 = vmatprep.subr.bf16.mxu0 %v3568
        %4438 = vmatpush2.bf16.msra.mxu0 %v3567
        %4439 = vmatprep.subr.bf16.mxu0 %v3561
        %4440 = vmatpush2.bf16.msra.mxu0 %v3560
        %4441 = vmatprep.subr.bf16.mxu0 %v3554
        %4442 = vmatpush2.bf16.msra.mxu0 %v3553
        %4443 = vmatprep.mubr.bf16.mxu0 %v1980
        %4444 = vmatmul.mubr.bf16.gmra.mxu0 %v1979
        %v4445 = vpop.f32.mrf.mxu0
        %v4446 = vadd.f32 %v2428, %v4445
        %v4447 = vpop.f32.mrf.mxu0
        %v4448 = vadd.f32 %v2432, %v4447
        %v4449 = vpop.f32.mrf.mxu0
        %v4450 = vpop.f32.mrf.mxu0
        %4451 = vdwg.mxu0
        %4452 = vmatprep.subr.bf16.mxu0 %v3659
        %4453 = vmatpush1.bf16.msra.mxu0 %v3658
        %4454 = vmatprep.subr.bf16.mxu0 %v3652
        %4455 = vmatpush1.bf16.msra.mxu0 %v3651
        %4456 = vmatprep.subr.bf16.mxu0 %v3645
        %4457 = vmatpush1.bf16.msra.mxu0 %v3644
        %4458 = vmatprep.subr.bf16.mxu0 %v3638
        %4459 = vmatpush1.bf16.msra.mxu0 %v3637
        %4460 = vmatprep.subr.bf16.mxu0 %v3631
        %4461 = vmatpush1.bf16.msra.mxu0 %v3630
        %4462 = vmatprep.subr.bf16.mxu0 %v3624
        %4463 = vmatpush1.bf16.msra.mxu0 %v3623
        %4464 = vmatprep.subr.bf16.mxu0 %v3617
        %4465 = vmatpush1.bf16.msra.mxu0 %v3616
        %4466 = vmatprep.subr.bf16.mxu0 %v3610
        %4467 = vmatpush1.bf16.msra.mxu0 %v3609
        %4468 = vmatprep.subr.bf16.mxu0 %v3715
        %4469 = vmatpush2.bf16.msra.mxu0 %v3714
        %4470 = vmatprep.subr.bf16.mxu0 %v3708
        %4471 = vmatpush2.bf16.msra.mxu0 %v3707
        %4472 = vmatprep.subr.bf16.mxu0 %v3701
        %4473 = vmatpush2.bf16.msra.mxu0 %v3700
        %4474 = vmatprep.subr.bf16.mxu0 %v3694
        %4475 = vmatpush2.bf16.msra.mxu0 %v3693
        %4476 = vmatprep.subr.bf16.mxu0 %v3687
        %4477 = vmatpush2.bf16.msra.mxu0 %v3686
        %4478 = vmatprep.subr.bf16.mxu0 %v3680
        %4479 = vmatpush2.bf16.msra.mxu0 %v3679
        %4480 = vmatprep.subr.bf16.mxu0 %v3673
        %4481 = vmatpush2.bf16.msra.mxu0 %v3672
        %4482 = vmatprep.subr.bf16.mxu0 %v3666
        %4483 = vmatpush2.bf16.msra.mxu0 %v3665
        %4484 = vmatprep.mubr.bf16.mxu0 %v1982
        %4485 = vmatmul.mubr.bf16.gmra.mxu0 %v1981
        %v4486 = vpop.f32.mrf.mxu0
        %v4487 = vadd.f32 %v4446, %v4486
        %v4488 = vpop.f32.mrf.mxu0
        %v4489 = vadd.f32 %v4448, %v4488
        %v4490 = vpop.f32.mrf.mxu0
        %v4491 = vpop.f32.mrf.mxu0
        %4492 = vdwg.mxu0
        %4493 = vmatprep.subr.bf16.mxu0 %v3771
        %4494 = vmatpush1.bf16.msra.mxu0 %v3770
        %4495 = vmatprep.subr.bf16.mxu0 %v3764
        %4496 = vmatpush1.bf16.msra.mxu0 %v3763
        %4497 = vmatprep.subr.bf16.mxu0 %v3757
        %4498 = vmatpush1.bf16.msra.mxu0 %v3756
        %4499 = vmatprep.subr.bf16.mxu0 %v3750
        %4500 = vmatpush1.bf16.msra.mxu0 %v3749
        %4501 = vmatprep.subr.bf16.mxu0 %v3743
        %4502 = vmatpush1.bf16.msra.mxu0 %v3742
        %4503 = vmatprep.subr.bf16.mxu0 %v3736
        %4504 = vmatpush1.bf16.msra.mxu0 %v3735
        %4505 = vmatprep.subr.bf16.mxu0 %v3729
        %4506 = vmatpush1.bf16.msra.mxu0 %v3728
        %4507 = vmatprep.subr.bf16.mxu0 %v3722
        %4508 = vmatpush1.bf16.msra.mxu0 %v3721
        %4509 = vmatprep.subr.bf16.mxu0 %v3827
        %4510 = vmatpush2.bf16.msra.mxu0 %v3826
        %4511 = vmatprep.subr.bf16.mxu0 %v3820
        %4512 = vmatpush2.bf16.msra.mxu0 %v3819
        %4513 = vmatprep.subr.bf16.mxu0 %v3813
        %4514 = vmatpush2.bf16.msra.mxu0 %v3812
        %4515 = vmatprep.subr.bf16.mxu0 %v3806
        %4516 = vmatpush2.bf16.msra.mxu0 %v3805
        %4517 = vmatprep.subr.bf16.mxu0 %v3799
        %4518 = vmatpush2.bf16.msra.mxu0 %v3798
        %4519 = vmatprep.subr.bf16.mxu0 %v3792
        %4520 = vmatpush2.bf16.msra.mxu0 %v3791
        %4521 = vmatprep.subr.bf16.mxu0 %v3785
        %4522 = vmatpush2.bf16.msra.mxu0 %v3784
        %4523 = vmatprep.subr.bf16.mxu0 %v3778
        %4524 = vmatpush2.bf16.msra.mxu0 %v3777
        %4525 = vmatprep.mubr.bf16.mxu0 %v1984
        %4526 = vmatmul.mubr.bf16.gmra.mxu0 %v1983
        %v4527 = vpop.f32.mrf.mxu0
        %v4528 = vadd.f32 %v4487, %v4527
        %v4529 = vpop.f32.mrf.mxu0
        %v4530 = vadd.f32 %v4489, %v4529
        %v4531 = vpop.f32.mrf.mxu0
        %v4532 = vpop.f32.mrf.mxu0
        %4533 = vdwg.mxu0
        %4534 = vmatprep.subr.bf16.mxu0 0
        %4535 = vmatpush1.bf16.msra.mxu0 %v3548
        %4536 = vmatprep.subr.bf16.mxu0 0
        %4537 = vmatpush1.bf16.msra.mxu0 %v3541
        %4538 = vmatprep.subr.bf16.mxu0 0
        %4539 = vmatpush1.bf16.msra.mxu0 %v3534
        %4540 = vmatprep.subr.bf16.mxu0 0
        %4541 = vmatpush1.bf16.msra.mxu0 %v3527
        %4542 = vmatprep.subr.bf16.mxu0 0
        %4543 = vmatpush1.bf16.msra.mxu0 %v3520
        %4544 = vmatprep.subr.bf16.mxu0 0
        %4545 = vmatpush1.bf16.msra.mxu0 %v3513
        %4546 = vmatprep.subr.bf16.mxu0 0
        %4547 = vmatpush1.bf16.msra.mxu0 %v3506
        %4548 = vmatprep.subr.bf16.mxu0 0
        %4549 = vmatpush1.bf16.msra.mxu0 %v3499
        %4550 = vmatprep.subr.bf16.mxu0 0
        %4551 = vmatpush2.bf16.msra.mxu0 %v3604
        %4552 = vmatprep.subr.bf16.mxu0 0
        %4553 = vmatpush2.bf16.msra.mxu0 %v3597
        %4554 = vmatprep.subr.bf16.mxu0 0
        %4555 = vmatpush2.bf16.msra.mxu0 %v3590
        %4556 = vmatprep.subr.bf16.mxu0 0
        %4557 = vmatpush2.bf16.msra.mxu0 %v3583
        %4558 = vmatprep.subr.bf16.mxu0 0
        %4559 = vmatpush2.bf16.msra.mxu0 %v3576
        %4560 = vmatprep.subr.bf16.mxu0 0
        %4561 = vmatpush2.bf16.msra.mxu0 %v3569
        %4562 = vmatprep.subr.bf16.mxu0 0
        %4563 = vmatpush2.bf16.msra.mxu0 %v3562
        %4564 = vmatprep.subr.bf16.mxu0 0
        %4565 = vmatpush2.bf16.msra.mxu0 %v3555
        %4566 = vmatprep.mubr.bf16.mxu0 %v1980
        %4567 = vmatmul.mubr.bf16.gmra.mxu0 %v1979
        %v4568 = vpop.f32.mrf.mxu0
        %v4569 = vadd.f32 %v2436, %v4568
        %v4570 = vpop.f32.mrf.mxu0
        %v4571 = vpop.f32.mrf.mxu0
        %v4572 = vpop.f32.mrf.mxu0
        %4573 = vdwg.mxu0
        %4574 = vmatprep.subr.bf16.mxu0 0
        %4575 = vmatpush1.bf16.msra.mxu0 %v3660
        %4576 = vmatprep.subr.bf16.mxu0 0
        %4577 = vmatpush1.bf16.msra.mxu0 %v3653
        %4578 = vmatprep.subr.bf16.mxu0 0
        %4579 = vmatpush1.bf16.msra.mxu0 %v3646
        %4580 = vmatprep.subr.bf16.mxu0 0
        %4581 = vmatpush1.bf16.msra.mxu0 %v3639
        %4582 = vmatprep.subr.bf16.mxu0 0
        %4583 = vmatpush1.bf16.msra.mxu0 %v3632
        %4584 = vmatprep.subr.bf16.mxu0 0
        %4585 = vmatpush1.bf16.msra.mxu0 %v3625
        %4586 = vmatprep.subr.bf16.mxu0 0
        %4587 = vmatpush1.bf16.msra.mxu0 %v3618
        %4588 = vmatprep.subr.bf16.mxu0 0
        %4589 = vmatpush1.bf16.msra.mxu0 %v3611
        %4590 = vmatprep.subr.bf16.mxu0 0
        %4591 = vmatpush2.bf16.msra.mxu0 %v3716
        %4592 = vmatprep.subr.bf16.mxu0 0
        %4593 = vmatpush2.bf16.msra.mxu0 %v3709
        %4594 = vmatprep.subr.bf16.mxu0 0
        %4595 = vmatpush2.bf16.msra.mxu0 %v3702
        %4596 = vmatprep.subr.bf16.mxu0 0
        %4597 = vmatpush2.bf16.msra.mxu0 %v3695
        %4598 = vmatprep.subr.bf16.mxu0 0
        %4599 = vmatpush2.bf16.msra.mxu0 %v3688
        %4600 = vmatprep.subr.bf16.mxu0 0
        %4601 = vmatpush2.bf16.msra.mxu0 %v3681
        %4602 = vmatprep.subr.bf16.mxu0 0
        %4603 = vmatpush2.bf16.msra.mxu0 %v3674
        %4604 = vmatprep.subr.bf16.mxu0 0
        %4605 = vmatpush2.bf16.msra.mxu0 %v3667
        %4606 = vmatprep.mubr.bf16.mxu0 %v1982
        %4607 = vmatmul.mubr.bf16.gmra.mxu0 %v1981
        %v4608 = vpop.f32.mrf.mxu0
        %v4609 = vadd.f32 %v4569, %v4608
        %v4610 = vpop.f32.mrf.mxu0
        %v4611 = vpop.f32.mrf.mxu0
        %v4612 = vpop.f32.mrf.mxu0
        %4613 = vdwg.mxu0
        %4614 = vmatprep.subr.bf16.mxu0 0
        %4615 = vmatpush1.bf16.msra.mxu0 %v3772
        %4616 = vmatprep.subr.bf16.mxu0 0
        %4617 = vmatpush1.bf16.msra.mxu0 %v3765
        %4618 = vmatprep.subr.bf16.mxu0 0
        %4619 = vmatpush1.bf16.msra.mxu0 %v3758
        %4620 = vmatprep.subr.bf16.mxu0 0
        %4621 = vmatpush1.bf16.msra.mxu0 %v3751
        %4622 = vmatprep.subr.bf16.mxu0 0
        %4623 = vmatpush1.bf16.msra.mxu0 %v3744
        %4624 = vmatprep.subr.bf16.mxu0 0
        %4625 = vmatpush1.bf16.msra.mxu0 %v3737
        %4626 = vmatprep.subr.bf16.mxu0 0
        %4627 = vmatpush1.bf16.msra.mxu0 %v3730
        %4628 = vmatprep.subr.bf16.mxu0 0
        %4629 = vmatpush1.bf16.msra.mxu0 %v3723
        %4630 = vmatprep.subr.bf16.mxu0 0
        %4631 = vmatpush2.bf16.msra.mxu0 %v3828
        %4632 = vmatprep.subr.bf16.mxu0 0
        %4633 = vmatpush2.bf16.msra.mxu0 %v3821
        %4634 = vmatprep.subr.bf16.mxu0 0
        %4635 = vmatpush2.bf16.msra.mxu0 %v3814
        %4636 = vmatprep.subr.bf16.mxu0 0
        %4637 = vmatpush2.bf16.msra.mxu0 %v3807
        %4638 = vmatprep.subr.bf16.mxu0 0
        %4639 = vmatpush2.bf16.msra.mxu0 %v3800
        %4640 = vmatprep.subr.bf16.mxu0 0
        %4641 = vmatpush2.bf16.msra.mxu0 %v3793
        %4642 = vmatprep.subr.bf16.mxu0 0
        %4643 = vmatpush2.bf16.msra.mxu0 %v3786
        %4644 = vmatprep.subr.bf16.mxu0 0
        %4645 = vmatpush2.bf16.msra.mxu0 %v3779
        %4646 = vmatprep.mubr.bf16.mxu0 %v1984
        %4647 = vmatmul.mubr.bf16.gmra.mxu0 %v1983
        %v4648 = vpop.f32.mrf.mxu0
        %v4649 = vadd.f32 %v4609, %v4648
        %v4650 = vpop.f32.mrf.mxu0
        %v4651 = vpop.f32.mrf.mxu0
        %v4652 = vpop.f32.mrf.mxu0
        %4653 = vdwg.mxu0
        %v4654 = vsub.f32 0.0, %v4282
        %v4655 = vsub.f32 0.0, %v4284
        %v4656 = vsub.f32 0.0, %v4405
        %v4657 = vsub.f32 0.0, %v4407
        %v4658 = vsub.f32 0.0, %v4528
        %v4659 = vsub.f32 0.0, %v4530
        %v4660 = vsub.f32 0.0, %v4649
        %v4661 = vmul.f32 %v4654, 1.442695
        %v4662 = vpow.pop %v4661
        %v4663 = vmul.f32 %v4655, 1.442695
        %v4664 = vpow.pop %v4663
        %v4665 = vmul.f32 %v4656, 1.442695
        %v4666 = vpow.pop %v4665
        %v4667 = vmul.f32 %v4657, 1.442695
        %v4668 = vpow.pop %v4667
        %v4669 = vmul.f32 %v4658, 1.442695
        %v4670 = vpow.pop %v4669
        %v4671 = vmul.f32 %v4659, 1.442695
        %v4672 = vpow.pop %v4671
        %v4673 = vmul.f32 %v4660, 1.442695
        %v4674 = vpow.pop %v4673
        %v4675 = vadd.f32 %v4662, 1.0
        %v4676 = vadd.f32 %v4664, 1.0
        %v4677 = vadd.f32 %v4666, 1.0
        %v4678 = vadd.f32 %v4668, 1.0
        %v4679 = vadd.f32 %v4670, 1.0
        %v4680 = vadd.f32 %v4672, 1.0
        %v4681 = vadd.f32 %v4674, 1.0
        %v4682 = vrcp.pop %v4675
        %v4683 = vrcp.pop %v4676
        %v4684 = vrcp.pop %v4677
        %v4685 = vrcp.pop %v4678
        %v4686 = vrcp.pop %v4679
        %v4687 = vrcp.pop %v4680
        %v4688 = vrcp.pop %v4681
        %4689 = vst [vmem:[%s455] sm:$0xff] %v4682
        %4690 = vst [vmem:[%s455 + $0x8] sm:$0xff] %v4683
        %4691 = vst [vmem:[%s455 + $0x10] sm:$0xff] %v4684
        %4692 = vst [vmem:[%s455 + $0x18] sm:$0xff] %v4685
        %4693 = vst [vmem:[%s455 + $0x20] sm:$0xff] %v4686
        %4694 = vst [vmem:[%s455 + $0x28] sm:$0xff] %v4687
        %4695 = vst [vmem:[%s455 + $0x30] sm:$0xff] %v4688
        %s4696 = sand.u32 %s232, 1
        %s4697 = scalar_lea.sflag [#allocation4], %s4696
        %s4698 = sand.u32 %s232, 1
        %s4699 = smul.addr %s4698, 56
        %s4700 = scalar_lea.vmem [#allocation17], %s4699
        // Predicated region
        $region93: #{tpu_custom_call.1} parent=55 // pred_check
          %p4701 = pneg %p242
        $region94: #{tpu_custom_call.1} parent=55 // pred_check_branch
          %4703 = sbr.rel (%p4701) target = $region96
        $region95: #{tpu_custom_call.1} parent=55 // pred_region
          %s4705 = ssub.s32 896, 896
          %4706 = vsyncadd %s4697, %s4705
          %s4707 = smul.addr %s30, 7
          %s4708 = smul.addr %s4707, 128
          %s4709 = scalar_lea.hbm %s9, %s4708
          %s4711 = sshll.u32 %s4700, 4
          %s4712 = int_to_ptr.vmem [resolvable:$true] %s4711
          %4714 = dma.vmem_to_hbm [thread:$0]  %s4712, 896, %s4709, %s4697
        $region96: #{tpu_custom_call.1} parent=55 // pred_fallthru
          _
      $region56: #{tpu_custom_call.1} parent=5 // pred_fallthru
        _
      %p4715 = scmp.le.s32.totalorder 2, %s25
      // Predicated region
      $region97: #{tpu_custom_call.1} parent=5 // pred_check
        %p4716 = pneg %p4715
      $region98: #{tpu_custom_call.1} parent=5 // pred_check_branch
        %4718 = sbr.rel (%p4716) target = $region100
      $region99: #{tpu_custom_call.1} parent=5 // pred_region
        %s4719 = ssub.s32 %s25, 2
        // Predicated region
        $region101: #{tpu_custom_call.1} parent=99 // pred_check
          %p4720 = pneg %p248
        $region102: #{tpu_custom_call.1} parent=99 // pred_check_branch
          %4722 = sbr.rel (%p4720) target = $region104
        $region103: #{tpu_custom_call.1} parent=99 // pred_region
          %s4723 = sand.u32 %s233, 1
          %s4724 = scalar_lea.sflag [#allocation4], %s4723
          %s4725 = sand.u32 %s233, 1
          %s4726 = smul.addr %s4725, 56
          %s4727 = scalar_lea.vmem [#allocation17], %s4726
          %4728 = dma.done %s4724, 896
        $region104: #{tpu_custom_call.1} parent=99 // pred_fallthru
          _
      $region100: #{tpu_custom_call.1} parent=5 // pred_fallthru
        _
    $region6: #{tpu_custom_call.1} parent=1 // loop_footer
      %s29 = sadd.s32 1, %s25
    $region7: #{tpu_custom_call.1} parent=1 // loop_footer_branch
      %24 = sbr.rel target = $region3
    $region8: #{tpu_custom_call.1} parent=1 // loop_exit
      _
    %4729 = vsyncpa [#allocation3], 1
    %s4730 = scalar_lea.sflag [#allocation3], 1
    %4731 = vsyncpa %s4730, 1
    %4732 = vsyncpa [#allocation6], 1
    %4733 = vsyncpa [#allocation9], 1
    %4734 = vsyncpa [#allocation12], 1
    %4735 = vsyncpa [#allocation15], 1
    %4736 = vsyncpa [#allocation4], 1
    %s4737 = scalar_lea.sflag [#allocation4], 1
    %4738 = vsyncpa %s4737, 1

// kernel: tpu_custom_call.1
$region0: #{tpu_custom_call.1}
  #allocation0 [shape = 'u32[]', space=smem, size = 0x4, offset = 0x4, fixed_abs, tag = 'smem constant byte address 0x4 - core index']
  #allocation1 [shape = 'u32[144,128]{1,0:T(1,128)}', space=vmem, size = 0x12000, scoped, tag = 'internal scratch']
  %s0 = inlined_call_operand.hbm [shape: f32[16,32], index: 0, kind: input, shape index: {}]
  %s1 = inlined_call_operand.hbm [shape: bf16[32,128], index: 1, kind: input, shape index: {}]
  %s2 = inlined_call_operand.hbm [shape: bf16[1,128], index: 2, kind: input, shape index: {}]
  %s3 = inlined_call_operand.hbm [shape: bf16[128,384], index: 3, kind: input, shape index: {}]
  %s4 = inlined_call_operand.hbm [shape: bf16[1,384], index: 4, kind: input, shape index: {}]
  %s5 = inlined_call_operand.hbm [shape: bf16[384,768], index: 5, kind: input, shape index: {}]
  %s6 = inlined_call_operand.hbm [shape: bf16[1,768], index: 6, kind: input, shape index: {}]
  %s7 = inlined_call_operand.hbm [shape: bf16[768,896], index: 7, kind: input, shape index: {}]
  %s8 = inlined_call_operand.hbm [shape: bf16[1,896], index: 8, kind: input, shape index: {}]
  %s9 = inlined_call_operand.hbm [shape: f32[16,896], index: 9, kind: output, shape index: {}]
  %s10 = sld [smem:[#allocation0]]
  $region105: #{tpu_custom_call.1} parent=0
    _
  %s12 = ssub.s32 1, %s10
  %s13 = scalar_select 0, %s12, %s10
  $region1: #{tpu_custom_call.1} parent=0
    #allocation2 [shape = 'u8[8192]{0}', space=vmem, size = 0x2000, scoped, tag = 'input window, operand 0']
    #allocation3 [shape = 's32[2]{0}', space=sflag, size = 0x8, scoped, tag = 'scoped memory for tpu_custom_call.1']
    #allocation4 [shape = 's32[2]{0}', space=sflag, size = 0x8, scoped, tag = 'scoped memory for tpu_custom_call.1']
    #allocation5 [shape = 'u8[8192]{0}', space=vmem, size = 0x2000, scoped, tag = 'input window, operand 1, single buffered']
    #allocation6 [shape = 's32[1]{0}', space=sflag, size = 0x4, scoped, tag = 'scoped memory for tpu_custom_call.1']
    #allocation7 [shape = 'u8[512]{0}', space=vmem, size = 0x400, scoped, tag = 'input window, operand 2, single buffered']
    #allocation8 [shape = 'u8[98304]{0}', space=vmem, size = 0x18000, scoped, tag = 'input window, operand 3, single buffered']
    #allocation9 [shape = 's32[1]{0}', space=sflag, size = 0x4, scoped, tag = 'scoped memory for tpu_custom_call.1']
    #allocation10 [shape = 'u8[1536]{0}', space=vmem, size = 0x800, scoped, tag = 'input window, operand 4, single buffered']
    #allocation11 [shape = 'u8[589824]{0}', space=vmem, size = 0x90000, scoped, tag = 'input window, operand 5, single buffered']
    #allocation12 [shape = 's32[1]{0}', space=sflag, size = 0x4, scoped, tag = 'scoped memory for tpu_custom_call.1']
    #allocation13 [shape = 'u8[3072]{0}', space=vmem, size = 0xc00, scoped, tag = 'input window, operand 6, single buffered']
    #allocation14 [shape = 'u8[1376256]{0}', space=vmem, size = 0x150000, scoped, tag = 'input window, operand 7, single buffered']
    #allocation15 [shape = 's32[1]{0}', space=sflag, size = 0x4, scoped, tag = 'scoped memory for tpu_custom_call.1']
    #allocation16 [shape = 'u8[3584]{0}', space=vmem, size = 0x1000, scoped, tag = 'input window, operand 8, single buffered']
    #allocation17 [shape = 'u8[57344]{0}', space=vmem, size = 0xe000, scoped, tag = 'output window, operand 0']
    %14 = vsyncpa [#allocation3], 0
    %s15 = scalar_lea.sflag [#allocation3], 1
    %16 = vsyncpa %s15, 0
    %17 = vsyncpa [#allocation6], 0
    %18 = vsyncpa [#allocation9], 0
    %19 = vsyncpa [#allocation12], 0
    %20 = vsyncpa [#allocation15], 0
    %21 = vsyncpa [#allocation4], 0
    %s22 = scalar_lea.sflag [#allocation4], 1
    %23 = vsyncpa %s22, 0
    loop: start=0, step=1, limit=4
    $region2: #{tpu_custom_call.1} parent=1 // loop_pre_header
      _
    $region3: #{tpu_custom_call.1} parent=1 // loop_header
      %s25 = sphi 0, %s29
      %p26 = scmp.ge.s32.totalorder %s25, 4
      %s35 = sphi 0, %s37
      %s38 = sphi 0, %s35
      %s39 = sphi 0, %s38
      %s55 = sphi 0, %s39
      %s59 = sphi 0, %s59
      %s61 = sphi 0, %s59
      %s62 = sphi 0, %s61
      %s76 = sphi 0, %s62
      %s80 = sphi 0, %s80
      %s82 = sphi 0, %s80
      %s83 = sphi 0, %s82
      %s97 = sphi 0, %s83
      %s101 = sphi 0, %s101
      %s103 = sphi 0, %s101
      %s104 = sphi 0, %s103
      %s118 = sphi 0, %s104
      %s122 = sphi 0, %s122
      %s124 = sphi 0, %s122
      %s125 = sphi 0, %s124
      %s139 = sphi 0, %s125
      %s143 = sphi 0, %s143
      %s145 = sphi 0, %s143
      %s146 = sphi 0, %s145
      %s160 = sphi 0, %s146
      %s164 = sphi 0, %s164
      %s166 = sphi 0, %s164
      %s167 = sphi 0, %s166
      %s181 = sphi 0, %s167
      %s185 = sphi 0, %s185
      %s187 = sphi 0, %s185
      %s188 = sphi 0, %s187
      %s202 = sphi 0, %s188
      %s206 = sphi 0, %s206
      %s208 = sphi 0, %s206
      %s209 = sphi 0, %s208
      %s223 = sphi 0, %s209
      %s229 = sphi 0, %s231
      %s232 = sphi 0, %s229
      %s233 = sphi 0, %s232
      %s249 = sphi 0, %s233
    $region4: #{tpu_custom_call.1} parent=1 // loop_header_branch
      %28 = sbr.rel (%p26) target = $region8
    $region5: #{tpu_custom_call.1} parent=1 // loop_body
      %s30 = ssub.s32 %s25, 1
      %s31 = ssub.s32 %s25, 2
      %s32 = sadd.s32 %s25, 1
      %s33 = ssub.s32 %s25, %s32
      %p34 = scmp.eq.s32.totalorder %s33, 0
      %s36 = sadd.s32 %s35, 1
      %s37 = scalar_select %p34, %s35, %s36
      %p40 = pneg %p34
      %p41 = scmp.eq.s32.totalorder %s25, 1
      %p42 = por %p40, %p41
      %p43 = scmp.ne.s32.totalorder %s35, %s38
      %p44 = scmp.eq.s32.totalorder %s25, 0
      %p45 = por %p43, %p44
      %p46 = scmp.ne.s32.totalorder %s35, %s38
      %p47 = scmp.eq.s32.totalorder %s30, 1
      %p48 = por %p46, %p47
      %p49 = scmp.ne.s32.totalorder %s38, %s39
      %p50 = scmp.eq.s32.totalorder %s30, 0
      %p51 = por %p49, %p50
      %p52 = scmp.ne.s32.totalorder %s38, %s39
      %p53 = scmp.eq.s32.totalorder %s31, 1
      %p54 = por %p52, %p53
      %p56 = scmp.ne.s32.totalorder %s39, %s55
      %p57 = scmp.eq.s32.totalorder %s31, 0
      %p58 = por %p56, %p57
      %s60 = sadd.s32 %s59, 1
      %p63 = scmp.eq.s32.totalorder %s25, 1
      %p64 = scmp.ne.s32.totalorder %s59, %s61
      %p65 = scmp.eq.s32.totalorder %s25, 0
      %p66 = por %p64, %p65
      %p67 = scmp.ne.s32.totalorder %s59, %s61
      %p68 = scmp.eq.s32.totalorder %s30, 1
      %p69 = por %p67, %p68
      %p70 = scmp.ne.s32.totalorder %s61, %s62
      %p71 = scmp.eq.s32.totalorder %s30, 0
      %p72 = por %p70, %p71
      %p73 = scmp.ne.s32.totalorder %s61, %s62
      %p74 = scmp.eq.s32.totalorder %s31, 1
      %p75 = por %p73, %p74
      %p77 = scmp.ne.s32.totalorder %s62, %s76
      %p78 = scmp.eq.s32.totalorder %s31, 0
      %p79 = por %p77, %p78
      %s81 = sadd.s32 %s80, 1
      %p84 = scmp.eq.s32.totalorder %s25, 1
      %p85 = scmp.ne.s32.totalorder %s80, %s82
      %p86 = scmp.eq.s32.totalorder %s25, 0
      %p87 = por %p85, %p86
      %p88 = scmp.ne.s32.totalorder %s80, %s82
      %p89 = scmp.eq.s32.totalorder %s30, 1
      %p90 = por %p88, %p89
      %p91 = scmp.ne.s32.totalorder %s82, %s83
      %p92 = scmp.eq.s32.totalorder %s30, 0
      %p93 = por %p91, %p92
      %p94 = scmp.ne.s32.totalorder %s82, %s83
      %p95 = scmp.eq.s32.totalorder %s31, 1
      %p96 = por %p94, %p95
      %p98 = scmp.ne.s32.totalorder %s83, %s97
      %p99 = scmp.eq.s32.totalorder %s31, 0
      %p100 = por %p98, %p99
      %s102 = sadd.s32 %s101, 1
      %p105 = scmp.eq.s32.totalorder %s25, 1
      %p106 = scmp.ne.s32.totalorder %s101, %s103
      %p107 = scmp.eq.s32.totalorder %s25, 0
      %p108 = por %p106, %p107
      %p109 = scmp.ne.s32.totalorder %s101, %s103
      %p110 = scmp.eq.s32.totalorder %s30, 1
      %p111 = por %p109, %p110
      %p112 = scmp.ne.s32.totalorder %s103, %s104
      %p113 = scmp.eq.s32.totalorder %s30, 0
      %p114 = por %p112, %p113
      %p115 = scmp.ne.s32.totalorder %s103, %s104
      %p116 = scmp.eq.s32.totalorder %s31, 1
      %p117 = por %p115, %p116
      %p119 = scmp.ne.s32.totalorder %s104, %s118
      %p120 = scmp.eq.s32.totalorder %s31, 0
      %p121 = por %p119, %p120
      %s123 = sadd.s32 %s122, 1
      %p126 = scmp.eq.s32.totalorder %s25, 1
      %p127 = scmp.ne.s32.totalorder %s122, %s124
      %p128 = scmp.eq.s32.totalorder %s25, 0
      %p129 = por %p127, %p128
      %p130 = scmp.ne.s32.totalorder %s122, %s124
      %p131 = scmp.eq.s32.totalorder %s30, 1
      %p132 = por %p130, %p131
      %p133 = scmp.ne.s32.totalorder %s124, %s125
      %p134 = scmp.eq.s32.totalorder %s30, 0
      %p135 = por %p133, %p134
      %p136 = scmp.ne.s32.totalorder %s124, %s125
      %p137 = scmp.eq.s32.totalorder %s31, 1
      %p138 = por %p136, %p137
      %p140 = scmp.ne.s32.totalorder %s125, %s139
      %p141 = scmp.eq.s32.totalorder %s31, 0
      %p142 = por %p140, %p141
      %s144 = sadd.s32 %s143, 1
      %p147 = scmp.eq.s32.totalorder %s25, 1
      %p148 = scmp.ne.s32.totalorder %s143, %s145
      %p149 = scmp.eq.s32.totalorder %s25, 0
      %p150 = por %p148, %p149
      %p151 = scmp.ne.s32.totalorder %s143, %s145
      %p152 = scmp.eq.s32.totalorder %s30, 1
      %p153 = por %p151, %p152
      %p154 = scmp.ne.s32.totalorder %s145, %s146
      %p155 = scmp.eq.s32.totalorder %s30, 0
      %p156 = por %p154, %p155
      %p157 = scmp.ne.s32.totalorder %s145, %s146
      %p158 = scmp.eq.s32.totalorder %s31, 1
      %p159 = por %p157, %p158
      %p161 = scmp.ne.s32.totalorder %s146, %s160
      %p162 = scmp.eq.s32.totalorder %s31, 0
      %p163 = por %p161, %p162
      %s165 = sadd.s32 %s164, 1
      %p168 = scmp.eq.s32.totalorder %s25, 1
      %p169 = scmp.ne.s32.totalorder %s164, %s166
      %p170 = scmp.eq.s32.totalorder %s25, 0
      %p171 = por %p169, %p170
      %p172 = scmp.ne.s32.totalorder %s164, %s166
      %p173 = scmp.eq.s32.totalorder %s30, 1
      %p174 = por %p172, %p173
      %p175 = scmp.ne.s32.totalorder %s166, %s167
      %p176 = scmp.eq.s32.totalorder %s30, 0
      %p177 = por %p175, %p176
      %p178 = scmp.ne.s32.totalorder %s166, %s167
      %p179 = scmp.eq.s32.totalorder %s31, 1
      %p180 = por %p178, %p179
      %p182 = scmp.ne.s32.totalorder %s167, %s181
      %p183 = scmp.eq.s32.totalorder %s31, 0
      %p184 = por %p182, %p183
      %s186 = sadd.s32 %s185, 1
      %p189 = scmp.eq.s32.totalorder %s25, 1
      %p190 = scmp.ne.s32.totalorder %s185, %s187
      %p191 = scmp.eq.s32.totalorder %s25, 0
      %p192 = por %p190, %p191
      %p193 = scmp.ne.s32.totalorder %s185, %s187
      %p194 = scmp.eq.s32.totalorder %s30, 1
      %p195 = por %p193, %p194
      %p196 = scmp.ne.s32.totalorder %s187, %s188
      %p197 = scmp.eq.s32.totalorder %s30, 0
      %p198 = por %p196, %p197
      %p199 = scmp.ne.s32.totalorder %s187, %s188
      %p200 = scmp.eq.s32.totalorder %s31, 1
      %p201 = por %p199, %p200
      %p203 = scmp.ne.s32.totalorder %s188, %s202
      %p204 = scmp.eq.s32.totalorder %s31, 0
      %p205 = por %p203, %p204
      %s207 = sadd.s32 %s206, 1
      %p210 = scmp.eq.s32.totalorder %s25, 1
      %p211 = scmp.ne.s32.totalorder %s206, %s208
      %p212 = scmp.eq.s32.totalorder %s25, 0
      %p213 = por %p211, %p212
      %p214 = scmp.ne.s32.totalorder %s206, %s208
      %p215 = scmp.eq.s32.totalorder %s30, 1
      %p216 = por %p214, %p215
      %p217 = scmp.ne.s32.totalorder %s208, %s209
      %p218 = scmp.eq.s32.totalorder %s30, 0
      %p219 = por %p217, %p218
      %p220 = scmp.ne.s32.totalorder %s208, %s209
      %p221 = scmp.eq.s32.totalorder %s31, 1
      %p222 = por %p220, %p221
      %p224 = scmp.ne.s32.totalorder %s209, %s223
      %p225 = scmp.eq.s32.totalorder %s31, 0
      %p226 = por %p224, %p225
      %s227 = ssub.s32 %s25, %s32
      %p228 = scmp.eq.s32.totalorder %s227, 0
      %s230 = sadd.s32 %s229, 1
      %s231 = scalar_select %p228, %s229, %s230
      %p234 = pneg %p228
      %p235 = scmp.eq.s32.totalorder %s25, 1
      %p236 = por %p234, %p235
      %p237 = scmp.ne.s32.totalorder %s229, %s232
      %p238 = scmp.eq.s32.totalorder %s25, 0
      %p239 = por %p237, %p238
      %p240 = scmp.ne.s32.totalorder %s229, %s232
      %p241 = scmp.eq.s32.totalorder %s30, 1
      %p242 = por %p240, %p241
      %p243 = scmp.ne.s32.totalorder %s232, %s233
      %p244 = scmp.eq.s32.totalorder %s30, 0
      %p245 = por %p243, %p244
      %p246 = scmp.ne.s32.totalorder %s232, %s233
      %p247 = scmp.eq.s32.totalorder %s31, 1
      %p248 = por %p246, %p247
      %p250 = scmp.ne.s32.totalorder %s233, %s249
      %p251 = scmp.eq.s32.totalorder %s31, 0
      %p252 = por %p250, %p251
      %p253 = scmp.le.s32.totalorder 1, %s25
      %p254 = scmp.lt.s32.totalorder %s25, 3
      %p255 = pnand %p253, %p254
      %p256 = pneg %p255
      // Predicated region
      $region9: #{tpu_custom_call.1} parent=5 // pred_check
        _
      $region10: #{tpu_custom_call.1} parent=5 // pred_check_branch
        %258 = sbr.rel (%p255) target = $region12
      $region11: #{tpu_custom_call.1} parent=5 // pred_region
        %s259 = ssub.s32 %s25, 1
        // Predicated region
        $region13: #{tpu_custom_call.1} parent=11 // pred_check
          %p260 = pneg %p72
        $region14: #{tpu_custom_call.1} parent=11 // pred_check_branch
          %262 = sbr.rel (%p260) target = $region16
        $region15: #{tpu_custom_call.1} parent=11 // pred_region
          %s264 = ssub.s32 256, 256
          %265 = vsyncadd [#allocation6], %s264
          %s266 = sshll.u32 [#allocation5], 4
          %s267 = int_to_ptr.vmem [resolvable:$true] %s266
          %272 = dma.hbm_to_vmem [thread:$0]  %s1, 256, %s267, [#allocation6], 64, 64, 4
        $region16: #{tpu_custom_call.1} parent=11 // pred_fallthru
          _
        // Predicated region
        $region17: #{tpu_custom_call.1} parent=11 // pred_check
          %p273 = pneg %p93
        $region18: #{tpu_custom_call.1} parent=11 // pred_check_branch
          %275 = sbr.rel (%p273) target = $region20
        $region19: #{tpu_custom_call.1} parent=11 // pred_region
          %s277 = ssub.s32 16, 16
          %278 = vsyncadd [#allocation6], %s277
          %s280 = sshll.u32 [#allocation7], 4
          %s281 = int_to_ptr.vmem [resolvable:$true] %s280
          %283 = dma.hbm_to_vmem [thread:$0]  %s2, 16, %s281, [#allocation6]
        $region20: #{tpu_custom_call.1} parent=11 // pred_fallthru
          _
        // Predicated region
        $region21: #{tpu_custom_call.1} parent=11 // pred_check
          %p284 = pneg %p114
        $region22: #{tpu_custom_call.1} parent=11 // pred_check_branch
          %286 = sbr.rel (%p284) target = $region24
        $region23: #{tpu_custom_call.1} parent=11 // pred_region
          %s288 = ssub.s32 3072, 3072
          %289 = vsyncadd [#allocation9], %s288
          %s290 = sshll.u32 [#allocation8], 4
          %s291 = int_to_ptr.vmem [resolvable:$true] %s290
          %296 = dma.hbm_to_vmem [thread:$0]  %s3, 3072, %s291, [#allocation9], 192, 192, 12
        $region24: #{tpu_custom_call.1} parent=11 // pred_fallthru
          _
        // Predicated region
        $region25: #{tpu_custom_call.1} parent=11 // pred_check
          %p297 = pneg %p135
        $region26: #{tpu_custom_call.1} parent=11 // pred_check_branch
          %299 = sbr.rel (%p297) target = $region28
        $region27: #{tpu_custom_call.1} parent=11 // pred_region
          %s301 = ssub.s32 48, 48
          %302 = vsyncadd [#allocation9], %s301
          %s304 = sshll.u32 [#allocation10], 4
          %s305 = int_to_ptr.vmem [resolvable:$true] %s304
          %307 = dma.hbm_to_vmem [thread:$0]  %s4, 48, %s305, [#allocation9]
        $region28: #{tpu_custom_call.1} parent=11 // pred_fallthru
          _
        // Predicated region
        $region29: #{tpu_custom_call.1} parent=11 // pred_check
          %p308 = pneg %p156
        $region30: #{tpu_custom_call.1} parent=11 // pred_check_branch
          %310 = sbr.rel (%p308) target = $region32
        $region31: #{tpu_custom_call.1} parent=11 // pred_region
          %s312 = ssub.s32 18432, 18432
          %313 = vsyncadd [#allocation12], %s312
          %s314 = sshll.u32 [#allocation11], 4
          %s315 = int_to_ptr.vmem [resolvable:$true] %s314
          %320 = dma.hbm_to_vmem [thread:$0]  %s5, 18432, %s315, [#allocation12], 384, 384, 24
        $region32: #{tpu_custom_call.1} parent=11 // pred_fallthru
          _
        // Predicated region
        $region33: #{tpu_custom_call.1} parent=11 // pred_check
          %p321 = pneg %p177
        $region34: #{tpu_custom_call.1} parent=11 // pred_check_branch
          %323 = sbr.rel (%p321) target = $region36
        $region35: #{tpu_custom_call.1} parent=11 // pred_region
          %s325 = ssub.s32 96, 96
          %326 = vsyncadd [#allocation12], %s325
          %s328 = sshll.u32 [#allocation13], 4
          %s329 = int_to_ptr.vmem [resolvable:$true] %s328
          %331 = dma.hbm_to_vmem [thread:$0]  %s6, 96, %s329, [#allocation12]
        $region36: #{tpu_custom_call.1} parent=11 // pred_fallthru
          _
        // Predicated region
        $region37: #{tpu_custom_call.1} parent=11 // pred_check
          %p332 = pneg %p198
        $region38: #{tpu_custom_call.1} parent=11 // pred_check_branch
          %334 = sbr.rel (%p332) target = $region40
        $region39: #{tpu_custom_call.1} parent=11 // pred_region
          %s336 = ssub.s32 43008, 43008
          %337 = vsyncadd [#allocation15], %s336
          %s338 = sshll.u32 [#allocation14], 4
          %s339 = int_to_ptr.vmem [resolvable:$true] %s338
          %344 = dma.hbm_to_vmem [thread:$0]  %s7, 43008, %s339, [#allocation15], 448, 448, 28
        $region40: #{tpu_custom_call.1} parent=11 // pred_fallthru
          _
        // Predicated region
        $region41: #{tpu_custom_call.1} parent=11 // pred_check
          %p345 = pneg %p219
        $region42: #{tpu_custom_call.1} parent=11 // pred_check_branch
          %347 = sbr.rel (%p345) target = $region44
        $region43: #{tpu_custom_call.1} parent=11 // pred_region
          %s349 = ssub.s32 112, 112
          %350 = vsyncadd [#allocation15], %s349
          %s352 = sshll.u32 [#allocation16], 4
          %s353 = int_to_ptr.vmem [resolvable:$true] %s352
          %355 = dma.hbm_to_vmem [thread:$0]  %s8, 112, %s353, [#allocation15]
        $region44: #{tpu_custom_call.1} parent=11 // pred_fallthru
          _
      $region12: #{tpu_custom_call.1} parent=5 // pred_fallthru
        _
      %p356 = scmp.lt.s32.totalorder %s25, 2
      // Predicated region
      $region45: #{tpu_custom_call.1} parent=5 // pred_check
        %p357 = pneg %p356
      $region46: #{tpu_custom_call.1} parent=5 // pred_check_branch
        %359 = sbr.rel (%p357) target = $region48
      $region47: #{tpu_custom_call.1} parent=5 // pred_region
        // Predicated region
        $region49: #{tpu_custom_call.1} parent=47 // pred_check
          %p360 = pneg %p45
        $region50: #{tpu_custom_call.1} parent=47 // pred_check_branch
          %362 = sbr.rel (%p360) target = $region52
        $region51: #{tpu_custom_call.1} parent=47 // pred_region
          %s363 = sand.u32 %s35, 1
          %s364 = scalar_lea.sflag [#allocation3], %s363
          %s365 = sand.u32 %s35, 1
          %s366 = smul.addr %s365, 8
          %s367 = scalar_lea.vmem [#allocation2], %s366
          %s369 = ssub.s32 128, 128
          %370 = vsyncadd %s364, %s369
          %s371 = smul.addr %s25, 128
          %s372 = scalar_lea.hbm %s0, %s371
          %s374 = sshll.u32 %s367, 4
          %s375 = int_to_ptr.vmem [resolvable:$true] %s374
          %377 = dma.hbm_to_vmem [thread:$0]  %s372, 128, %s375, %s364
        $region52: #{tpu_custom_call.1} parent=47 // pred_fallthru
          _
      $region48: #{tpu_custom_call.1} parent=5 // pred_fallthru
        _
      %p378 = scmp.le.s32.totalorder 1, %s25
      %p379 = scmp.lt.s32.totalorder %s25, 3
      %p380 = pnand %p378, %p379
      %p381 = pneg %p380
      // Predicated region
      $region53: #{tpu_custom_call.1} parent=5 // pred_check
        _
      $region54: #{tpu_custom_call.1} parent=5 // pred_check_branch
        %383 = sbr.rel (%p380) target = $region56
      $region55: #{tpu_custom_call.1} parent=5 // pred_region
        %s384 = ssub.s32 %s25, 1
        %s385 = sand.u32 %s38, 1
        %s386 = scalar_lea.sflag [#allocation3], %s385
        %s387 = sand.u32 %s38, 1
        %s388 = smul.addr %s387, 8
        %s389 = scalar_lea.vmem [#allocation2], %s388
        // Predicated region
        $region57: #{tpu_custom_call.1} parent=55 // pred_check
          %p390 = pneg %p51
        $region58: #{tpu_custom_call.1} parent=55 // pred_check_branch
          %392 = sbr.rel (%p390) target = $region60
        $region59: #{tpu_custom_call.1} parent=55 // pred_region
          %393 = dma.done %s386, 128
        $region60: #{tpu_custom_call.1} parent=55 // pred_fallthru
          _
        // Predicated region
        $region61: #{tpu_custom_call.1} parent=55 // pred_check
          %p394 = pneg %p72
        $region62: #{tpu_custom_call.1} parent=55 // pred_check_branch
          %396 = sbr.rel (%p394) target = $region64
        $region63: #{tpu_custom_call.1} parent=55 // pred_region
          %397 = dma.done [#allocation6], 256
        $region64: #{tpu_custom_call.1} parent=55 // pred_fallthru
          _
        // Predicated region
        $region65: #{tpu_custom_call.1} parent=55 // pred_check
          %p398 = pneg %p93
        $region66: #{tpu_custom_call.1} parent=55 // pred_check_branch
          %400 = sbr.rel (%p398) target = $region68
        $region67: #{tpu_custom_call.1} parent=55 // pred_region
          %401 = dma.done [#allocation6], 16
        $region68: #{tpu_custom_call.1} parent=55 // pred_fallthru
          _
        // Predicated region
        $region69: #{tpu_custom_call.1} parent=55 // pred_check
          %p402 = pneg %p114
        $region70: #{tpu_custom_call.1} parent=55 // pred_check_branch
          %404 = sbr.rel (%p402) target = $region72
        $region71: #{tpu_custom_call.1} parent=55 // pred_region
          %405 = dma.done [#allocation9], 3072
        $region72: #{tpu_custom_call.1} parent=55 // pred_fallthru
          _
        // Predicated region
        $region73: #{tpu_custom_call.1} parent=55 // pred_check
          %p406 = pneg %p135
        $region74: #{tpu_custom_call.1} parent=55 // pred_check_branch
          %408 = sbr.rel (%p406) target = $region76
        $region75: #{tpu_custom_call.1} parent=55 // pred_region
          %409 = dma.done [#allocation9], 48
        $region76: #{tpu_custom_call.1} parent=55 // pred_fallthru
          _
        // Predicated region
        $region77: #{tpu_custom_call.1} parent=55 // pred_check
          %p410 = pneg %p156
        $region78: #{tpu_custom_call.1} parent=55 // pred_check_branch
          %412 = sbr.rel (%p410) target = $region80
        $region79: #{tpu_custom_call.1} parent=55 // pred_region
          %413 = dma.done [#allocation12], 18432
        $region80: #{tpu_custom_call.1} parent=55 // pred_fallthru
          _
        // Predicated region
        $region81: #{tpu_custom_call.1} parent=55 // pred_check
          %p414 = pneg %p177
        $region82: #{tpu_custom_call.1} parent=55 // pred_check_branch
          %416 = sbr.rel (%p414) target = $region84
        $region83: #{tpu_custom_call.1} parent=55 // pred_region
          %417 = dma.done [#allocation12], 96
        $region84: #{tpu_custom_call.1} parent=55 // pred_fallthru
          _
        // Predicated region
        $region85: #{tpu_custom_call.1} parent=55 // pred_check
          %p418 = pneg %p198
        $region86: #{tpu_custom_call.1} parent=55 // pred_check_branch
          %420 = sbr.rel (%p418) target = $region88
        $region87: #{tpu_custom_call.1} parent=55 // pred_region
          %421 = dma.done [#allocation15], 43008
        $region88: #{tpu_custom_call.1} parent=55 // pred_fallthru
          _
        // Predicated region
        $region89: #{tpu_custom_call.1} parent=55 // pred_check
          %p422 = pneg %p219
        $region90: #{tpu_custom_call.1} parent=55 // pred_check_branch
          %424 = sbr.rel (%p422) target = $region92
        $region91: #{tpu_custom_call.1} parent=55 // pred_region
          %425 = dma.done [#allocation15], 112
        $region92: #{tpu_custom_call.1} parent=55 // pred_fallthru
          _
        %s426 = sand.u32 %s38, 1
        %s427 = scalar_lea.sflag [#allocation3], %s426
        %s428 = sand.u32 %s38, 1
        %s429 = smul.addr %s428, 8
        %s430 = scalar_lea.vmem [#allocation2], %s429
        %p431 = pneg %p51
        %p432 = pneg %p48
        %p433 = pneg %p72
        %p434 = pneg %p69
        %p435 = pneg %p93
        %p436 = pneg %p90
        %p437 = pneg %p114
        %p438 = pneg %p111
        %p439 = pneg %p135
        %p440 = pneg %p132
        %p441 = pneg %p156
        %p442 = pneg %p153
        %p443 = pneg %p177
        %p444 = pneg %p174
        %p445 = pneg %p198
        %p446 = pneg %p195
        %p447 = pneg %p219
        %p448 = pneg %p216
        %p449 = pneg %p245
        %p450 = pneg %p242
        %s451 = sand.u32 %s232, 1
        %s452 = scalar_lea.sflag [#allocation4], %s451
        %s453 = sand.u32 %s232, 1
        %s454 = smul.addr %s453, 56
        %s455 = scalar_lea.vmem [#allocation17], %s454
        %v457 = vld [vmem:[%s389] sm:$0xff]
        %v458 = vpack.c.bf16 %v457, %v457
        %v459 = vld [vmem:[#allocation5] sm:$0xf]
        %v460 = vld [vmem:[#allocation5 + $0x4] sm:$0xf]
        %v461 = vld [vmem:[#allocation5 + $0x8] sm:$0xf]
        %v462 = vld [vmem:[#allocation5 + $0xc] sm:$0xf]
        %v463 = vld [vmem:[#allocation7] sm:$0x1]
        %v464 = vunpack.c.l.bf16 %v463
        %v465 = vlaneseq
        %v466 = vshrl.u32 %v465, 7
        %v467 = vsub.s32 0, %v466
        %v468 = vrot.slane %v464, %v467
        %v473 = vunpack.c.l.b16 %v459
        %v474 = vunpack.c.l.b16 %v460
        %v475 = vunpack.c.l.b16 %v461
        %v476 = vunpack.c.l.b16 %v462
        %v477 = vpack.c.b16 %v474, %v473
        %v478 = vpack.c.b16 %v476, %v475
        %vm481 = vcmask 261120
        %v483 = vsel %vm481, %v458, 0
        %485 = vmatprep.subr.bf16.mxu0 0
        %486 = vmatpush1.bf16.msra.mxu0 0
        %487 = vmatprep.subr.bf16.mxu0 0
        %488 = vmatpush1.bf16.msra.mxu0 0
        %489 = vmatprep.subr.bf16.mxu0 0
        %490 = vmatpush1.bf16.msra.mxu0 0
        %491 = vmatprep.subr.bf16.mxu0 0
        %492 = vmatpush1.bf16.msra.mxu0 0
        %493 = vmatprep.subr.bf16.mxu0 0
        %494 = vmatpush1.bf16.msra.mxu0 0
        %495 = vmatprep.subr.bf16.mxu0 0
        %496 = vmatpush1.bf16.msra.mxu0 0
        %497 = vmatprep.subr.bf16.mxu0 0
        %498 = vmatpush1.bf16.msra.mxu0 %v478
        %499 = vmatprep.subr.bf16.mxu0 0
        %500 = vmatpush1.bf16.msra.mxu0 %v477
        %501 = vmatprep.subr.bf16.mxu0 0
        %502 = vmatpush2.bf16.msra.mxu0 0
        %503 = vmatprep.subr.bf16.mxu0 0
        %504 = vmatpush2.bf16.msra.mxu0 0
        %505 = vmatprep.subr.bf16.mxu0 0
        %506 = vmatpush2.bf16.msra.mxu0 0
        %507 = vmatprep.subr.bf16.mxu0 0
        %508 = vmatpush2.bf16.msra.mxu0 0
        %509 = vmatprep.subr.bf16.mxu0 0
        %510 = vmatpush2.bf16.msra.mxu0 0
        %511 = vmatprep.subr.bf16.mxu0 0
        %512 = vmatpush2.bf16.msra.mxu0 0
        %513 = vmatprep.subr.bf16.mxu0 0
        %514 = vmatpush2.bf16.msra.mxu0 0
        %515 = vmatprep.subr.bf16.mxu0 0
        %516 = vmatpush2.bf16.msra.mxu0 0
        %517 = vmatprep.mubr.bf16.mxu0 0
        %518 = vmatmul.mubr.bf16.gmra.mxu0 %v483
        %v519 = vpop.f32.mrf.mxu0
        %v520 = vadd.f32 %v468, %v519
        %v521 = vpop.f32.mrf.mxu0
        %v522 = vpop.f32.mrf.mxu0
        %v523 = vpop.f32.mrf.mxu0
        %524 = vdwg.mxu0
        %v525 = vmax.f32 %v520, 0.0
        %v526 = vpack.c.bf16 %v525, %v525
        %v527 = vld [vmem:[#allocation8] sm:$0xff]
        %v528 = vld [vmem:[#allocation8 + $0x8] sm:$0xf]
        %v529 = vld [vmem:[#allocation8 + $0xc] sm:$0xff]
        %v530 = vld [vmem:[#allocation8 + $0x14] sm:$0xf]
        %v531 = vld [vmem:[#allocation8 + $0x18] sm:$0xff]
        %v532 = vld [vmem:[#allocation8 + $0x20] sm:$0xf]
        %v533 = vld [vmem:[#allocation8 + $0x24] sm:$0xff]
        %v534 = vld [vmem:[#allocation8 + $0x2c] sm:$0xf]
        %v535 = vld [vmem:[#allocation8 + $0x30] sm:$0xff]
        %v536 = vld [vmem:[#allocation8 + $0x38] sm:$0xf]
        %v537 = vld [vmem:[#allocation8 + $0x3c] sm:$0xff]
        %v538 = vld [vmem:[#allocation8 + $0x44] sm:$0xf]
        %v539 = vld [vmem:[#allocation8 + $0x48] sm:$0xff]
        %v540 = vld [vmem:[#allocation8 + $0x50] sm:$0xf]
        %v541 = vld [vmem:[#allocation8 + $0x54] sm:$0xff]
        %v542 = vld [vmem:[#allocation8 + $0x5c] sm:$0xf]
        %v543 = vld [vmem:[#allocation8 + $0x60] sm:$0xff]
        %v544 = vld [vmem:[#allocation8 + $0x68] sm:$0xf]
        %v545 = vld [vmem:[#allocation8 + $0x6c] sm:$0xff]
        %v546 = vld [vmem:[#allocation8 + $0x74] sm:$0xf]
        %v547 = vld [vmem:[#allocation8 + $0x78] sm:$0xff]
        %v548 = vld [vmem:[#allocation8 + $0x80] sm:$0xf]
        %v549 = vld [vmem:[#allocation8 + $0x84] sm:$0xff]
        %v550 = vld [vmem:[#allocation8 + $0x8c] sm:$0xf]
        %v551 = vld [vmem:[#allocation8 + $0x90] sm:$0xff]
        %v552 = vld [vmem:[#allocation8 + $0x98] sm:$0xf]
        %v553 = vld [vmem:[#allocation8 + $0x9c] sm:$0xff]
        %v554 = vld [vmem:[#allocation8 + $0xa4] sm:$0xf]
        %v555 = vld [vmem:[#allocation8 + $0xa8] sm:$0xff]
        %v556 = vld [vmem:[#allocation8 + $0xb0] sm:$0xf]
        %v557 = vld [vmem:[#allocation8 + $0xb4] sm:$0xff]
        %v558 = vld [vmem:[#allocation8 + $0xbc] sm:$0xf]
        %v559 = vld [vmem:[#allocation10] sm:$0x7]
        %v560 = vunpack.c.l.bf16 %v559
        %v562 = vlaneseq
        %v563 = vshrl.u32 %v562, 7
        %v564 = vsub.s32 0, %v563
        %v565 = vrot.slane %v560, %v564
        %v566 = vlaneseq
        %v567 = vshrl.u32 %v566, 7
        %v568 = vsub.s32 2, %v567
        %v569 = vrot.slane %v560, %v568
        %v570 = vlaneseq
        %v571 = vshrl.u32 %v570, 7
        %v572 = vsub.s32 4, %v571
        %v573 = vrot.slane %v560, %v572
        %v577 = vlaneseq
        %v578 = vshrl.u32 %v577, 7
        %v579 = vsub.s32 0, %v578
        %v580 = vrot.slane %v565, %v579
        %v581 = vlaneseq
        %v582 = vshrl.u32 %v581, 7
        %v583 = vsub.s32 0, %v582
        %v584 = vrot.slane %v569, %v583
        %v585 = vlaneseq
        %v586 = vshrl.u32 %v585, 7
        %v587 = vsub.s32 0, %v586
        %v588 = vrot.slane %v573, %v587
        %v621 = vunpack.c.l.b16 %v527
        %v622 = vunpack.c.h.b16 %v527
        %v623 = vunpack.c.l.b16 %v528
        %v624 = vunpack.c.l.b16 %v529
        %v625 = vunpack.c.h.b16 %v529
        %v626 = vunpack.c.l.b16 %v530
        %v627 = vunpack.c.l.b16 %v531
        %v628 = vunpack.c.h.b16 %v531
        %v629 = vunpack.c.l.b16 %v532
        %v630 = vunpack.c.l.b16 %v533
        %v631 = vunpack.c.h.b16 %v533
        %v632 = vunpack.c.l.b16 %v534
        %v633 = vunpack.c.l.b16 %v535
        %v634 = vunpack.c.h.b16 %v535
        %v635 = vunpack.c.l.b16 %v536
        %v636 = vunpack.c.l.b16 %v537
        %v637 = vunpack.c.h.b16 %v537
        %v638 = vunpack.c.l.b16 %v538
        %v639 = vunpack.c.l.b16 %v539
        %v640 = vunpack.c.h.b16 %v539
        %v641 = vunpack.c.l.b16 %v540
        %v642 = vunpack.c.l.b16 %v541
        %v643 = vunpack.c.h.b16 %v541
        %v644 = vunpack.c.l.b16 %v542
        %v645 = vunpack.c.l.b16 %v543
        %v646 = vunpack.c.h.b16 %v543
        %v647 = vunpack.c.l.b16 %v544
        %v648 = vunpack.c.l.b16 %v545
        %v649 = vunpack.c.h.b16 %v545
        %v650 = vunpack.c.l.b16 %v546
        %v651 = vunpack.c.l.b16 %v547
        %v652 = vunpack.c.h.b16 %v547
        %v653 = vunpack.c.l.b16 %v548
        %v654 = vunpack.c.l.b16 %v549
        %v655 = vunpack.c.h.b16 %v549
        %v656 = vunpack.c.l.b16 %v550
        %v657 = vunpack.c.l.b16 %v551
        %v658 = vunpack.c.h.b16 %v551
        %v659 = vunpack.c.l.b16 %v552
        %v660 = vunpack.c.l.b16 %v553
        %v661 = vunpack.c.h.b16 %v553
        %v662 = vunpack.c.l.b16 %v554
        %v663 = vunpack.c.l.b16 %v555
        %v664 = vunpack.c.h.b16 %v555
        %v665 = vunpack.c.l.b16 %v556
        %v666 = vunpack.c.l.b16 %v557
        %v667 = vunpack.c.h.b16 %v557
        %v668 = vunpack.c.l.b16 %v558
        %v669 = vpack.c.b16 %v624, %v621
        %v670 = vpack.c.b16 %v625, %v622
        %v671 = vpack.c.b16 %v626, %v623
        %v672 = vpack.c.b16 %v630, %v627
        %v673 = vpack.c.b16 %v631, %v628
        %v674 = vpack.c.b16 %v632, %v629
        %v675 = vpack.c.b16 %v636, %v633
        %v676 = vpack.c.b16 %v637, %v634
        %v677 = vpack.c.b16 %v638, %v635
        %v678 = vpack.c.b16 %v642, %v639
        %v679 = vpack.c.b16 %v643, %v640
        %v680 = vpack.c.b16 %v644, %v641
        %v681 = vpack.c.b16 %v648, %v645
        %v682 = vpack.c.b16 %v649, %v646
        %v683 = vpack.c.b16 %v650, %v647
        %v684 = vpack.c.b16 %v654, %v651
        %v685 = vpack.c.b16 %v655, %v652
        %v686 = vpack.c.b16 %v656, %v653
        %v687 = vpack.c.b16 %v660, %v657
        %v688 = vpack.c.b16 %v661, %v658
        %v689 = vpack.c.b16 %v662, %v659
        %v690 = vpack.c.b16 %v666, %v663
        %v691 = vpack.c.b16 %v667, %v664
        %v692 = vpack.c.b16 %v668, %v665
        %717 = vmatprep.subr.bf16.mxu0 %v691
        %718 = vmatpush1.bf16.msra.mxu0 %v690
        %719 = vmatprep.subr.bf16.mxu0 %v688
        %720 = vmatpush1.bf16.msra.mxu0 %v687
        %721 = vmatprep.subr.bf16.mxu0 %v685
        %722 = vmatpush1.bf16.msra.mxu0 %v684
        %723 = vmatprep.subr.bf16.mxu0 %v682
        %724 = vmatpush1.bf16.msra.mxu0 %v681
        %725 = vmatprep.subr.bf16.mxu0 %v679
        %726 = vmatpush1.bf16.msra.mxu0 %v678
        %727 = vmatprep.subr.bf16.mxu0 %v676
        %728 = vmatpush1.bf16.msra.mxu0 %v675
        %729 = vmatprep.subr.bf16.mxu0 %v673
        %730 = vmatpush1.bf16.msra.mxu0 %v672
        %731 = vmatprep.subr.bf16.mxu0 %v670
        %732 = vmatpush1.bf16.msra.mxu0 %v669
        %733 = vmatprep.subr.bf16.mxu0 0
        %734 = vmatpush2.bf16.msra.mxu0 0
        %735 = vmatprep.subr.bf16.mxu0 0
        %736 = vmatpush2.bf16.msra.mxu0 0
        %737 = vmatprep.subr.bf16.mxu0 0
        %738 = vmatpush2.bf16.msra.mxu0 0
        %739 = vmatprep.subr.bf16.mxu0 0
        %740 = vmatpush2.bf16.msra.mxu0 0
        %741 = vmatprep.subr.bf16.mxu0 0
        %742 = vmatpush2.bf16.msra.mxu0 0
        %743 = vmatprep.subr.bf16.mxu0 0
        %744 = vmatpush2.bf16.msra.mxu0 0
        %745 = vmatprep.subr.bf16.mxu0 0
        %746 = vmatpush2.bf16.msra.mxu0 0
        %747 = vmatprep.subr.bf16.mxu0 0
        %748 = vmatpush2.bf16.msra.mxu0 0
        %749 = vmatprep.mubr.bf16.mxu0 0
        %750 = vmatmul.mubr.bf16.gmra.mxu0 %v526
        %v751 = vpop.f32.mrf.mxu0
        %v752 = vadd.f32 %v580, %v751
        %v753 = vpop.f32.mrf.mxu0
        %v754 = vadd.f32 %v584, %v753
        %v755 = vpop.f32.mrf.mxu0
        %v756 = vpop.f32.mrf.mxu0
        %757 = vdwg.mxu0
        %758 = vmatprep.subr.bf16.mxu0 0
        %759 = vmatpush1.bf16.msra.mxu0 %v692
        %760 = vmatprep.subr.bf16.mxu0 0
        %761 = vmatpush1.bf16.msra.mxu0 %v689
        %762 = vmatprep.subr.bf16.mxu0 0
        %763 = vmatpush1.bf16.msra.mxu0 %v686
        %764 = vmatprep.subr.bf16.mxu0 0
        %765 = vmatpush1.bf16.msra.mxu0 %v683
        %766 = vmatprep.subr.bf16.mxu0 0
        %767 = vmatpush1.bf16.msra.mxu0 %v680
        %768 = vmatprep.subr.bf16.mxu0 0
        %769 = vmatpush1.bf16.msra.mxu0 %v677
        %770 = vmatprep.subr.bf16.mxu0 0
        %771 = vmatpush1.bf16.msra.mxu0 %v674
        %772 = vmatprep.subr.bf16.mxu0 0
        %773 = vmatpush1.bf16.msra.mxu0 %v671
        %774 = vmatprep.subr.bf16.mxu0 0
        %775 = vmatpush2.bf16.msra.mxu0 0
        %776 = vmatprep.subr.bf16.mxu0 0
        %777 = vmatpush2.bf16.msra.mxu0 0
        %778 = vmatprep.subr.bf16.mxu0 0
        %779 = vmatpush2.bf16.msra.mxu0 0
        %780 = vmatprep.subr.bf16.mxu0 0
        %781 = vmatpush2.bf16.msra.mxu0 0
        %782 = vmatprep.subr.bf16.mxu0 0
        %783 = vmatpush2.bf16.msra.mxu0 0
        %784 = vmatprep.subr.bf16.mxu0 0
        %785 = vmatpush2.bf16.msra.mxu0 0
        %786 = vmatprep.subr.bf16.mxu0 0
        %787 = vmatpush2.bf16.msra.mxu0 0
        %788 = vmatprep.subr.bf16.mxu0 0
        %789 = vmatpush2.bf16.msra.mxu0 0
        %790 = vmatprep.mubr.bf16.mxu0 0
        %791 = vmatmul.mubr.bf16.gmra.mxu0 %v526
        %v792 = vpop.f32.mrf.mxu0
        %v793 = vadd.f32 %v588, %v792
        %v794 = vpop.f32.mrf.mxu0
        %v795 = vpop.f32.mrf.mxu0
        %v796 = vpop.f32.mrf.mxu0
        %797 = vdwg.mxu0
        %v798 = vmax.f32 %v752, 0.0
        %v799 = vmax.f32 %v754, 0.0
        %v800 = vmax.f32 %v793, 0.0
        %v801 = vpack.c.bf16 %v798, %v798
        %v802 = vpack.c.bf16 %v799, %v799
        %v803 = vpack.c.bf16 %v800, %v800
        %v804 = vld [vmem:[#allocation11] sm:$0xff]
        %v805 = vld [vmem:[#allocation11 + $0x8] sm:$0xff]
        %v806 = vld [vmem:[#allocation11 + $0x10] sm:$0xff]
        %v807 = vld [vmem:[#allocation11 + $0x18] sm:$0xff]
        %v808 = vld [vmem:[#allocation11 + $0x20] sm:$0xff]
        %v809 = vld [vmem:[#allocation11 + $0x28] sm:$0xff]
        %v810 = vld [vmem:[#allocation11 + $0x30] sm:$0xff]
        %v811 = vld [vmem:[#allocation11 + $0x38] sm:$0xff]
        %v812 = vld [vmem:[#allocation11 + $0x40] sm:$0xff]
        %v813 = vld [vmem:[#allocation11 + $0x48] sm:$0xff]
        %v814 = vld [vmem:[#allocation11 + $0x50] sm:$0xff]
        %v815 = vld [vmem:[#allocation11 + $0x58] sm:$0xff]
        %v816 = vld [vmem:[#allocation11 + $0x60] sm:$0xff]
        %v817 = vld [vmem:[#allocation11 + $0x68] sm:$0xff]
        %v818 = vld [vmem:[#allocation11 + $0x70] sm:$0xff]
        %v819 = vld [vmem:[#allocation11 + $0x78] sm:$0xff]
        %v820 = vld [vmem:[#allocation11 + $0x80] sm:$0xff]
        %v821 = vld [vmem:[#allocation11 + $0x88] sm:$0xff]
        %v822 = vld [vmem:[#allocation11 + $0x90] sm:$0xff]
        %v823 = vld [vmem:[#allocation11 + $0x98] sm:$0xff]
        %v824 = vld [vmem:[#allocation11 + $0xa0] sm:$0xff]
        %v825 = vld [vmem:[#allocation11 + $0xa8] sm:$0xff]
        %v826 = vld [vmem:[#allocation11 + $0xb0] sm:$0xff]
        %v827 = vld [vmem:[#allocation11 + $0xb8] sm:$0xff]
        %v828 = vld [vmem:[#allocation11 + $0xc0] sm:$0xff]
        %v829 = vld [vmem:[#allocation11 + $0xc8] sm:$0xff]
        %v830 = vld [vmem:[#allocation11 + $0xd0] sm:$0xff]
        %v831 = vld [vmem:[#allocation11 + $0xd8] sm:$0xff]
        %v832 = vld [vmem:[#allocation11 + $0xe0] sm:$0xff]
        %v833 = vld [vmem:[#allocation11 + $0xe8] sm:$0xff]
        %v834 = vld [vmem:[#allocation11 + $0xf0] sm:$0xff]
        %v835 = vld [vmem:[#allocation11 + $0xf8] sm:$0xff]
        %v836 = vld [vmem:[#allocation11 + $0x100] sm:$0xff]
        %v837 = vld [vmem:[#allocation11 + $0x108] sm:$0xff]
        %v838 = vld [vmem:[#allocation11 + $0x110] sm:$0xff]
        %v839 = vld [vmem:[#allocation11 + $0x118] sm:$0xff]
        %v840 = vld [vmem:[#allocation11 + $0x120] sm:$0xff]
        %v841 = vld [vmem:[#allocation11 + $0x128] sm:$0xff]
        %v842 = vld [vmem:[#allocation11 + $0x130] sm:$0xff]
        %v843 = vld [vmem:[#allocation11 + $0x138] sm:$0xff]
        %v844 = vld [vmem:[#allocation11 + $0x140] sm:$0xff]
        %v845 = vld [vmem:[#allocation11 + $0x148] sm:$0xff]
        %v846 = vld [vmem:[#allocation11 + $0x150] sm:$0xff]
        %v847 = vld [vmem:[#allocation11 + $0x158] sm:$0xff]
        %v848 = vld [vmem:[#allocation11 + $0x160] sm:$0xff]
        %v849 = vld [vmem:[#allocation11 + $0x168] sm:$0xff]
        %v850 = vld [vmem:[#allocation11 + $0x170] sm:$0xff]
        %v851 = vld [vmem:[#allocation11 + $0x178] sm:$0xff]
        %v852 = vld [vmem:[#allocation11 + $0x180] sm:$0xff]
        %v853 = vld [vmem:[#allocation11 + $0x188] sm:$0xff]
        %v854 = vld [vmem:[#allocation11 + $0x190] sm:$0xff]
        %v855 = vld [vmem:[#allocation11 + $0x198] sm:$0xff]
        %v856 = vld [vmem:[#allocation11 + $0x1a0] sm:$0xff]
        %v857 = vld [vmem:[#allocation11 + $0x1a8] sm:$0xff]
        %v858 = vld [vmem:[#allocation11 + $0x1b0] sm:$0xff]
        %v859 = vld [vmem:[#allocation11 + $0x1b8] sm:$0xff]
        %v860 = vld [vmem:[#allocation11 + $0x1c0] sm:$0xff]
        %v861 = vld [vmem:[#allocation11 + $0x1c8] sm:$0xff]
        %v862 = vld [vmem:[#allocation11 + $0x1d0] sm:$0xff]
        %v863 = vld [vmem:[#allocation11 + $0x1d8] sm:$0xff]
        %v864 = vld [vmem:[#allocation11 + $0x1e0] sm:$0xff]
        %v865 = vld [vmem:[#allocation11 + $0x1e8] sm:$0xff]
        %v866 = vld [vmem:[#allocation11 + $0x1f0] sm:$0xff]
        %v867 = vld [vmem:[#allocation11 + $0x1f8] sm:$0xff]
        %v868 = vld [vmem:[#allocation11 + $0x200] sm:$0xff]
        %v869 = vld [vmem:[#allocation11 + $0x208] sm:$0xff]
        %v870 = vld [vmem:[#allocation11 + $0x210] sm:$0xff]
        %v871 = vld [vmem:[#allocation11 + $0x218] sm:$0xff]
        %v872 = vld [vmem:[#allocation11 + $0x220] sm:$0xff]
        %v873 = vld [vmem:[#allocation11 + $0x228] sm:$0xff]
        %v874 = vld [vmem:[#allocation11 + $0x230] sm:$0xff]
        %v875 = vld [vmem:[#allocation11 + $0x238] sm:$0xff]
        %v876 = vld [vmem:[#allocation11 + $0x240] sm:$0xff]
        %v877 = vld [vmem:[#allocation11 + $0x248] sm:$0xff]
        %v878 = vld [vmem:[#allocation11 + $0x250] sm:$0xff]
        %v879 = vld [vmem:[#allocation11 + $0x258] sm:$0xff]
        %v880 = vld [vmem:[#allocation11 + $0x260] sm:$0xff]
        %v881 = vld [vmem:[#allocation11 + $0x268] sm:$0xff]
        %v882 = vld [vmem:[#allocation11 + $0x270] sm:$0xff]
        %v883 = vld [vmem:[#allocation11 + $0x278] sm:$0xff]
        %v884 = vld [vmem:[#allocation11 + $0x280] sm:$0xff]
        %v885 = vld [vmem:[#allocation11 + $0x288] sm:$0xff]
        %v886 = vld [vmem:[#allocation11 + $0x290] sm:$0xff]
        %v887 = vld [vmem:[#allocation11 + $0x298] sm:$0xff]
        %v888 = vld [vmem:[#allocation11 + $0x2a0] sm:$0xff]
        %v889 = vld [vmem:[#allocation11 + $0x2a8] sm:$0xff]
        %v890 = vld [vmem:[#allocation11 + $0x2b0] sm:$0xff]
        %v891 = vld [vmem:[#allocation11 + $0x2b8] sm:$0xff]
        %v892 = vld [vmem:[#allocation11 + $0x2c0] sm:$0xff]
        %v893 = vld [vmem:[#allocation11 + $0x2c8] sm:$0xff]
        %v894 = vld [vmem:[#allocation11 + $0x2d0] sm:$0xff]
        %v895 = vld [vmem:[#allocation11 + $0x2d8] sm:$0xff]
        %v896 = vld [vmem:[#allocation11 + $0x2e0] sm:$0xff]
        %v897 = vld [vmem:[#allocation11 + $0x2e8] sm:$0xff]
        %v898 = vld [vmem:[#allocation11 + $0x2f0] sm:$0xff]
        %v899 = vld [vmem:[#allocation11 + $0x2f8] sm:$0xff]
        %v900 = vld [vmem:[#allocation11 + $0x300] sm:$0xff]
        %v901 = vld [vmem:[#allocation11 + $0x308] sm:$0xff]
        %v902 = vld [vmem:[#allocation11 + $0x310] sm:$0xff]
        %v903 = vld [vmem:[#allocation11 + $0x318] sm:$0xff]
        %v904 = vld [vmem:[#allocation11 + $0x320] sm:$0xff]
        %v905 = vld [vmem:[#allocation11 + $0x328] sm:$0xff]
        %v906 = vld [vmem:[#allocation11 + $0x330] sm:$0xff]
        %v907 = vld [vmem:[#allocation11 + $0x338] sm:$0xff]
        %v908 = vld [vmem:[#allocation11 + $0x340] sm:$0xff]
        %v909 = vld [vmem:[#allocation11 + $0x348] sm:$0xff]
        %v910 = vld [vmem:[#allocation11 + $0x350] sm:$0xff]
        %v911 = vld [vmem:[#allocation11 + $0x358] sm:$0xff]
        %v912 = vld [vmem:[#allocation11 + $0x360] sm:$0xff]
        %v913 = vld [vmem:[#allocation11 + $0x368] sm:$0xff]
        %v914 = vld [vmem:[#allocation11 + $0x370] sm:$0xff]
        %v915 = vld [vmem:[#allocation11 + $0x378] sm:$0xff]
        %v916 = vld [vmem:[#allocation11 + $0x380] sm:$0xff]
        %v917 = vld [vmem:[#allocation11 + $0x388] sm:$0xff]
        %v918 = vld [vmem:[#allocation11 + $0x390] sm:$0xff]
        %v919 = vld [vmem:[#allocation11 + $0x398] sm:$0xff]
        %v920 = vld [vmem:[#allocation11 + $0x3a0] sm:$0xff]
        %v921 = vld [vmem:[#allocation11 + $0x3a8] sm:$0xff]
        %v922 = vld [vmem:[#allocation11 + $0x3b0] sm:$0xff]
        %v923 = vld [vmem:[#allocation11 + $0x3b8] sm:$0xff]
        %v924 = vld [vmem:[#allocation11 + $0x3c0] sm:$0xff]
        %v925 = vld [vmem:[#allocation11 + $0x3c8] sm:$0xff]
        %v926 = vld [vmem:[#allocation11 + $0x3d0] sm:$0xff]
        %v927 = vld [vmem:[#allocation11 + $0x3d8] sm:$0xff]
        %v928 = vld [vmem:[#allocation11 + $0x3e0] sm:$0xff]
        %v929 = vld [vmem:[#allocation11 + $0x3e8] sm:$0xff]
        %v930 = vld [vmem:[#allocation11 + $0x3f0] sm:$0xff]
        %v931 = vld [vmem:[#allocation11 + $0x3f8] sm:$0xff]
        %v932 = vld [vmem:[#allocation11 + $0x400] sm:$0xff]
        %v933 = vld [vmem:[#allocation11 + $0x408] sm:$0xff]
        %v934 = vld [vmem:[#allocation11 + $0x410] sm:$0xff]
        %v935 = vld [vmem:[#allocation11 + $0x418] sm:$0xff]
        %v936 = vld [vmem:[#allocation11 + $0x420] sm:$0xff]
        %v937 = vld [vmem:[#allocation11 + $0x428] sm:$0xff]
        %v938 = vld [vmem:[#allocation11 + $0x430] sm:$0xff]
        %v939 = vld [vmem:[#allocation11 + $0x438] sm:$0xff]
        %v940 = vld [vmem:[#allocation11 + $0x440] sm:$0xff]
        %v941 = vld [vmem:[#allocation11 + $0x448] sm:$0xff]
        %v942 = vld [vmem:[#allocation11 + $0x450] sm:$0xff]
        %v943 = vld [vmem:[#allocation11 + $0x458] sm:$0xff]
        %v944 = vld [vmem:[#allocation11 + $0x460] sm:$0xff]
        %v945 = vld [vmem:[#allocation11 + $0x468] sm:$0xff]
        %v946 = vld [vmem:[#allocation11 + $0x470] sm:$0xff]
        %v947 = vld [vmem:[#allocation11 + $0x478] sm:$0xff]
        %v948 = vld [vmem:[#allocation13] sm:$0x3f]
        %v949 = vunpack.c.l.bf16 %v948
        %v950 = vunpack.c.h.bf16 %v948
        %v953 = vlaneseq
        %v954 = vshrl.u32 %v953, 7
        %v955 = vsub.s32 0, %v954
        %v956 = vrot.slane %v949, %v955
        %v957 = vlaneseq
        %v958 = vshrl.u32 %v957, 7
        %v959 = vsub.s32 2, %v958
        %v960 = vrot.slane %v949, %v959
        %v961 = vlaneseq
        %v962 = vshrl.u32 %v961, 7
        %v963 = vsub.s32 4, %v962
        %v964 = vrot.slane %v949, %v963
        %v965 = vlaneseq
        %v966 = vshrl.u32 %v965, 7
        %v967 = vsub.s32 6, %v966
        %v968 = vrot.slane %v949, %v967
        %v969 = vlaneseq
        %v970 = vshrl.u32 %v969, 7
        %v971 = vsub.s32 0, %v970
        %v972 = vrot.slane %v950, %v971
        %v973 = vlaneseq
        %v974 = vshrl.u32 %v973, 7
        %v975 = vsub.s32 2, %v974
        %v976 = vrot.slane %v950, %v975
        %v983 = vlaneseq
        %v984 = vshrl.u32 %v983, 7
        %v985 = vsub.s32 0, %v984
        %v986 = vrot.slane %v956, %v985
        %v987 = vlaneseq
        %v988 = vshrl.u32 %v987, 7
        %v989 = vsub.s32 0, %v988
        %v990 = vrot.slane %v960, %v989
        %v991 = vlaneseq
        %v992 = vshrl.u32 %v991, 7
        %v993 = vsub.s32 0, %v992
        %v994 = vrot.slane %v964, %v993
        %v995 = vlaneseq
        %v996 = vshrl.u32 %v995, 7
        %v997 = vsub.s32 0, %v996
        %v998 = vrot.slane %v968, %v997
        %v999 = vlaneseq
        %v1000 = vshrl.u32 %v999, 7
        %v1001 = vsub.s32 0, %v1000
        %v1002 = vrot.slane %v972, %v1001
        %v1003 = vlaneseq
        %v1004 = vshrl.u32 %v1003, 7
        %v1005 = vsub.s32 0, %v1004
        %v1006 = vrot.slane %v976, %v1005
        %v1151 = vunpack.c.l.b16 %v804
        %v1152 = vunpack.c.h.b16 %v804
        %v1153 = vunpack.c.l.b16 %v805
        %v1154 = vunpack.c.h.b16 %v805
        %v1155 = vunpack.c.l.b16 %v806
        %v1156 = vunpack.c.h.b16 %v806
        %v1157 = vunpack.c.l.b16 %v807
        %v1158 = vunpack.c.h.b16 %v807
        %v1159 = vunpack.c.l.b16 %v808
        %v1160 = vunpack.c.h.b16 %v808
        %v1161 = vunpack.c.l.b16 %v809
        %v1162 = vunpack.c.h.b16 %v809
        %v1163 = vunpack.c.l.b16 %v810
        %v1164 = vunpack.c.h.b16 %v810
        %v1165 = vunpack.c.l.b16 %v811
        %v1166 = vunpack.c.h.b16 %v811
        %v1167 = vunpack.c.l.b16 %v812
        %v1168 = vunpack.c.h.b16 %v812
        %v1169 = vunpack.c.l.b16 %v813
        %v1170 = vunpack.c.h.b16 %v813
        %v1171 = vunpack.c.l.b16 %v814
        %v1172 = vunpack.c.h.b16 %v814
        %v1173 = vunpack.c.l.b16 %v815
        %v1174 = vunpack.c.h.b16 %v815
        %v1175 = vunpack.c.l.b16 %v816
        %v1176 = vunpack.c.h.b16 %v816
        %v1177 = vunpack.c.l.b16 %v817
        %v1178 = vunpack.c.h.b16 %v817
        %v1179 = vunpack.c.l.b16 %v818
        %v1180 = vunpack.c.h.b16 %v818
        %v1181 = vunpack.c.l.b16 %v819
        %v1182 = vunpack.c.h.b16 %v819
        %v1183 = vunpack.c.l.b16 %v820
        %v1184 = vunpack.c.h.b16 %v820
        %v1185 = vunpack.c.l.b16 %v821
        %v1186 = vunpack.c.h.b16 %v821
        %v1187 = vunpack.c.l.b16 %v822
        %v1188 = vunpack.c.h.b16 %v822
        %v1189 = vunpack.c.l.b16 %v823
        %v1190 = vunpack.c.h.b16 %v823
        %v1191 = vunpack.c.l.b16 %v824
        %v1192 = vunpack.c.h.b16 %v824
        %v1193 = vunpack.c.l.b16 %v825
        %v1194 = vunpack.c.h.b16 %v825
        %v1195 = vunpack.c.l.b16 %v826
        %v1196 = vunpack.c.h.b16 %v826
        %v1197 = vunpack.c.l.b16 %v827
        %v1198 = vunpack.c.h.b16 %v827
        %v1199 = vunpack.c.l.b16 %v828
        %v1200 = vunpack.c.h.b16 %v828
        %v1201 = vunpack.c.l.b16 %v829
        %v1202 = vunpack.c.h.b16 %v829
        %v1203 = vunpack.c.l.b16 %v830
        %v1204 = vunpack.c.h.b16 %v830
        %v1205 = vunpack.c.l.b16 %v831
        %v1206 = vunpack.c.h.b16 %v831
        %v1207 = vunpack.c.l.b16 %v832
        %v1208 = vunpack.c.h.b16 %v832
        %v1209 = vunpack.c.l.b16 %v833
        %v1210 = vunpack.c.h.b16 %v833
        %v1211 = vunpack.c.l.b16 %v834
        %v1212 = vunpack.c.h.b16 %v834
        %v1213 = vunpack.c.l.b16 %v835
        %v1214 = vunpack.c.h.b16 %v835
        %v1215 = vunpack.c.l.b16 %v836
        %v1216 = vunpack.c.h.b16 %v836
        %v1217 = vunpack.c.l.b16 %v837
        %v1218 = vunpack.c.h.b16 %v837
        %v1219 = vunpack.c.l.b16 %v838
        %v1220 = vunpack.c.h.b16 %v838
        %v1221 = vunpack.c.l.b16 %v839
        %v1222 = vunpack.c.h.b16 %v839
        %v1223 = vunpack.c.l.b16 %v840
        %v1224 = vunpack.c.h.b16 %v840
        %v1225 = vunpack.c.l.b16 %v841
        %v1226 = vunpack.c.h.b16 %v841
        %v1227 = vunpack.c.l.b16 %v842
        %v1228 = vunpack.c.h.b16 %v842
        %v1229 = vunpack.c.l.b16 %v843
        %v1230 = vunpack.c.h.b16 %v843
        %v1231 = vunpack.c.l.b16 %v844
        %v1232 = vunpack.c.h.b16 %v844
        %v1233 = vunpack.c.l.b16 %v845
        %v1234 = vunpack.c.h.b16 %v845
        %v1235 = vunpack.c.l.b16 %v846
        %v1236 = vunpack.c.h.b16 %v846
        %v1237 = vunpack.c.l.b16 %v847
        %v1238 = vunpack.c.h.b16 %v847
        %v1239 = vunpack.c.l.b16 %v848
        %v1240 = vunpack.c.h.b16 %v848
        %v1241 = vunpack.c.l.b16 %v849
        %v1242 = vunpack.c.h.b16 %v849
        %v1243 = vunpack.c.l.b16 %v850
        %v1244 = vunpack.c.h.b16 %v850
        %v1245 = vunpack.c.l.b16 %v851
        %v1246 = vunpack.c.h.b16 %v851
        %v1247 = vunpack.c.l.b16 %v852
        %v1248 = vunpack.c.h.b16 %v852
        %v1249 = vunpack.c.l.b16 %v853
        %v1250 = vunpack.c.h.b16 %v853
        %v1251 = vunpack.c.l.b16 %v854
        %v1252 = vunpack.c.h.b16 %v854
        %v1253 = vunpack.c.l.b16 %v855
        %v1254 = vunpack.c.h.b16 %v855
        %v1255 = vunpack.c.l.b16 %v856
        %v1256 = vunpack.c.h.b16 %v856
        %v1257 = vunpack.c.l.b16 %v857
        %v1258 = vunpack.c.h.b16 %v857
        %v1259 = vunpack.c.l.b16 %v858
        %v1260 = vunpack.c.h.b16 %v858
        %v1261 = vunpack.c.l.b16 %v859
        %v1262 = vunpack.c.h.b16 %v859
        %v1263 = vunpack.c.l.b16 %v860
        %v1264 = vunpack.c.h.b16 %v860
        %v1265 = vunpack.c.l.b16 %v861
        %v1266 = vunpack.c.h.b16 %v861
        %v1267 = vunpack.c.l.b16 %v862
        %v1268 = vunpack.c.h.b16 %v862
        %v1269 = vunpack.c.l.b16 %v863
        %v1270 = vunpack.c.h.b16 %v863
        %v1271 = vunpack.c.l.b16 %v864
        %v1272 = vunpack.c.h.b16 %v864
        %v1273 = vunpack.c.l.b16 %v865
        %v1274 = vunpack.c.h.b16 %v865
        %v1275 = vunpack.c.l.b16 %v866
        %v1276 = vunpack.c.h.b16 %v866
        %v1277 = vunpack.c.l.b16 %v867
        %v1278 = vunpack.c.h.b16 %v867
        %v1279 = vunpack.c.l.b16 %v868
        %v1280 = vunpack.c.h.b16 %v868
        %v1281 = vunpack.c.l.b16 %v869
        %v1282 = vunpack.c.h.b16 %v869
        %v1283 = vunpack.c.l.b16 %v870
        %v1284 = vunpack.c.h.b16 %v870
        %v1285 = vunpack.c.l.b16 %v871
        %v1286 = vunpack.c.h.b16 %v871
        %v1287 = vunpack.c.l.b16 %v872
        %v1288 = vunpack.c.h.b16 %v872
        %v1289 = vunpack.c.l.b16 %v873
        %v1290 = vunpack.c.h.b16 %v873
        %v1291 = vunpack.c.l.b16 %v874
        %v1292 = vunpack.c.h.b16 %v874
        %v1293 = vunpack.c.l.b16 %v875
        %v1294 = vunpack.c.h.b16 %v875
        %v1295 = vunpack.c.l.b16 %v876
        %v1296 = vunpack.c.h.b16 %v876
        %v1297 = vunpack.c.l.b16 %v877
        %v1298 = vunpack.c.h.b16 %v877
        %v1299 = vunpack.c.l.b16 %v878
        %v1300 = vunpack.c.h.b16 %v878
        %v1301 = vunpack.c.l.b16 %v879
        %v1302 = vunpack.c.h.b16 %v879
        %v1303 = vunpack.c.l.b16 %v880
        %v1304 = vunpack.c.h.b16 %v880
        %v1305 = vunpack.c.l.b16 %v881
        %v1306 = vunpack.c.h.b16 %v881
        %v1307 = vunpack.c.l.b16 %v882
        %v1308 = vunpack.c.h.b16 %v882
        %v1309 = vunpack.c.l.b16 %v883
        %v1310 = vunpack.c.h.b16 %v883
        %v1311 = vunpack.c.l.b16 %v884
        %v1312 = vunpack.c.h.b16 %v884
        %v1313 = vunpack.c.l.b16 %v885
        %v1314 = vunpack.c.h.b16 %v885
        %v1315 = vunpack.c.l.b16 %v886
        %v1316 = vunpack.c.h.b16 %v886
        %v1317 = vunpack.c.l.b16 %v887
        %v1318 = vunpack.c.h.b16 %v887
        %v1319 = vunpack.c.l.b16 %v888
        %v1320 = vunpack.c.h.b16 %v888
        %v1321 = vunpack.c.l.b16 %v889
        %v1322 = vunpack.c.h.b16 %v889
        %v1323 = vunpack.c.l.b16 %v890
        %v1324 = vunpack.c.h.b16 %v890
        %v1325 = vunpack.c.l.b16 %v891
        %v1326 = vunpack.c.h.b16 %v891
        %v1327 = vunpack.c.l.b16 %v892
        %v1328 = vunpack.c.h.b16 %v892
        %v1329 = vunpack.c.l.b16 %v893
        %v1330 = vunpack.c.h.b16 %v893
        %v1331 = vunpack.c.l.b16 %v894
        %v1332 = vunpack.c.h.b16 %v894
        %v1333 = vunpack.c.l.b16 %v895
        %v1334 = vunpack.c.h.b16 %v895
        %v1335 = vunpack.c.l.b16 %v896
        %v1336 = vunpack.c.h.b16 %v896
        %v1337 = vunpack.c.l.b16 %v897
        %v1338 = vunpack.c.h.b16 %v897
        %v1339 = vunpack.c.l.b16 %v898
        %v1340 = vunpack.c.h.b16 %v898
        %v1341 = vunpack.c.l.b16 %v899
        %v1342 = vunpack.c.h.b16 %v899
        %v1343 = vunpack.c.l.b16 %v900
        %v1344 = vunpack.c.h.b16 %v900
        %v1345 = vunpack.c.l.b16 %v901
        %v1346 = vunpack.c.h.b16 %v901
        %v1347 = vunpack.c.l.b16 %v902
        %v1348 = vunpack.c.h.b16 %v902
        %v1349 = vunpack.c.l.b16 %v903
        %v1350 = vunpack.c.h.b16 %v903
        %v1351 = vunpack.c.l.b16 %v904
        %v1352 = vunpack.c.h.b16 %v904
        %v1353 = vunpack.c.l.b16 %v905
        %v1354 = vunpack.c.h.b16 %v905
        %v1355 = vunpack.c.l.b16 %v906
        %v1356 = vunpack.c.h.b16 %v906
        %v1357 = vunpack.c.l.b16 %v907
        %v1358 = vunpack.c.h.b16 %v907
        %v1359 = vunpack.c.l.b16 %v908
        %v1360 = vunpack.c.h.b16 %v908
        %v1361 = vunpack.c.l.b16 %v909
        %v1362 = vunpack.c.h.b16 %v909
        %v1363 = vunpack.c.l.b16 %v910
        %v1364 = vunpack.c.h.b16 %v910
        %v1365 = vunpack.c.l.b16 %v911
        %v1366 = vunpack.c.h.b16 %v911
        %v1367 = vunpack.c.l.b16 %v912
        %v1368 = vunpack.c.h.b16 %v912
        %v1369 = vunpack.c.l.b16 %v913
        %v1370 = vunpack.c.h.b16 %v913
        %v1371 = vunpack.c.l.b16 %v914
        %v1372 = vunpack.c.h.b16 %v914
        %v1373 = vunpack.c.l.b16 %v915
        %v1374 = vunpack.c.h.b16 %v915
        %v1375 = vunpack.c.l.b16 %v916
        %v1376 = vunpack.c.h.b16 %v916
        %v1377 = vunpack.c.l.b16 %v917
        %v1378 = vunpack.c.h.b16 %v917
        %v1379 = vunpack.c.l.b16 %v918
        %v1380 = vunpack.c.h.b16 %v918
        %v1381 = vunpack.c.l.b16 %v919
        %v1382 = vunpack.c.h.b16 %v919
        %v1383 = vunpack.c.l.b16 %v920
        %v1384 = vunpack.c.h.b16 %v920
        %v1385 = vunpack.c.l.b16 %v921
        %v1386 = vunpack.c.h.b16 %v921
        %v1387 = vunpack.c.l.b16 %v922
        %v1388 = vunpack.c.h.b16 %v922
        %v1389 = vunpack.c.l.b16 %v923
        %v1390 = vunpack.c.h.b16 %v923
        %v1391 = vunpack.c.l.b16 %v924
        %v1392 = vunpack.c.h.b16 %v924
        %v1393 = vunpack.c.l.b16 %v925
        %v1394 = vunpack.c.h.b16 %v925
        %v1395 = vunpack.c.l.b16 %v926
        %v1396 = vunpack.c.h.b16 %v926
        %v1397 = vunpack.c.l.b16 %v927
        %v1398 = vunpack.c.h.b16 %v927
        %v1399 = vunpack.c.l.b16 %v928
        %v1400 = vunpack.c.h.b16 %v928
        %v1401 = vunpack.c.l.b16 %v929
        %v1402 = vunpack.c.h.b16 %v929
        %v1403 = vunpack.c.l.b16 %v930
        %v1404 = vunpack.c.h.b16 %v930
        %v1405 = vunpack.c.l.b16 %v931
        %v1406 = vunpack.c.h.b16 %v931
        %v1407 = vunpack.c.l.b16 %v932
        %v1408 = vunpack.c.h.b16 %v932
        %v1409 = vunpack.c.l.b16 %v933
        %v1410 = vunpack.c.h.b16 %v933
        %v1411 = vunpack.c.l.b16 %v934
        %v1412 = vunpack.c.h.b16 %v934
        %v1413 = vunpack.c.l.b16 %v935
        %v1414 = vunpack.c.h.b16 %v935
        %v1415 = vunpack.c.l.b16 %v936
        %v1416 = vunpack.c.h.b16 %v936
        %v1417 = vunpack.c.l.b16 %v937
        %v1418 = vunpack.c.h.b16 %v937
        %v1419 = vunpack.c.l.b16 %v938
        %v1420 = vunpack.c.h.b16 %v938
        %v1421 = vunpack.c.l.b16 %v939
        %v1422 = vunpack.c.h.b16 %v939
        %v1423 = vunpack.c.l.b16 %v940
        %v1424 = vunpack.c.h.b16 %v940
        %v1425 = vunpack.c.l.b16 %v941
        %v1426 = vunpack.c.h.b16 %v941
        %v1427 = vunpack.c.l.b16 %v942
        %v1428 = vunpack.c.h.b16 %v942
        %v1429 = vunpack.c.l.b16 %v943
        %v1430 = vunpack.c.h.b16 %v943
        %v1431 = vunpack.c.l.b16 %v944
        %v1432 = vunpack.c.h.b16 %v944
        %v1433 = vunpack.c.l.b16 %v945
        %v1434 = vunpack.c.h.b16 %v945
        %v1435 = vunpack.c.l.b16 %v946
        %v1436 = vunpack.c.h.b16 %v946
        %v1437 = vunpack.c.l.b16 %v947
        %v1438 = vunpack.c.h.b16 %v947
        %v1439 = vpack.c.b16 %v1157, %v1151
        %v1440 = vpack.c.b16 %v1158, %v1152
        %v1441 = vpack.c.b16 %v1159, %v1153
        %v1442 = vpack.c.b16 %v1160, %v1154
        %v1443 = vpack.c.b16 %v1161, %v1155
        %v1444 = vpack.c.b16 %v1162, %v1156
        %v1445 = vpack.c.b16 %v1169, %v1163
        %v1446 = vpack.c.b16 %v1170, %v1164
        %v1447 = vpack.c.b16 %v1171, %v1165
        %v1448 = vpack.c.b16 %v1172, %v1166
        %v1449 = vpack.c.b16 %v1173, %v1167
        %v1450 = vpack.c.b16 %v1174, %v1168
        %v1451 = vpack.c.b16 %v1181, %v1175
        %v1452 = vpack.c.b16 %v1182, %v1176
        %v1453 = vpack.c.b16 %v1183, %v1177
        %v1454 = vpack.c.b16 %v1184, %v1178
        %v1455 = vpack.c.b16 %v1185, %v1179
        %v1456 = vpack.c.b16 %v1186, %v1180
        %v1457 = vpack.c.b16 %v1193, %v1187
        %v1458 = vpack.c.b16 %v1194, %v1188
        %v1459 = vpack.c.b16 %v1195, %v1189
        %v1460 = vpack.c.b16 %v1196, %v1190
        %v1461 = vpack.c.b16 %v1197, %v1191
        %v1462 = vpack.c.b16 %v1198, %v1192
        %v1463 = vpack.c.b16 %v1205, %v1199
        %v1464 = vpack.c.b16 %v1206, %v1200
        %v1465 = vpack.c.b16 %v1207, %v1201
        %v1466 = vpack.c.b16 %v1208, %v1202
        %v1467 = vpack.c.b16 %v1209, %v1203
        %v1468 = vpack.c.b16 %v1210, %v1204
        %v1469 = vpack.c.b16 %v1217, %v1211
        %v1470 = vpack.c.b16 %v1218, %v1212
        %v1471 = vpack.c.b16 %v1219, %v1213
        %v1472 = vpack.c.b16 %v1220, %v1214
        %v1473 = vpack.c.b16 %v1221, %v1215
        %v1474 = vpack.c.b16 %v1222, %v1216
        %v1475 = vpack.c.b16 %v1229, %v1223
        %v1476 = vpack.c.b16 %v1230, %v1224
        %v1477 = vpack.c.b16 %v1231, %v1225
        %v1478 = vpack.c.b16 %v1232, %v1226
        %v1479 = vpack.c.b16 %v1233, %v1227
        %v1480 = vpack.c.b16 %v1234, %v1228
        %v1481 = vpack.c.b16 %v1241, %v1235
        %v1482 = vpack.c.b16 %v1242, %v1236
        %v1483 = vpack.c.b16 %v1243, %v1237
        %v1484 = vpack.c.b16 %v1244, %v1238
        %v1485 = vpack.c.b16 %v1245, %v1239
        %v1486 = vpack.c.b16 %v1246, %v1240
        %v1487 = vpack.c.b16 %v1253, %v1247
        %v1488 = vpack.c.b16 %v1254, %v1248
        %v1489 = vpack.c.b16 %v1255, %v1249
        %v1490 = vpack.c.b16 %v1256, %v1250
        %v1491 = vpack.c.b16 %v1257, %v1251
        %v1492 = vpack.c.b16 %v1258, %v1252
        %v1493 = vpack.c.b16 %v1265, %v1259
        %v1494 = vpack.c.b16 %v1266, %v1260
        %v1495 = vpack.c.b16 %v1267, %v1261
        %v1496 = vpack.c.b16 %v1268, %v1262
        %v1497 = vpack.c.b16 %v1269, %v1263
        %v1498 = vpack.c.b16 %v1270, %v1264
        %v1499 = vpack.c.b16 %v1277, %v1271
        %v1500 = vpack.c.b16 %v1278, %v1272
        %v1501 = vpack.c.b16 %v1279, %v1273
        %v1502 = vpack.c.b16 %v1280, %v1274
        %v1503 = vpack.c.b16 %v1281, %v1275
        %v1504 = vpack.c.b16 %v1282, %v1276
        %v1505 = vpack.c.b16 %v1289, %v1283
        %v1506 = vpack.c.b16 %v1290, %v1284
        %v1507 = vpack.c.b16 %v1291, %v1285
        %v1508 = vpack.c.b16 %v1292, %v1286
        %v1509 = vpack.c.b16 %v1293, %v1287
        %v1510 = vpack.c.b16 %v1294, %v1288
        %v1511 = vpack.c.b16 %v1301, %v1295
        %v1512 = vpack.c.b16 %v1302, %v1296
        %v1513 = vpack.c.b16 %v1303, %v1297
        %v1514 = vpack.c.b16 %v1304, %v1298
        %v1515 = vpack.c.b16 %v1305, %v1299
        %v1516 = vpack.c.b16 %v1306, %v1300
        %v1517 = vpack.c.b16 %v1313, %v1307
        %v1518 = vpack.c.b16 %v1314, %v1308
        %v1519 = vpack.c.b16 %v1315, %v1309
        %v1520 = vpack.c.b16 %v1316, %v1310
        %v1521 = vpack.c.b16 %v1317, %v1311
        %v1522 = vpack.c.b16 %v1318, %v1312
        %v1523 = vpack.c.b16 %v1325, %v1319
        %v1524 = vpack.c.b16 %v1326, %v1320
        %v1525 = vpack.c.b16 %v1327, %v1321
        %v1526 = vpack.c.b16 %v1328, %v1322
        %v1527 = vpack.c.b16 %v1329, %v1323
        %v1528 = vpack.c.b16 %v1330, %v1324
        %v1529 = vpack.c.b16 %v1337, %v1331
        %v1530 = vpack.c.b16 %v1338, %v1332
        %v1531 = vpack.c.b16 %v1339, %v1333
        %v1532 = vpack.c.b16 %v1340, %v1334
        %v1533 = vpack.c.b16 %v1341, %v1335
        %v1534 = vpack.c.b16 %v1342, %v1336
        %v1535 = vpack.c.b16 %v1349, %v1343
        %v1536 = vpack.c.b16 %v1350, %v1344
        %v1537 = vpack.c.b16 %v1351, %v1345
        %v1538 = vpack.c.b16 %v1352, %v1346
        %v1539 = vpack.c.b16 %v1353, %v1347
        %v1540 = vpack.c.b16 %v1354, %v1348
        %v1541 = vpack.c.b16 %v1361, %v1355
        %v1542 = vpack.c.b16 %v1362, %v1356
        %v1543 = vpack.c.b16 %v1363, %v1357
        %v1544 = vpack.c.b16 %v1364, %v1358
        %v1545 = vpack.c.b16 %v1365, %v1359
        %v1546 = vpack.c.b16 %v1366, %v1360
        %v1547 = vpack.c.b16 %v1373, %v1367
        %v1548 = vpack.c.b16 %v1374, %v1368
        %v1549 = vpack.c.b16 %v1375, %v1369
        %v1550 = vpack.c.b16 %v1376, %v1370
        %v1551 = vpack.c.b16 %v1377, %v1371
        %v1552 = vpack.c.b16 %v1378, %v1372
        %v1553 = vpack.c.b16 %v1385, %v1379
        %v1554 = vpack.c.b16 %v1386, %v1380
        %v1555 = vpack.c.b16 %v1387, %v1381
        %v1556 = vpack.c.b16 %v1388, %v1382
        %v1557 = vpack.c.b16 %v1389, %v1383
        %v1558 = vpack.c.b16 %v1390, %v1384
        %v1559 = vpack.c.b16 %v1397, %v1391
        %v1560 = vpack.c.b16 %v1398, %v1392
        %v1561 = vpack.c.b16 %v1399, %v1393
        %v1562 = vpack.c.b16 %v1400, %v1394
        %v1563 = vpack.c.b16 %v1401, %v1395
        %v1564 = vpack.c.b16 %v1402, %v1396
        %v1565 = vpack.c.b16 %v1409, %v1403
        %v1566 = vpack.c.b16 %v1410, %v1404
        %v1567 = vpack.c.b16 %v1411, %v1405
        %v1568 = vpack.c.b16 %v1412, %v1406
        %v1569 = vpack.c.b16 %v1413, %v1407
        %v1570 = vpack.c.b16 %v1414, %v1408
        %v1571 = vpack.c.b16 %v1421, %v1415
        %v1572 = vpack.c.b16 %v1422, %v1416
        %v1573 = vpack.c.b16 %v1423, %v1417
        %v1574 = vpack.c.b16 %v1424, %v1418
        %v1575 = vpack.c.b16 %v1425, %v1419
        %v1576 = vpack.c.b16 %v1426, %v1420
        %v1577 = vpack.c.b16 %v1433, %v1427
        %v1578 = vpack.c.b16 %v1434, %v1428
        %v1579 = vpack.c.b16 %v1435, %v1429
        %v1580 = vpack.c.b16 %v1436, %v1430
        %v1581 = vpack.c.b16 %v1437, %v1431
        %v1582 = vpack.c.b16 %v1438, %v1432
        %1727 = vmatprep.subr.bf16.mxu0 %v1482
        %1728 = vmatpush1.bf16.msra.mxu0 %v1481
        %1729 = vmatprep.subr.bf16.mxu0 %v1476
        %1730 = vmatpush1.bf16.msra.mxu0 %v1475
        %1731 = vmatprep.subr.bf16.mxu0 %v1470
        %1732 = vmatpush1.bf16.msra.mxu0 %v1469
        %1733 = vmatprep.subr.bf16.mxu0 %v1464
        %1734 = vmatpush1.bf16.msra.mxu0 %v1463
        %1735 = vmatprep.subr.bf16.mxu0 %v1458
        %1736 = vmatpush1.bf16.msra.mxu0 %v1457
        %1737 = vmatprep.subr.bf16.mxu0 %v1452
        %1738 = vmatpush1.bf16.msra.mxu0 %v1451
        %1739 = vmatprep.subr.bf16.mxu0 %v1446
        %1740 = vmatpush1.bf16.msra.mxu0 %v1445
        %1741 = vmatprep.subr.bf16.mxu0 %v1440
        %1742 = vmatpush1.bf16.msra.mxu0 %v1439
        %1743 = vmatprep.subr.bf16.mxu0 %v1530
        %1744 = vmatpush2.bf16.msra.mxu0 %v1529
        %1745 = vmatprep.subr.bf16.mxu0 %v1524
        %1746 = vmatpush2.bf16.msra.mxu0 %v1523
        %1747 = vmatprep.subr.bf16.mxu0 %v1518
        %1748 = vmatpush2.bf16.msra.mxu0 %v1517
        %1749 = vmatprep.subr.bf16.mxu0 %v1512
        %1750 = vmatpush2.bf16.msra.mxu0 %v1511
        %1751 = vmatprep.subr.bf16.mxu0 %v1506
        %1752 = vmatpush2.bf16.msra.mxu0 %v1505
        %1753 = vmatprep.subr.bf16.mxu0 %v1500
        %1754 = vmatpush2.bf16.msra.mxu0 %v1499
        %1755 = vmatprep.subr.bf16.mxu0 %v1494
        %1756 = vmatpush2.bf16.msra.mxu0 %v1493
        %1757 = vmatprep.subr.bf16.mxu0 %v1488
        %1758 = vmatpush2.bf16.msra.mxu0 %v1487
        %1759 = vmatprep.mubr.bf16.mxu0 %v802
        %1760 = vmatmul.mubr.bf16.gmra.mxu0 %v801
        %v1761 = vpop.f32.mrf.mxu0
        %v1762 = vadd.f32 %v986, %v1761
        %v1763 = vpop.f32.mrf.mxu0
        %v1764 = vadd.f32 %v990, %v1763
        %v1765 = vpop.f32.mrf.mxu0
        %v1766 = vpop.f32.mrf.mxu0
        %1767 = vdwg.mxu0
        %1768 = vmatprep.subr.bf16.mxu0 %v1578
        %1769 = vmatpush1.bf16.msra.mxu0 %v1577
        %1770 = vmatprep.subr.bf16.mxu0 %v1572
        %1771 = vmatpush1.bf16.msra.mxu0 %v1571
        %1772 = vmatprep.subr.bf16.mxu0 %v1566
        %1773 = vmatpush1.bf16.msra.mxu0 %v1565
        %1774 = vmatprep.subr.bf16.mxu0 %v1560
        %1775 = vmatpush1.bf16.msra.mxu0 %v1559
        %1776 = vmatprep.subr.bf16.mxu0 %v1554
        %1777 = vmatpush1.bf16.msra.mxu0 %v1553
        %1778 = vmatprep.subr.bf16.mxu0 %v1548
        %1779 = vmatpush1.bf16.msra.mxu0 %v1547
        %1780 = vmatprep.subr.bf16.mxu0 %v1542
        %1781 = vmatpush1.bf16.msra.mxu0 %v1541
        %1782 = vmatprep.subr.bf16.mxu0 %v1536
        %1783 = vmatpush1.bf16.msra.mxu0 %v1535
        %1784 = vmatprep.subr.bf16.mxu0 0
        %1785 = vmatpush2.bf16.msra.mxu0 0
        %1786 = vmatprep.subr.bf16.mxu0 0
        %1787 = vmatpush2.bf16.msra.mxu0 0
        %1788 = vmatprep.subr.bf16.mxu0 0
        %1789 = vmatpush2.bf16.msra.mxu0 0
        %1790 = vmatprep.subr.bf16.mxu0 0
        %1791 = vmatpush2.bf16.msra.mxu0 0
        %1792 = vmatprep.subr.bf16.mxu0 0
        %1793 = vmatpush2.bf16.msra.mxu0 0
        %1794 = vmatprep.subr.bf16.mxu0 0
        %1795 = vmatpush2.bf16.msra.mxu0 0
        %1796 = vmatprep.subr.bf16.mxu0 0
        %1797 = vmatpush2.bf16.msra.mxu0 0
        %1798 = vmatprep.subr.bf16.mxu0 0
        %1799 = vmatpush2.bf16.msra.mxu0 0
        %1800 = vmatprep.mubr.bf16.mxu0 0
        %1801 = vmatmul.mubr.bf16.gmra.mxu0 %v803
        %v1802 = vpop.f32.mrf.mxu0
        %v1803 = vadd.f32 %v1762, %v1802
        %v1804 = vpop.f32.mrf.mxu0
        %v1805 = vadd.f32 %v1764, %v1804
        %v1806 = vpop.f32.mrf.mxu0
        %v1807 = vpop.f32.mrf.mxu0
        %1808 = vdwg.mxu0
        %1809 = vmatprep.subr.bf16.mxu0 %v1484
        %1810 = vmatpush1.bf16.msra.mxu0 %v1483
        %1811 = vmatprep.subr.bf16.mxu0 %v1478
        %1812 = vmatpush1.bf16.msra.mxu0 %v1477
        %1813 = vmatprep.subr.bf16.mxu0 %v1472
        %1814 = vmatpush1.bf16.msra.mxu0 %v1471
        %1815 = vmatprep.subr.bf16.mxu0 %v1466
        %1816 = vmatpush1.bf16.msra.mxu0 %v1465
        %1817 = vmatprep.subr.bf16.mxu0 %v1460
        %1818 = vmatpush1.bf16.msra.mxu0 %v1459
        %1819 = vmatprep.subr.bf16.mxu0 %v1454
        %1820 = vmatpush1.bf16.msra.mxu0 %v1453
        %1821 = vmatprep.subr.bf16.mxu0 %v1448
        %1822 = vmatpush1.bf16.msra.mxu0 %v1447
        %1823 = vmatprep.subr.bf16.mxu0 %v1442
        %1824 = vmatpush1.bf16.msra.mxu0 %v1441
        %1825 = vmatprep.subr.bf16.mxu0 %v1532
        %1826 = vmatpush2.bf16.msra.mxu0 %v1531
        %1827 = vmatprep.subr.bf16.mxu0 %v1526
        %1828 = vmatpush2.bf16.msra.mxu0 %v1525
        %1829 = vmatprep.subr.bf16.mxu0 %v1520
        %1830 = vmatpush2.bf16.msra.mxu0 %v1519
        %1831 = vmatprep.subr.bf16.mxu0 %v1514
        %1832 = vmatpush2.bf16.msra.mxu0 %v1513
        %1833 = vmatprep.subr.bf16.mxu0 %v1508
        %1834 = vmatpush2.bf16.msra.mxu0 %v1507
        %1835 = vmatprep.subr.bf16.mxu0 %v1502
        %1836 = vmatpush2.bf16.msra.mxu0 %v1501
        %1837 = vmatprep.subr.bf16.mxu0 %v1496
        %1838 = vmatpush2.bf16.msra.mxu0 %v1495
        %1839 = vmatprep.subr.bf16.mxu0 %v1490
        %1840 = vmatpush2.bf16.msra.mxu0 %v1489
        %1841 = vmatprep.mubr.bf16.mxu0 %v802
        %1842 = vmatmul.mubr.bf16.gmra.mxu0 %v801
        %v1843 = vpop.f32.mrf.mxu0
        %v1844 = vadd.f32 %v994, %v1843
        %v1845 = vpop.f32.mrf.mxu0
        %v1846 = vadd.f32 %v998, %v1845
        %v1847 = vpop.f32.mrf.mxu0
        %v1848 = vpop.f32.mrf.mxu0
        %1849 = vdwg.mxu0
        %1850 = vmatprep.subr.bf16.mxu0 %v1580
        %1851 = vmatpush1.bf16.msra.mxu0 %v1579
        %1852 = vmatprep.subr.bf16.mxu0 %v1574
        %1853 = vmatpush1.bf16.msra.mxu0 %v1573
        %1854 = vmatprep.subr.bf16.mxu0 %v1568
        %1855 = vmatpush1.bf16.msra.mxu0 %v1567
        %1856 = vmatprep.subr.bf16.mxu0 %v1562
        %1857 = vmatpush1.bf16.msra.mxu0 %v1561
        %1858 = vmatprep.subr.bf16.mxu0 %v1556
        %1859 = vmatpush1.bf16.msra.mxu0 %v1555
        %1860 = vmatprep.subr.bf16.mxu0 %v1550
        %1861 = vmatpush1.bf16.msra.mxu0 %v1549
        %1862 = vmatprep.subr.bf16.mxu0 %v1544
        %1863 = vmatpush1.bf16.msra.mxu0 %v1543
        %1864 = vmatprep.subr.bf16.mxu0 %v1538
        %1865 = vmatpush1.bf16.msra.mxu0 %v1537
        %1866 = vmatprep.subr.bf16.mxu0 0
        %1867 = vmatpush2.bf16.msra.mxu0 0
        %1868 = vmatprep.subr.bf16.mxu0 0
        %1869 = vmatpush2.bf16.msra.mxu0 0
        %1870 = vmatprep.subr.bf16.mxu0 0
        %1871 = vmatpush2.bf16.msra.mxu0 0
        %1872 = vmatprep.subr.bf16.mxu0 0
        %1873 = vmatpush2.bf16.msra.mxu0 0
        %1874 = vmatprep.subr.bf16.mxu0 0
        %1875 = vmatpush2.bf16.msra.mxu0 0
        %1876 = vmatprep.subr.bf16.mxu0 0
        %1877 = vmatpush2.bf16.msra.mxu0 0
        %1878 = vmatprep.subr.bf16.mxu0 0
        %1879 = vmatpush2.bf16.msra.mxu0 0
        %1880 = vmatprep.subr.bf16.mxu0 0
        %1881 = vmatpush2.bf16.msra.mxu0 0
        %1882 = vmatprep.mubr.bf16.mxu0 0
        %1883 = vmatmul.mubr.bf16.gmra.mxu0 %v803
        %v1884 = vpop.f32.mrf.mxu0
        %v1885 = vadd.f32 %v1844, %v1884
        %v1886 = vpop.f32.mrf.mxu0
        %v1887 = vadd.f32 %v1846, %v1886
        %v1888 = vpop.f32.mrf.mxu0
        %v1889 = vpop.f32.mrf.mxu0
        %1890 = vdwg.mxu0
        %1891 = vmatprep.subr.bf16.mxu0 %v1486
        %1892 = vmatpush1.bf16.msra.mxu0 %v1485
        %1893 = vmatprep.subr.bf16.mxu0 %v1480
        %1894 = vmatpush1.bf16.msra.mxu0 %v1479
        %1895 = vmatprep.subr.bf16.mxu0 %v1474
        %1896 = vmatpush1.bf16.msra.mxu0 %v1473
        %1897 = vmatprep.subr.bf16.mxu0 %v1468
        %1898 = vmatpush1.bf16.msra.mxu0 %v1467
        %1899 = vmatprep.subr.bf16.mxu0 %v1462
        %1900 = vmatpush1.bf16.msra.mxu0 %v1461
        %1901 = vmatprep.subr.bf16.mxu0 %v1456
        %1902 = vmatpush1.bf16.msra.mxu0 %v1455
        %1903 = vmatprep.subr.bf16.mxu0 %v1450
        %1904 = vmatpush1.bf16.msra.mxu0 %v1449
        %1905 = vmatprep.subr.bf16.mxu0 %v1444
        %1906 = vmatpush1.bf16.msra.mxu0 %v1443
        %1907 = vmatprep.subr.bf16.mxu0 %v1534
        %1908 = vmatpush2.bf16.msra.mxu0 %v1533
        %1909 = vmatprep.subr.bf16.mxu0 %v1528
        %1910 = vmatpush2.bf16.msra.mxu0 %v1527
        %1911 = vmatprep.subr.bf16.mxu0 %v1522
        %1912 = vmatpush2.bf16.msra.mxu0 %v1521
        %1913 = vmatprep.subr.bf16.mxu0 %v1516
        %1914 = vmatpush2.bf16.msra.mxu0 %v1515
        %1915 = vmatprep.subr.bf16.mxu0 %v1510
        %1916 = vmatpush2.bf16.msra.mxu0 %v1509
        %1917 = vmatprep.subr.bf16.mxu0 %v1504
        %1918 = vmatpush2.bf16.msra.mxu0 %v1503
        %1919 = vmatprep.subr.bf16.mxu0 %v1498
        %1920 = vmatpush2.bf16.msra.mxu0 %v1497
        %1921 = vmatprep.subr.bf16.mxu0 %v1492
        %1922 = vmatpush2.bf16.msra.mxu0 %v1491
        %1923 = vmatprep.mubr.bf16.mxu0 %v802
        %1924 = vmatmul.mubr.bf16.gmra.mxu0 %v801
        %v1925 = vpop.f32.mrf.mxu0
        %v1926 = vadd.f32 %v1002, %v1925
        %v1927 = vpop.f32.mrf.mxu0
        %v1928 = vadd.f32 %v1006, %v1927
        %v1929 = vpop.f32.mrf.mxu0
        %v1930 = vpop.f32.mrf.mxu0
        %1931 = vdwg.mxu0
        %1932 = vmatprep.subr.bf16.mxu0 %v1582
        %1933 = vmatpush1.bf16.msra.mxu0 %v1581
        %1934 = vmatprep.subr.bf16.mxu0 %v1576
        %1935 = vmatpush1.bf16.msra.mxu0 %v1575
        %1936 = vmatprep.subr.bf16.mxu0 %v1570
        %1937 = vmatpush1.bf16.msra.mxu0 %v1569
        %1938 = vmatprep.subr.bf16.mxu0 %v1564
        %1939 = vmatpush1.bf16.msra.mxu0 %v1563
        %1940 = vmatprep.subr.bf16.mxu0 %v1558
        %1941 = vmatpush1.bf16.msra.mxu0 %v1557
        %1942 = vmatprep.subr.bf16.mxu0 %v1552
        %1943 = vmatpush1.bf16.msra.mxu0 %v1551
        %1944 = vmatprep.subr.bf16.mxu0 %v1546
        %1945 = vmatpush1.bf16.msra.mxu0 %v1545
        %1946 = vmatprep.subr.bf16.mxu0 %v1540
        %1947 = vmatpush1.bf16.msra.mxu0 %v1539
        %1948 = vmatprep.subr.bf16.mxu0 0
        %1949 = vmatpush2.bf16.msra.mxu0 0
        %1950 = vmatprep.subr.bf16.mxu0 0
        %1951 = vmatpush2.bf16.msra.mxu0 0
        %1952 = vmatprep.subr.bf16.mxu0 0
        %1953 = vmatpush2.bf16.msra.mxu0 0
        %1954 = vmatprep.subr.bf16.mxu0 0
        %1955 = vmatpush2.bf16.msra.mxu0 0
        %1956 = vmatprep.subr.bf16.mxu0 0
        %1957 = vmatpush2.bf16.msra.mxu0 0
        %1958 = vmatprep.subr.bf16.mxu0 0
        %1959 = vmatpush2.bf16.msra.mxu0 0
        %1960 = vmatprep.subr.bf16.mxu0 0
        %1961 = vmatpush2.bf16.msra.mxu0 0
        %1962 = vmatprep.subr.bf16.mxu0 0
        %1963 = vmatpush2.bf16.msra.mxu0 0
        %1964 = vmatprep.mubr.bf16.mxu0 0
        %1965 = vmatmul.mubr.bf16.gmra.mxu0 %v803
        %v1966 = vpop.f32.mrf.mxu0
        %v1967 = vadd.f32 %v1926, %v1966
        %v1968 = vpop.f32.mrf.mxu0
        %v1969 = vadd.f32 %v1928, %v1968
        %v1970 = vpop.f32.mrf.mxu0
        %v1971 = vpop.f32.mrf.mxu0
        %1972 = vdwg.mxu0
        %v1973 = vmax.f32 %v1803, 0.0
        %v1974 = vmax.f32 %v1805, 0.0
        %v1975 = vmax.f32 %v1885, 0.0
        %v1976 = vmax.f32 %v1887, 0.0
        %v1977 = vmax.f32 %v1967, 0.0
        %v1978 = vmax.f32 %v1969, 0.0
        %v1979 = vpack.c.bf16 %v1973, %v1973
        %v1980 = vpack.c.bf16 %v1974, %v1974
        %v1981 = vpack.c.bf16 %v1975, %v1975
        %v1982 = vpack.c.bf16 %v1976, %v1976
        %v1983 = vpack.c.bf16 %v1977, %v1977
        %v1984 = vpack.c.bf16 %v1978, %v1978
        %v1985 = vld [vmem:[#allocation14] sm:$0xff]
        %v1986 = vld [vmem:[#allocation14 + $0x8] sm:$0xff]
        %v1987 = vld [vmem:[#allocation14 + $0x10] sm:$0xff]
        %v1988 = vld [vmem:[#allocation14 + $0x18] sm:$0xf]
        %v1989 = vld [vmem:[#allocation14 + $0x1c] sm:$0xff]
        %v1990 = vld [vmem:[#allocation14 + $0x24] sm:$0xff]
        %v1991 = vld [vmem:[#allocation14 + $0x2c] sm:$0xff]
        %v1992 = vld [vmem:[#allocation14 + $0x34] sm:$0xf]
        %v1993 = vld [vmem:[#allocation14 + $0x38] sm:$0xff]
        %v1994 = vld [vmem:[#allocation14 + $0x40] sm:$0xff]
        %v1995 = vld [vmem:[#allocation14 + $0x48] sm:$0xff]
        %v1996 = vld [vmem:[#allocation14 + $0x50] sm:$0xf]
        %v1997 = vld [vmem:[#allocation14 + $0x54] sm:$0xff]
        %v1998 = vld [vmem:[#allocation14 + $0x5c] sm:$0xff]
        %v1999 = vld [vmem:[#allocation14 + $0x64] sm:$0xff]
        %v2000 = vld [vmem:[#allocation14 + $0x6c] sm:$0xf]
        %v2001 = vld [vmem:[#allocation14 + $0x70] sm:$0xff]
        %v2002 = vld [vmem:[#allocation14 + $0x78] sm:$0xff]
        %v2003 = vld [vmem:[#allocation14 + $0x80] sm:$0xff]
        %v2004 = vld [vmem:[#allocation14 + $0x88] sm:$0xf]
        %v2005 = vld [vmem:[#allocation14 + $0x8c] sm:$0xff]
        %v2006 = vld [vmem:[#allocation14 + $0x94] sm:$0xff]
        %v2007 = vld [vmem:[#allocation14 + $0x9c] sm:$0xff]
        %v2008 = vld [vmem:[#allocation14 + $0xa4] sm:$0xf]
        %v2009 = vld [vmem:[#allocation14 + $0xa8] sm:$0xff]
        %v2010 = vld [vmem:[#allocation14 + $0xb0] sm:$0xff]
        %v2011 = vld [vmem:[#allocation14 + $0xb8] sm:$0xff]
        %v2012 = vld [vmem:[#allocation14 + $0xc0] sm:$0xf]
        %v2013 = vld [vmem:[#allocation14 + $0xc4] sm:$0xff]
        %v2014 = vld [vmem:[#allocation14 + $0xcc] sm:$0xff]
        %v2015 = vld [vmem:[#allocation14 + $0xd4] sm:$0xff]
        %v2016 = vld [vmem:[#allocation14 + $0xdc] sm:$0xf]
        %v2017 = vld [vmem:[#allocation14 + $0xe0] sm:$0xff]
        %v2018 = vld [vmem:[#allocation14 + $0xe8] sm:$0xff]
        %v2019 = vld [vmem:[#allocation14 + $0xf0] sm:$0xff]
        %v2020 = vld [vmem:[#allocation14 + $0xf8] sm:$0xf]
        %v2021 = vld [vmem:[#allocation14 + $0xfc] sm:$0xff]
        %v2022 = vld [vmem:[#allocation14 + $0x104] sm:$0xff]
        %v2023 = vld [vmem:[#allocation14 + $0x10c] sm:$0xff]
        %v2024 = vld [vmem:[#allocation14 + $0x114] sm:$0xf]
        %v2025 = vld [vmem:[#allocation14 + $0x118] sm:$0xff]
        %v2026 = vld [vmem:[#allocation14 + $0x120] sm:$0xff]
        %v2027 = vld [vmem:[#allocation14 + $0x128] sm:$0xff]
        %v2028 = vld [vmem:[#allocation14 + $0x130] sm:$0xf]
        %v2029 = vld [vmem:[#allocation14 + $0x134] sm:$0xff]
        %v2030 = vld [vmem:[#allocation14 + $0x13c] sm:$0xff]
        %v2031 = vld [vmem:[#allocation14 + $0x144] sm:$0xff]
        %v2032 = vld [vmem:[#allocation14 + $0x14c] sm:$0xf]
        %v2033 = vld [vmem:[#allocation14 + $0x150] sm:$0xff]
        %v2034 = vld [vmem:[#allocation14 + $0x158] sm:$0xff]
        %v2035 = vld [vmem:[#allocation14 + $0x160] sm:$0xff]
        %v2036 = vld [vmem:[#allocation14 + $0x168] sm:$0xf]
        %v2037 = vld [vmem:[#allocation14 + $0x16c] sm:$0xff]
        %v2038 = vld [vmem:[#allocation14 + $0x174] sm:$0xff]
        %v2039 = vld [vmem:[#allocation14 + $0x17c] sm:$0xff]
        %v2040 = vld [vmem:[#allocation14 + $0x184] sm:$0xf]
        %v2041 = vld [vmem:[#allocation14 + $0x188] sm:$0xff]
        %v2042 = vld [vmem:[#allocation14 + $0x190] sm:$0xff]
        %v2043 = vld [vmem:[#allocation14 + $0x198] sm:$0xff]
        %v2044 = vld [vmem:[#allocation14 + $0x1a0] sm:$0xf]
        %v2045 = vld [vmem:[#allocation14 + $0x1a4] sm:$0xff]
        %v2046 = vld [vmem:[#allocation14 + $0x1ac] sm:$0xff]
        %v2047 = vld [vmem:[#allocation14 + $0x1b4] sm:$0xff]
        %v2048 = vld [vmem:[#allocation14 + $0x1bc] sm:$0xf]
        %v2049 = vld [vmem:[#allocation14 + $0x1c0] sm:$0xff]
        %v2050 = vld [vmem:[#allocation14 + $0x1c8] sm:$0xff]
        %v2051 = vld [vmem:[#allocation14 + $0x1d0] sm:$0xff]
        %v2052 = vld [vmem:[#allocation14 + $0x1d8] sm:$0xf]
        %v2053 = vld [vmem:[#allocation14 + $0x1dc] sm:$0xff]
        %v2054 = vld [vmem:[#allocation14 + $0x1e4] sm:$0xff]
        %v2055 = vld [vmem:[#allocation14 + $0x1ec] sm:$0xff]
        %v2056 = vld [vmem:[#allocation14 + $0x1f4] sm:$0xf]
        %v2057 = vld [vmem:[#allocation14 + $0x1f8] sm:$0xff]
        %v2058 = vld [vmem:[#allocation14 + $0x200] sm:$0xff]
        %v2059 = vld [vmem:[#allocation14 + $0x208] sm:$0xff]
        %v2060 = vld [vmem:[#allocation14 + $0x210] sm:$0xf]
        %v2061 = vld [vmem:[#allocation14 + $0x214] sm:$0xff]
        %v2062 = vld [vmem:[#allocation14 + $0x21c] sm:$0xff]
        %v2063 = vld [vmem:[#allocation14 + $0x224] sm:$0xff]
        %v2064 = vld [vmem:[#allocation14 + $0x22c] sm:$0xf]
        %v2065 = vld [vmem:[#allocation14 + $0x230] sm:$0xff]
        %v2066 = vld [vmem:[#allocation14 + $0x238] sm:$0xff]
        %v2067 = vld [vmem:[#allocation14 + $0x240] sm:$0xff]
        %v2068 = vld [vmem:[#allocation14 + $0x248] sm:$0xf]
        %v2069 = vld [vmem:[#allocation14 + $0x24c] sm:$0xff]
        %v2070 = vld [vmem:[#allocation14 + $0x254] sm:$0xff]
        %v2071 = vld [vmem:[#allocation14 + $0x25c] sm:$0xff]
        %v2072 = vld [vmem:[#allocation14 + $0x264] sm:$0xf]
        %v2073 = vld [vmem:[#allocation14 + $0x268] sm:$0xff]
        %v2074 = vld [vmem:[#allocation14 + $0x270] sm:$0xff]
        %v2075 = vld [vmem:[#allocation14 + $0x278] sm:$0xff]
        %v2076 = vld [vmem:[#allocation14 + $0x280] sm:$0xf]
        %v2077 = vld [vmem:[#allocation14 + $0x284] sm:$0xff]
        %v2078 = vld [vmem:[#allocation14 + $0x28c] sm:$0xff]
        %v2079 = vld [vmem:[#allocation14 + $0x294] sm:$0xff]
        %v2080 = vld [vmem:[#allocation14 + $0x29c] sm:$0xf]
        %v2081 = vld [vmem:[#allocation14 + $0x2a0] sm:$0xff]
        %v2082 = vld [vmem:[#allocation14 + $0x2a8] sm:$0xff]
        %v2083 = vld [vmem:[#allocation14 + $0x2b0] sm:$0xff]
        %v2084 = vld [vmem:[#allocation14 + $0x2b8] sm:$0xf]
        %v2085 = vld [vmem:[#allocation14 + $0x2bc] sm:$0xff]
        %v2086 = vld [vmem:[#allocation14 + $0x2c4] sm:$0xff]
        %v2087 = vld [vmem:[#allocation14 + $0x2cc] sm:$0xff]
        %v2088 = vld [vmem:[#allocation14 + $0x2d4] sm:$0xf]
        %v2089 = vld [vmem:[#allocation14 + $0x2d8] sm:$0xff]
        %v2090 = vld [vmem:[#allocation14 + $0x2e0] sm:$0xff]
        %v2091 = vld [vmem:[#allocation14 + $0x2e8] sm:$0xff]
        %v2092 = vld [vmem:[#allocation14 + $0x2f0] sm:$0xf]
        %v2093 = vld [vmem:[#allocation14 + $0x2f4] sm:$0xff]
        %v2094 = vld [vmem:[#allocation14 + $0x2fc] sm:$0xff]
        %v2095 = vld [vmem:[#allocation14 + $0x304] sm:$0xff]
        %v2096 = vld [vmem:[#allocation14 + $0x30c] sm:$0xf]
        %v2097 = vld [vmem:[#allocation14 + $0x310] sm:$0xff]
        %v2098 = vld [vmem:[#allocation14 + $0x318] sm:$0xff]
        %v2099 = vld [vmem:[#allocation14 + $0x320] sm:$0xff]
        %v2100 = vld [vmem:[#allocation14 + $0x328] sm:$0xf]
        %v2101 = vld [vmem:[#allocation14 + $0x32c] sm:$0xff]
        %v2102 = vld [vmem:[#allocation14 + $0x334] sm:$0xff]
        %v2103 = vld [vmem:[#allocation14 + $0x33c] sm:$0xff]
        %v2104 = vld [vmem:[#allocation14 + $0x344] sm:$0xf]
        %v2105 = vld [vmem:[#allocation14 + $0x348] sm:$0xff]
        %v2106 = vld [vmem:[#allocation14 + $0x350] sm:$0xff]
        %v2107 = vld [vmem:[#allocation14 + $0x358] sm:$0xff]
        %v2108 = vld [vmem:[#allocation14 + $0x360] sm:$0xf]
        %v2109 = vld [vmem:[#allocation14 + $0x364] sm:$0xff]
        %v2110 = vld [vmem:[#allocation14 + $0x36c] sm:$0xff]
        %v2111 = vld [vmem:[#allocation14 + $0x374] sm:$0xff]
        %v2112 = vld [vmem:[#allocation14 + $0x37c] sm:$0xf]
        %v2113 = vld [vmem:[#allocation14 + $0x380] sm:$0xff]
        %v2114 = vld [vmem:[#allocation14 + $0x388] sm:$0xff]
        %v2115 = vld [vmem:[#allocation14 + $0x390] sm:$0xff]
        %v2116 = vld [vmem:[#allocation14 + $0x398] sm:$0xf]
        %v2117 = vld [vmem:[#allocation14 + $0x39c] sm:$0xff]
        %v2118 = vld [vmem:[#allocation14 + $0x3a4] sm:$0xff]
        %v2119 = vld [vmem:[#allocation14 + $0x3ac] sm:$0xff]
        %v2120 = vld [vmem:[#allocation14 + $0x3b4] sm:$0xf]
        %v2121 = vld [vmem:[#allocation14 + $0x3b8] sm:$0xff]
        %v2122 = vld [vmem:[#allocation14 + $0x3c0] sm:$0xff]
        %v2123 = vld [vmem:[#allocation14 + $0x3c8] sm:$0xff]
        %v2124 = vld [vmem:[#allocation14 + $0x3d0] sm:$0xf]
        %v2125 = vld [vmem:[#allocation14 + $0x3d4] sm:$0xff]
        %v2126 = vld [vmem:[#allocation14 + $0x3dc] sm:$0xff]
        %v2127 = vld [vmem:[#allocation14 + $0x3e4] sm:$0xff]
        %v2128 = vld [vmem:[#allocation14 + $0x3ec] sm:$0xf]
        %v2129 = vld [vmem:[#allocation14 + $0x3f0] sm:$0xff]
        %v2130 = vld [vmem:[#allocation14 + $0x3f8] sm:$0xff]
        %v2131 = vld [vmem:[#allocation14 + $0x400] sm:$0xff]
        %v2132 = vld [vmem:[#allocation14 + $0x408] sm:$0xf]
        %v2133 = vld [vmem:[#allocation14 + $0x40c] sm:$0xff]
        %v2134 = vld [vmem:[#allocation14 + $0x414] sm:$0xff]
        %v2135 = vld [vmem:[#allocation14 + $0x41c] sm:$0xff]
        %v2136 = vld [vmem:[#allocation14 + $0x424] sm:$0xf]
        %v2137 = vld [vmem:[#allocation14 + $0x428] sm:$0xff]
        %v2138 = vld [vmem:[#allocation14 + $0x430] sm:$0xff]
        %v2139 = vld [vmem:[#allocation14 + $0x438] sm:$0xff]
        %v2140 = vld [vmem:[#allocation14 + $0x440] sm:$0xf]
        %v2141 = vld [vmem:[#allocation14 + $0x444] sm:$0xff]
        %v2142 = vld [vmem:[#allocation14 + $0x44c] sm:$0xff]
        %v2143 = vld [vmem:[#allocation14 + $0x454] sm:$0xff]
        %v2144 = vld [vmem:[#allocation14 + $0x45c] sm:$0xf]
        %v2145 = vld [vmem:[#allocation14 + $0x460] sm:$0xff]
        %v2146 = vld [vmem:[#allocation14 + $0x468] sm:$0xff]
        %v2147 = vld [vmem:[#allocation14 + $0x470] sm:$0xff]
        %v2148 = vld [vmem:[#allocation14 + $0x478] sm:$0xf]
        %v2149 = vld [vmem:[#allocation14 + $0x47c] sm:$0xff]
        %v2150 = vld [vmem:[#allocation14 + $0x484] sm:$0xff]
        %v2151 = vld [vmem:[#allocation14 + $0x48c] sm:$0xff]
        %v2152 = vld [vmem:[#allocation14 + $0x494] sm:$0xf]
        %v2153 = vld [vmem:[#allocation14 + $0x498] sm:$0xff]
        %v2154 = vld [vmem:[#allocation14 + $0x4a0] sm:$0xff]
        %v2155 = vld [vmem:[#allocation14 + $0x4a8] sm:$0xff]
        %v2156 = vld [vmem:[#allocation14 + $0x4b0] sm:$0xf]
        %v2157 = vld [vmem:[#allocation14 + $0x4b4] sm:$0xff]
        %v2158 = vld [vmem:[#allocation14 + $0x4bc] sm:$0xff]
        %v2159 = vld [vmem:[#allocation14 + $0x4c4] sm:$0xff]
        %v2160 = vld [vmem:[#allocation14 + $0x4cc] sm:$0xf]
        %v2161 = vld [vmem:[#allocation14 + $0x4d0] sm:$0xff]
        %v2162 = vld [vmem:[#allocation14 + $0x4d8] sm:$0xff]
        %v2163 = vld [vmem:[#allocation14 + $0x4e0] sm:$0xff]
        %v2164 = vld [vmem:[#allocation14 + $0x4e8] sm:$0xf]
        %v2165 = vld [vmem:[#allocation14 + $0x4ec] sm:$0xff]
        %v2166 = vld [vmem:[#allocation14 + $0x4f4] sm:$0xff]
        %v2167 = vld [vmem:[#allocation14 + $0x4fc] sm:$0xff]
        %v2168 = vld [vmem:[#allocation14 + $0x504] sm:$0xf]
        %v2169 = vld [vmem:[#allocation14 + $0x508] sm:$0xff]
        %v2170 = vld [vmem:[#allocation14 + $0x510] sm:$0xff]
        %v2171 = vld [vmem:[#allocation14 + $0x518] sm:$0xff]
        %v2172 = vld [vmem:[#allocation14 + $0x520] sm:$0xf]
        %v2173 = vld [vmem:[#allocation14 + $0x524] sm:$0xff]
        %v2174 = vld [vmem:[#allocation14 + $0x52c] sm:$0xff]
        %v2175 = vld [vmem:[#allocation14 + $0x534] sm:$0xff]
        %v2176 = vld [vmem:[#allocation14 + $0x53c] sm:$0xf]
        %v2177 = vld [vmem:[#allocation14 + $0x540] sm:$0xff]
        %v2178 = vld [vmem:[#allocation14 + $0x548] sm:$0xff]
        %v2179 = vld [vmem:[#allocation14 + $0x550] sm:$0xff]
        %v2180 = vld [vmem:[#allocation14 + $0x558] sm:$0xf]
        %v2181 = vld [vmem:[#allocation14 + $0x55c] sm:$0xff]
        %v2182 = vld [vmem:[#allocation14 + $0x564] sm:$0xff]
        %v2183 = vld [vmem:[#allocation14 + $0x56c] sm:$0xff]
        %v2184 = vld [vmem:[#allocation14 + $0x574] sm:$0xf]
        %v2185 = vld [vmem:[#allocation14 + $0x578] sm:$0xff]
        %v2186 = vld [vmem:[#allocation14 + $0x580] sm:$0xff]
        %v2187 = vld [vmem:[#allocation14 + $0x588] sm:$0xff]
        %v2188 = vld [vmem:[#allocation14 + $0x590] sm:$0xf]
        %v2189 = vld [vmem:[#allocation14 + $0x594] sm:$0xff]
        %v2190 = vld [vmem:[#allocation14 + $0x59c] sm:$0xff]
        %v2191 = vld [vmem:[#allocation14 + $0x5a4] sm:$0xff]
        %v2192 = vld [vmem:[#allocation14 + $0x5ac] sm:$0xf]
        %v2193 = vld [vmem:[#allocation14 + $0x5b0] sm:$0xff]
        %v2194 = vld [vmem:[#allocation14 + $0x5b8] sm:$0xff]
        %v2195 = vld [vmem:[#allocation14 + $0x5c0] sm:$0xff]
        %v2196 = vld [vmem:[#allocation14 + $0x5c8] sm:$0xf]
        %v2197 = vld [vmem:[#allocation14 + $0x5cc] sm:$0xff]
        %v2198 = vld [vmem:[#allocation14 + $0x5d4] sm:$0xff]
        %v2199 = vld [vmem:[#allocation14 + $0x5dc] sm:$0xff]
        %v2200 = vld [vmem:[#allocation14 + $0x5e4] sm:$0xf]
        %v2201 = vld [vmem:[#allocation14 + $0x5e8] sm:$0xff]
        %v2202 = vld [vmem:[#allocation14 + $0x5f0] sm:$0xff]
        %v2203 = vld [vmem:[#allocation14 + $0x5f8] sm:$0xff]
        %v2204 = vld [vmem:[#allocation14 + $0x600] sm:$0xf]
        %v2205 = vld [vmem:[#allocation14 + $0x604] sm:$0xff]
        %v2206 = vld [vmem:[#allocation14 + $0x60c] sm:$0xff]
        %v2207 = vld [vmem:[#allocation14 + $0x614] sm:$0xff]
        %v2208 = vld [vmem:[#allocation14 + $0x61c] sm:$0xf]
        %v2209 = vld [vmem:[#allocation14 + $0x620] sm:$0xff]
        %v2210 = vld [vmem:[#allocation14 + $0x628] sm:$0xff]
        %v2211 = vld [vmem:[#allocation14 + $0x630] sm:$0xff]
        %v2212 = vld [vmem:[#allocation14 + $0x638] sm:$0xf]
        %v2213 = vld [vmem:[#allocation14 + $0x63c] sm:$0xff]
        %v2214 = vld [vmem:[#allocation14 + $0x644] sm:$0xff]
        %v2215 = vld [vmem:[#allocation14 + $0x64c] sm:$0xff]
        %v2216 = vld [vmem:[#allocation14 + $0x654] sm:$0xf]
        %v2217 = vld [vmem:[#allocation14 + $0x658] sm:$0xff]
        %v2218 = vld [vmem:[#allocation14 + $0x660] sm:$0xff]
        %v2219 = vld [vmem:[#allocation14 + $0x668] sm:$0xff]
        %v2220 = vld [vmem:[#allocation14 + $0x670] sm:$0xf]
        %v2221 = vld [vmem:[#allocation14 + $0x674] sm:$0xff]
        %v2222 = vld [vmem:[#allocation14 + $0x67c] sm:$0xff]
        %v2223 = vld [vmem:[#allocation14 + $0x684] sm:$0xff]
        %v2224 = vld [vmem:[#allocation14 + $0x68c] sm:$0xf]
        %v2225 = vld [vmem:[#allocation14 + $0x690] sm:$0xff]
        %v2226 = vld [vmem:[#allocation14 + $0x698] sm:$0xff]
        %v2227 = vld [vmem:[#allocation14 + $0x6a0] sm:$0xff]
        %v2228 = vld [vmem:[#allocation14 + $0x6a8] sm:$0xf]
        %v2229 = vld [vmem:[#allocation14 + $0x6ac] sm:$0xff]
        %v2230 = vld [vmem:[#allocation14 + $0x6b4] sm:$0xff]
        %v2231 = vld [vmem:[#allocation14 + $0x6bc] sm:$0xff]
        %v2232 = vld [vmem:[#allocation14 + $0x6c4] sm:$0xf]
        %v2233 = vld [vmem:[#allocation14 + $0x6c8] sm:$0xff]
        %v2234 = vld [vmem:[#allocation14 + $0x6d0] sm:$0xff]
        %v2235 = vld [vmem:[#allocation14 + $0x6d8] sm:$0xff]
        %v2236 = vld [vmem:[#allocation14 + $0x6e0] sm:$0xf]
        %v2237 = vld [vmem:[#allocation14 + $0x6e4] sm:$0xff]
        %v2238 = vld [vmem:[#allocation14 + $0x6ec] sm:$0xff]
        %v2239 = vld [vmem:[#allocation14 + $0x6f4] sm:$0xff]
        %v2240 = vld [vmem:[#allocation14 + $0x6fc] sm:$0xf]
        %v2241 = vld [vmem:[#allocation14 + $0x700] sm:$0xff]
        %v2242 = vld [vmem:[#allocation14 + $0x708] sm:$0xff]
        %v2243 = vld [vmem:[#allocation14 + $0x710] sm:$0xff]
        %v2244 = vld [vmem:[#allocation14 + $0x718] sm:$0xf]
        %v2245 = vld [vmem:[#allocation14 + $0x71c] sm:$0xff]
        %v2246 = vld [vmem:[#allocation14 + $0x724] sm:$0xff]
        %v2247 = vld [vmem:[#allocation14 + $0x72c] sm:$0xff]
        %v2248 = vld [vmem:[#allocation14 + $0x734] sm:$0xf]
        %v2249 = vld [vmem:[#allocation14 + $0x738] sm:$0xff]
        %v2250 = vld [vmem:[#allocation14 + $0x740] sm:$0xff]
        %v2251 = vld [vmem:[#allocation14 + $0x748] sm:$0xff]
        %v2252 = vld [vmem:[#allocation14 + $0x750] sm:$0xf]
        %v2253 = vld [vmem:[#allocation14 + $0x754] sm:$0xff]
        %v2254 = vld [vmem:[#allocation14 + $0x75c] sm:$0xff]
        %v2255 = vld [vmem:[#allocation14 + $0x764] sm:$0xff]
        %v2256 = vld [vmem:[#allocation14 + $0x76c] sm:$0xf]
        %v2257 = vld [vmem:[#allocation14 + $0x770] sm:$0xff]
        %v2258 = vld [vmem:[#allocation14 + $0x778] sm:$0xff]
        %v2259 = vld [vmem:[#allocation14 + $0x780] sm:$0xff]
        %v2260 = vld [vmem:[#allocation14 + $0x788] sm:$0xf]
        %v2261 = vld [vmem:[#allocation14 + $0x78c] sm:$0xff]
        %v2262 = vld [vmem:[#allocation14 + $0x794] sm:$0xff]
        %v2263 = vld [vmem:[#allocation14 + $0x79c] sm:$0xff]
        %v2264 = vld [vmem:[#allocation14 + $0x7a4] sm:$0xf]
        %v2265 = vld [vmem:[#allocation14 + $0x7a8] sm:$0xff]
        %v2266 = vld [vmem:[#allocation14 + $0x7b0] sm:$0xff]
        %v2267 = vld [vmem:[#allocation14 + $0x7b8] sm:$0xff]
        %v2268 = vld [vmem:[#allocation14 + $0x7c0] sm:$0xf]
        %v2269 = vld [vmem:[#allocation14 + $0x7c4] sm:$0xff]
        %v2270 = vld [vmem:[#allocation14 + $0x7cc] sm:$0xff]
        %v2271 = vld [vmem:[#allocation14 + $0x7d4] sm:$0xff]
        %v2272 = vld [vmem:[#allocation14 + $0x7dc] sm:$0xf]
        %v2273 = vld [vmem:[#allocation14 + $0x7e0] sm:$0xff]
        %v2274 = vld [vmem:[#allocation14 + $0x7e8] sm:$0xff]
        %v2275 = vld [vmem:[#allocation14 + $0x7f0] sm:$0xff]
        %v2276 = vld [vmem:[#allocation14 + $0x7f8] sm:$0xf]
        %v2277 = vld [vmem:[#allocation14 + $0x7fc] sm:$0xff]
        %v2278 = vld [vmem:[#allocation14 + $0x804] sm:$0xff]
        %v2279 = vld [vmem:[#allocation14 + $0x80c] sm:$0xff]
        %v2280 = vld [vmem:[#allocation14 + $0x814] sm:$0xf]
        %v2281 = vld [vmem:[#allocation14 + $0x818] sm:$0xff]
        %v2282 = vld [vmem:[#allocation14 + $0x820] sm:$0xff]
        %v2283 = vld [vmem:[#allocation14 + $0x828] sm:$0xff]
        %v2284 = vld [vmem:[#allocation14 + $0x830] sm:$0xf]
        %v2285 = vld [vmem:[#allocation14 + $0x834] sm:$0xff]
        %v2286 = vld [vmem:[#allocation14 + $0x83c] sm:$0xff]
        %v2287 = vld [vmem:[#allocation14 + $0x844] sm:$0xff]
        %v2288 = vld [vmem:[#allocation14 + $0x84c] sm:$0xf]
        %v2289 = vld [vmem:[#allocation14 + $0x850] sm:$0xff]
        %v2290 = vld [vmem:[#allocation14 + $0x858] sm:$0xff]
        %v2291 = vld [vmem:[#allocation14 + $0x860] sm:$0xff]
        %v2292 = vld [vmem:[#allocation14 + $0x868] sm:$0xf]
        %v2293 = vld [vmem:[#allocation14 + $0x86c] sm:$0xff]
        %v2294 = vld [vmem:[#allocation14 + $0x874] sm:$0xff]
        %v2295 = vld [vmem:[#allocation14 + $0x87c] sm:$0xff]
        %v2296 = vld [vmem:[#allocation14 + $0x884] sm:$0xf]
        %v2297 = vld [vmem:[#allocation14 + $0x888] sm:$0xff]
        %v2298 = vld [vmem:[#allocation14 + $0x890] sm:$0xff]
        %v2299 = vld [vmem:[#allocation14 + $0x898] sm:$0xff]
        %v2300 = vld [vmem:[#allocation14 + $0x8a0] sm:$0xf]
        %v2301 = vld [vmem:[#allocation14 + $0x8a4] sm:$0xff]
        %v2302 = vld [vmem:[#allocation14 + $0x8ac] sm:$0xff]
        %v2303 = vld [vmem:[#allocation14 + $0x8b4] sm:$0xff]
        %v2304 = vld [vmem:[#allocation14 + $0x8bc] sm:$0xf]
        %v2305 = vld [vmem:[#allocation14 + $0x8c0] sm:$0xff]
        %v2306 = vld [vmem:[#allocation14 + $0x8c8] sm:$0xff]
        %v2307 = vld [vmem:[#allocation14 + $0x8d0] sm:$0xff]
        %v2308 = vld [vmem:[#allocation14 + $0x8d8] sm:$0xf]
        %v2309 = vld [vmem:[#allocation14 + $0x8dc] sm:$0xff]
        %v2310 = vld [vmem:[#allocation14 + $0x8e4] sm:$0xff]
        %v2311 = vld [vmem:[#allocation14 + $0x8ec] sm:$0xff]
        %v2312 = vld [vmem:[#allocation14 + $0x8f4] sm:$0xf]
        %v2313 = vld [vmem:[#allocation14 + $0x8f8] sm:$0xff]
        %v2314 = vld [vmem:[#allocation14 + $0x900] sm:$0xff]
        %v2315 = vld [vmem:[#allocation14 + $0x908] sm:$0xff]
        %v2316 = vld [vmem:[#allocation14 + $0x910] sm:$0xf]
        %v2317 = vld [vmem:[#allocation14 + $0x914] sm:$0xff]
        %v2318 = vld [vmem:[#allocation14 + $0x91c] sm:$0xff]
        %v2319 = vld [vmem:[#allocation14 + $0x924] sm:$0xff]
        %v2320 = vld [vmem:[#allocation14 + $0x92c] sm:$0xf]
        %v2321 = vld [vmem:[#allocation14 + $0x930] sm:$0xff]
        %v2322 = vld [vmem:[#allocation14 + $0x938] sm:$0xff]
        %v2323 = vld [vmem:[#allocation14 + $0x940] sm:$0xff]
        %v2324 = vld [vmem:[#allocation14 + $0x948] sm:$0xf]
        %v2325 = vld [vmem:[#allocation14 + $0x94c] sm:$0xff]
        %v2326 = vld [vmem:[#allocation14 + $0x954] sm:$0xff]
        %v2327 = vld [vmem:[#allocation14 + $0x95c] sm:$0xff]
        %v2328 = vld [vmem:[#allocation14 + $0x964] sm:$0xf]
        %v2329 = vld [vmem:[#allocation14 + $0x968] sm:$0xff]
        %v2330 = vld [vmem:[#allocation14 + $0x970] sm:$0xff]
        %v2331 = vld [vmem:[#allocation14 + $0x978] sm:$0xff]
        %v2332 = vld [vmem:[#allocation14 + $0x980] sm:$0xf]
        %v2333 = vld [vmem:[#allocation14 + $0x984] sm:$0xff]
        %v2334 = vld [vmem:[#allocation14 + $0x98c] sm:$0xff]
        %v2335 = vld [vmem:[#allocation14 + $0x994] sm:$0xff]
        %v2336 = vld [vmem:[#allocation14 + $0x99c] sm:$0xf]
        %v2337 = vld [vmem:[#allocation14 + $0x9a0] sm:$0xff]
        %v2338 = vld [vmem:[#allocation14 + $0x9a8] sm:$0xff]
        %v2339 = vld [vmem:[#allocation14 + $0x9b0] sm:$0xff]
        %v2340 = vld [vmem:[#allocation14 + $0x9b8] sm:$0xf]
        %v2341 = vld [vmem:[#allocation14 + $0x9bc] sm:$0xff]
        %v2342 = vld [vmem:[#allocation14 + $0x9c4] sm:$0xff]
        %v2343 = vld [vmem:[#allocation14 + $0x9cc] sm:$0xff]
        %v2344 = vld [vmem:[#allocation14 + $0x9d4] sm:$0xf]
        %v2345 = vld [vmem:[#allocation14 + $0x9d8] sm:$0xff]
        %v2346 = vld [vmem:[#allocation14 + $0x9e0] sm:$0xff]
        %v2347 = vld [vmem:[#allocation14 + $0x9e8] sm:$0xff]
        %v2348 = vld [vmem:[#allocation14 + $0x9f0] sm:$0xf]
        %v2349 = vld [vmem:[#allocation14 + $0x9f4] sm:$0xff]
        %v2350 = vld [vmem:[#allocation14 + $0x9fc] sm:$0xff]
        %v2351 = vld [vmem:[#allocation14 + $0xa04] sm:$0xff]
        %v2352 = vld [vmem:[#allocation14 + $0xa0c] sm:$0xf]
        %v2353 = vld [vmem:[#allocation14 + $0xa10] sm:$0xff]
        %v2354 = vld [vmem:[#allocation14 + $0xa18] sm:$0xff]
        %v2355 = vld [vmem:[#allocation14 + $0xa20] sm:$0xff]
        %v2356 = vld [vmem:[#allocation14 + $0xa28] sm:$0xf]
        %v2357 = vld [vmem:[#allocation14 + $0xa2c] sm:$0xff]
        %v2358 = vld [vmem:[#allocation14 + $0xa34] sm:$0xff]
        %v2359 = vld [vmem:[#allocation14 + $0xa3c] sm:$0xff]
        %v2360 = vld [vmem:[#allocation14 + $0xa44] sm:$0xf]
        %v2361 = vld [vmem:[#allocation14 + $0xa48] sm:$0xff]
        %v2362 = vld [vmem:[#allocation14 + $0xa50] sm:$0xff]
        %v2363 = vld [vmem:[#allocation14 + $0xa58] sm:$0xff]
        %v2364 = vld [vmem:[#allocation14 + $0xa60] sm:$0xf]
        %v2365 = vld [vmem:[#allocation14 + $0xa64] sm:$0xff]
        %v2366 = vld [vmem:[#allocation14 + $0xa6c] sm:$0xff]
        %v2367 = vld [vmem:[#allocation14 + $0xa74] sm:$0xff]
        %v2368 = vld [vmem:[#allocation14 + $0xa7c] sm:$0xf]
        %v2369 = vld [vmem:[#allocation16] sm:$0x7f]
        %v2370 = vunpack.c.l.bf16 %v2369
        %v2371 = vunpack.c.h.bf16 %v2369
        %v2374 = vlaneseq
        %v2375 = vshrl.u32 %v2374, 7
        %v2376 = vsub.s32 0, %v2375
        %v2377 = vrot.slane %v2370, %v2376
        %v2378 = vlaneseq
        %v2379 = vshrl.u32 %v2378, 7
        %v2380 = vsub.s32 2, %v2379
        %v2381 = vrot.slane %v2370, %v2380
        %v2382 = vlaneseq
        %v2383 = vshrl.u32 %v2382, 7
        %v2384 = vsub.s32 4, %v2383
        %v2385 = vrot.slane %v2370, %v2384
        %v2386 = vlaneseq
        %v2387 = vshrl.u32 %v2386, 7
        %v2388 = vsub.s32 6, %v2387
        %v2389 = vrot.slane %v2370, %v2388
        %v2390 = vlaneseq
        %v2391 = vshrl.u32 %v2390, 7
        %v2392 = vsub.s32 0, %v2391
        %v2393 = vrot.slane %v2371, %v2392
        %v2394 = vlaneseq
        %v2395 = vshrl.u32 %v2394, 7
        %v2396 = vsub.s32 2, %v2395
        %v2397 = vrot.slane %v2371, %v2396
        %v2398 = vlaneseq
        %v2399 = vshrl.u32 %v2398, 7
        %v2400 = vsub.s32 4, %v2399
        %v2401 = vrot.slane %v2371, %v2400
        %v2409 = vlaneseq
        %v2410 = vshrl.u32 %v2409, 7
        %v2411 = vsub.s32 0, %v2410
        %v2412 = vrot.slane %v2377, %v2411
        %v2413 = vlaneseq
        %v2414 = vshrl.u32 %v2413, 7
        %v2415 = vsub.s32 0, %v2414
        %v2416 = vrot.slane %v2381, %v2415
        %v2417 = vlaneseq
        %v2418 = vshrl.u32 %v2417, 7
        %v2419 = vsub.s32 0, %v2418
        %v2420 = vrot.slane %v2385, %v2419
        %v2421 = vlaneseq
        %v2422 = vshrl.u32 %v2421, 7
        %v2423 = vsub.s32 0, %v2422
        %v2424 = vrot.slane %v2389, %v2423
        %v2425 = vlaneseq
        %v2426 = vshrl.u32 %v2425, 7
        %v2427 = vsub.s32 0, %v2426
        %v2428 = vrot.slane %v2393, %v2427
        %v2429 = vlaneseq
        %v2430 = vshrl.u32 %v2429, 7
        %v2431 = vsub.s32 0, %v2430
        %v2432 = vrot.slane %v2397, %v2431
        %v2433 = vlaneseq
        %v2434 = vshrl.u32 %v2433, 7
        %v2435 = vsub.s32 0, %v2434
        %v2436 = vrot.slane %v2401, %v2435
        %v2821 = vunpack.c.l.b16 %v1985
        %v2822 = vunpack.c.h.b16 %v1985
        %v2823 = vunpack.c.l.b16 %v1986
        %v2824 = vunpack.c.h.b16 %v1986
        %v2825 = vunpack.c.l.b16 %v1987
        %v2826 = vunpack.c.h.b16 %v1987
        %v2827 = vunpack.c.l.b16 %v1988
        %v2828 = vunpack.c.l.b16 %v1989
        %v2829 = vunpack.c.h.b16 %v1989
        %v2830 = vunpack.c.l.b16 %v1990
        %v2831 = vunpack.c.h.b16 %v1990
        %v2832 = vunpack.c.l.b16 %v1991
        %v2833 = vunpack.c.h.b16 %v1991
        %v2834 = vunpack.c.l.b16 %v1992
        %v2835 = vunpack.c.l.b16 %v1993
        %v2836 = vunpack.c.h.b16 %v1993
        %v2837 = vunpack.c.l.b16 %v1994
        %v2838 = vunpack.c.h.b16 %v1994
        %v2839 = vunpack.c.l.b16 %v1995
        %v2840 = vunpack.c.h.b16 %v1995
        %v2841 = vunpack.c.l.b16 %v1996
        %v2842 = vunpack.c.l.b16 %v1997
        %v2843 = vunpack.c.h.b16 %v1997
        %v2844 = vunpack.c.l.b16 %v1998
        %v2845 = vunpack.c.h.b16 %v1998
        %v2846 = vunpack.c.l.b16 %v1999
        %v2847 = vunpack.c.h.b16 %v1999
        %v2848 = vunpack.c.l.b16 %v2000
        %v2849 = vunpack.c.l.b16 %v2001
        %v2850 = vunpack.c.h.b16 %v2001
        %v2851 = vunpack.c.l.b16 %v2002
        %v2852 = vunpack.c.h.b16 %v2002
        %v2853 = vunpack.c.l.b16 %v2003
        %v2854 = vunpack.c.h.b16 %v2003
        %v2855 = vunpack.c.l.b16 %v2004
        %v2856 = vunpack.c.l.b16 %v2005
        %v2857 = vunpack.c.h.b16 %v2005
        %v2858 = vunpack.c.l.b16 %v2006
        %v2859 = vunpack.c.h.b16 %v2006
        %v2860 = vunpack.c.l.b16 %v2007
        %v2861 = vunpack.c.h.b16 %v2007
        %v2862 = vunpack.c.l.b16 %v2008
        %v2863 = vunpack.c.l.b16 %v2009
        %v2864 = vunpack.c.h.b16 %v2009
        %v2865 = vunpack.c.l.b16 %v2010
        %v2866 = vunpack.c.h.b16 %v2010
        %v2867 = vunpack.c.l.b16 %v2011
        %v2868 = vunpack.c.h.b16 %v2011
        %v2869 = vunpack.c.l.b16 %v2012
        %v2870 = vunpack.c.l.b16 %v2013
        %v2871 = vunpack.c.h.b16 %v2013
        %v2872 = vunpack.c.l.b16 %v2014
        %v2873 = vunpack.c.h.b16 %v2014
        %v2874 = vunpack.c.l.b16 %v2015
        %v2875 = vunpack.c.h.b16 %v2015
        %v2876 = vunpack.c.l.b16 %v2016
        %v2877 = vunpack.c.l.b16 %v2017
        %v2878 = vunpack.c.h.b16 %v2017
        %v2879 = vunpack.c.l.b16 %v2018
        %v2880 = vunpack.c.h.b16 %v2018
        %v2881 = vunpack.c.l.b16 %v2019
        %v2882 = vunpack.c.h.b16 %v2019
        %v2883 = vunpack.c.l.b16 %v2020
        %v2884 = vunpack.c.l.b16 %v2021
        %v2885 = vunpack.c.h.b16 %v2021
        %v2886 = vunpack.c.l.b16 %v2022
        %v2887 = vunpack.c.h.b16 %v2022
        %v2888 = vunpack.c.l.b16 %v2023
        %v2889 = vunpack.c.h.b16 %v2023
        %v2890 = vunpack.c.l.b16 %v2024
        %v2891 = vunpack.c.l.b16 %v2025
        %v2892 = vunpack.c.h.b16 %v2025
        %v2893 = vunpack.c.l.b16 %v2026
        %v2894 = vunpack.c.h.b16 %v2026
        %v2895 = vunpack.c.l.b16 %v2027
        %v2896 = vunpack.c.h.b16 %v2027
        %v2897 = vunpack.c.l.b16 %v2028
        %v2898 = vunpack.c.l.b16 %v2029
        %v2899 = vunpack.c.h.b16 %v2029
        %v2900 = vunpack.c.l.b16 %v2030
        %v2901 = vunpack.c.h.b16 %v2030
        %v2902 = vunpack.c.l.b16 %v2031
        %v2903 = vunpack.c.h.b16 %v2031
        %v2904 = vunpack.c.l.b16 %v2032
        %v2905 = vunpack.c.l.b16 %v2033
        %v2906 = vunpack.c.h.b16 %v2033
        %v2907 = vunpack.c.l.b16 %v2034
        %v2908 = vunpack.c.h.b16 %v2034
        %v2909 = vunpack.c.l.b16 %v2035
        %v2910 = vunpack.c.h.b16 %v2035
        %v2911 = vunpack.c.l.b16 %v2036
        %v2912 = vunpack.c.l.b16 %v2037
        %v2913 = vunpack.c.h.b16 %v2037
        %v2914 = vunpack.c.l.b16 %v2038
        %v2915 = vunpack.c.h.b16 %v2038
        %v2916 = vunpack.c.l.b16 %v2039
        %v2917 = vunpack.c.h.b16 %v2039
        %v2918 = vunpack.c.l.b16 %v2040
        %v2919 = vunpack.c.l.b16 %v2041
        %v2920 = vunpack.c.h.b16 %v2041
        %v2921 = vunpack.c.l.b16 %v2042
        %v2922 = vunpack.c.h.b16 %v2042
        %v2923 = vunpack.c.l.b16 %v2043
        %v2924 = vunpack.c.h.b16 %v2043
        %v2925 = vunpack.c.l.b16 %v2044
        %v2926 = vunpack.c.l.b16 %v2045
        %v2927 = vunpack.c.h.b16 %v2045
        %v2928 = vunpack.c.l.b16 %v2046
        %v2929 = vunpack.c.h.b16 %v2046
        %v2930 = vunpack.c.l.b16 %v2047
        %v2931 = vunpack.c.h.b16 %v2047
        %v2932 = vunpack.c.l.b16 %v2048
        %v2933 = vunpack.c.l.b16 %v2049
        %v2934 = vunpack.c.h.b16 %v2049
        %v2935 = vunpack.c.l.b16 %v2050
        %v2936 = vunpack.c.h.b16 %v2050
        %v2937 = vunpack.c.l.b16 %v2051
        %v2938 = vunpack.c.h.b16 %v2051
        %v2939 = vunpack.c.l.b16 %v2052
        %v2940 = vunpack.c.l.b16 %v2053
        %v2941 = vunpack.c.h.b16 %v2053
        %v2942 = vunpack.c.l.b16 %v2054
        %v2943 = vunpack.c.h.b16 %v2054
        %v2944 = vunpack.c.l.b16 %v2055
        %v2945 = vunpack.c.h.b16 %v2055
        %v2946 = vunpack.c.l.b16 %v2056
        %v2947 = vunpack.c.l.b16 %v2057
        %v2948 = vunpack.c.h.b16 %v2057
        %v2949 = vunpack.c.l.b16 %v2058
        %v2950 = vunpack.c.h.b16 %v2058
        %v2951 = vunpack.c.l.b16 %v2059
        %v2952 = vunpack.c.h.b16 %v2059
        %v2953 = vunpack.c.l.b16 %v2060
        %v2954 = vunpack.c.l.b16 %v2061
        %v2955 = vunpack.c.h.b16 %v2061
        %v2956 = vunpack.c.l.b16 %v2062
        %v2957 = vunpack.c.h.b16 %v2062
        %v2958 = vunpack.c.l.b16 %v2063
        %v2959 = vunpack.c.h.b16 %v2063
        %v2960 = vunpack.c.l.b16 %v2064
        %v2961 = vunpack.c.l.b16 %v2065
        %v2962 = vunpack.c.h.b16 %v2065
        %v2963 = vunpack.c.l.b16 %v2066
        %v2964 = vunpack.c.h.b16 %v2066
        %v2965 = vunpack.c.l.b16 %v2067
        %v2966 = vunpack.c.h.b16 %v2067
        %v2967 = vunpack.c.l.b16 %v2068
        %v2968 = vunpack.c.l.b16 %v2069
        %v2969 = vunpack.c.h.b16 %v2069
        %v2970 = vunpack.c.l.b16 %v2070
        %v2971 = vunpack.c.h.b16 %v2070
        %v2972 = vunpack.c.l.b16 %v2071
        %v2973 = vunpack.c.h.b16 %v2071
        %v2974 = vunpack.c.l.b16 %v2072
        %v2975 = vunpack.c.l.b16 %v2073
        %v2976 = vunpack.c.h.b16 %v2073
        %v2977 = vunpack.c.l.b16 %v2074
        %v2978 = vunpack.c.h.b16 %v2074
        %v2979 = vunpack.c.l.b16 %v2075
        %v2980 = vunpack.c.h.b16 %v2075
        %v2981 = vunpack.c.l.b16 %v2076
        %v2982 = vunpack.c.l.b16 %v2077
        %v2983 = vunpack.c.h.b16 %v2077
        %v2984 = vunpack.c.l.b16 %v2078
        %v2985 = vunpack.c.h.b16 %v2078
        %v2986 = vunpack.c.l.b16 %v2079
        %v2987 = vunpack.c.h.b16 %v2079
        %v2988 = vunpack.c.l.b16 %v2080
        %v2989 = vunpack.c.l.b16 %v2081
        %v2990 = vunpack.c.h.b16 %v2081
        %v2991 = vunpack.c.l.b16 %v2082
        %v2992 = vunpack.c.h.b16 %v2082
        %v2993 = vunpack.c.l.b16 %v2083
        %v2994 = vunpack.c.h.b16 %v2083
        %v2995 = vunpack.c.l.b16 %v2084
        %v2996 = vunpack.c.l.b16 %v2085
        %v2997 = vunpack.c.h.b16 %v2085
        %v2998 = vunpack.c.l.b16 %v2086
        %v2999 = vunpack.c.h.b16 %v2086
        %v3000 = vunpack.c.l.b16 %v2087
        %v3001 = vunpack.c.h.b16 %v2087
        %v3002 = vunpack.c.l.b16 %v2088
        %v3003 = vunpack.c.l.b16 %v2089
        %v3004 = vunpack.c.h.b16 %v2089
        %v3005 = vunpack.c.l.b16 %v2090
        %v3006 = vunpack.c.h.b16 %v2090
        %v3007 = vunpack.c.l.b16 %v2091
        %v3008 = vunpack.c.h.b16 %v2091
        %v3009 = vunpack.c.l.b16 %v2092
        %v3010 = vunpack.c.l.b16 %v2093
        %v3011 = vunpack.c.h.b16 %v2093
        %v3012 = vunpack.c.l.b16 %v2094
        %v3013 = vunpack.c.h.b16 %v2094
        %v3014 = vunpack.c.l.b16 %v2095
        %v3015 = vunpack.c.h.b16 %v2095
        %v3016 = vunpack.c.l.b16 %v2096
        %v3017 = vunpack.c.l.b16 %v2097
        %v3018 = vunpack.c.h.b16 %v2097
        %v3019 = vunpack.c.l.b16 %v2098
        %v3020 = vunpack.c.h.b16 %v2098
        %v3021 = vunpack.c.l.b16 %v2099
        %v3022 = vunpack.c.h.b16 %v2099
        %v3023 = vunpack.c.l.b16 %v2100
        %v3024 = vunpack.c.l.b16 %v2101
        %v3025 = vunpack.c.h.b16 %v2101
        %v3026 = vunpack.c.l.b16 %v2102
        %v3027 = vunpack.c.h.b16 %v2102
        %v3028 = vunpack.c.l.b16 %v2103
        %v3029 = vunpack.c.h.b16 %v2103
        %v3030 = vunpack.c.l.b16 %v2104
        %v3031 = vunpack.c.l.b16 %v2105
        %v3032 = vunpack.c.h.b16 %v2105
        %v3033 = vunpack.c.l.b16 %v2106
        %v3034 = vunpack.c.h.b16 %v2106
        %v3035 = vunpack.c.l.b16 %v2107
        %v3036 = vunpack.c.h.b16 %v2107
        %v3037 = vunpack.c.l.b16 %v2108
        %v3038 = vunpack.c.l.b16 %v2109
        %v3039 = vunpack.c.h.b16 %v2109
        %v3040 = vunpack.c.l.b16 %v2110
        %v3041 = vunpack.c.h.b16 %v2110
        %v3042 = vunpack.c.l.b16 %v2111
        %v3043 = vunpack.c.h.b16 %v2111
        %v3044 = vunpack.c.l.b16 %v2112
        %v3045 = vunpack.c.l.b16 %v2113
        %v3046 = vunpack.c.h.b16 %v2113
        %v3047 = vunpack.c.l.b16 %v2114
        %v3048 = vunpack.c.h.b16 %v2114
        %v3049 = vunpack.c.l.b16 %v2115
        %v3050 = vunpack.c.h.b16 %v2115
        %v3051 = vunpack.c.l.b16 %v2116
        %v3052 = vunpack.c.l.b16 %v2117
        %v3053 = vunpack.c.h.b16 %v2117
        %v3054 = vunpack.c.l.b16 %v2118
        %v3055 = vunpack.c.h.b16 %v2118
        %v3056 = vunpack.c.l.b16 %v2119
        %v3057 = vunpack.c.h.b16 %v2119
        %v3058 = vunpack.c.l.b16 %v2120
        %v3059 = vunpack.c.l.b16 %v2121
        %v3060 = vunpack.c.h.b16 %v2121
        %v3061 = vunpack.c.l.b16 %v2122
        %v3062 = vunpack.c.h.b16 %v2122
        %v3063 = vunpack.c.l.b16 %v2123
        %v3064 = vunpack.c.h.b16 %v2123
        %v3065 = vunpack.c.l.b16 %v2124
        %v3066 = vunpack.c.l.b16 %v2125
        %v3067 = vunpack.c.h.b16 %v2125
        %v3068 = vunpack.c.l.b16 %v2126
        %v3069 = vunpack.c.h.b16 %v2126
        %v3070 = vunpack.c.l.b16 %v2127
        %v3071 = vunpack.c.h.b16 %v2127
        %v3072 = vunpack.c.l.b16 %v2128
        %v3073 = vunpack.c.l.b16 %v2129
        %v3074 = vunpack.c.h.b16 %v2129
        %v3075 = vunpack.c.l.b16 %v2130
        %v3076 = vunpack.c.h.b16 %v2130
        %v3077 = vunpack.c.l.b16 %v2131
        %v3078 = vunpack.c.h.b16 %v2131
        %v3079 = vunpack.c.l.b16 %v2132
        %v3080 = vunpack.c.l.b16 %v2133
        %v3081 = vunpack.c.h.b16 %v2133
        %v3082 = vunpack.c.l.b16 %v2134
        %v3083 = vunpack.c.h.b16 %v2134
        %v3084 = vunpack.c.l.b16 %v2135
        %v3085 = vunpack.c.h.b16 %v2135
        %v3086 = vunpack.c.l.b16 %v2136
        %v3087 = vunpack.c.l.b16 %v2137
        %v3088 = vunpack.c.h.b16 %v2137
        %v3089 = vunpack.c.l.b16 %v2138
        %v3090 = vunpack.c.h.b16 %v2138
        %v3091 = vunpack.c.l.b16 %v2139
        %v3092 = vunpack.c.h.b16 %v2139
        %v3093 = vunpack.c.l.b16 %v2140
        %v3094 = vunpack.c.l.b16 %v2141
        %v3095 = vunpack.c.h.b16 %v2141
        %v3096 = vunpack.c.l.b16 %v2142
        %v3097 = vunpack.c.h.b16 %v2142
        %v3098 = vunpack.c.l.b16 %v2143
        %v3099 = vunpack.c.h.b16 %v2143
        %v3100 = vunpack.c.l.b16 %v2144
        %v3101 = vunpack.c.l.b16 %v2145
        %v3102 = vunpack.c.h.b16 %v2145
        %v3103 = vunpack.c.l.b16 %v2146
        %v3104 = vunpack.c.h.b16 %v2146
        %v3105 = vunpack.c.l.b16 %v2147
        %v3106 = vunpack.c.h.b16 %v2147
        %v3107 = vunpack.c.l.b16 %v2148
        %v3108 = vunpack.c.l.b16 %v2149
        %v3109 = vunpack.c.h.b16 %v2149
        %v3110 = vunpack.c.l.b16 %v2150
        %v3111 = vunpack.c.h.b16 %v2150
        %v3112 = vunpack.c.l.b16 %v2151
        %v3113 = vunpack.c.h.b16 %v2151
        %v3114 = vunpack.c.l.b16 %v2152
        %v3115 = vunpack.c.l.b16 %v2153
        %v3116 = vunpack.c.h.b16 %v2153
        %v3117 = vunpack.c.l.b16 %v2154
        %v3118 = vunpack.c.h.b16 %v2154
        %v3119 = vunpack.c.l.b16 %v2155
        %v3120 = vunpack.c.h.b16 %v2155
        %v3121 = vunpack.c.l.b16 %v2156
        %v3122 = vunpack.c.l.b16 %v2157
        %v3123 = vunpack.c.h.b16 %v2157
        %v3124 = vunpack.c.l.b16 %v2158
        %v3125 = vunpack.c.h.b16 %v2158
        %v3126 = vunpack.c.l.b16 %v2159
        %v3127 = vunpack.c.h.b16 %v2159
        %v3128 = vunpack.c.l.b16 %v2160
        %v3129 = vunpack.c.l.b16 %v2161
        %v3130 = vunpack.c.h.b16 %v2161
        %v3131 = vunpack.c.l.b16 %v2162
        %v3132 = vunpack.c.h.b16 %v2162
        %v3133 = vunpack.c.l.b16 %v2163
        %v3134 = vunpack.c.h.b16 %v2163
        %v3135 = vunpack.c.l.b16 %v2164
        %v3136 = vunpack.c.l.b16 %v2165
        %v3137 = vunpack.c.h.b16 %v2165
        %v3138 = vunpack.c.l.b16 %v2166
        %v3139 = vunpack.c.h.b16 %v2166
        %v3140 = vunpack.c.l.b16 %v2167
        %v3141 = vunpack.c.h.b16 %v2167
        %v3142 = vunpack.c.l.b16 %v2168
        %v3143 = vunpack.c.l.b16 %v2169
        %v3144 = vunpack.c.h.b16 %v2169
        %v3145 = vunpack.c.l.b16 %v2170
        %v3146 = vunpack.c.h.b16 %v2170
        %v3147 = vunpack.c.l.b16 %v2171
        %v3148 = vunpack.c.h.b16 %v2171
        %v3149 = vunpack.c.l.b16 %v2172
        %v3150 = vunpack.c.l.b16 %v2173
        %v3151 = vunpack.c.h.b16 %v2173
        %v3152 = vunpack.c.l.b16 %v2174
        %v3153 = vunpack.c.h.b16 %v2174
        %v3154 = vunpack.c.l.b16 %v2175
        %v3155 = vunpack.c.h.b16 %v2175
        %v3156 = vunpack.c.l.b16 %v2176
        %v3157 = vunpack.c.l.b16 %v2177
        %v3158 = vunpack.c.h.b16 %v2177
        %v3159 = vunpack.c.l.b16 %v2178
        %v3160 = vunpack.c.h.b16 %v2178
        %v3161 = vunpack.c.l.b16 %v2179
        %v3162 = vunpack.c.h.b16 %v2179
        %v3163 = vunpack.c.l.b16 %v2180
        %v3164 = vunpack.c.l.b16 %v2181
        %v3165 = vunpack.c.h.b16 %v2181
        %v3166 = vunpack.c.l.b16 %v2182
        %v3167 = vunpack.c.h.b16 %v2182
        %v3168 = vunpack.c.l.b16 %v2183
        %v3169 = vunpack.c.h.b16 %v2183
        %v3170 = vunpack.c.l.b16 %v2184
        %v3171 = vunpack.c.l.b16 %v2185
        %v3172 = vunpack.c.h.b16 %v2185
        %v3173 = vunpack.c.l.b16 %v2186
        %v3174 = vunpack.c.h.b16 %v2186
        %v3175 = vunpack.c.l.b16 %v2187
        %v3176 = vunpack.c.h.b16 %v2187
        %v3177 = vunpack.c.l.b16 %v2188
        %v3178 = vunpack.c.l.b16 %v2189
        %v3179 = vunpack.c.h.b16 %v2189
        %v3180 = vunpack.c.l.b16 %v2190
        %v3181 = vunpack.c.h.b16 %v2190
        %v3182 = vunpack.c.l.b16 %v2191
        %v3183 = vunpack.c.h.b16 %v2191
        %v3184 = vunpack.c.l.b16 %v2192
        %v3185 = vunpack.c.l.b16 %v2193
        %v3186 = vunpack.c.h.b16 %v2193
        %v3187 = vunpack.c.l.b16 %v2194
        %v3188 = vunpack.c.h.b16 %v2194
        %v3189 = vunpack.c.l.b16 %v2195
        %v3190 = vunpack.c.h.b16 %v2195
        %v3191 = vunpack.c.l.b16 %v2196
        %v3192 = vunpack.c.l.b16 %v2197
        %v3193 = vunpack.c.h.b16 %v2197
        %v3194 = vunpack.c.l.b16 %v2198
        %v3195 = vunpack.c.h.b16 %v2198
        %v3196 = vunpack.c.l.b16 %v2199
        %v3197 = vunpack.c.h.b16 %v2199
        %v3198 = vunpack.c.l.b16 %v2200
        %v3199 = vunpack.c.l.b16 %v2201
        %v3200 = vunpack.c.h.b16 %v2201
        %v3201 = vunpack.c.l.b16 %v2202
        %v3202 = vunpack.c.h.b16 %v2202
        %v3203 = vunpack.c.l.b16 %v2203
        %v3204 = vunpack.c.h.b16 %v2203
        %v3205 = vunpack.c.l.b16 %v2204
        %v3206 = vunpack.c.l.b16 %v2205
        %v3207 = vunpack.c.h.b16 %v2205
        %v3208 = vunpack.c.l.b16 %v2206
        %v3209 = vunpack.c.h.b16 %v2206
        %v3210 = vunpack.c.l.b16 %v2207
        %v3211 = vunpack.c.h.b16 %v2207
        %v3212 = vunpack.c.l.b16 %v2208
        %v3213 = vunpack.c.l.b16 %v2209
        %v3214 = vunpack.c.h.b16 %v2209
        %v3215 = vunpack.c.l.b16 %v2210
        %v3216 = vunpack.c.h.b16 %v2210
        %v3217 = vunpack.c.l.b16 %v2211
        %v3218 = vunpack.c.h.b16 %v2211
        %v3219 = vunpack.c.l.b16 %v2212
        %v3220 = vunpack.c.l.b16 %v2213
        %v3221 = vunpack.c.h.b16 %v2213
        %v3222 = vunpack.c.l.b16 %v2214
        %v3223 = vunpack.c.h.b16 %v2214
        %v3224 = vunpack.c.l.b16 %v2215
        %v3225 = vunpack.c.h.b16 %v2215
        %v3226 = vunpack.c.l.b16 %v2216
        %v3227 = vunpack.c.l.b16 %v2217
        %v3228 = vunpack.c.h.b16 %v2217
        %v3229 = vunpack.c.l.b16 %v2218
        %v3230 = vunpack.c.h.b16 %v2218
        %v3231 = vunpack.c.l.b16 %v2219
        %v3232 = vunpack.c.h.b16 %v2219
        %v3233 = vunpack.c.l.b16 %v2220
        %v3234 = vunpack.c.l.b16 %v2221
        %v3235 = vunpack.c.h.b16 %v2221
        %v3236 = vunpack.c.l.b16 %v2222
        %v3237 = vunpack.c.h.b16 %v2222
        %v3238 = vunpack.c.l.b16 %v2223
        %v3239 = vunpack.c.h.b16 %v2223
        %v3240 = vunpack.c.l.b16 %v2224
        %v3241 = vunpack.c.l.b16 %v2225
        %v3242 = vunpack.c.h.b16 %v2225
        %v3243 = vunpack.c.l.b16 %v2226
        %v3244 = vunpack.c.h.b16 %v2226
        %v3245 = vunpack.c.l.b16 %v2227
        %v3246 = vunpack.c.h.b16 %v2227
        %v3247 = vunpack.c.l.b16 %v2228
        %v3248 = vunpack.c.l.b16 %v2229
        %v3249 = vunpack.c.h.b16 %v2229
        %v3250 = vunpack.c.l.b16 %v2230
        %v3251 = vunpack.c.h.b16 %v2230
        %v3252 = vunpack.c.l.b16 %v2231
        %v3253 = vunpack.c.h.b16 %v2231
        %v3254 = vunpack.c.l.b16 %v2232
        %v3255 = vunpack.c.l.b16 %v2233
        %v3256 = vunpack.c.h.b16 %v2233
        %v3257 = vunpack.c.l.b16 %v2234
        %v3258 = vunpack.c.h.b16 %v2234
        %v3259 = vunpack.c.l.b16 %v2235
        %v3260 = vunpack.c.h.b16 %v2235
        %v3261 = vunpack.c.l.b16 %v2236
        %v3262 = vunpack.c.l.b16 %v2237
        %v3263 = vunpack.c.h.b16 %v2237
        %v3264 = vunpack.c.l.b16 %v2238
        %v3265 = vunpack.c.h.b16 %v2238
        %v3266 = vunpack.c.l.b16 %v2239
        %v3267 = vunpack.c.h.b16 %v2239
        %v3268 = vunpack.c.l.b16 %v2240
        %v3269 = vunpack.c.l.b16 %v2241
        %v3270 = vunpack.c.h.b16 %v2241
        %v3271 = vunpack.c.l.b16 %v2242
        %v3272 = vunpack.c.h.b16 %v2242
        %v3273 = vunpack.c.l.b16 %v2243
        %v3274 = vunpack.c.h.b16 %v2243
        %v3275 = vunpack.c.l.b16 %v2244
        %v3276 = vunpack.c.l.b16 %v2245
        %v3277 = vunpack.c.h.b16 %v2245
        %v3278 = vunpack.c.l.b16 %v2246
        %v3279 = vunpack.c.h.b16 %v2246
        %v3280 = vunpack.c.l.b16 %v2247
        %v3281 = vunpack.c.h.b16 %v2247
        %v3282 = vunpack.c.l.b16 %v2248
        %v3283 = vunpack.c.l.b16 %v2249
        %v3284 = vunpack.c.h.b16 %v2249
        %v3285 = vunpack.c.l.b16 %v2250
        %v3286 = vunpack.c.h.b16 %v2250
        %v3287 = vunpack.c.l.b16 %v2251
        %v3288 = vunpack.c.h.b16 %v2251
        %v3289 = vunpack.c.l.b16 %v2252
        %v3290 = vunpack.c.l.b16 %v2253
        %v3291 = vunpack.c.h.b16 %v2253
        %v3292 = vunpack.c.l.b16 %v2254
        %v3293 = vunpack.c.h.b16 %v2254
        %v3294 = vunpack.c.l.b16 %v2255
        %v3295 = vunpack.c.h.b16 %v2255
        %v3296 = vunpack.c.l.b16 %v2256
        %v3297 = vunpack.c.l.b16 %v2257
        %v3298 = vunpack.c.h.b16 %v2257
        %v3299 = vunpack.c.l.b16 %v2258
        %v3300 = vunpack.c.h.b16 %v2258
        %v3301 = vunpack.c.l.b16 %v2259
        %v3302 = vunpack.c.h.b16 %v2259
        %v3303 = vunpack.c.l.b16 %v2260
        %v3304 = vunpack.c.l.b16 %v2261
        %v3305 = vunpack.c.h.b16 %v2261
        %v3306 = vunpack.c.l.b16 %v2262
        %v3307 = vunpack.c.h.b16 %v2262
        %v3308 = vunpack.c.l.b16 %v2263
        %v3309 = vunpack.c.h.b16 %v2263
        %v3310 = vunpack.c.l.b16 %v2264
        %v3311 = vunpack.c.l.b16 %v2265
        %v3312 = vunpack.c.h.b16 %v2265
        %v3313 = vunpack.c.l.b16 %v2266
        %v3314 = vunpack.c.h.b16 %v2266
        %v3315 = vunpack.c.l.b16 %v2267
        %v3316 = vunpack.c.h.b16 %v2267
        %v3317 = vunpack.c.l.b16 %v2268
        %v3318 = vunpack.c.l.b16 %v2269
        %v3319 = vunpack.c.h.b16 %v2269
        %v3320 = vunpack.c.l.b16 %v2270
        %v3321 = vunpack.c.h.b16 %v2270
        %v3322 = vunpack.c.l.b16 %v2271
        %v3323 = vunpack.c.h.b16 %v2271
        %v3324 = vunpack.c.l.b16 %v2272
        %v3325 = vunpack.c.l.b16 %v2273
        %v3326 = vunpack.c.h.b16 %v2273
        %v3327 = vunpack.c.l.b16 %v2274
        %v3328 = vunpack.c.h.b16 %v2274
        %v3329 = vunpack.c.l.b16 %v2275
        %v3330 = vunpack.c.h.b16 %v2275
        %v3331 = vunpack.c.l.b16 %v2276
        %v3332 = vunpack.c.l.b16 %v2277
        %v3333 = vunpack.c.h.b16 %v2277
        %v3334 = vunpack.c.l.b16 %v2278
        %v3335 = vunpack.c.h.b16 %v2278
        %v3336 = vunpack.c.l.b16 %v2279
        %v3337 = vunpack.c.h.b16 %v2279
        %v3338 = vunpack.c.l.b16 %v2280
        %v3339 = vunpack.c.l.b16 %v2281
        %v3340 = vunpack.c.h.b16 %v2281
        %v3341 = vunpack.c.l.b16 %v2282
        %v3342 = vunpack.c.h.b16 %v2282
        %v3343 = vunpack.c.l.b16 %v2283
        %v3344 = vunpack.c.h.b16 %v2283
        %v3345 = vunpack.c.l.b16 %v2284
        %v3346 = vunpack.c.l.b16 %v2285
        %v3347 = vunpack.c.h.b16 %v2285
        %v3348 = vunpack.c.l.b16 %v2286
        %v3349 = vunpack.c.h.b16 %v2286
        %v3350 = vunpack.c.l.b16 %v2287
        %v3351 = vunpack.c.h.b16 %v2287
        %v3352 = vunpack.c.l.b16 %v2288
        %v3353 = vunpack.c.l.b16 %v2289
        %v3354 = vunpack.c.h.b16 %v2289
        %v3355 = vunpack.c.l.b16 %v2290
        %v3356 = vunpack.c.h.b16 %v2290
        %v3357 = vunpack.c.l.b16 %v2291
        %v3358 = vunpack.c.h.b16 %v2291
        %v3359 = vunpack.c.l.b16 %v2292
        %v3360 = vunpack.c.l.b16 %v2293
        %v3361 = vunpack.c.h.b16 %v2293
        %v3362 = vunpack.c.l.b16 %v2294
        %v3363 = vunpack.c.h.b16 %v2294
        %v3364 = vunpack.c.l.b16 %v2295
        %v3365 = vunpack.c.h.b16 %v2295
        %v3366 = vunpack.c.l.b16 %v2296
        %v3367 = vunpack.c.l.b16 %v2297
        %v3368 = vunpack.c.h.b16 %v2297
        %v3369 = vunpack.c.l.b16 %v2298
        %v3370 = vunpack.c.h.b16 %v2298
        %v3371 = vunpack.c.l.b16 %v2299
        %v3372 = vunpack.c.h.b16 %v2299
        %v3373 = vunpack.c.l.b16 %v2300
        %v3374 = vunpack.c.l.b16 %v2301
        %v3375 = vunpack.c.h.b16 %v2301
        %v3376 = vunpack.c.l.b16 %v2302
        %v3377 = vunpack.c.h.b16 %v2302
        %v3378 = vunpack.c.l.b16 %v2303
        %v3379 = vunpack.c.h.b16 %v2303
        %v3380 = vunpack.c.l.b16 %v2304
        %v3381 = vunpack.c.l.b16 %v2305
        %v3382 = vunpack.c.h.b16 %v2305
        %v3383 = vunpack.c.l.b16 %v2306
        %v3384 = vunpack.c.h.b16 %v2306
        %v3385 = vunpack.c.l.b16 %v2307
        %v3386 = vunpack.c.h.b16 %v2307
        %v3387 = vunpack.c.l.b16 %v2308
        %v3388 = vunpack.c.l.b16 %v2309
        %v3389 = vunpack.c.h.b16 %v2309
        %v3390 = vunpack.c.l.b16 %v2310
        %v3391 = vunpack.c.h.b16 %v2310
        %v3392 = vunpack.c.l.b16 %v2311
        %v3393 = vunpack.c.h.b16 %v2311
        %v3394 = vunpack.c.l.b16 %v2312
        %v3395 = vunpack.c.l.b16 %v2313
        %v3396 = vunpack.c.h.b16 %v2313
        %v3397 = vunpack.c.l.b16 %v2314
        %v3398 = vunpack.c.h.b16 %v2314
        %v3399 = vunpack.c.l.b16 %v2315
        %v3400 = vunpack.c.h.b16 %v2315
        %v3401 = vunpack.c.l.b16 %v2316
        %v3402 = vunpack.c.l.b16 %v2317
        %v3403 = vunpack.c.h.b16 %v2317
        %v3404 = vunpack.c.l.b16 %v2318
        %v3405 = vunpack.c.h.b16 %v2318
        %v3406 = vunpack.c.l.b16 %v2319
        %v3407 = vunpack.c.h.b16 %v2319
        %v3408 = vunpack.c.l.b16 %v2320
        %v3409 = vunpack.c.l.b16 %v2321
        %v3410 = vunpack.c.h.b16 %v2321
        %v3411 = vunpack.c.l.b16 %v2322
        %v3412 = vunpack.c.h.b16 %v2322
        %v3413 = vunpack.c.l.b16 %v2323
        %v3414 = vunpack.c.h.b16 %v2323
        %v3415 = vunpack.c.l.b16 %v2324
        %v3416 = vunpack.c.l.b16 %v2325
        %v3417 = vunpack.c.h.b16 %v2325
        %v3418 = vunpack.c.l.b16 %v2326
        %v3419 = vunpack.c.h.b16 %v2326
        %v3420 = vunpack.c.l.b16 %v2327
        %v3421 = vunpack.c.h.b16 %v2327
        %v3422 = vunpack.c.l.b16 %v2328
        %v3423 = vunpack.c.l.b16 %v2329
        %v3424 = vunpack.c.h.b16 %v2329
        %v3425 = vunpack.c.l.b16 %v2330
        %v3426 = vunpack.c.h.b16 %v2330
        %v3427 = vunpack.c.l.b16 %v2331
        %v3428 = vunpack.c.h.b16 %v2331
        %v3429 = vunpack.c.l.b16 %v2332
        %v3430 = vunpack.c.l.b16 %v2333
        %v3431 = vunpack.c.h.b16 %v2333
        %v3432 = vunpack.c.l.b16 %v2334
        %v3433 = vunpack.c.h.b16 %v2334
        %v3434 = vunpack.c.l.b16 %v2335
        %v3435 = vunpack.c.h.b16 %v2335
        %v3436 = vunpack.c.l.b16 %v2336
        %v3437 = vunpack.c.l.b16 %v2337
        %v3438 = vunpack.c.h.b16 %v2337
        %v3439 = vunpack.c.l.b16 %v2338
        %v3440 = vunpack.c.h.b16 %v2338
        %v3441 = vunpack.c.l.b16 %v2339
        %v3442 = vunpack.c.h.b16 %v2339
        %v3443 = vunpack.c.l.b16 %v2340
        %v3444 = vunpack.c.l.b16 %v2341
        %v3445 = vunpack.c.h.b16 %v2341
        %v3446 = vunpack.c.l.b16 %v2342
        %v3447 = vunpack.c.h.b16 %v2342
        %v3448 = vunpack.c.l.b16 %v2343
        %v3449 = vunpack.c.h.b16 %v2343
        %v3450 = vunpack.c.l.b16 %v2344
        %v3451 = vunpack.c.l.b16 %v2345
        %v3452 = vunpack.c.h.b16 %v2345
        %v3453 = vunpack.c.l.b16 %v2346
        %v3454 = vunpack.c.h.b16 %v2346
        %v3455 = vunpack.c.l.b16 %v2347
        %v3456 = vunpack.c.h.b16 %v2347
        %v3457 = vunpack.c.l.b16 %v2348
        %v3458 = vunpack.c.l.b16 %v2349
        %v3459 = vunpack.c.h.b16 %v2349
        %v3460 = vunpack.c.l.b16 %v2350
        %v3461 = vunpack.c.h.b16 %v2350
        %v3462 = vunpack.c.l.b16 %v2351
        %v3463 = vunpack.c.h.b16 %v2351
        %v3464 = vunpack.c.l.b16 %v2352
        %v3465 = vunpack.c.l.b16 %v2353
        %v3466 = vunpack.c.h.b16 %v2353
        %v3467 = vunpack.c.l.b16 %v2354
        %v3468 = vunpack.c.h.b16 %v2354
        %v3469 = vunpack.c.l.b16 %v2355
        %v3470 = vunpack.c.h.b16 %v2355
        %v3471 = vunpack.c.l.b16 %v2356
        %v3472 = vunpack.c.l.b16 %v2357
        %v3473 = vunpack.c.h.b16 %v2357
        %v3474 = vunpack.c.l.b16 %v2358
        %v3475 = vunpack.c.h.b16 %v2358
        %v3476 = vunpack.c.l.b16 %v2359
        %v3477 = vunpack.c.h.b16 %v2359
        %v3478 = vunpack.c.l.b16 %v2360
        %v3479 = vunpack.c.l.b16 %v2361
        %v3480 = vunpack.c.h.b16 %v2361
        %v3481 = vunpack.c.l.b16 %v2362
        %v3482 = vunpack.c.h.b16 %v2362
        %v3483 = vunpack.c.l.b16 %v2363
        %v3484 = vunpack.c.h.b16 %v2363
        %v3485 = vunpack.c.l.b16 %v2364
        %v3486 = vunpack.c.l.b16 %v2365
        %v3487 = vunpack.c.h.b16 %v2365
        %v3488 = vunpack.c.l.b16 %v2366
        %v3489 = vunpack.c.h.b16 %v2366
        %v3490 = vunpack.c.l.b16 %v2367
        %v3491 = vunpack.c.h.b16 %v2367
        %v3492 = vunpack.c.l.b16 %v2368
        %v3493 = vpack.c.b16 %v2828, %v2821
        %v3494 = vpack.c.b16 %v2829, %v2822
        %v3495 = vpack.c.b16 %v2830, %v2823
        %v3496 = vpack.c.b16 %v2831, %v2824
        %v3497 = vpack.c.b16 %v2832, %v2825
        %v3498 = vpack.c.b16 %v2833, %v2826
        %v3499 = vpack.c.b16 %v2834, %v2827
        %v3500 = vpack.c.b16 %v2842, %v2835
        %v3501 = vpack.c.b16 %v2843, %v2836
        %v3502 = vpack.c.b16 %v2844, %v2837
        %v3503 = vpack.c.b16 %v2845, %v2838
        %v3504 = vpack.c.b16 %v2846, %v2839
        %v3505 = vpack.c.b16 %v2847, %v2840
        %v3506 = vpack.c.b16 %v2848, %v2841
        %v3507 = vpack.c.b16 %v2856, %v2849
        %v3508 = vpack.c.b16 %v2857, %v2850
        %v3509 = vpack.c.b16 %v2858, %v2851
        %v3510 = vpack.c.b16 %v2859, %v2852
        %v3511 = vpack.c.b16 %v2860, %v2853
        %v3512 = vpack.c.b16 %v2861, %v2854
        %v3513 = vpack.c.b16 %v2862, %v2855
        %v3514 = vpack.c.b16 %v2870, %v2863
        %v3515 = vpack.c.b16 %v2871, %v2864
        %v3516 = vpack.c.b16 %v2872, %v2865
        %v3517 = vpack.c.b16 %v2873, %v2866
        %v3518 = vpack.c.b16 %v2874, %v2867
        %v3519 = vpack.c.b16 %v2875, %v2868
        %v3520 = vpack.c.b16 %v2876, %v2869
        %v3521 = vpack.c.b16 %v2884, %v2877
        %v3522 = vpack.c.b16 %v2885, %v2878
        %v3523 = vpack.c.b16 %v2886, %v2879
        %v3524 = vpack.c.b16 %v2887, %v2880
        %v3525 = vpack.c.b16 %v2888, %v2881
        %v3526 = vpack.c.b16 %v2889, %v2882
        %v3527 = vpack.c.b16 %v2890, %v2883
        %v3528 = vpack.c.b16 %v2898, %v2891
        %v3529 = vpack.c.b16 %v2899, %v2892
        %v3530 = vpack.c.b16 %v2900, %v2893
        %v3531 = vpack.c.b16 %v2901, %v2894
        %v3532 = vpack.c.b16 %v2902, %v2895
        %v3533 = vpack.c.b16 %v2903, %v2896
        %v3534 = vpack.c.b16 %v2904, %v2897
        %v3535 = vpack.c.b16 %v2912, %v2905
        %v3536 = vpack.c.b16 %v2913, %v2906
        %v3537 = vpack.c.b16 %v2914, %v2907
        %v3538 = vpack.c.b16 %v2915, %v2908
        %v3539 = vpack.c.b16 %v2916, %v2909
        %v3540 = vpack.c.b16 %v2917, %v2910
        %v3541 = vpack.c.b16 %v2918, %v2911
        %v3542 = vpack.c.b16 %v2926, %v2919
        %v3543 = vpack.c.b16 %v2927, %v2920
        %v3544 = vpack.c.b16 %v2928, %v2921
        %v3545 = vpack.c.b16 %v2929, %v2922
        %v3546 = vpack.c.b16 %v2930, %v2923
        %v3547 = vpack.c.b16 %v2931, %v2924
        %v3548 = vpack.c.b16 %v2932, %v2925
        %v3549 = vpack.c.b16 %v2940, %v2933
        %v3550 = vpack.c.b16 %v2941, %v2934
        %v3551 = vpack.c.b16 %v2942, %v2935
        %v3552 = vpack.c.b16 %v2943, %v2936
        %v3553 = vpack.c.b16 %v2944, %v2937
        %v3554 = vpack.c.b16 %v2945, %v2938
        %v3555 = vpack.c.b16 %v2946, %v2939
        %v3556 = vpack.c.b16 %v2954, %v2947
        %v3557 = vpack.c.b16 %v2955, %v2948
        %v3558 = vpack.c.b16 %v2956, %v2949
        %v3559 = vpack.c.b16 %v2957, %v2950
        %v3560 = vpack.c.b16 %v2958, %v2951
        %v3561 = vpack.c.b16 %v2959, %v2952
        %v3562 = vpack.c.b16 %v2960, %v2953
        %v3563 = vpack.c.b16 %v2968, %v2961
        %v3564 = vpack.c.b16 %v2969, %v2962
        %v3565 = vpack.c.b16 %v2970, %v2963
        %v3566 = vpack.c.b16 %v2971, %v2964
        %v3567 = vpack.c.b16 %v2972, %v2965
        %v3568 = vpack.c.b16 %v2973, %v2966
        %v3569 = vpack.c.b16 %v2974, %v2967
        %v3570 = vpack.c.b16 %v2982, %v2975
        %v3571 = vpack.c.b16 %v2983, %v2976
        %v3572 = vpack.c.b16 %v2984, %v2977
        %v3573 = vpack.c.b16 %v2985, %v2978
        %v3574 = vpack.c.b16 %v2986, %v2979
        %v3575 = vpack.c.b16 %v2987, %v2980
        %v3576 = vpack.c.b16 %v2988, %v2981
        %v3577 = vpack.c.b16 %v2996, %v2989
        %v3578 = vpack.c.b16 %v2997, %v2990
        %v3579 = vpack.c.b16 %v2998, %v2991
        %v3580 = vpack.c.b16 %v2999, %v2992
        %v3581 = vpack.c.b16 %v3000, %v2993
        %v3582 = vpack.c.b16 %v3001, %v2994
        %v3583 = vpack.c.b16 %v3002, %v2995
        %v3584 = vpack.c.b16 %v3010, %v3003
        %v3585 = vpack.c.b16 %v3011, %v3004
        %v3586 = vpack.c.b16 %v3012, %v3005
        %v3587 = vpack.c.b16 %v3013, %v3006
        %v3588 = vpack.c.b16 %v3014, %v3007
        %v3589 = vpack.c.b16 %v3015, %v3008
        %v3590 = vpack.c.b16 %v3016, %v3009
        %v3591 = vpack.c.b16 %v3024, %v3017
        %v3592 = vpack.c.b16 %v3025, %v3018
        %v3593 = vpack.c.b16 %v3026, %v3019
        %v3594 = vpack.c.b16 %v3027, %v3020
        %v3595 = vpack.c.b16 %v3028, %v3021
        %v3596 = vpack.c.b16 %v3029, %v3022
        %v3597 = vpack.c.b16 %v3030, %v3023
        %v3598 = vpack.c.b16 %v3038, %v3031
        %v3599 = vpack.c.b16 %v3039, %v3032
        %v3600 = vpack.c.b16 %v3040, %v3033
        %v3601 = vpack.c.b16 %v3041, %v3034
        %v3602 = vpack.c.b16 %v3042, %v3035
        %v3603 = vpack.c.b16 %v3043, %v3036
        %v3604 = vpack.c.b16 %v3044, %v3037
        %v3605 = vpack.c.b16 %v3052, %v3045
        %v3606 = vpack.c.b16 %v3053, %v3046
        %v3607 = vpack.c.b16 %v3054, %v3047
        %v3608 = vpack.c.b16 %v3055, %v3048
        %v3609 = vpack.c.b16 %v3056, %v3049
        %v3610 = vpack.c.b16 %v3057, %v3050
        %v3611 = vpack.c.b16 %v3058, %v3051
        %v3612 = vpack.c.b16 %v3066, %v3059
        %v3613 = vpack.c.b16 %v3067, %v3060
        %v3614 = vpack.c.b16 %v3068, %v3061
        %v3615 = vpack.c.b16 %v3069, %v3062
        %v3616 = vpack.c.b16 %v3070, %v3063
        %v3617 = vpack.c.b16 %v3071, %v3064
        %v3618 = vpack.c.b16 %v3072, %v3065
        %v3619 = vpack.c.b16 %v3080, %v3073
        %v3620 = vpack.c.b16 %v3081, %v3074
        %v3621 = vpack.c.b16 %v3082, %v3075
        %v3622 = vpack.c.b16 %v3083, %v3076
        %v3623 = vpack.c.b16 %v3084, %v3077
        %v3624 = vpack.c.b16 %v3085, %v3078
        %v3625 = vpack.c.b16 %v3086, %v3079
        %v3626 = vpack.c.b16 %v3094, %v3087
        %v3627 = vpack.c.b16 %v3095, %v3088
        %v3628 = vpack.c.b16 %v3096, %v3089
        %v3629 = vpack.c.b16 %v3097, %v3090
        %v3630 = vpack.c.b16 %v3098, %v3091
        %v3631 = vpack.c.b16 %v3099, %v3092
        %v3632 = vpack.c.b16 %v3100, %v3093
        %v3633 = vpack.c.b16 %v3108, %v3101
        %v3634 = vpack.c.b16 %v3109, %v3102
        %v3635 = vpack.c.b16 %v3110, %v3103
        %v3636 = vpack.c.b16 %v3111, %v3104
        %v3637 = vpack.c.b16 %v3112, %v3105
        %v3638 = vpack.c.b16 %v3113, %v3106
        %v3639 = vpack.c.b16 %v3114, %v3107
        %v3640 = vpack.c.b16 %v3122, %v3115
        %v3641 = vpack.c.b16 %v3123, %v3116
        %v3642 = vpack.c.b16 %v3124, %v3117
        %v3643 = vpack.c.b16 %v3125, %v3118
        %v3644 = vpack.c.b16 %v3126, %v3119
        %v3645 = vpack.c.b16 %v3127, %v3120
        %v3646 = vpack.c.b16 %v3128, %v3121
        %v3647 = vpack.c.b16 %v3136, %v3129
        %v3648 = vpack.c.b16 %v3137, %v3130
        %v3649 = vpack.c.b16 %v3138, %v3131
        %v3650 = vpack.c.b16 %v3139, %v3132
        %v3651 = vpack.c.b16 %v3140, %v3133
        %v3652 = vpack.c.b16 %v3141, %v3134
        %v3653 = vpack.c.b16 %v3142, %v3135
        %v3654 = vpack.c.b16 %v3150, %v3143
        %v3655 = vpack.c.b16 %v3151, %v3144
        %v3656 = vpack.c.b16 %v3152, %v3145
        %v3657 = vpack.c.b16 %v3153, %v3146
        %v3658 = vpack.c.b16 %v3154, %v3147
        %v3659 = vpack.c.b16 %v3155, %v3148
        %v3660 = vpack.c.b16 %v3156, %v3149
        %v3661 = vpack.c.b16 %v3164, %v3157
        %v3662 = vpack.c.b16 %v3165, %v3158
        %v3663 = vpack.c.b16 %v3166, %v3159
        %v3664 = vpack.c.b16 %v3167, %v3160
        %v3665 = vpack.c.b16 %v3168, %v3161
        %v3666 = vpack.c.b16 %v3169, %v3162
        %v3667 = vpack.c.b16 %v3170, %v3163
        %v3668 = vpack.c.b16 %v3178, %v3171
        %v3669 = vpack.c.b16 %v3179, %v3172
        %v3670 = vpack.c.b16 %v3180, %v3173
        %v3671 = vpack.c.b16 %v3181, %v3174
        %v3672 = vpack.c.b16 %v3182, %v3175
        %v3673 = vpack.c.b16 %v3183, %v3176
        %v3674 = vpack.c.b16 %v3184, %v3177
        %v3675 = vpack.c.b16 %v3192, %v3185
        %v3676 = vpack.c.b16 %v3193, %v3186
        %v3677 = vpack.c.b16 %v3194, %v3187
        %v3678 = vpack.c.b16 %v3195, %v3188
        %v3679 = vpack.c.b16 %v3196, %v3189
        %v3680 = vpack.c.b16 %v3197, %v3190
        %v3681 = vpack.c.b16 %v3198, %v3191
        %v3682 = vpack.c.b16 %v3206, %v3199
        %v3683 = vpack.c.b16 %v3207, %v3200
        %v3684 = vpack.c.b16 %v3208, %v3201
        %v3685 = vpack.c.b16 %v3209, %v3202
        %v3686 = vpack.c.b16 %v3210, %v3203
        %v3687 = vpack.c.b16 %v3211, %v3204
        %v3688 = vpack.c.b16 %v3212, %v3205
        %v3689 = vpack.c.b16 %v3220, %v3213
        %v3690 = vpack.c.b16 %v3221, %v3214
        %v3691 = vpack.c.b16 %v3222, %v3215
        %v3692 = vpack.c.b16 %v3223, %v3216
        %v3693 = vpack.c.b16 %v3224, %v3217
        %v3694 = vpack.c.b16 %v3225, %v3218
        %v3695 = vpack.c.b16 %v3226, %v3219
        %v3696 = vpack.c.b16 %v3234, %v3227
        %v3697 = vpack.c.b16 %v3235, %v3228
        %v3698 = vpack.c.b16 %v3236, %v3229
        %v3699 = vpack.c.b16 %v3237, %v3230
        %v3700 = vpack.c.b16 %v3238, %v3231
        %v3701 = vpack.c.b16 %v3239, %v3232
        %v3702 = vpack.c.b16 %v3240, %v3233
        %v3703 = vpack.c.b16 %v3248, %v3241
        %v3704 = vpack.c.b16 %v3249, %v3242
        %v3705 = vpack.c.b16 %v3250, %v3243
        %v3706 = vpack.c.b16 %v3251, %v3244
        %v3707 = vpack.c.b16 %v3252, %v3245
        %v3708 = vpack.c.b16 %v3253, %v3246
        %v3709 = vpack.c.b16 %v3254, %v3247
        %v3710 = vpack.c.b16 %v3262, %v3255
        %v3711 = vpack.c.b16 %v3263, %v3256
        %v3712 = vpack.c.b16 %v3264, %v3257
        %v3713 = vpack.c.b16 %v3265, %v3258
        %v3714 = vpack.c.b16 %v3266, %v3259
        %v3715 = vpack.c.b16 %v3267, %v3260
        %v3716 = vpack.c.b16 %v3268, %v3261
        %v3717 = vpack.c.b16 %v3276, %v3269
        %v3718 = vpack.c.b16 %v3277, %v3270
        %v3719 = vpack.c.b16 %v3278, %v3271
        %v3720 = vpack.c.b16 %v3279, %v3272
        %v3721 = vpack.c.b16 %v3280, %v3273
        %v3722 = vpack.c.b16 %v3281, %v3274
        %v3723 = vpack.c.b16 %v3282, %v3275
        %v3724 = vpack.c.b16 %v3290, %v3283
        %v3725 = vpack.c.b16 %v3291, %v3284
        %v3726 = vpack.c.b16 %v3292, %v3285
        %v3727 = vpack.c.b16 %v3293, %v3286
        %v3728 = vpack.c.b16 %v3294, %v3287
        %v3729 = vpack.c.b16 %v3295, %v3288
        %v3730 = vpack.c.b16 %v3296, %v3289
        %v3731 = vpack.c.b16 %v3304, %v3297
        %v3732 = vpack.c.b16 %v3305, %v3298
        %v3733 = vpack.c.b16 %v3306, %v3299
        %v3734 = vpack.c.b16 %v3307, %v3300
        %v3735 = vpack.c.b16 %v3308, %v3301
        %v3736 = vpack.c.b16 %v3309, %v3302
        %v3737 = vpack.c.b16 %v3310, %v3303
        %v3738 = vpack.c.b16 %v3318, %v3311
        %v3739 = vpack.c.b16 %v3319, %v3312
        %v3740 = vpack.c.b16 %v3320, %v3313
        %v3741 = vpack.c.b16 %v3321, %v3314
        %v3742 = vpack.c.b16 %v3322, %v3315
        %v3743 = vpack.c.b16 %v3323, %v3316
        %v3744 = vpack.c.b16 %v3324, %v3317
        %v3745 = vpack.c.b16 %v3332, %v3325
        %v3746 = vpack.c.b16 %v3333, %v3326
        %v3747 = vpack.c.b16 %v3334, %v3327
        %v3748 = vpack.c.b16 %v3335, %v3328
        %v3749 = vpack.c.b16 %v3336, %v3329
        %v3750 = vpack.c.b16 %v3337, %v3330
        %v3751 = vpack.c.b16 %v3338, %v3331
        %v3752 = vpack.c.b16 %v3346, %v3339
        %v3753 = vpack.c.b16 %v3347, %v3340
        %v3754 = vpack.c.b16 %v3348, %v3341
        %v3755 = vpack.c.b16 %v3349, %v3342
        %v3756 = vpack.c.b16 %v3350, %v3343
        %v3757 = vpack.c.b16 %v3351, %v3344
        %v3758 = vpack.c.b16 %v3352, %v3345
        %v3759 = vpack.c.b16 %v3360, %v3353
        %v3760 = vpack.c.b16 %v3361, %v3354
        %v3761 = vpack.c.b16 %v3362, %v3355
        %v3762 = vpack.c.b16 %v3363, %v3356
        %v3763 = vpack.c.b16 %v3364, %v3357
        %v3764 = vpack.c.b16 %v3365, %v3358
        %v3765 = vpack.c.b16 %v3366, %v3359
        %v3766 = vpack.c.b16 %v3374, %v3367
        %v3767 = vpack.c.b16 %v3375, %v3368
        %v3768 = vpack.c.b16 %v3376, %v3369
        %v3769 = vpack.c.b16 %v3377, %v3370
        %v3770 = vpack.c.b16 %v3378, %v3371
        %v3771 = vpack.c.b16 %v3379, %v3372
        %v3772 = vpack.c.b16 %v3380, %v3373
        %v3773 = vpack.c.b16 %v3388, %v3381
        %v3774 = vpack.c.b16 %v3389, %v3382
        %v3775 = vpack.c.b16 %v3390, %v3383
        %v3776 = vpack.c.b16 %v3391, %v3384
        %v3777 = vpack.c.b16 %v3392, %v3385
        %v3778 = vpack.c.b16 %v3393, %v3386
        %v3779 = vpack.c.b16 %v3394, %v3387
        %v3780 = vpack.c.b16 %v3402, %v3395
        %v3781 = vpack.c.b16 %v3403, %v3396
        %v3782 = vpack.c.b16 %v3404, %v3397
        %v3783 = vpack.c.b16 %v3405, %v3398
        %v3784 = vpack.c.b16 %v3406, %v3399
        %v3785 = vpack.c.b16 %v3407, %v3400
        %v3786 = vpack.c.b16 %v3408, %v3401
        %v3787 = vpack.c.b16 %v3416, %v3409
        %v3788 = vpack.c.b16 %v3417, %v3410
        %v3789 = vpack.c.b16 %v3418, %v3411
        %v3790 = vpack.c.b16 %v3419, %v3412
        %v3791 = vpack.c.b16 %v3420, %v3413
        %v3792 = vpack.c.b16 %v3421, %v3414
        %v3793 = vpack.c.b16 %v3422, %v3415
        %v3794 = vpack.c.b16 %v3430, %v3423
        %v3795 = vpack.c.b16 %v3431, %v3424
        %v3796 = vpack.c.b16 %v3432, %v3425
        %v3797 = vpack.c.b16 %v3433, %v3426
        %v3798 = vpack.c.b16 %v3434, %v3427
        %v3799 = vpack.c.b16 %v3435, %v3428
        %v3800 = vpack.c.b16 %v3436, %v3429
        %v3801 = vpack.c.b16 %v3444, %v3437
        %v3802 = vpack.c.b16 %v3445, %v3438
        %v3803 = vpack.c.b16 %v3446, %v3439
        %v3804 = vpack.c.b16 %v3447, %v3440
        %v3805 = vpack.c.b16 %v3448, %v3441
        %v3806 = vpack.c.b16 %v3449, %v3442
        %v3807 = vpack.c.b16 %v3450, %v3443
        %v3808 = vpack.c.b16 %v3458, %v3451
        %v3809 = vpack.c.b16 %v3459, %v3452
        %v3810 = vpack.c.b16 %v3460, %v3453
        %v3811 = vpack.c.b16 %v3461, %v3454
        %v3812 = vpack.c.b16 %v3462, %v3455
        %v3813 = vpack.c.b16 %v3463, %v3456
        %v3814 = vpack.c.b16 %v3464, %v3457
        %v3815 = vpack.c.b16 %v3472, %v3465
        %v3816 = vpack.c.b16 %v3473, %v3466
        %v3817 = vpack.c.b16 %v3474, %v3467
        %v3818 = vpack.c.b16 %v3475, %v3468
        %v3819 = vpack.c.b16 %v3476, %v3469
        %v3820 = vpack.c.b16 %v3477, %v3470
        %v3821 = vpack.c.b16 %v3478, %v3471
        %v3822 = vpack.c.b16 %v3486, %v3479
        %v3823 = vpack.c.b16 %v3487, %v3480
        %v3824 = vpack.c.b16 %v3488, %v3481
        %v3825 = vpack.c.b16 %v3489, %v3482
        %v3826 = vpack.c.b16 %v3490, %v3483
        %v3827 = vpack.c.b16 %v3491, %v3484
        %v3828 = vpack.c.b16 %v3492, %v3485
        %4165 = vmatprep.subr.bf16.mxu0 %v3543
        %4166 = vmatpush1.bf16.msra.mxu0 %v3542
        %4167 = vmatprep.subr.bf16.mxu0 %v3536
        %4168 = vmatpush1.bf16.msra.mxu0 %v3535
        %4169 = vmatprep.subr.bf16.mxu0 %v3529
        %4170 = vmatpush1.bf16.msra.mxu0 %v3528
        %4171 = vmatprep.subr.bf16.mxu0 %v3522
        %4172 = vmatpush1.bf16.msra.mxu0 %v3521
        %4173 = vmatprep.subr.bf16.mxu0 %v3515
        %4174 = vmatpush1.bf16.msra.mxu0 %v3514
        %4175 = vmatprep.subr.bf16.mxu0 %v3508
        %4176 = vmatpush1.bf16.msra.mxu0 %v3507
        %4177 = vmatprep.subr.bf16.mxu0 %v3501
        %4178 = vmatpush1.bf16.msra.mxu0 %v3500
        %4179 = vmatprep.subr.bf16.mxu0 %v3494
        %4180 = vmatpush1.bf16.msra.mxu0 %v3493
        %4181 = vmatprep.subr.bf16.mxu0 %v3599
        %4182 = vmatpush2.bf16.msra.mxu0 %v3598
        %4183 = vmatprep.subr.bf16.mxu0 %v3592
        %4184 = vmatpush2.bf16.msra.mxu0 %v3591
        %4185 = vmatprep.subr.bf16.mxu0 %v3585
        %4186 = vmatpush2.bf16.msra.mxu0 %v3584
        %4187 = vmatprep.subr.bf16.mxu0 %v3578
        %4188 = vmatpush2.bf16.msra.mxu0 %v3577
        %4189 = vmatprep.subr.bf16.mxu0 %v3571
        %4190 = vmatpush2.bf16.msra.mxu0 %v3570
        %4191 = vmatprep.subr.bf16.mxu0 %v3564
        %4192 = vmatpush2.bf16.msra.mxu0 %v3563
        %4193 = vmatprep.subr.bf16.mxu0 %v3557
        %4194 = vmatpush2.bf16.msra.mxu0 %v3556
        %4195 = vmatprep.subr.bf16.mxu0 %v3550
        %4196 = vmatpush2.bf16.msra.mxu0 %v3549
        %4197 = vmatprep.mubr.bf16.mxu0 %v1980
        %4198 = vmatmul.mubr.bf16.gmra.mxu0 %v1979
        %v4199 = vpop.f32.mrf.mxu0
        %v4200 = vadd.f32 %v2412, %v4199
        %v4201 = vpop.f32.mrf.mxu0
        %v4202 = vadd.f32 %v2416, %v4201
        %v4203 = vpop.f32.mrf.mxu0
        %v4204 = vpop.f32.mrf.mxu0
        %4205 = vdwg.mxu0
        %4206 = vmatprep.subr.bf16.mxu0 %v3655
        %4207 = vmatpush1.bf16.msra.mxu0 %v3654
        %4208 = vmatprep.subr.bf16.mxu0 %v3648
        %4209 = vmatpush1.bf16.msra.mxu0 %v3647
        %4210 = vmatprep.subr.bf16.mxu0 %v3641
        %4211 = vmatpush1.bf16.msra.mxu0 %v3640
        %4212 = vmatprep.subr.bf16.mxu0 %v3634
        %4213 = vmatpush1.bf16.msra.mxu0 %v3633
        %4214 = vmatprep.subr.bf16.mxu0 %v3627
        %4215 = vmatpush1.bf16.msra.mxu0 %v3626
        %4216 = vmatprep.subr.bf16.mxu0 %v3620
        %4217 = vmatpush1.bf16.msra.mxu0 %v3619
        %4218 = vmatprep.subr.bf16.mxu0 %v3613
        %4219 = vmatpush1.bf16.msra.mxu0 %v3612
        %4220 = vmatprep.subr.bf16.mxu0 %v3606
        %4221 = vmatpush1.bf16.msra.mxu0 %v3605
        %4222 = vmatprep.subr.bf16.mxu0 %v3711
        %4223 = vmatpush2.bf16.msra.mxu0 %v3710
        %4224 = vmatprep.subr.bf16.mxu0 %v3704
        %4225 = vmatpush2.bf16.msra.mxu0 %v3703
        %4226 = vmatprep.subr.bf16.mxu0 %v3697
        %4227 = vmatpush2.bf16.msra.mxu0 %v3696
        %4228 = vmatprep.subr.bf16.mxu0 %v3690
        %4229 = vmatpush2.bf16.msra.mxu0 %v3689
        %4230 = vmatprep.subr.bf16.mxu0 %v3683
        %4231 = vmatpush2.bf16.msra.mxu0 %v3682
        %4232 = vmatprep.subr.bf16.mxu0 %v3676
        %4233 = vmatpush2.bf16.msra.mxu0 %v3675
        %4234 = vmatprep.subr.bf16.mxu0 %v3669
        %4235 = vmatpush2.bf16.msra.mxu0 %v3668
        %4236 = vmatprep.subr.bf16.mxu0 %v3662
        %4237 = vmatpush2.bf16.msra.mxu0 %v3661
        %4238 = vmatprep.mubr.bf16.mxu0 %v1982
        %4239 = vmatmul.mubr.bf16.gmra.mxu0 %v1981
        %v4240 = vpop.f32.mrf.mxu0
        %v4241 = vadd.f32 %v4200, %v4240
        %v4242 = vpop.f32.mrf.mxu0
        %v4243 = vadd.f32 %v4202, %v4242
        %v4244 = vpop.f32.mrf.mxu0
        %v4245 = vpop.f32.mrf.mxu0
        %4246 = vdwg.mxu0
        %4247 = vmatprep.subr.bf16.mxu0 %v3767
        %4248 = vmatpush1.bf16.msra.mxu0 %v3766
        %4249 = vmatprep.subr.bf16.mxu0 %v3760
        %4250 = vmatpush1.bf16.msra.mxu0 %v3759
        %4251 = vmatprep.subr.bf16.mxu0 %v3753
        %4252 = vmatpush1.bf16.msra.mxu0 %v3752
        %4253 = vmatprep.subr.bf16.mxu0 %v3746
        %4254 = vmatpush1.bf16.msra.mxu0 %v3745
        %4255 = vmatprep.subr.bf16.mxu0 %v3739
        %4256 = vmatpush1.bf16.msra.mxu0 %v3738
        %4257 = vmatprep.subr.bf16.mxu0 %v3732
        %4258 = vmatpush1.bf16.msra.mxu0 %v3731
        %4259 = vmatprep.subr.bf16.mxu0 %v3725
        %4260 = vmatpush1.bf16.msra.mxu0 %v3724
        %4261 = vmatprep.subr.bf16.mxu0 %v3718
        %4262 = vmatpush1.bf16.msra.mxu0 %v3717
        %4263 = vmatprep.subr.bf16.mxu0 %v3823
        %4264 = vmatpush2.bf16.msra.mxu0 %v3822
        %4265 = vmatprep.subr.bf16.mxu0 %v3816
        %4266 = vmatpush2.bf16.msra.mxu0 %v3815
        %4267 = vmatprep.subr.bf16.mxu0 %v3809
        %4268 = vmatpush2.bf16.msra.mxu0 %v3808
        %4269 = vmatprep.subr.bf16.mxu0 %v3802
        %4270 = vmatpush2.bf16.msra.mxu0 %v3801
        %4271 = vmatprep.subr.bf16.mxu0 %v3795
        %4272 = vmatpush2.bf16.msra.mxu0 %v3794
        %4273 = vmatprep.subr.bf16.mxu0 %v3788
        %4274 = vmatpush2.bf16.msra.mxu0 %v3787
        %4275 = vmatprep.subr.bf16.mxu0 %v3781
        %4276 = vmatpush2.bf16.msra.mxu0 %v3780
        %4277 = vmatprep.subr.bf16.mxu0 %v3774
        %4278 = vmatpush2.bf16.msra.mxu0 %v3773
        %4279 = vmatprep.mubr.bf16.mxu0 %v1984
        %4280 = vmatmul.mubr.bf16.gmra.mxu0 %v1983
        %v4281 = vpop.f32.mrf.mxu0
        %v4282 = vadd.f32 %v4241, %v4281
        %v4283 = vpop.f32.mrf.mxu0
        %v4284 = vadd.f32 %v4243, %v4283
        %v4285 = vpop.f32.mrf.mxu0
        %v4286 = vpop.f32.mrf.mxu0
        %4287 = vdwg.mxu0
        %4288 = vmatprep.subr.bf16.mxu0 %v3545
        %4289 = vmatpush1.bf16.msra.mxu0 %v3544
        %4290 = vmatprep.subr.bf16.mxu0 %v3538
        %4291 = vmatpush1.bf16.msra.mxu0 %v3537
        %4292 = vmatprep.subr.bf16.mxu0 %v3531
        %4293 = vmatpush1.bf16.msra.mxu0 %v3530
        %4294 = vmatprep.subr.bf16.mxu0 %v3524
        %4295 = vmatpush1.bf16.msra.mxu0 %v3523
        %4296 = vmatprep.subr.bf16.mxu0 %v3517
        %4297 = vmatpush1.bf16.msra.mxu0 %v3516
        %4298 = vmatprep.subr.bf16.mxu0 %v3510
        %4299 = vmatpush1.bf16.msra.mxu0 %v3509
        %4300 = vmatprep.subr.bf16.mxu0 %v3503
        %4301 = vmatpush1.bf16.msra.mxu0 %v3502
        %4302 = vmatprep.subr.bf16.mxu0 %v3496
        %4303 = vmatpush1.bf16.msra.mxu0 %v3495
        %4304 = vmatprep.subr.bf16.mxu0 %v3601
        %4305 = vmatpush2.bf16.msra.mxu0 %v3600
        %4306 = vmatprep.subr.bf16.mxu0 %v3594
        %4307 = vmatpush2.bf16.msra.mxu0 %v3593
        %4308 = vmatprep.subr.bf16.mxu0 %v3587
        %4309 = vmatpush2.bf16.msra.mxu0 %v3586
        %4310 = vmatprep.subr.bf16.mxu0 %v3580
        %4311 = vmatpush2.bf16.msra.mxu0 %v3579
        %4312 = vmatprep.subr.bf16.mxu0 %v3573
        %4313 = vmatpush2.bf16.msra.mxu0 %v3572
        %4314 = vmatprep.subr.bf16.mxu0 %v3566
        %4315 = vmatpush2.bf16.msra.mxu0 %v3565
        %4316 = vmatprep.subr.bf16.mxu0 %v3559
        %4317 = vmatpush2.bf16.msra.mxu0 %v3558
        %4318 = vmatprep.subr.bf16.mxu0 %v3552
        %4319 = vmatpush2.bf16.msra.mxu0 %v3551
        %4320 = vmatprep.mubr.bf16.mxu0 %v1980
        %4321 = vmatmul.mubr.bf16.gmra.mxu0 %v1979
        %v4322 = vpop.f32.mrf.mxu0
        %v4323 = vadd.f32 %v2420, %v4322
        %v4324 = vpop.f32.mrf.mxu0
        %v4325 = vadd.f32 %v2424, %v4324
        %v4326 = vpop.f32.mrf.mxu0
        %v4327 = vpop.f32.mrf.mxu0
        %4328 = vdwg.mxu0
        %4329 = vmatprep.subr.bf16.mxu0 %v3657
        %4330 = vmatpush1.bf16.msra.mxu0 %v3656
        %4331 = vmatprep.subr.bf16.mxu0 %v3650
        %4332 = vmatpush1.bf16.msra.mxu0 %v3649
        %4333 = vmatprep.subr.bf16.mxu0 %v3643
        %4334 = vmatpush1.bf16.msra.mxu0 %v3642
        %4335 = vmatprep.subr.bf16.mxu0 %v3636
        %4336 = vmatpush1.bf16.msra.mxu0 %v3635
        %4337 = vmatprep.subr.bf16.mxu0 %v3629
        %4338 = vmatpush1.bf16.msra.mxu0 %v3628
        %4339 = vmatprep.subr.bf16.mxu0 %v3622
        %4340 = vmatpush1.bf16.msra.mxu0 %v3621
        %4341 = vmatprep.subr.bf16.mxu0 %v3615
        %4342 = vmatpush1.bf16.msra.mxu0 %v3614
        %4343 = vmatprep.subr.bf16.mxu0 %v3608
        %4344 = vmatpush1.bf16.msra.mxu0 %v3607
        %4345 = vmatprep.subr.bf16.mxu0 %v3713
        %4346 = vmatpush2.bf16.msra.mxu0 %v3712
        %4347 = vmatprep.subr.bf16.mxu0 %v3706
        %4348 = vmatpush2.bf16.msra.mxu0 %v3705
        %4349 = vmatprep.subr.bf16.mxu0 %v3699
        %4350 = vmatpush2.bf16.msra.mxu0 %v3698
        %4351 = vmatprep.subr.bf16.mxu0 %v3692
        %4352 = vmatpush2.bf16.msra.mxu0 %v3691
        %4353 = vmatprep.subr.bf16.mxu0 %v3685
        %4354 = vmatpush2.bf16.msra.mxu0 %v3684
        %4355 = vmatprep.subr.bf16.mxu0 %v3678
        %4356 = vmatpush2.bf16.msra.mxu0 %v3677
        %4357 = vmatprep.subr.bf16.mxu0 %v3671
        %4358 = vmatpush2.bf16.msra.mxu0 %v3670
        %4359 = vmatprep.subr.bf16.mxu0 %v3664
        %4360 = vmatpush2.bf16.msra.mxu0 %v3663
        %4361 = vmatprep.mubr.bf16.mxu0 %v1982
        %4362 = vmatmul.mubr.bf16.gmra.mxu0 %v1981
        %v4363 = vpop.f32.mrf.mxu0
        %v4364 = vadd.f32 %v4323, %v4363
        %v4365 = vpop.f32.mrf.mxu0
        %v4366 = vadd.f32 %v4325, %v4365
        %v4367 = vpop.f32.mrf.mxu0
        %v4368 = vpop.f32.mrf.mxu0
        %4369 = vdwg.mxu0
        %4370 = vmatprep.subr.bf16.mxu0 %v3769
        %4371 = vmatpush1.bf16.msra.mxu0 %v3768
        %4372 = vmatprep.subr.bf16.mxu0 %v3762
        %4373 = vmatpush1.bf16.msra.mxu0 %v3761
        %4374 = vmatprep.subr.bf16.mxu0 %v3755
        %4375 = vmatpush1.bf16.msra.mxu0 %v3754
        %4376 = vmatprep.subr.bf16.mxu0 %v3748
        %4377 = vmatpush1.bf16.msra.mxu0 %v3747
        %4378 = vmatprep.subr.bf16.mxu0 %v3741
        %4379 = vmatpush1.bf16.msra.mxu0 %v3740
        %4380 = vmatprep.subr.bf16.mxu0 %v3734
        %4381 = vmatpush1.bf16.msra.mxu0 %v3733
        %4382 = vmatprep.subr.bf16.mxu0 %v3727
        %4383 = vmatpush1.bf16.msra.mxu0 %v3726
        %4384 = vmatprep.subr.bf16.mxu0 %v3720
        %4385 = vmatpush1.bf16.msra.mxu0 %v3719
        %4386 = vmatprep.subr.bf16.mxu0 %v3825
        %4387 = vmatpush2.bf16.msra.mxu0 %v3824
        %4388 = vmatprep.subr.bf16.mxu0 %v3818
        %4389 = vmatpush2.bf16.msra.mxu0 %v3817
        %4390 = vmatprep.subr.bf16.mxu0 %v3811
        %4391 = vmatpush2.bf16.msra.mxu0 %v3810
        %4392 = vmatprep.subr.bf16.mxu0 %v3804
        %4393 = vmatpush2.bf16.msra.mxu0 %v3803
        %4394 = vmatprep.subr.bf16.mxu0 %v3797
        %4395 = vmatpush2.bf16.msra.mxu0 %v3796
        %4396 = vmatprep.subr.bf16.mxu0 %v3790
        %4397 = vmatpush2.bf16.msra.mxu0 %v3789
        %4398 = vmatprep.subr.bf16.mxu0 %v3783
        %4399 = vmatpush2.bf16.msra.mxu0 %v3782
        %4400 = vmatprep.subr.bf16.mxu0 %v3776
        %4401 = vmatpush2.bf16.msra.mxu0 %v3775
        %4402 = vmatprep.mubr.bf16.mxu0 %v1984
        %4403 = vmatmul.mubr.bf16.gmra.mxu0 %v1983
        %v4404 = vpop.f32.mrf.mxu0
        %v4405 = vadd.f32 %v4364, %v4404
        %v4406 = vpop.f32.mrf.mxu0
        %v4407 = vadd.f32 %v4366, %v4406
        %v4408 = vpop.f32.mrf.mxu0
        %v4409 = vpop.f32.mrf.mxu0
        %4410 = vdwg.mxu0
        %4411 = vmatprep.subr.bf16.mxu0 %v3547
        %4412 = vmatpush1.bf16.msra.mxu0 %v3546
        %4413 = vmatprep.subr.bf16.mxu0 %v3540
        %4414 = vmatpush1.bf16.msra.mxu0 %v3539
        %4415 = vmatprep.subr.bf16.mxu0 %v3533
        %4416 = vmatpush1.bf16.msra.mxu0 %v3532
        %4417 = vmatprep.subr.bf16.mxu0 %v3526
        %4418 = vmatpush1.bf16.msra.mxu0 %v3525
        %4419 = vmatprep.subr.bf16.mxu0 %v3519
        %4420 = vmatpush1.bf16.msra.mxu0 %v3518
        %4421 = vmatprep.subr.bf16.mxu0 %v3512
        %4422 = vmatpush1.bf16.msra.mxu0 %v3511
        %4423 = vmatprep.subr.bf16.mxu0 %v3505
        %4424 = vmatpush1.bf16.msra.mxu0 %v3504
        %4425 = vmatprep.subr.bf16.mxu0 %v3498
        %4426 = vmatpush1.bf16.msra.mxu0 %v3497
        %4427 = vmatprep.subr.bf16.mxu0 %v3603
        %4428 = vmatpush2.bf16.msra.mxu0 %v3602
        %4429 = vmatprep.subr.bf16.mxu0 %v3596
        %4430 = vmatpush2.bf16.msra.mxu0 %v3595
        %4431 = vmatprep.subr.bf16.mxu0 %v3589
        %4432 = vmatpush2.bf16.msra.mxu0 %v3588
        %4433 = vmatprep.subr.bf16.mxu0 %v3582
        %4434 = vmatpush2.bf16.msra.mxu0 %v3581
        %4435 = vmatprep.subr.bf16.mxu0 %v3575
        %4436 = vmatpush2.bf16.msra.mxu0 %v3574
        %4437 = vmatprep.subr.bf16.mxu0 %v3568
        %4438 = vmatpush2.bf16.msra.mxu0 %v3567
        %4439 = vmatprep.subr.bf16.mxu0 %v3561
        %4440 = vmatpush2.bf16.msra.mxu0 %v3560
        %4441 = vmatprep.subr.bf16.mxu0 %v3554
        %4442 = vmatpush2.bf16.msra.mxu0 %v3553
        %4443 = vmatprep.mubr.bf16.mxu0 %v1980
        %4444 = vmatmul.mubr.bf16.gmra.mxu0 %v1979
        %v4445 = vpop.f32.mrf.mxu0
        %v4446 = vadd.f32 %v2428, %v4445
        %v4447 = vpop.f32.mrf.mxu0
        %v4448 = vadd.f32 %v2432, %v4447
        %v4449 = vpop.f32.mrf.mxu0
        %v4450 = vpop.f32.mrf.mxu0
        %4451 = vdwg.mxu0
        %4452 = vmatprep.subr.bf16.mxu0 %v3659
        %4453 = vmatpush1.bf16.msra.mxu0 %v3658
        %4454 = vmatprep.subr.bf16.mxu0 %v3652
        %4455 = vmatpush1.bf16.msra.mxu0 %v3651
        %4456 = vmatprep.subr.bf16.mxu0 %v3645
        %4457 = vmatpush1.bf16.msra.mxu0 %v3644
        %4458 = vmatprep.subr.bf16.mxu0 %v3638
        %4459 = vmatpush1.bf16.msra.mxu0 %v3637
        %4460 = vmatprep.subr.bf16.mxu0 %v3631
        %4461 = vmatpush1.bf16.msra.mxu0 %v3630
        %4462 = vmatprep.subr.bf16.mxu0 %v3624
        %4463 = vmatpush1.bf16.msra.mxu0 %v3623
        %4464 = vmatprep.subr.bf16.mxu0 %v3617
        %4465 = vmatpush1.bf16.msra.mxu0 %v3616
        %4466 = vmatprep.subr.bf16.mxu0 %v3610
        %4467 = vmatpush1.bf16.msra.mxu0 %v3609
        %4468 = vmatprep.subr.bf16.mxu0 %v3715
        %4469 = vmatpush2.bf16.msra.mxu0 %v3714
        %4470 = vmatprep.subr.bf16.mxu0 %v3708
        %4471 = vmatpush2.bf16.msra.mxu0 %v3707
        %4472 = vmatprep.subr.bf16.mxu0 %v3701
        %4473 = vmatpush2.bf16.msra.mxu0 %v3700
        %4474 = vmatprep.subr.bf16.mxu0 %v3694
        %4475 = vmatpush2.bf16.msra.mxu0 %v3693
        %4476 = vmatprep.subr.bf16.mxu0 %v3687
        %4477 = vmatpush2.bf16.msra.mxu0 %v3686
        %4478 = vmatprep.subr.bf16.mxu0 %v3680
        %4479 = vmatpush2.bf16.msra.mxu0 %v3679
        %4480 = vmatprep.subr.bf16.mxu0 %v3673
        %4481 = vmatpush2.bf16.msra.mxu0 %v3672
        %4482 = vmatprep.subr.bf16.mxu0 %v3666
        %4483 = vmatpush2.bf16.msra.mxu0 %v3665
        %4484 = vmatprep.mubr.bf16.mxu0 %v1982
        %4485 = vmatmul.mubr.bf16.gmra.mxu0 %v1981
        %v4486 = vpop.f32.mrf.mxu0
        %v4487 = vadd.f32 %v4446, %v4486
        %v4488 = vpop.f32.mrf.mxu0
        %v4489 = vadd.f32 %v4448, %v4488
        %v4490 = vpop.f32.mrf.mxu0
        %v4491 = vpop.f32.mrf.mxu0
        %4492 = vdwg.mxu0
        %4493 = vmatprep.subr.bf16.mxu0 %v3771
        %4494 = vmatpush1.bf16.msra.mxu0 %v3770
        %4495 = vmatprep.subr.bf16.mxu0 %v3764
        %4496 = vmatpush1.bf16.msra.mxu0 %v3763
        %4497 = vmatprep.subr.bf16.mxu0 %v3757
        %4498 = vmatpush1.bf16.msra.mxu0 %v3756
        %4499 = vmatprep.subr.bf16.mxu0 %v3750
        %4500 = vmatpush1.bf16.msra.mxu0 %v3749
        %4501 = vmatprep.subr.bf16.mxu0 %v3743
        %4502 = vmatpush1.bf16.msra.mxu0 %v3742
        %4503 = vmatprep.subr.bf16.mxu0 %v3736
        %4504 = vmatpush1.bf16.msra.mxu0 %v3735
        %4505 = vmatprep.subr.bf16.mxu0 %v3729
        %4506 = vmatpush1.bf16.msra.mxu0 %v3728
        %4507 = vmatprep.subr.bf16.mxu0 %v3722
        %4508 = vmatpush1.bf16.msra.mxu0 %v3721
        %4509 = vmatprep.subr.bf16.mxu0 %v3827
        %4510 = vmatpush2.bf16.msra.mxu0 %v3826
        %4511 = vmatprep.subr.bf16.mxu0 %v3820
        %4512 = vmatpush2.bf16.msra.mxu0 %v3819
        %4513 = vmatprep.subr.bf16.mxu0 %v3813
        %4514 = vmatpush2.bf16.msra.mxu0 %v3812
        %4515 = vmatprep.subr.bf16.mxu0 %v3806
        %4516 = vmatpush2.bf16.msra.mxu0 %v3805
        %4517 = vmatprep.subr.bf16.mxu0 %v3799
        %4518 = vmatpush2.bf16.msra.mxu0 %v3798
        %4519 = vmatprep.subr.bf16.mxu0 %v3792
        %4520 = vmatpush2.bf16.msra.mxu0 %v3791
        %4521 = vmatprep.subr.bf16.mxu0 %v3785
        %4522 = vmatpush2.bf16.msra.mxu0 %v3784
        %4523 = vmatprep.subr.bf16.mxu0 %v3778
        %4524 = vmatpush2.bf16.msra.mxu0 %v3777
        %4525 = vmatprep.mubr.bf16.mxu0 %v1984
        %4526 = vmatmul.mubr.bf16.gmra.mxu0 %v1983
        %v4527 = vpop.f32.mrf.mxu0
        %v4528 = vadd.f32 %v4487, %v4527
        %v4529 = vpop.f32.mrf.mxu0
        %v4530 = vadd.f32 %v4489, %v4529
        %v4531 = vpop.f32.mrf.mxu0
        %v4532 = vpop.f32.mrf.mxu0
        %4533 = vdwg.mxu0
        %4534 = vmatprep.subr.bf16.mxu0 0
        %4535 = vmatpush1.bf16.msra.mxu0 %v3548
        %4536 = vmatprep.subr.bf16.mxu0 0
        %4537 = vmatpush1.bf16.msra.mxu0 %v3541
        %4538 = vmatprep.subr.bf16.mxu0 0
        %4539 = vmatpush1.bf16.msra.mxu0 %v3534
        %4540 = vmatprep.subr.bf16.mxu0 0
        %4541 = vmatpush1.bf16.msra.mxu0 %v3527
        %4542 = vmatprep.subr.bf16.mxu0 0
        %4543 = vmatpush1.bf16.msra.mxu0 %v3520
        %4544 = vmatprep.subr.bf16.mxu0 0
        %4545 = vmatpush1.bf16.msra.mxu0 %v3513
        %4546 = vmatprep.subr.bf16.mxu0 0
        %4547 = vmatpush1.bf16.msra.mxu0 %v3506
        %4548 = vmatprep.subr.bf16.mxu0 0
        %4549 = vmatpush1.bf16.msra.mxu0 %v3499
        %4550 = vmatprep.subr.bf16.mxu0 0
        %4551 = vmatpush2.bf16.msra.mxu0 %v3604
        %4552 = vmatprep.subr.bf16.mxu0 0
        %4553 = vmatpush2.bf16.msra.mxu0 %v3597
        %4554 = vmatprep.subr.bf16.mxu0 0
        %4555 = vmatpush2.bf16.msra.mxu0 %v3590
        %4556 = vmatprep.subr.bf16.mxu0 0
        %4557 = vmatpush2.bf16.msra.mxu0 %v3583
        %4558 = vmatprep.subr.bf16.mxu0 0
        %4559 = vmatpush2.bf16.msra.mxu0 %v3576
        %4560 = vmatprep.subr.bf16.mxu0 0
        %4561 = vmatpush2.bf16.msra.mxu0 %v3569
        %4562 = vmatprep.subr.bf16.mxu0 0
        %4563 = vmatpush2.bf16.msra.mxu0 %v3562
        %4564 = vmatprep.subr.bf16.mxu0 0
        %4565 = vmatpush2.bf16.msra.mxu0 %v3555
        %4566 = vmatprep.mubr.bf16.mxu0 %v1980
        %4567 = vmatmul.mubr.bf16.gmra.mxu0 %v1979
        %v4568 = vpop.f32.mrf.mxu0
        %v4569 = vadd.f32 %v2436, %v4568
        %v4570 = vpop.f32.mrf.mxu0
        %v4571 = vpop.f32.mrf.mxu0
        %v4572 = vpop.f32.mrf.mxu0
        %4573 = vdwg.mxu0
        %4574 = vmatprep.subr.bf16.mxu0 0
        %4575 = vmatpush1.bf16.msra.mxu0 %v3660
        %4576 = vmatprep.subr.bf16.mxu0 0
        %4577 = vmatpush1.bf16.msra.mxu0 %v3653
        %4578 = vmatprep.subr.bf16.mxu0 0
        %4579 = vmatpush1.bf16.msra.mxu0 %v3646
        %4580 = vmatprep.subr.bf16.mxu0 0
        %4581 = vmatpush1.bf16.msra.mxu0 %v3639
        %4582 = vmatprep.subr.bf16.mxu0 0
        %4583 = vmatpush1.bf16.msra.mxu0 %v3632
        %4584 = vmatprep.subr.bf16.mxu0 0
        %4585 = vmatpush1.bf16.msra.mxu0 %v3625
        %4586 = vmatprep.subr.bf16.mxu0 0
        %4587 = vmatpush1.bf16.msra.mxu0 %v3618
        %4588 = vmatprep.subr.bf16.mxu0 0
        %4589 = vmatpush1.bf16.msra.mxu0 %v3611
        %4590 = vmatprep.subr.bf16.mxu0 0
        %4591 = vmatpush2.bf16.msra.mxu0 %v3716
        %4592 = vmatprep.subr.bf16.mxu0 0
        %4593 = vmatpush2.bf16.msra.mxu0 %v3709
        %4594 = vmatprep.subr.bf16.mxu0 0
        %4595 = vmatpush2.bf16.msra.mxu0 %v3702
        %4596 = vmatprep.subr.bf16.mxu0 0
        %4597 = vmatpush2.bf16.msra.mxu0 %v3695
        %4598 = vmatprep.subr.bf16.mxu0 0
        %4599 = vmatpush2.bf16.msra.mxu0 %v3688
        %4600 = vmatprep.subr.bf16.mxu0 0
        %4601 = vmatpush2.bf16.msra.mxu0 %v3681
        %4602 = vmatprep.subr.bf16.mxu0 0
        %4603 = vmatpush2.bf16.msra.mxu0 %v3674
        %4604 = vmatprep.subr.bf16.mxu0 0
        %4605 = vmatpush2.bf16.msra.mxu0 %v3667
        %4606 = vmatprep.mubr.bf16.mxu0 %v1982
        %4607 = vmatmul.mubr.bf16.gmra.mxu0 %v1981
        %v4608 = vpop.f32.mrf.mxu0
        %v4609 = vadd.f32 %v4569, %v4608
        %v4610 = vpop.f32.mrf.mxu0
        %v4611 = vpop.f32.mrf.mxu0
        %v4612 = vpop.f32.mrf.mxu0
        %4613 = vdwg.mxu0
        %4614 = vmatprep.subr.bf16.mxu0 0
        %4615 = vmatpush1.bf16.msra.mxu0 %v3772
        %4616 = vmatprep.subr.bf16.mxu0 0
        %4617 = vmatpush1.bf16.msra.mxu0 %v3765
        %4618 = vmatprep.subr.bf16.mxu0 0
        %4619 = vmatpush1.bf16.msra.mxu0 %v3758
        %4620 = vmatprep.subr.bf16.mxu0 0
        %4621 = vmatpush1.bf16.msra.mxu0 %v3751
        %4622 = vmatprep.subr.bf16.mxu0 0
        %4623 = vmatpush1.bf16.msra.mxu0 %v3744
        %4624 = vmatprep.subr.bf16.mxu0 0
        %4625 = vmatpush1.bf16.msra.mxu0 %v3737
        %4626 = vmatprep.subr.bf16.mxu0 0
        %4627 = vmatpush1.bf16.msra.mxu0 %v3730
        %4628 = vmatprep.subr.bf16.mxu0 0
        %4629 = vmatpush1.bf16.msra.mxu0 %v3723
        %4630 = vmatprep.subr.bf16.mxu0 0
        %4631 = vmatpush2.bf16.msra.mxu0 %v3828
        %4632 = vmatprep.subr.bf16.mxu0 0
        %4633 = vmatpush2.bf16.msra.mxu0 %v3821
        %4634 = vmatprep.subr.bf16.mxu0 0
        %4635 = vmatpush2.bf16.msra.mxu0 %v3814
        %4636 = vmatprep.subr.bf16.mxu0 0
        %4637 = vmatpush2.bf16.msra.mxu0 %v3807
        %4638 = vmatprep.subr.bf16.mxu0 0
        %4639 = vmatpush2.bf16.msra.mxu0 %v3800
        %4640 = vmatprep.subr.bf16.mxu0 0
        %4641 = vmatpush2.bf16.msra.mxu0 %v3793
        %4642 = vmatprep.subr.bf16.mxu0 0
        %4643 = vmatpush2.bf16.msra.mxu0 %v3786
        %4644 = vmatprep.subr.bf16.mxu0 0
        %4645 = vmatpush2.bf16.msra.mxu0 %v3779
        %4646 = vmatprep.mubr.bf16.mxu0 %v1984
        %4647 = vmatmul.mubr.bf16.gmra.mxu0 %v1983
        %v4648 = vpop.f32.mrf.mxu0
        %v4649 = vadd.f32 %v4609, %v4648
        %v4650 = vpop.f32.mrf.mxu0
        %v4651 = vpop.f32.mrf.mxu0
        %v4652 = vpop.f32.mrf.mxu0
        %4653 = vdwg.mxu0
        %v4654 = vsub.f32 0.0, %v4282
        %v4655 = vsub.f32 0.0, %v4284
        %v4656 = vsub.f32 0.0, %v4405
        %v4657 = vsub.f32 0.0, %v4407
        %v4658 = vsub.f32 0.0, %v4528
        %v4659 = vsub.f32 0.0, %v4530
        %v4660 = vsub.f32 0.0, %v4649
        %v4661 = vmul.f32 %v4654, 1.442695
        %v4662 = vpow.pop %v4661
        %v4663 = vmul.f32 %v4655, 1.442695
        %v4664 = vpow.pop %v4663
        %v4665 = vmul.f32 %v4656, 1.442695
        %v4666 = vpow.pop %v4665
        %v4667 = vmul.f32 %v4657, 1.442695
        %v4668 = vpow.pop %v4667
        %v4669 = vmul.f32 %v4658, 1.442695
        %v4670 = vpow.pop %v4669
        %v4671 = vmul.f32 %v4659, 1.442695
        %v4672 = vpow.pop %v4671
        %v4673 = vmul.f32 %v4660, 1.442695
        %v4674 = vpow.pop %v4673
        %v4675 = vadd.f32 %v4662, 1.0
        %v4676 = vadd.f32 %v4664, 1.0
        %v4677 = vadd.f32 %v4666, 1.0
        %v4678 = vadd.f32 %v4668, 1.0
        %v4679 = vadd.f32 %v4670, 1.0
        %v4680 = vadd.f32 %v4672, 1.0
        %v4681 = vadd.f32 %v4674, 1.0
        %v4682 = vrcp.pop %v4675
        %v4683 = vrcp.pop %v4676
        %v4684 = vrcp.pop %v4677
        %v4685 = vrcp.pop %v4678
        %v4686 = vrcp.pop %v4679
        %v4687 = vrcp.pop %v4680
        %v4688 = vrcp.pop %v4681
        %4689 = vst [vmem:[%s455] sm:$0xff] %v4682
        %4690 = vst [vmem:[%s455 + $0x8] sm:$0xff] %v4683
        %4691 = vst [vmem:[%s455 + $0x10] sm:$0xff] %v4684
        %4692 = vst [vmem:[%s455 + $0x18] sm:$0xff] %v4685
        %4693 = vst [vmem:[%s455 + $0x20] sm:$0xff] %v4686
        %4694 = vst [vmem:[%s455 + $0x28] sm:$0xff] %v4687
        %4695 = vst [vmem:[%s455 + $0x30] sm:$0xff] %v4688
        %s4696 = sand.u32 %s232, 1
        %s4697 = scalar_lea.sflag [#allocation4], %s4696
        %s4698 = sand.u32 %s232, 1
        %s4699 = smul.addr %s4698, 56
        %s4700 = scalar_lea.vmem [#allocation17], %s4699
        // Predicated region
        $region93: #{tpu_custom_call.1} parent=55 // pred_check
          %p4701 = pneg %p242
        $region94: #{tpu_custom_call.1} parent=55 // pred_check_branch
          %4703 = sbr.rel (%p4701) target = $region96
        $region95: #{tpu_custom_call.1} parent=55 // pred_region
          %s4705 = ssub.s32 896, 896
          %4706 = vsyncadd %s4697, %s4705
          %s4707 = smul.addr %s30, 7
          %s4708 = smul.addr %s4707, 128
          %s4709 = scalar_lea.hbm %s9, %s4708
          %s4711 = sshll.u32 %s4700, 4
          %s4712 = int_to_ptr.vmem [resolvable:$true] %s4711
          %4714 = dma.vmem_to_hbm [thread:$0]  %s4712, 896, %s4709, %s4697
        $region96: #{tpu_custom_call.1} parent=55 // pred_fallthru
          _
      $region56: #{tpu_custom_call.1} parent=5 // pred_fallthru
        _
      %p4715 = scmp.le.s32.totalorder 2, %s25
      // Predicated region
      $region97: #{tpu_custom_call.1} parent=5 // pred_check
        %p4716 = pneg %p4715
      $region98: #{tpu_custom_call.1} parent=5 // pred_check_branch
        %4718 = sbr.rel (%p4716) target = $region100
      $region99: #{tpu_custom_call.1} parent=5 // pred_region
        %s4719 = ssub.s32 %s25, 2
        // Predicated region
        $region101: #{tpu_custom_call.1} parent=99 // pred_check
          %p4720 = pneg %p248
        $region102: #{tpu_custom_call.1} parent=99 // pred_check_branch
          %4722 = sbr.rel (%p4720) target = $region104
        $region103: #{tpu_custom_call.1} parent=99 // pred_region
          %s4723 = sand.u32 %s233, 1
          %s4724 = scalar_lea.sflag [#allocation4], %s4723
          %s4725 = sand.u32 %s233, 1
          %s4726 = smul.addr %s4725, 56
          %s4727 = scalar_lea.vmem [#allocation17], %s4726
          %4728 = dma.done %s4724, 896
        $region104: #{tpu_custom_call.1} parent=99 // pred_fallthru
          _
      $region100: #{tpu_custom_call.1} parent=5 // pred_fallthru
        _
    $region6: #{tpu_custom_call.1} parent=1 // loop_footer
      %s29 = sadd.s32 1, %s25
    $region7: #{tpu_custom_call.1} parent=1 // loop_footer_branch
      %24 = sbr.rel target = $region3
    $region8: #{tpu_custom_call.1} parent=1 // loop_exit
      _
    %4729 = vsyncpa [#allocation3], 1
    %s4730 = scalar_lea.sflag [#allocation3], 1
    %4731 = vsyncpa %s4730, 1
    %4732 = vsyncpa [#allocation6], 1
    %4733 = vsyncpa [#allocation9], 1
    %4734 = vsyncpa [#allocation12], 1
    %4735 = vsyncpa [#allocation15], 1
    %4736 = vsyncpa [#allocation4], 1
    %s4737 = scalar_lea.sflag [#allocation4], 1
    %4738 = vsyncpa %s4737, 1

</llo_original>
